<compile_context>
chip_gen: v6e
topology: v6e:2x2x1
jax: 0.10.0
libtpu: 0.0.40
codegen_flags: <defaults>
</compile_context>

<pallas_src>
import jax
import jax.numpy as jnp
from jax.experimental import pallas as pl
from jax.experimental.pallas import tpu as pltpu

_HI = jax.lax.Precision.HIGHEST


def _leaky_relu(v, alpha=0.1):
    # PyTorch forward uses F.leaky_relu(..., 0.1) explicitly.
    return jnp.where(v >= 0, v, alpha * v)


def _pick_batch_block(n, c, hwp):
    """Batch elements per grid step: amortize per-step overhead, keep blocks small."""
    per = c * hwp * 4  # bytes of one f32 batch element
    if n * per <= (2 << 20):
        return n                      # everything fits one step; no pipeline possible anyway
    nb = 1
    for cand in range(2, 9):
        if n % cand == 0 and cand * per <= (2 << 20) and n // cand >= 2:
            nb = cand
    return nb


def _make_kernel(nb, h, w, crp):
    """Kernel closure over static shape params.  x/out blocks are (nb, C, HWp)."""

    def kernel(x_ref, pool_ref, exp_ref, w_down_ref, w_up_ref, o_ref):
        pool_m = pool_ref[...]            # (HWp, H+W)  one-hot avg-pool (1/W | 1/H folded in)
        exp_m = exp_ref[...]              # (H+W, HWp)  one-hot expansion
        eh = exp_m[:h, :]                 # (H, HWp)
        ew = exp_m[h:, :]                 # (W, HWp)

        w_down = w_down_ref[...]          # (3*crp, C): [conv1x1 ; scale0 ; shift0]
        w_up = w_up_ref[...]              # (C, 4*crp): [F_h | F_w | scale1 | shift1]
        w1 = w_down[0:crp, :]
        wsc0 = w_down[crp:2 * crp, :]
        wsh0 = w_down[2 * crp:3 * crp, :]
        wfh = w_up[:, 0:crp]
        wfw = w_up[:, crp:2 * crp]
        wsc1 = w_up[:, 2 * crp:3 * crp]
        wsh1 = w_up[:, 3 * crp:4 * crp]

        for b in range(nb):               # static unroll, nb is small
            x = x_ref[b]                  # (C, HWp) f32

            # --- pooled spatial stats: cat([x_h, x_w]) in one lane-dense matmul
            # (DEFAULT precision = single-pass bf16 MXU, f32 accumulate).
            pooled = jnp.dot(x, pool_m, preferred_element_type=jnp.float32)  # (C, H+W)

            # --- coordinate-attention branch (tiny; keep full precision) ------
            y = jnp.maximum(
                jnp.dot(w1, pooled, precision=_HI,
                        preferred_element_type=jnp.float32), 0.0)            # (crp, H+W)
            y_h = y[:, :h]                                                    # (crp, H)
            y_w = y[:, h:]                                                    # (crp, W)
            s_h = jax.nn.sigmoid(jnp.dot(wfh, y_h, precision=_HI,
                                         preferred_element_type=jnp.float32))  # (C, H)
            s_w = jax.nn.sigmoid(jnp.dot(wfw, y_w, precision=_HI,
                                         preferred_element_type=jnp.float32))  # (C, W)

            # --- SFT scale branch: gap derived from x_h (== mean over all pixels)
            gap = jnp.mean(pooled[:, :h], axis=1, keepdims=True)             # (C, 1)
            sc = _leaky_relu(jnp.dot(wsc0, gap, precision=_HI,
                                     preferred_element_type=jnp.float32))    # (crp, 1)
            scale = jax.nn.sigmoid(jnp.dot(wsc1, sc, precision=_HI,
                                           preferred_element_type=jnp.float32))  # (C, 1)

            # --- SFT shift branch: big per-pixel 1x1 convs (single-pass bf16 MXU)
            sh = _leaky_relu(jnp.dot(wsh0, x,
                                     preferred_element_type=jnp.float32))    # (crp, HWp)
            shift = jnp.dot(wsh1, sh,
                            preferred_element_type=jnp.float32)              # (C, HWp)

            # --- combine: fold per-channel scale into the H-gate before expansion,
            # so out = x * (s_h*scale)_full * s_w_full * (x + shift)
            g_h = jnp.dot(s_h * scale, eh,
                          preferred_element_type=jnp.float32)                # (C, HWp)
            g_w = jnp.dot(s_w, ew,
                          preferred_element_type=jnp.float32)                # (C, HWp)
            out = x * g_h * g_w * (x + shift)
            o_ref[b] = out.astype(o_ref.dtype)

    return kernel


def sftca_forward(x_nchw, params, *, vmem_limit_bytes=48 * 1024 * 1024):
    """x_nchw: (N, C, H, W) float32 (PyTorch-native layout). Returns (N, C, H, W)."""
    N, C, H, W = x_nchw.shape
    hw = H * W
    hwp = hw if hw % 128 == 0 else ((hw + 127) // 128) * 128   # lane-dense minor dim
    cr = params["w_conv1x1"].shape[0]
    crp = max(8, ((cr + 7) // 8) * 8)                          # pad Cr to sublane granularity

    # Free view for row-major NCHW: no transpose anywhere.
    x3 = x_nchw.reshape(N, C, hw)
    if hwp != hw:
        x3 = jnp.pad(x3, ((0, 0), (0, 0), (0, hwp - hw)))

    def pad_out(wm):  # (Cr, C) -> (Crp, C), zero rows (relu(0)=leaky(0)=0 keeps it exact)
        return jnp.pad(wm, ((0, crp - cr), (0, 0)))

    def pad_in(wm):   # (C, Cr) -> (C, Crp), zero cols
        return jnp.pad(wm, ((0, 0), (0, crp - cr)))

    # Consolidated weights: one down-projection stack, one up-projection stack.
    w_down = jnp.concatenate([pad_out(params["w_conv1x1"]),
                              pad_out(params["w_scale0"]),
                              pad_out(params["w_shift0"])], axis=0)      # (3*crp, C)
    w_up = jnp.concatenate([pad_in(params["w_F_h"]),
                            pad_in(params["w_F_w"]),
                            pad_in(params["w_scale1"]),
                            pad_in(params["w_shift1"])], axis=1)         # (C, 4*crp)

    # One-hot pooling / expansion matrices (flattening order k = h*W + w).
    # Padded pixel columns (k >= hw) are zeroed so averages and output stay exact.
    k = jnp.arange(hwp)
    valid = k < hw
    eh = ((k[None, :] // W == jnp.arange(H)[:, None]) & valid[None, :]).astype(jnp.float32)
    ew = ((k[None, :] % W == jnp.arange(W)[:, None]) & valid[None, :]).astype(jnp.float32)
    pool_mat = jnp.concatenate([eh.T * (1.0 / W), ew.T * (1.0 / H)], axis=1)  # (HWp, H+W)
    exp_mat = jnp.concatenate([eh, ew], axis=0)                               # (H+W, HWp)

    nb = _pick_batch_block(N, C, hwp)
    kernel = _make_kernel(nb, H, W, crp)
    consts = [pool_mat, exp_mat, w_down, w_up]

    def full_spec(a):
        return pl.BlockSpec(a.shape, lambda n, _nd=a.ndim: (0,) * _nd)

    out = pl.pallas_call(
        kernel,
        out_shape=jax.ShapeDtypeStruct((N, C, hwp), x_nchw.dtype),
        grid=(N // nb,),
        in_specs=[pl.BlockSpec((nb, C, hwp), lambda n: (n, 0, 0))]
                 + [full_spec(a) for a in consts],
        out_specs=pl.BlockSpec((nb, C, hwp), lambda n: (n, 0, 0)),
        compiler_params=pltpu.CompilerParams(
            dimension_semantics=("parallel",),      # batch groups -> v7x megacore
            vmem_limit_bytes=vmem_limit_bytes),     # <= 48 MiB for v7x headroom
    )(x3, *consts)

    if hwp != hw:
        out = out[:, :, :hw]
    return out.reshape(N, C, H, W)


def sftca_reference(x, p):
    """Pure-JAX NCHW reference mirroring the PyTorch forward exactly (f32)."""
    N, C, H, W = x.shape

    def conv(t, w):  # 1x1 conv, no bias; w: (out, in)
        return jnp.einsum('nchw,oc->nohw', t, w, precision="highest")

    x_h = jnp.transpose(jnp.mean(x, axis=3, keepdims=True), (0, 1, 3, 2))
    x_w = jnp.mean(x, axis=2, keepdims=True)
    gap = jnp.mean(x, axis=(2, 3), keepdims=True)

    cat = jnp.concatenate([x_h, x_w], axis=3)
    y = jax.nn.relu(conv(cat, p["w_conv1x1"]))
    y_h, y_w = y[..., :H], y[..., H:]

    s_h = jax.nn.sigmoid(conv(jnp.transpose(y_h, (0, 1, 3, 2)), p["w_F_h"]))
    s_w = jax.nn.sigmoid(conv(y_w, p["w_F_w"]))

    scale = jax.nn.sigmoid(
        conv(jax.nn.leaky_relu(conv(gap, p["w_scale0"]), 0.1), p["w_scale1"]))
    shift = conv(jax.nn.leaky_relu(conv(x, p["w_shift0"]), 0.1), p["w_shift1"])
    shift = (x + shift) * scale
    return x * s_h * s_w * shift


def make_params(key, channel, reduction):
    cr = channel // reduction
    keys = jax.random.split(key, 7)

    def w(k, out_c, in_c):
        return (jax.random.normal(k, (out_c, in_c), jnp.float32)
                / jnp.sqrt(jnp.float32(in_c)))

    return {
        "w_conv1x1": w(keys[0], cr, channel),
        "w_F_h":     w(keys[1], channel, cr),
        "w_F_w":     w(keys[2], channel, cr),
        "w_scale0":  w(keys[3], cr, channel),
        "w_scale1":  w(keys[4], channel, cr),
        "w_shift0":  w(keys[5], cr, channel),
        "w_shift1":  w(keys[6], channel, cr),
    }


if __name__ == "__main__":
    # Small shapes consistent with the module (channel must be a multiple of
    # reduction=16): channel=64, h=w=16, batch=2.
    N, C, H, W = 2, 64, 16, 16
    reduction = 16

    key = jax.random.PRNGKey(0)
    kx, kp = jax.random.split(key)
    x = jax.random.normal(kx, (N, C, H, W), jnp.float32)
    params = make_params(kp, C, reduction)

    out = jax.block_until_ready(sftca_forward(x, params))
    ref = jax.block_until_ready(sftca_reference(x, params))

    assert out.shape == (N, C, H, W)
    # Tolerance 3e-2: the large matmuls (spatial pooling, gate expansion, and the
    # per-pixel shift-branch 1x1 convs) deliberately run as single-pass bf16 MXU
    # ops with f32 accumulation (perf review), while the reference is full f32
    # HIGHEST precision.
    assert jnp.allclose(out, ref, rtol=3e-2, atol=3e-2), (
        float(jnp.max(jnp.abs(out - ref))))

    print("KERNEL_OK")
</pallas_src>

<mosaic_0001>
module attributes {stable_mosaic.version = 11 : i64} {
  func.func @kernel(%arg0: i32, %arg1: memref<2x64x256xf32, #tpu.memory_space<vmem>>, %arg2: memref<256x32xf32, #tpu.memory_space<vmem>>, %arg3: memref<32x256xf32, #tpu.memory_space<vmem>>, %arg4: memref<24x64xf32, #tpu.memory_space<vmem>>, %arg5: memref<64x32xf32, #tpu.memory_space<vmem>>, %arg6: memref<2x64x256xf32, #tpu.memory_space<vmem>>) attributes {dimension_semantics = [#tpu.dimension_semantics<parallel>], iteration_bounds = array<i64: 1>, scalar_prefetch = 0 : i64, scratch_operands = 0 : i64, tpu.core_type = #tpu.core_type<tc>, window_params = [{transform_indices = @transform_0, window_bounds = array<i64: 2, 64, 256>}, {pipeline_mode = #tpu.pipeline_mode<synchronous>, transform_indices = @transform_1, window_bounds = array<i64: 256, 32>}, {pipeline_mode = #tpu.pipeline_mode<synchronous>, transform_indices = @transform_2, window_bounds = array<i64: 32, 256>}, {pipeline_mode = #tpu.pipeline_mode<synchronous>, transform_indices = @transform_3, window_bounds = array<i64: 24, 64>}, {pipeline_mode = #tpu.pipeline_mode<synchronous>, transform_indices = @transform_4, window_bounds = array<i64: 64, 32>}, {transform_indices = @transform_5, window_bounds = array<i64: 2, 64, 256>}]} {
    %c0 = arith.constant 0 : index
    %c0_0 = arith.constant 0 : index
    %0 = vector.load %arg2[%c0, %c0_0] : memref<256x32xf32, #tpu.memory_space<vmem>>, vector<256x32xf32>
    %c0_1 = arith.constant 0 : index
    %c0_2 = arith.constant 0 : index
    %1 = vector.load %arg3[%c0_1, %c0_2] : memref<32x256xf32, #tpu.memory_space<vmem>>, vector<32x256xf32>
    %2 = vector.extract_strided_slice %1 {offsets = [0, 0], sizes = [16, 256], strides = [1, 1]} : vector<32x256xf32> to vector<16x256xf32>
    %3 = vector.extract_strided_slice %1 {offsets = [16, 0], sizes = [16, 256], strides = [1, 1]} : vector<32x256xf32> to vector<16x256xf32>
    %c0_3 = arith.constant 0 : index
    %c0_4 = arith.constant 0 : index
    %4 = vector.load %arg4[%c0_3, %c0_4] : memref<24x64xf32, #tpu.memory_space<vmem>>, vector<24x64xf32>
    %c0_5 = arith.constant 0 : index
    %c0_6 = arith.constant 0 : index
    %5 = vector.load %arg5[%c0_5, %c0_6] : memref<64x32xf32, #tpu.memory_space<vmem>>, vector<64x32xf32>
    %6 = vector.extract_strided_slice %4 {offsets = [0, 0], sizes = [8, 64], strides = [1, 1]} : vector<24x64xf32> to vector<8x64xf32>
    %7 = vector.extract_strided_slice %4 {offsets = [8, 0], sizes = [8, 64], strides = [1, 1]} : vector<24x64xf32> to vector<8x64xf32>
    %8 = vector.extract_strided_slice %4 {offsets = [16, 0], sizes = [8, 64], strides = [1, 1]} : vector<24x64xf32> to vector<8x64xf32>
    %9 = vector.extract_strided_slice %5 {offsets = [0, 0], sizes = [64, 8], strides = [1, 1]} : vector<64x32xf32> to vector<64x8xf32>
    %10 = vector.extract_strided_slice %5 {offsets = [0, 8], sizes = [64, 8], strides = [1, 1]} : vector<64x32xf32> to vector<64x8xf32>
    %11 = vector.extract_strided_slice %5 {offsets = [0, 16], sizes = [64, 8], strides = [1, 1]} : vector<64x32xf32> to vector<64x8xf32>
    %12 = vector.extract_strided_slice %5 {offsets = [0, 24], sizes = [64, 8], strides = [1, 1]} : vector<64x32xf32> to vector<64x8xf32>
    %c0_7 = arith.constant 0 : index
    %c0_8 = arith.constant 0 : index
    %c0_9 = arith.constant 0 : index
    %13 = vector.load %arg1[%c0_7, %c0_8, %c0_9] : memref<2x64x256xf32, #tpu.memory_space<vmem>>, vector<1x64x256xf32>
    %14 = vector.shape_cast %13 : vector<1x64x256xf32> to vector<64x256xf32>
    %cst = arith.constant dense<0.000000e+00> : vector<64x32xf32>
    %15 = tpu.matmul %14, %0, %cst {dimension_numbers = #tpu.dot_dimension_numbers<[1], [0], [0], [1], [0, 0, 1, 1], [], []>} : vector<64x256xf32>, vector<256x32xf32>, vector<64x32xf32> -> vector<64x32xf32>
    %cst_10 = arith.constant dense<0.000000e+00> : vector<8x32xf32>
    %16 = tpu.matmul %6, %15, %cst_10 {dimension_numbers = #tpu.dot_dimension_numbers<[1], [0], [0], [1], [0, 0, 1, 1], [], []>, precision = #tpu.contract_precision<fp32>} : vector<8x64xf32>, vector<64x32xf32>, vector<8x32xf32> -> vector<8x32xf32>
    %cst_11 = arith.constant 0.000000e+00 : f32
    %17 = vector.broadcast %cst_11 : f32 to vector<8x32xf32>
    %18 = arith.maximumf %16, %17 : vector<8x32xf32>
    %19 = vector.extract_strided_slice %18 {offsets = [0, 0], sizes = [8, 16], strides = [1, 1]} : vector<8x32xf32> to vector<8x16xf32>
    %20 = vector.extract_strided_slice %18 {offsets = [0, 16], sizes = [8, 16], strides = [1, 1]} : vector<8x32xf32> to vector<8x16xf32>
    %cst_12 = arith.constant dense<0.000000e+00> : vector<64x16xf32>
    %21 = tpu.matmul %9, %19, %cst_12 {dimension_numbers = #tpu.dot_dimension_numbers<[1], [0], [0], [1], [0, 0, 1, 1], [], []>, precision = #tpu.contract_precision<fp32>} : vector<64x8xf32>, vector<8x16xf32>, vector<64x16xf32> -> vector<64x16xf32>
    %22 = arith.negf %21 : vector<64x16xf32>
    %23 = math.exp %22 : vector<64x16xf32>
    %cst_13 = arith.constant 1.000000e+00 : f32
    %24 = vector.broadcast %cst_13 : f32 to vector<64x16xf32>
    %25 = arith.addf %24, %23 : vector<64x16xf32>
    %26 = arith.divf %24, %25 : vector<64x16xf32>
    %cst_14 = arith.constant dense<0.000000e+00> : vector<64x16xf32>
    %27 = tpu.matmul %10, %20, %cst_14 {dimension_numbers = #tpu.dot_dimension_numbers<[1], [0], [0], [1], [0, 0, 1, 1], [], []>, precision = #tpu.contract_precision<fp32>} : vector<64x8xf32>, vector<8x16xf32>, vector<64x16xf32> -> vector<64x16xf32>
    %28 = arith.negf %27 : vector<64x16xf32>
    %29 = math.exp %28 : vector<64x16xf32>
    %cst_15 = arith.constant 1.000000e+00 : f32
    %30 = vector.broadcast %cst_15 : f32 to vector<64x16xf32>
    %31 = arith.addf %30, %29 : vector<64x16xf32>
    %32 = arith.divf %30, %31 : vector<64x16xf32>
    %33 = vector.extract_strided_slice %15 {offsets = [0, 0], sizes = [64, 16], strides = [1, 1]} : vector<64x32xf32> to vector<64x16xf32>
    %cst_16 = arith.constant dense<0.000000e+00> : vector<64xf32>
    %34 = vector.multi_reduction <add>, %33, %cst_16 [1] : vector<64x16xf32> to vector<64xf32>
    %35 = vector.shape_cast %34 : vector<64xf32> to vector<64x1xf32>
    %cst_17 = arith.constant 1.600000e+01 : f32
    %36 = vector.broadcast %cst_17 : f32 to vector<64x1xf32>
    %37 = arith.divf %35, %36 : vector<64x1xf32>
    %cst_18 = arith.constant dense<0.000000e+00> : vector<8x1xf32>
    %38 = tpu.matmul %7, %37, %cst_18 {dimension_numbers = #tpu.dot_dimension_numbers<[1], [0], [0], [1], [0, 0, 1, 1], [], []>, precision = #tpu.contract_precision<fp32>} : vector<8x64xf32>, vector<64x1xf32>, vector<8x1xf32> -> vector<8x1xf32>
    %cst_19 = arith.constant 0.000000e+00 : f32
    %39 = vector.broadcast %cst_19 : f32 to vector<8x1xf32>
    %40 = arith.cmpf oge, %38, %39 : vector<8x1xf32>
    %cst_20 = arith.constant 1.000000e-01 : f32
    %41 = vector.broadcast %cst_20 : f32 to vector<8x1xf32>
    %42 = arith.mulf %41, %38 : vector<8x1xf32>
    %43 = arith.select %40, %38, %42 : vector<8x1xi1>, vector<8x1xf32>
    %cst_21 = arith.constant dense<0.000000e+00> : vector<64x1xf32>
    %44 = tpu.matmul %11, %43, %cst_21 {dimension_numbers = #tpu.dot_dimension_numbers<[1], [0], [0], [1], [0, 0, 1, 1], [], []>, precision = #tpu.contract_precision<fp32>} : vector<64x8xf32>, vector<8x1xf32>, vector<64x1xf32> -> vector<64x1xf32>
    %45 = arith.negf %44 : vector<64x1xf32>
    %46 = math.exp %45 : vector<64x1xf32>
    %cst_22 = arith.constant 1.000000e+00 : f32
    %47 = vector.broadcast %cst_22 : f32 to vector<64x1xf32>
    %48 = arith.addf %47, %46 : vector<64x1xf32>
    %49 = arith.divf %47, %48 : vector<64x1xf32>
    %cst_23 = arith.constant dense<0.000000e+00> : vector<8x256xf32>
    %50 = tpu.matmul %8, %14, %cst_23 {dimension_numbers = #tpu.dot_dimension_numbers<[1], [0], [0], [1], [0, 0, 1, 1], [], []>} : vector<8x64xf32>, vector<64x256xf32>, vector<8x256xf32> -> vector<8x256xf32>
    %cst_24 = arith.constant 0.000000e+00 : f32
    %51 = vector.broadcast %cst_24 : f32 to vector<8x256xf32>
    %52 = arith.cmpf oge, %50, %51 : vector<8x256xf32>
    %cst_25 = arith.constant 1.000000e-01 : f32
    %53 = vector.broadcast %cst_25 : f32 to vector<8x256xf32>
    %54 = arith.mulf %53, %50 : vector<8x256xf32>
    %55 = arith.select %52, %50, %54 : vector<8x256xi1>, vector<8x256xf32>
    %cst_26 = arith.constant dense<0.000000e+00> : vector<64x256xf32>
    %56 = tpu.matmul %12, %55, %cst_26 {dimension_numbers = #tpu.dot_dimension_numbers<[1], [0], [0], [1], [0, 0, 1, 1], [], []>} : vector<64x8xf32>, vector<8x256xf32>, vector<64x256xf32> -> vector<64x256xf32>
    %57 = vector.broadcast %49 : vector<64x1xf32> to vector<64x16xf32>
    %58 = arith.mulf %26, %57 : vector<64x16xf32>
    %cst_27 = arith.constant dense<0.000000e+00> : vector<64x256xf32>
    %59 = tpu.matmul %58, %2, %cst_27 {dimension_numbers = #tpu.dot_dimension_numbers<[1], [0], [0], [1], [0, 0, 1, 1], [], []>} : vector<64x16xf32>, vector<16x256xf32>, vector<64x256xf32> -> vector<64x256xf32>
    %cst_28 = arith.constant dense<0.000000e+00> : vector<64x256xf32>
    %60 = tpu.matmul %32, %3, %cst_28 {dimension_numbers = #tpu.dot_dimension_numbers<[1], [0], [0], [1], [0, 0, 1, 1], [], []>} : vector<64x16xf32>, vector<16x256xf32>, vector<64x256xf32> -> vector<64x256xf32>
    %61 = arith.mulf %14, %59 : vector<64x256xf32>
    %62 = arith.mulf %61, %60 : vector<64x256xf32>
    %63 = arith.addf %14, %56 : vector<64x256xf32>
    %64 = arith.mulf %62, %63 : vector<64x256xf32>
    %c0_29 = arith.constant 0 : index
    %c0_30 = arith.constant 0 : index
    %c0_31 = arith.constant 0 : index
    %65 = vector.load %arg6[%c0_29, %c0_30, %c0_31] : memref<2x64x256xf32, #tpu.memory_space<vmem>>, vector<1x64x256xf32>
    %66 = vector.shape_cast %65 : vector<1x64x256xf32> to vector<64x256xf32>
    %67 = vector.shape_cast %64 : vector<64x256xf32> to vector<1x64x256xf32>
    tpu.vector_store %arg6[%c0_29, %c0_30, %c0_31], %67 {strides = array<i32>} : memref<2x64x256xf32, #tpu.memory_space<vmem>>, vector<1x64x256xf32>,
    %c1 = arith.constant 1 : index
    %c0_32 = arith.constant 0 : index
    %c0_33 = arith.constant 0 : index
    %68 = vector.load %arg1[%c1, %c0_32, %c0_33] : memref<2x64x256xf32, #tpu.memory_space<vmem>>, vector<1x64x256xf32>
    %69 = vector.shape_cast %68 : vector<1x64x256xf32> to vector<64x256xf32>
    %cst_34 = arith.constant dense<0.000000e+00> : vector<64x32xf32>
    %70 = tpu.matmul %69, %0, %cst_34 {dimension_numbers = #tpu.dot_dimension_numbers<[1], [0], [0], [1], [0, 0, 1, 1], [], []>} : vector<64x256xf32>, vector<256x32xf32>, vector<64x32xf32> -> vector<64x32xf32>
    %cst_35 = arith.constant dense<0.000000e+00> : vector<8x32xf32>
    %71 = tpu.matmul %6, %70, %cst_35 {dimension_numbers = #tpu.dot_dimension_numbers<[1], [0], [0], [1], [0, 0, 1, 1], [], []>, precision = #tpu.contract_precision<fp32>} : vector<8x64xf32>, vector<64x32xf32>, vector<8x32xf32> -> vector<8x32xf32>
    %cst_36 = arith.constant 0.000000e+00 : f32
    %72 = vector.broadcast %cst_36 : f32 to vector<8x32xf32>
    %73 = arith.maximumf %71, %72 : vector<8x32xf32>
    %74 = vector.extract_strided_slice %73 {offsets = [0, 0], sizes = [8, 16], strides = [1, 1]} : vector<8x32xf32> to vector<8x16xf32>
    %75 = vector.extract_strided_slice %73 {offsets = [0, 16], sizes = [8, 16], strides = [1, 1]} : vector<8x32xf32> to vector<8x16xf32>
    %cst_37 = arith.constant dense<0.000000e+00> : vector<64x16xf32>
    %76 = tpu.matmul %9, %74, %cst_37 {dimension_numbers = #tpu.dot_dimension_numbers<[1], [0], [0], [1], [0, 0, 1, 1], [], []>, precision = #tpu.contract_precision<fp32>} : vector<64x8xf32>, vector<8x16xf32>, vector<64x16xf32> -> vector<64x16xf32>
    %77 = arith.negf %76 : vector<64x16xf32>
    %78 = math.exp %77 : vector<64x16xf32>
    %cst_38 = arith.constant 1.000000e+00 : f32
    %79 = vector.broadcast %cst_38 : f32 to vector<64x16xf32>
    %80 = arith.addf %79, %78 : vector<64x16xf32>
    %81 = arith.divf %79, %80 : vector<64x16xf32>
    %cst_39 = arith.constant dense<0.000000e+00> : vector<64x16xf32>
    %82 = tpu.matmul %10, %75, %cst_39 {dimension_numbers = #tpu.dot_dimension_numbers<[1], [0], [0], [1], [0, 0, 1, 1], [], []>, precision = #tpu.contract_precision<fp32>} : vector<64x8xf32>, vector<8x16xf32>, vector<64x16xf32> -> vector<64x16xf32>
    %83 = arith.negf %82 : vector<64x16xf32>
    %84 = math.exp %83 : vector<64x16xf32>
    %cst_40 = arith.constant 1.000000e+00 : f32
    %85 = vector.broadcast %cst_40 : f32 to vector<64x16xf32>
    %86 = arith.addf %85, %84 : vector<64x16xf32>
    %87 = arith.divf %85, %86 : vector<64x16xf32>
    %88 = vector.extract_strided_slice %70 {offsets = [0, 0], sizes = [64, 16], strides = [1, 1]} : vector<64x32xf32> to vector<64x16xf32>
    %cst_41 = arith.constant dense<0.000000e+00> : vector<64xf32>
    %89 = vector.multi_reduction <add>, %88, %cst_41 [1] : vector<64x16xf32> to vector<64xf32>
    %90 = vector.shape_cast %89 : vector<64xf32> to vector<64x1xf32>
    %cst_42 = arith.constant 1.600000e+01 : f32
    %91 = vector.broadcast %cst_42 : f32 to vector<64x1xf32>
    %92 = arith.divf %90, %91 : vector<64x1xf32>
    %cst_43 = arith.constant dense<0.000000e+00> : vector<8x1xf32>
    %93 = tpu.matmul %7, %92, %cst_43 {dimension_numbers = #tpu.dot_dimension_numbers<[1], [0], [0], [1], [0, 0, 1, 1], [], []>, precision = #tpu.contract_precision<fp32>} : vector<8x64xf32>, vector<64x1xf32>, vector<8x1xf32> -> vector<8x1xf32>
    %cst_44 = arith.constant 0.000000e+00 : f32
    %94 = vector.broadcast %cst_44 : f32 to vector<8x1xf32>
    %95 = arith.cmpf oge, %93, %94 : vector<8x1xf32>
    %cst_45 = arith.constant 1.000000e-01 : f32
    %96 = vector.broadcast %cst_45 : f32 to vector<8x1xf32>
    %97 = arith.mulf %96, %93 : vector<8x1xf32>
    %98 = arith.select %95, %93, %97 : vector<8x1xi1>, vector<8x1xf32>
    %cst_46 = arith.constant dense<0.000000e+00> : vector<64x1xf32>
    %99 = tpu.matmul %11, %98, %cst_46 {dimension_numbers = #tpu.dot_dimension_numbers<[1], [0], [0], [1], [0, 0, 1, 1], [], []>, precision = #tpu.contract_precision<fp32>} : vector<64x8xf32>, vector<8x1xf32>, vector<64x1xf32> -> vector<64x1xf32>
    %100 = arith.negf %99 : vector<64x1xf32>
    %101 = math.exp %100 : vector<64x1xf32>
    %cst_47 = arith.constant 1.000000e+00 : f32
    %102 = vector.broadcast %cst_47 : f32 to vector<64x1xf32>
    %103 = arith.addf %102, %101 : vector<64x1xf32>
    %104 = arith.divf %102, %103 : vector<64x1xf32>
    %cst_48 = arith.constant dense<0.000000e+00> : vector<8x256xf32>
    %105 = tpu.matmul %8, %69, %cst_48 {dimension_numbers = #tpu.dot_dimension_numbers<[1], [0], [0], [1], [0, 0, 1, 1], [], []>} : vector<8x64xf32>, vector<64x256xf32>, vector<8x256xf32> -> vector<8x256xf32>
    %cst_49 = arith.constant 0.000000e+00 : f32
    %106 = vector.broadcast %cst_49 : f32 to vector<8x256xf32>
    %107 = arith.cmpf oge, %105, %106 : vector<8x256xf32>
    %cst_50 = arith.constant 1.000000e-01 : f32
    %108 = vector.broadcast %cst_50 : f32 to vector<8x256xf32>
    %109 = arith.mulf %108, %105 : vector<8x256xf32>
    %110 = arith.select %107, %105, %109 : vector<8x256xi1>, vector<8x256xf32>
    %cst_51 = arith.constant dense<0.000000e+00> : vector<64x256xf32>
    %111 = tpu.matmul %12, %110, %cst_51 {dimension_numbers = #tpu.dot_dimension_numbers<[1], [0], [0], [1], [0, 0, 1, 1], [], []>} : vector<64x8xf32>, vector<8x256xf32>, vector<64x256xf32> -> vector<64x256xf32>
    %112 = vector.broadcast %104 : vector<64x1xf32> to vector<64x16xf32>
    %113 = arith.mulf %81, %112 : vector<64x16xf32>
    %cst_52 = arith.constant dense<0.000000e+00> : vector<64x256xf32>
    %114 = tpu.matmul %113, %2, %cst_52 {dimension_numbers = #tpu.dot_dimension_numbers<[1], [0], [0], [1], [0, 0, 1, 1], [], []>} : vector<64x16xf32>, vector<16x256xf32>, vector<64x256xf32> -> vector<64x256xf32>
    %cst_53 = arith.constant dense<0.000000e+00> : vector<64x256xf32>
    %115 = tpu.matmul %87, %3, %cst_53 {dimension_numbers = #tpu.dot_dimension_numbers<[1], [0], [0], [1], [0, 0, 1, 1], [], []>} : vector<64x16xf32>, vector<16x256xf32>, vector<64x256xf32> -> vector<64x256xf32>
    %116 = arith.mulf %69, %114 : vector<64x256xf32>
    %117 = arith.mulf %116, %115 : vector<64x256xf32>
    %118 = arith.addf %69, %111 : vector<64x256xf32>
    %119 = arith.mulf %117, %118 : vector<64x256xf32>
    %c1_54 = arith.constant 1 : index
    %c0_55 = arith.constant 0 : index
    %c0_56 = arith.constant 0 : index
    %120 = vector.load %arg6[%c1_54, %c0_55, %c0_56] : memref<2x64x256xf32, #tpu.memory_space<vmem>>, vector<1x64x256xf32>
    %121 = vector.shape_cast %120 : vector<1x64x256xf32> to vector<64x256xf32>
    %122 = vector.shape_cast %119 : vector<64x256xf32> to vector<1x64x256xf32>
    tpu.vector_store %arg6[%c1_54, %c0_55, %c0_56], %122 {strides = array<i32>} : memref<2x64x256xf32, #tpu.memory_space<vmem>>, vector<1x64x256xf32>,
    return
  }
  func.func @transform_0(%arg0: i32) -> (i32, i32, i32) {
    %c0_i32 = arith.constant 0 : i32
    %c0_i32_0 = arith.constant 0 : i32
    %c0_i32_1 = arith.constant 0 : i32
    return %arg0, %c0_i32, %c0_i32_0 : i32, i32, i32
  }
  func.func @transform_1(%arg0: i32) -> (i32, i32) {
    %c0_i32 = arith.constant 0 : i32
    %c0_i32_0 = arith.constant 0 : i32
    %c0_i32_1 = arith.constant 0 : i32
    return %c0_i32, %c0_i32_0 : i32, i32
  }
  func.func @transform_2(%arg0: i32) -> (i32, i32) {
    %c0_i32 = arith.constant 0 : i32
    %c0_i32_0 = arith.constant 0 : i32
    %c0_i32_1 = arith.constant 0 : i32
    return %c0_i32, %c0_i32_0 : i32, i32
  }
  func.func @transform_3(%arg0: i32) -> (i32, i32) {
    %c0_i32 = arith.constant 0 : i32
    %c0_i32_0 = arith.constant 0 : i32
    %c0_i32_1 = arith.constant 0 : i32
    return %c0_i32, %c0_i32_0 : i32, i32
  }
  func.func @transform_4(%arg0: i32) -> (i32, i32) {
    %c0_i32 = arith.constant 0 : i32
    %c0_i32_0 = arith.constant 0 : i32
    %c0_i32_1 = arith.constant 0 : i32
    return %c0_i32, %c0_i32_0 : i32, i32
  }
  func.func @transform_5(%arg0: i32) -> (i32, i32, i32) {
    %c0_i32 = arith.constant 0 : i32
    %c0_i32_0 = arith.constant 0 : i32
    %c0_i32_1 = arith.constant 0 : i32
    return %arg0, %c0_i32, %c0_i32_0 : i32, i32, i32
  }
}

</mosaic_0001>

<llo_original>
// kernel: tpu_custom_call.1
$region0: #{tpu_custom_call.1}
  #allocation0 [shape = 'u32[]', space=smem, size = 0x4, offset = 0x4, fixed_abs, tag = 'smem constant byte address 0x4 - core index']
  #allocation1 [shape = 'u32[144,128]{1,0:T(1,128)}', space=vmem, size = 0x12000, scoped, tag = 'internal scratch']
  %s0 = inlined_call_operand.vmem [shape: f32[2,64,256], index: 0, kind: input, shape index: {}]
  %s1 = inlined_call_operand.vmem [shape: f32[256,32], index: 1, kind: input, shape index: {}]
  %s2 = inlined_call_operand.vmem [shape: f32[32,256], index: 2, kind: input, shape index: {}]
  %s3 = inlined_call_operand.vmem [shape: f32[24,64], index: 3, kind: input, shape index: {}]
  %s4 = inlined_call_operand.vmem [shape: f32[64,32], index: 4, kind: input, shape index: {}]
  %s5 = inlined_call_operand.hbm [shape: f32[2,64,256], index: 5, kind: output, shape index: {}]
  %s6 = sld [smem:[#allocation0]]
  $region30: #{tpu_custom_call.1} parent=0
    _
  %s8 = ssub.s32 1, %s6
  %s9 = scalar_select 0, %s8, %s6
  $region1: #{tpu_custom_call.1} parent=0
    #allocation2 [shape = 'u8[131072]{0}', space=vmem, size = 0x20000, scoped, tag = 'output window, operand 0, single buffered']
    #allocation3 [shape = 's32[1]{0}', space=sflag, size = 0x4, scoped, tag = 'scoped memory for tpu_custom_call.1']
    %10 = vsyncpa [#allocation3], 0
    // Predicated region
    $region2: #{tpu_custom_call.1} parent=1 // pred_check
      _
    $region3: #{tpu_custom_call.1} parent=1 // pred_check_branch
      %12 = sbr.rel (0) target = $region5
    $region4: #{tpu_custom_call.1} parent=1 // pred_region
      _
    $region5: #{tpu_custom_call.1} parent=1 // pred_fallthru
      _
    // Predicated region
    $region6: #{tpu_custom_call.1} parent=1 // pred_check
      _
    $region7: #{tpu_custom_call.1} parent=1 // pred_check_branch
      %14 = sbr.rel (0) target = $region9
    $region8: #{tpu_custom_call.1} parent=1 // pred_region
      _
    $region9: #{tpu_custom_call.1} parent=1 // pred_fallthru
      _
    // Predicated region
    $region10: #{tpu_custom_call.1} parent=1 // pred_check
      _
    $region11: #{tpu_custom_call.1} parent=1 // pred_check_branch
      %16 = sbr.rel (0) target = $region13
    $region12: #{tpu_custom_call.1} parent=1 // pred_region
      _
    $region13: #{tpu_custom_call.1} parent=1 // pred_fallthru
      _
    // Predicated region
    $region14: #{tpu_custom_call.1} parent=1 // pred_check
      _
    $region15: #{tpu_custom_call.1} parent=1 // pred_check_branch
      %18 = sbr.rel (0) target = $region17
    $region16: #{tpu_custom_call.1} parent=1 // pred_region
      _
    $region17: #{tpu_custom_call.1} parent=1 // pred_fallthru
      _
    // Predicated region
    $region18: #{tpu_custom_call.1} parent=1 // pred_check
      _
    $region19: #{tpu_custom_call.1} parent=1 // pred_check_branch
      %20 = sbr.rel (0) target = $region21
    $region20: #{tpu_custom_call.1} parent=1 // pred_region
      _
    $region21: #{tpu_custom_call.1} parent=1 // pred_fallthru
      _
    %v21 = vld [vmem:[%s1] sm:$0xff]
    %v22 = vld [vmem:[%s1 + $0x8] sm:$0xff]
    %v23 = vld [vmem:[%s1 + $0x10] sm:$0xff]
    %v24 = vld [vmem:[%s1 + $0x18] sm:$0xff]
    %v25 = vld [vmem:[%s1 + $0x20] sm:$0xff]
    %v26 = vld [vmem:[%s1 + $0x28] sm:$0xff]
    %v27 = vld [vmem:[%s1 + $0x30] sm:$0xff]
    %v28 = vld [vmem:[%s1 + $0x38] sm:$0xff]
    %v29 = vld [vmem:[%s1 + $0x40] sm:$0xff]
    %v30 = vld [vmem:[%s1 + $0x48] sm:$0xff]
    %v31 = vld [vmem:[%s1 + $0x50] sm:$0xff]
    %v32 = vld [vmem:[%s1 + $0x58] sm:$0xff]
    %v33 = vld [vmem:[%s1 + $0x60] sm:$0xff]
    %v34 = vld [vmem:[%s1 + $0x68] sm:$0xff]
    %v35 = vld [vmem:[%s1 + $0x70] sm:$0xff]
    %v36 = vld [vmem:[%s1 + $0x78] sm:$0xff]
    %v37 = vld [vmem:[%s1 + $0x80] sm:$0xff]
    %v38 = vld [vmem:[%s1 + $0x88] sm:$0xff]
    %v39 = vld [vmem:[%s1 + $0x90] sm:$0xff]
    %v40 = vld [vmem:[%s1 + $0x98] sm:$0xff]
    %v41 = vld [vmem:[%s1 + $0xa0] sm:$0xff]
    %v42 = vld [vmem:[%s1 + $0xa8] sm:$0xff]
    %v43 = vld [vmem:[%s1 + $0xb0] sm:$0xff]
    %v44 = vld [vmem:[%s1 + $0xb8] sm:$0xff]
    %v45 = vld [vmem:[%s1 + $0xc0] sm:$0xff]
    %v46 = vld [vmem:[%s1 + $0xc8] sm:$0xff]
    %v47 = vld [vmem:[%s1 + $0xd0] sm:$0xff]
    %v48 = vld [vmem:[%s1 + $0xd8] sm:$0xff]
    %v49 = vld [vmem:[%s1 + $0xe0] sm:$0xff]
    %v50 = vld [vmem:[%s1 + $0xe8] sm:$0xff]
    %v51 = vld [vmem:[%s1 + $0xf0] sm:$0xff]
    %v52 = vld [vmem:[%s1 + $0xf8] sm:$0xff]
    %v53 = vld [vmem:[%s2] sm:$0xff]
    %v54 = vld [vmem:[%s2 + $0x8] sm:$0xff]
    %v55 = vld [vmem:[%s2 + $0x10] sm:$0xff]
    %v56 = vld [vmem:[%s2 + $0x18] sm:$0xff]
    %v57 = vld [vmem:[%s2 + $0x20] sm:$0xff]
    %v58 = vld [vmem:[%s2 + $0x28] sm:$0xff]
    %v59 = vld [vmem:[%s2 + $0x30] sm:$0xff]
    %v60 = vld [vmem:[%s2 + $0x38] sm:$0xff]
    %v61 = vld [vmem:[%s3] sm:$0xff]
    %v62 = vld [vmem:[%s3 + $0x8] sm:$0xff]
    %v63 = vld [vmem:[%s3 + $0x10] sm:$0xff]
    %v64 = vld [vmem:[%s4] sm:$0xff]
    %v65 = vld [vmem:[%s4 + $0x8] sm:$0xff]
    %v66 = vld [vmem:[%s4 + $0x10] sm:$0xff]
    %v67 = vld [vmem:[%s4 + $0x18] sm:$0xff]
    %v68 = vld [vmem:[%s4 + $0x20] sm:$0xff]
    %v69 = vld [vmem:[%s4 + $0x28] sm:$0xff]
    %v70 = vld [vmem:[%s4 + $0x30] sm:$0xff]
    %v71 = vld [vmem:[%s4 + $0x38] sm:$0xff]
    %v72 = vld [vmem:[%s0] sm:$0xff]
    %v73 = vld [vmem:[%s0 + $0x8] sm:$0xff]
    %v74 = vld [vmem:[%s0 + $0x10] sm:$0xff]
    %v75 = vld [vmem:[%s0 + $0x18] sm:$0xff]
    %v76 = vld [vmem:[%s0 + $0x20] sm:$0xff]
    %v77 = vld [vmem:[%s0 + $0x28] sm:$0xff]
    %v78 = vld [vmem:[%s0 + $0x30] sm:$0xff]
    %v79 = vld [vmem:[%s0 + $0x38] sm:$0xff]
    %v80 = vld [vmem:[%s0 + $0x40] sm:$0xff]
    %v81 = vld [vmem:[%s0 + $0x48] sm:$0xff]
    %v82 = vld [vmem:[%s0 + $0x50] sm:$0xff]
    %v83 = vld [vmem:[%s0 + $0x58] sm:$0xff]
    %v84 = vld [vmem:[%s0 + $0x60] sm:$0xff]
    %v85 = vld [vmem:[%s0 + $0x68] sm:$0xff]
    %v86 = vld [vmem:[%s0 + $0x70] sm:$0xff]
    %v87 = vld [vmem:[%s0 + $0x78] sm:$0xff]
    %88 = vmatprep.subr.mxu0 0.0
    %89 = vmatpush1.msra.mxu0 %v36
    %90 = vmatprep.subr.mxu0 0.0
    %91 = vmatpush1.msra.mxu0 %v35
    %92 = vmatprep.subr.mxu0 0.0
    %93 = vmatpush1.msra.mxu0 %v34
    %94 = vmatprep.subr.mxu0 0.0
    %95 = vmatpush1.msra.mxu0 %v33
    %96 = vmatprep.subr.mxu0 0.0
    %97 = vmatpush1.msra.mxu0 %v32
    %98 = vmatprep.subr.mxu0 0.0
    %99 = vmatpush1.msra.mxu0 %v31
    %100 = vmatprep.subr.mxu0 0.0
    %101 = vmatpush1.msra.mxu0 %v30
    %102 = vmatprep.subr.mxu0 0.0
    %103 = vmatpush1.msra.mxu0 %v29
    %104 = vmatprep.subr.mxu0 0.0
    %105 = vmatpush1.msra.mxu0 %v28
    %106 = vmatprep.subr.mxu0 0.0
    %107 = vmatpush1.msra.mxu0 %v27
    %108 = vmatprep.subr.mxu0 0.0
    %109 = vmatpush1.msra.mxu0 %v26
    %110 = vmatprep.subr.mxu0 0.0
    %111 = vmatpush1.msra.mxu0 %v25
    %112 = vmatprep.subr.mxu0 0.0
    %113 = vmatpush1.msra.mxu0 %v24
    %114 = vmatprep.subr.mxu0 0.0
    %115 = vmatpush1.msra.mxu0 %v23
    %116 = vmatprep.subr.mxu0 0.0
    %117 = vmatpush1.msra.mxu0 %v22
    %118 = vmatprep.subr.mxu0 0.0
    %119 = vmatpush1.msra.mxu0 %v21
    %120 = vmatprep.subr.mxu0 0.0
    %121 = vmatpush2.msra.mxu0 %v52
    %122 = vmatprep.subr.mxu0 0.0
    %123 = vmatpush2.msra.mxu0 %v51
    %124 = vmatprep.subr.mxu0 0.0
    %125 = vmatpush2.msra.mxu0 %v50
    %126 = vmatprep.subr.mxu0 0.0
    %127 = vmatpush2.msra.mxu0 %v49
    %128 = vmatprep.subr.mxu0 0.0
    %129 = vmatpush2.msra.mxu0 %v48
    %130 = vmatprep.subr.mxu0 0.0
    %131 = vmatpush2.msra.mxu0 %v47
    %132 = vmatprep.subr.mxu0 0.0
    %133 = vmatpush2.msra.mxu0 %v46
    %134 = vmatprep.subr.mxu0 0.0
    %135 = vmatpush2.msra.mxu0 %v45
    %136 = vmatprep.subr.mxu0 0.0
    %137 = vmatpush2.msra.mxu0 %v44
    %138 = vmatprep.subr.mxu0 0.0
    %139 = vmatpush2.msra.mxu0 %v43
    %140 = vmatprep.subr.mxu0 0.0
    %141 = vmatpush2.msra.mxu0 %v42
    %142 = vmatprep.subr.mxu0 0.0
    %143 = vmatpush2.msra.mxu0 %v41
    %144 = vmatprep.subr.mxu0 0.0
    %145 = vmatpush2.msra.mxu0 %v40
    %146 = vmatprep.subr.mxu0 0.0
    %147 = vmatpush2.msra.mxu0 %v39
    %148 = vmatprep.subr.mxu0 0.0
    %149 = vmatpush2.msra.mxu0 %v38
    %150 = vmatprep.subr.mxu0 0.0
    %151 = vmatpush2.msra.mxu0 %v37
    %152 = vmatprep.mubr.f32.mxu0 %v73
    %153 = vmatmul.mubr.f32.gmra.mxu0 %v72
    %v154 = vpop.f32.mrf.mxu0
    %v155 = vadd.f32 0.0, %v154
    %v156 = vpop.f32.mrf.mxu0
    %157 = vmatprep.mubr.f32.mxu0 %v75
    %158 = vmatmul.mubr.f32.gmra.mxu0 %v74
    %v159 = vpop.f32.mrf.mxu0
    %v160 = vadd.f32 0.0, %v159
    %v161 = vpop.f32.mrf.mxu0
    %162 = vmatprep.mubr.f32.mxu0 %v77
    %163 = vmatmul.mubr.f32.gmra.mxu0 %v76
    %v164 = vpop.f32.mrf.mxu0
    %v165 = vadd.f32 0.0, %v164
    %v166 = vpop.f32.mrf.mxu0
    %167 = vmatprep.mubr.f32.mxu0 %v79
    %168 = vmatmul.mubr.f32.gmra.mxu0 %v78
    %v169 = vpop.f32.mrf.mxu0
    %v170 = vadd.f32 0.0, %v169
    %v171 = vpop.f32.mrf.mxu0
    %172 = vmatprep.mubr.f32.mxu0 %v81
    %173 = vmatmul.mubr.f32.gmra.mxu0 %v80
    %v174 = vpop.f32.mrf.mxu0
    %v175 = vadd.f32 0.0, %v174
    %v176 = vpop.f32.mrf.mxu0
    %177 = vmatprep.mubr.f32.mxu0 %v83
    %178 = vmatmul.mubr.f32.gmra.mxu0 %v82
    %v179 = vpop.f32.mrf.mxu0
    %v180 = vadd.f32 0.0, %v179
    %v181 = vpop.f32.mrf.mxu0
    %182 = vmatprep.mubr.f32.mxu0 %v85
    %183 = vmatmul.mubr.f32.gmra.mxu0 %v84
    %v184 = vpop.f32.mrf.mxu0
    %v185 = vadd.f32 0.0, %v184
    %v186 = vpop.f32.mrf.mxu0
    %187 = vmatprep.mubr.f32.mxu0 %v87
    %188 = vmatmul.mubr.f32.gmra.mxu0 %v86
    %v189 = vpop.f32.mrf.mxu0
    %v190 = vadd.f32 0.0, %v189
    %v191 = vpop.f32.mrf.mxu0
    %192 = vdwg.mxu0
    %vm193 = vcmask 523264
    %v195 = vsel %vm193, %v61, 0
    %197 = vmatprep.subr.mxu0 0.0
    %198 = vmatpush1.msra.mxu0 0.0
    %199 = vmatprep.subr.mxu0 0.0
    %200 = vmatpush1.msra.mxu0 0.0
    %201 = vmatprep.subr.mxu0 0.0
    %202 = vmatpush1.msra.mxu0 0.0
    %203 = vmatprep.subr.mxu0 0.0
    %204 = vmatpush1.msra.mxu0 0.0
    %205 = vmatprep.subr.mxu0 0.0
    %206 = vmatpush1.msra.mxu0 0.0
    %207 = vmatprep.subr.mxu0 0.0
    %208 = vmatpush1.msra.mxu0 0.0
    %209 = vmatprep.subr.mxu0 0.0
    %210 = vmatpush1.msra.mxu0 0.0
    %211 = vmatprep.subr.mxu0 0.0
    %212 = vmatpush1.msra.mxu0 0.0
    %213 = vmatprep.subr.mxu0 0.0
    %v214 = vand.u32 %v190, 4294901760
    %215 = vmatpush1.msra.mxu0 %v214
    %216 = vmatprep.subr.mxu0 0.0
    %v217 = vand.u32 %v185, 4294901760
    %218 = vmatpush1.msra.mxu0 %v217
    %219 = vmatprep.subr.mxu0 0.0
    %v220 = vand.u32 %v180, 4294901760
    %221 = vmatpush1.msra.mxu0 %v220
    %222 = vmatprep.subr.mxu0 0.0
    %v223 = vand.u32 %v175, 4294901760
    %224 = vmatpush1.msra.mxu0 %v223
    %225 = vmatprep.subr.mxu0 0.0
    %v226 = vand.u32 %v170, 4294901760
    %227 = vmatpush1.msra.mxu0 %v226
    %228 = vmatprep.subr.mxu0 0.0
    %v229 = vand.u32 %v165, 4294901760
    %230 = vmatpush1.msra.mxu0 %v229
    %231 = vmatprep.subr.mxu0 0.0
    %v232 = vand.u32 %v160, 4294901760
    %233 = vmatpush1.msra.mxu0 %v232
    %234 = vmatprep.subr.mxu0 0.0
    %v235 = vand.u32 %v155, 4294901760
    %236 = vmatpush1.msra.mxu0 %v235
    %237 = vmatprep.subr.mxu0 0.0
    %238 = vmatpush2.msra.mxu0 0.0
    %239 = vmatprep.subr.mxu0 0.0
    %240 = vmatpush2.msra.mxu0 0.0
    %241 = vmatprep.subr.mxu0 0.0
    %242 = vmatpush2.msra.mxu0 0.0
    %243 = vmatprep.subr.mxu0 0.0
    %244 = vmatpush2.msra.mxu0 0.0
    %245 = vmatprep.subr.mxu0 0.0
    %246 = vmatpush2.msra.mxu0 0.0
    %247 = vmatprep.subr.mxu0 0.0
    %248 = vmatpush2.msra.mxu0 0.0
    %249 = vmatprep.subr.mxu0 0.0
    %250 = vmatpush2.msra.mxu0 0.0
    %251 = vmatprep.subr.mxu0 0.0
    %252 = vmatpush2.msra.mxu0 0.0
    %253 = vmatprep.subr.mxu0 0.0
    %254 = vmatpush2.msra.mxu0 0.0
    %255 = vmatprep.subr.mxu0 0.0
    %256 = vmatpush2.msra.mxu0 0.0
    %257 = vmatprep.subr.mxu0 0.0
    %258 = vmatpush2.msra.mxu0 0.0
    %259 = vmatprep.subr.mxu0 0.0
    %260 = vmatpush2.msra.mxu0 0.0
    %261 = vmatprep.subr.mxu0 0.0
    %262 = vmatpush2.msra.mxu0 0.0
    %263 = vmatprep.subr.mxu0 0.0
    %264 = vmatpush2.msra.mxu0 0.0
    %265 = vmatprep.subr.mxu0 0.0
    %266 = vmatpush2.msra.mxu0 0.0
    %267 = vmatprep.subr.mxu0 0.0
    %268 = vmatpush2.msra.mxu0 0.0
    %269 = vmatprep.mubr.f32.mxu0 0.0
    %v270 = vand.u32 %v195, 4294901760
    %v271 = vsub.f32 %v195, %v270
    %v272 = vand.u32 %v271, 4294901760
    %v273 = vsub.f32 %v271, %v272
    %v274 = vand.u32 %v273, 4294901760
    %275 = vmatmul.mubr.f32.gmra.mxu0 %v274
    %v276 = vpop.f32.mrf.mxu0
    %v277 = vadd.f32 0.0, %v276
    %v278 = vpop.f32.mrf.mxu0
    %279 = vdwg.mxu0
    %280 = vmatprep.subr.mxu0 0.0
    %281 = vmatpush1.msra.mxu0 0.0
    %282 = vmatprep.subr.mxu0 0.0
    %283 = vmatpush1.msra.mxu0 0.0
    %284 = vmatprep.subr.mxu0 0.0
    %285 = vmatpush1.msra.mxu0 0.0
    %286 = vmatprep.subr.mxu0 0.0
    %287 = vmatpush1.msra.mxu0 0.0
    %288 = vmatprep.subr.mxu0 0.0
    %289 = vmatpush1.msra.mxu0 0.0
    %290 = vmatprep.subr.mxu0 0.0
    %291 = vmatpush1.msra.mxu0 0.0
    %292 = vmatprep.subr.mxu0 0.0
    %293 = vmatpush1.msra.mxu0 0.0
    %294 = vmatprep.subr.mxu0 0.0
    %295 = vmatpush1.msra.mxu0 0.0
    %296 = vmatprep.subr.mxu0 0.0
    %v297 = vand.u32 %v190, 4294901760
    %v298 = vsub.f32 %v190, %v297
    %v299 = vand.u32 %v298, 4294901760
    %v300 = vsub.f32 %v298, %v299
    %v301 = vand.u32 %v300, 4294901760
    %302 = vmatpush1.msra.mxu0 %v301
    %303 = vmatprep.subr.mxu0 0.0
    %v304 = vand.u32 %v185, 4294901760
    %v305 = vsub.f32 %v185, %v304
    %v306 = vand.u32 %v305, 4294901760
    %v307 = vsub.f32 %v305, %v306
    %v308 = vand.u32 %v307, 4294901760
    %309 = vmatpush1.msra.mxu0 %v308
    %310 = vmatprep.subr.mxu0 0.0
    %v311 = vand.u32 %v180, 4294901760
    %v312 = vsub.f32 %v180, %v311
    %v313 = vand.u32 %v312, 4294901760
    %v314 = vsub.f32 %v312, %v313
    %v315 = vand.u32 %v314, 4294901760
    %316 = vmatpush1.msra.mxu0 %v315
    %317 = vmatprep.subr.mxu0 0.0
    %v318 = vand.u32 %v175, 4294901760
    %v319 = vsub.f32 %v175, %v318
    %v320 = vand.u32 %v319, 4294901760
    %v321 = vsub.f32 %v319, %v320
    %v322 = vand.u32 %v321, 4294901760
    %323 = vmatpush1.msra.mxu0 %v322
    %324 = vmatprep.subr.mxu0 0.0
    %v325 = vand.u32 %v170, 4294901760
    %v326 = vsub.f32 %v170, %v325
    %v327 = vand.u32 %v326, 4294901760
    %v328 = vsub.f32 %v326, %v327
    %v329 = vand.u32 %v328, 4294901760
    %330 = vmatpush1.msra.mxu0 %v329
    %331 = vmatprep.subr.mxu0 0.0
    %v332 = vand.u32 %v165, 4294901760
    %v333 = vsub.f32 %v165, %v332
    %v334 = vand.u32 %v333, 4294901760
    %v335 = vsub.f32 %v333, %v334
    %v336 = vand.u32 %v335, 4294901760
    %337 = vmatpush1.msra.mxu0 %v336
    %338 = vmatprep.subr.mxu0 0.0
    %v339 = vand.u32 %v160, 4294901760
    %v340 = vsub.f32 %v160, %v339
    %v341 = vand.u32 %v340, 4294901760
    %v342 = vsub.f32 %v340, %v341
    %v343 = vand.u32 %v342, 4294901760
    %344 = vmatpush1.msra.mxu0 %v343
    %345 = vmatprep.subr.mxu0 0.0
    %v346 = vand.u32 %v155, 4294901760
    %v347 = vsub.f32 %v155, %v346
    %v348 = vand.u32 %v347, 4294901760
    %v349 = vsub.f32 %v347, %v348
    %v350 = vand.u32 %v349, 4294901760
    %351 = vmatpush1.msra.mxu0 %v350
    %352 = vmatprep.subr.mxu0 0.0
    %353 = vmatpush2.msra.mxu0 0.0
    %354 = vmatprep.subr.mxu0 0.0
    %355 = vmatpush2.msra.mxu0 0.0
    %356 = vmatprep.subr.mxu0 0.0
    %357 = vmatpush2.msra.mxu0 0.0
    %358 = vmatprep.subr.mxu0 0.0
    %359 = vmatpush2.msra.mxu0 0.0
    %360 = vmatprep.subr.mxu0 0.0
    %361 = vmatpush2.msra.mxu0 0.0
    %362 = vmatprep.subr.mxu0 0.0
    %363 = vmatpush2.msra.mxu0 0.0
    %364 = vmatprep.subr.mxu0 0.0
    %365 = vmatpush2.msra.mxu0 0.0
    %366 = vmatprep.subr.mxu0 0.0
    %367 = vmatpush2.msra.mxu0 0.0
    %368 = vmatprep.subr.mxu0 0.0
    %369 = vmatpush2.msra.mxu0 0.0
    %370 = vmatprep.subr.mxu0 0.0
    %371 = vmatpush2.msra.mxu0 0.0
    %372 = vmatprep.subr.mxu0 0.0
    %373 = vmatpush2.msra.mxu0 0.0
    %374 = vmatprep.subr.mxu0 0.0
    %375 = vmatpush2.msra.mxu0 0.0
    %376 = vmatprep.subr.mxu0 0.0
    %377 = vmatpush2.msra.mxu0 0.0
    %378 = vmatprep.subr.mxu0 0.0
    %379 = vmatpush2.msra.mxu0 0.0
    %380 = vmatprep.subr.mxu0 0.0
    %381 = vmatpush2.msra.mxu0 0.0
    %382 = vmatprep.subr.mxu0 0.0
    %383 = vmatpush2.msra.mxu0 0.0
    %384 = vmatprep.mubr.f32.mxu0 0.0
    %v385 = vand.u32 %v195, 4294901760
    %386 = vmatmul.mubr.f32.gmra.mxu0 %v385
    %v387 = vpop.f32.mrf.mxu0
    %v388 = vadd.f32 %v277, %v387
    %v389 = vpop.f32.mrf.mxu0
    %390 = vdwg.mxu0
    %391 = vmatprep.subr.mxu0 0.0
    %392 = vmatpush1.msra.mxu0 0.0
    %393 = vmatprep.subr.mxu0 0.0
    %394 = vmatpush1.msra.mxu0 0.0
    %395 = vmatprep.subr.mxu0 0.0
    %396 = vmatpush1.msra.mxu0 0.0
    %397 = vmatprep.subr.mxu0 0.0
    %398 = vmatpush1.msra.mxu0 0.0
    %399 = vmatprep.subr.mxu0 0.0
    %400 = vmatpush1.msra.mxu0 0.0
    %401 = vmatprep.subr.mxu0 0.0
    %402 = vmatpush1.msra.mxu0 0.0
    %403 = vmatprep.subr.mxu0 0.0
    %404 = vmatpush1.msra.mxu0 0.0
    %405 = vmatprep.subr.mxu0 0.0
    %406 = vmatpush1.msra.mxu0 0.0
    %407 = vmatprep.subr.mxu0 0.0
    %v408 = vand.u32 %v190, 4294901760
    %v409 = vsub.f32 %v190, %v408
    %410 = vmatpush1.msra.mxu0 %v409
    %411 = vmatprep.subr.mxu0 0.0
    %v412 = vand.u32 %v185, 4294901760
    %v413 = vsub.f32 %v185, %v412
    %414 = vmatpush1.msra.mxu0 %v413
    %415 = vmatprep.subr.mxu0 0.0
    %v416 = vand.u32 %v180, 4294901760
    %v417 = vsub.f32 %v180, %v416
    %418 = vmatpush1.msra.mxu0 %v417
    %419 = vmatprep.subr.mxu0 0.0
    %v420 = vand.u32 %v175, 4294901760
    %v421 = vsub.f32 %v175, %v420
    %422 = vmatpush1.msra.mxu0 %v421
    %423 = vmatprep.subr.mxu0 0.0
    %v424 = vand.u32 %v170, 4294901760
    %v425 = vsub.f32 %v170, %v424
    %426 = vmatpush1.msra.mxu0 %v425
    %427 = vmatprep.subr.mxu0 0.0
    %v428 = vand.u32 %v165, 4294901760
    %v429 = vsub.f32 %v165, %v428
    %430 = vmatpush1.msra.mxu0 %v429
    %431 = vmatprep.subr.mxu0 0.0
    %v432 = vand.u32 %v160, 4294901760
    %v433 = vsub.f32 %v160, %v432
    %434 = vmatpush1.msra.mxu0 %v433
    %435 = vmatprep.subr.mxu0 0.0
    %v436 = vand.u32 %v155, 4294901760
    %v437 = vsub.f32 %v155, %v436
    %438 = vmatpush1.msra.mxu0 %v437
    %439 = vmatprep.subr.mxu0 0.0
    %440 = vmatpush2.msra.mxu0 0.0
    %441 = vmatprep.subr.mxu0 0.0
    %442 = vmatpush2.msra.mxu0 0.0
    %443 = vmatprep.subr.mxu0 0.0
    %444 = vmatpush2.msra.mxu0 0.0
    %445 = vmatprep.subr.mxu0 0.0
    %446 = vmatpush2.msra.mxu0 0.0
    %447 = vmatprep.subr.mxu0 0.0
    %448 = vmatpush2.msra.mxu0 0.0
    %449 = vmatprep.subr.mxu0 0.0
    %450 = vmatpush2.msra.mxu0 0.0
    %451 = vmatprep.subr.mxu0 0.0
    %452 = vmatpush2.msra.mxu0 0.0
    %453 = vmatprep.subr.mxu0 0.0
    %454 = vmatpush2.msra.mxu0 0.0
    %455 = vmatprep.subr.mxu0 0.0
    %456 = vmatpush2.msra.mxu0 0.0
    %457 = vmatprep.subr.mxu0 0.0
    %458 = vmatpush2.msra.mxu0 0.0
    %459 = vmatprep.subr.mxu0 0.0
    %460 = vmatpush2.msra.mxu0 0.0
    %461 = vmatprep.subr.mxu0 0.0
    %462 = vmatpush2.msra.mxu0 0.0
    %463 = vmatprep.subr.mxu0 0.0
    %464 = vmatpush2.msra.mxu0 0.0
    %465 = vmatprep.subr.mxu0 0.0
    %466 = vmatpush2.msra.mxu0 0.0
    %467 = vmatprep.subr.mxu0 0.0
    %468 = vmatpush2.msra.mxu0 0.0
    %469 = vmatprep.subr.mxu0 0.0
    %470 = vmatpush2.msra.mxu0 0.0
    %471 = vmatprep.mubr.f32.mxu0 0.0
    %v472 = vand.u32 %v195, 4294901760
    %v473 = vsub.f32 %v195, %v472
    %474 = vmatmul.mubr.f32.gmra.mxu0 %v473
    %v475 = vpop.f32.mrf.mxu0
    %v476 = vadd.f32 %v388, %v475
    %v477 = vpop.f32.mrf.mxu0
    %478 = vdwg.mxu0
    %479 = vmatprep.subr.mxu0 0.0
    %480 = vmatpush1.msra.mxu0 0.0
    %481 = vmatprep.subr.mxu0 0.0
    %482 = vmatpush1.msra.mxu0 0.0
    %483 = vmatprep.subr.mxu0 0.0
    %484 = vmatpush1.msra.mxu0 0.0
    %485 = vmatprep.subr.mxu0 0.0
    %486 = vmatpush1.msra.mxu0 0.0
    %487 = vmatprep.subr.mxu0 0.0
    %488 = vmatpush1.msra.mxu0 0.0
    %489 = vmatprep.subr.mxu0 0.0
    %490 = vmatpush1.msra.mxu0 0.0
    %491 = vmatprep.subr.mxu0 0.0
    %492 = vmatpush1.msra.mxu0 0.0
    %493 = vmatprep.subr.mxu0 0.0
    %494 = vmatpush1.msra.mxu0 0.0
    %495 = vmatprep.subr.mxu0 0.0
    %v496 = vand.u32 %v190, 4294901760
    %497 = vmatpush1.msra.mxu0 %v496
    %498 = vmatprep.subr.mxu0 0.0
    %v499 = vand.u32 %v185, 4294901760
    %500 = vmatpush1.msra.mxu0 %v499
    %501 = vmatprep.subr.mxu0 0.0
    %v502 = vand.u32 %v180, 4294901760
    %503 = vmatpush1.msra.mxu0 %v502
    %504 = vmatprep.subr.mxu0 0.0
    %v505 = vand.u32 %v175, 4294901760
    %506 = vmatpush1.msra.mxu0 %v505
    %507 = vmatprep.subr.mxu0 0.0
    %v508 = vand.u32 %v170, 4294901760
    %509 = vmatpush1.msra.mxu0 %v508
    %510 = vmatprep.subr.mxu0 0.0
    %v511 = vand.u32 %v165, 4294901760
    %512 = vmatpush1.msra.mxu0 %v511
    %513 = vmatprep.subr.mxu0 0.0
    %v514 = vand.u32 %v160, 4294901760
    %515 = vmatpush1.msra.mxu0 %v514
    %516 = vmatprep.subr.mxu0 0.0
    %v517 = vand.u32 %v155, 4294901760
    %518 = vmatpush1.msra.mxu0 %v517
    %519 = vmatprep.subr.mxu0 0.0
    %520 = vmatpush2.msra.mxu0 0.0
    %521 = vmatprep.subr.mxu0 0.0
    %522 = vmatpush2.msra.mxu0 0.0
    %523 = vmatprep.subr.mxu0 0.0
    %524 = vmatpush2.msra.mxu0 0.0
    %525 = vmatprep.subr.mxu0 0.0
    %526 = vmatpush2.msra.mxu0 0.0
    %527 = vmatprep.subr.mxu0 0.0
    %528 = vmatpush2.msra.mxu0 0.0
    %529 = vmatprep.subr.mxu0 0.0
    %530 = vmatpush2.msra.mxu0 0.0
    %531 = vmatprep.subr.mxu0 0.0
    %532 = vmatpush2.msra.mxu0 0.0
    %533 = vmatprep.subr.mxu0 0.0
    %534 = vmatpush2.msra.mxu0 0.0
    %535 = vmatprep.subr.mxu0 0.0
    %536 = vmatpush2.msra.mxu0 0.0
    %537 = vmatprep.subr.mxu0 0.0
    %538 = vmatpush2.msra.mxu0 0.0
    %539 = vmatprep.subr.mxu0 0.0
    %540 = vmatpush2.msra.mxu0 0.0
    %541 = vmatprep.subr.mxu0 0.0
    %542 = vmatpush2.msra.mxu0 0.0
    %543 = vmatprep.subr.mxu0 0.0
    %544 = vmatpush2.msra.mxu0 0.0
    %545 = vmatprep.subr.mxu0 0.0
    %546 = vmatpush2.msra.mxu0 0.0
    %547 = vmatprep.subr.mxu0 0.0
    %548 = vmatpush2.msra.mxu0 0.0
    %549 = vmatprep.subr.mxu0 0.0
    %550 = vmatpush2.msra.mxu0 0.0
    %551 = vmatprep.mubr.f32.mxu0 0.0
    %v552 = vand.u32 %v195, 4294901760
    %v553 = vsub.f32 %v195, %v552
    %v554 = vand.u32 %v553, 4294901760
    %555 = vmatmul.mubr.f32.gmra.mxu0 %v554
    %v556 = vpop.f32.mrf.mxu0
    %v557 = vadd.f32 %v476, %v556
    %v558 = vpop.f32.mrf.mxu0
    %559 = vdwg.mxu0
    %560 = vmatprep.subr.mxu0 0.0
    %561 = vmatpush1.msra.mxu0 0.0
    %562 = vmatprep.subr.mxu0 0.0
    %563 = vmatpush1.msra.mxu0 0.0
    %564 = vmatprep.subr.mxu0 0.0
    %565 = vmatpush1.msra.mxu0 0.0
    %566 = vmatprep.subr.mxu0 0.0
    %567 = vmatpush1.msra.mxu0 0.0
    %568 = vmatprep.subr.mxu0 0.0
    %569 = vmatpush1.msra.mxu0 0.0
    %570 = vmatprep.subr.mxu0 0.0
    %571 = vmatpush1.msra.mxu0 0.0
    %572 = vmatprep.subr.mxu0 0.0
    %573 = vmatpush1.msra.mxu0 0.0
    %574 = vmatprep.subr.mxu0 0.0
    %575 = vmatpush1.msra.mxu0 0.0
    %576 = vmatprep.subr.mxu0 0.0
    %v577 = vand.u32 %v190, 4294901760
    %v578 = vsub.f32 %v190, %v577
    %v579 = vand.u32 %v578, 4294901760
    %580 = vmatpush1.msra.mxu0 %v579
    %581 = vmatprep.subr.mxu0 0.0
    %v582 = vand.u32 %v185, 4294901760
    %v583 = vsub.f32 %v185, %v582
    %v584 = vand.u32 %v583, 4294901760
    %585 = vmatpush1.msra.mxu0 %v584
    %586 = vmatprep.subr.mxu0 0.0
    %v587 = vand.u32 %v180, 4294901760
    %v588 = vsub.f32 %v180, %v587
    %v589 = vand.u32 %v588, 4294901760
    %590 = vmatpush1.msra.mxu0 %v589
    %591 = vmatprep.subr.mxu0 0.0
    %v592 = vand.u32 %v175, 4294901760
    %v593 = vsub.f32 %v175, %v592
    %v594 = vand.u32 %v593, 4294901760
    %595 = vmatpush1.msra.mxu0 %v594
    %596 = vmatprep.subr.mxu0 0.0
    %v597 = vand.u32 %v170, 4294901760
    %v598 = vsub.f32 %v170, %v597
    %v599 = vand.u32 %v598, 4294901760
    %600 = vmatpush1.msra.mxu0 %v599
    %601 = vmatprep.subr.mxu0 0.0
    %v602 = vand.u32 %v165, 4294901760
    %v603 = vsub.f32 %v165, %v602
    %v604 = vand.u32 %v603, 4294901760
    %605 = vmatpush1.msra.mxu0 %v604
    %606 = vmatprep.subr.mxu0 0.0
    %v607 = vand.u32 %v160, 4294901760
    %v608 = vsub.f32 %v160, %v607
    %v609 = vand.u32 %v608, 4294901760
    %610 = vmatpush1.msra.mxu0 %v609
    %611 = vmatprep.subr.mxu0 0.0
    %v612 = vand.u32 %v155, 4294901760
    %v613 = vsub.f32 %v155, %v612
    %v614 = vand.u32 %v613, 4294901760
    %615 = vmatpush1.msra.mxu0 %v614
    %616 = vmatprep.subr.mxu0 0.0
    %617 = vmatpush2.msra.mxu0 0.0
    %618 = vmatprep.subr.mxu0 0.0
    %619 = vmatpush2.msra.mxu0 0.0
    %620 = vmatprep.subr.mxu0 0.0
    %621 = vmatpush2.msra.mxu0 0.0
    %622 = vmatprep.subr.mxu0 0.0
    %623 = vmatpush2.msra.mxu0 0.0
    %624 = vmatprep.subr.mxu0 0.0
    %625 = vmatpush2.msra.mxu0 0.0
    %626 = vmatprep.subr.mxu0 0.0
    %627 = vmatpush2.msra.mxu0 0.0
    %628 = vmatprep.subr.mxu0 0.0
    %629 = vmatpush2.msra.mxu0 0.0
    %630 = vmatprep.subr.mxu0 0.0
    %631 = vmatpush2.msra.mxu0 0.0
    %632 = vmatprep.subr.mxu0 0.0
    %633 = vmatpush2.msra.mxu0 0.0
    %634 = vmatprep.subr.mxu0 0.0
    %635 = vmatpush2.msra.mxu0 0.0
    %636 = vmatprep.subr.mxu0 0.0
    %637 = vmatpush2.msra.mxu0 0.0
    %638 = vmatprep.subr.mxu0 0.0
    %639 = vmatpush2.msra.mxu0 0.0
    %640 = vmatprep.subr.mxu0 0.0
    %641 = vmatpush2.msra.mxu0 0.0
    %642 = vmatprep.subr.mxu0 0.0
    %643 = vmatpush2.msra.mxu0 0.0
    %644 = vmatprep.subr.mxu0 0.0
    %645 = vmatpush2.msra.mxu0 0.0
    %646 = vmatprep.subr.mxu0 0.0
    %647 = vmatpush2.msra.mxu0 0.0
    %648 = vmatprep.mubr.f32.mxu0 0.0
    %v649 = vand.u32 %v195, 4294901760
    %650 = vmatmul.mubr.f32.gmra.mxu0 %v649
    %v651 = vpop.f32.mrf.mxu0
    %v652 = vadd.f32 %v557, %v651
    %v653 = vpop.f32.mrf.mxu0
    %654 = vdwg.mxu0
    %655 = vmatprep.subr.mxu0 0.0
    %656 = vmatpush1.msra.mxu0 0.0
    %657 = vmatprep.subr.mxu0 0.0
    %658 = vmatpush1.msra.mxu0 0.0
    %659 = vmatprep.subr.mxu0 0.0
    %660 = vmatpush1.msra.mxu0 0.0
    %661 = vmatprep.subr.mxu0 0.0
    %662 = vmatpush1.msra.mxu0 0.0
    %663 = vmatprep.subr.mxu0 0.0
    %664 = vmatpush1.msra.mxu0 0.0
    %665 = vmatprep.subr.mxu0 0.0
    %666 = vmatpush1.msra.mxu0 0.0
    %667 = vmatprep.subr.mxu0 0.0
    %668 = vmatpush1.msra.mxu0 0.0
    %669 = vmatprep.subr.mxu0 0.0
    %670 = vmatpush1.msra.mxu0 0.0
    %671 = vmatprep.subr.mxu0 0.0
    %v672 = vand.u32 %v190, 4294901760
    %673 = vmatpush1.msra.mxu0 %v672
    %674 = vmatprep.subr.mxu0 0.0
    %v675 = vand.u32 %v185, 4294901760
    %676 = vmatpush1.msra.mxu0 %v675
    %677 = vmatprep.subr.mxu0 0.0
    %v678 = vand.u32 %v180, 4294901760
    %679 = vmatpush1.msra.mxu0 %v678
    %680 = vmatprep.subr.mxu0 0.0
    %v681 = vand.u32 %v175, 4294901760
    %682 = vmatpush1.msra.mxu0 %v681
    %683 = vmatprep.subr.mxu0 0.0
    %v684 = vand.u32 %v170, 4294901760
    %685 = vmatpush1.msra.mxu0 %v684
    %686 = vmatprep.subr.mxu0 0.0
    %v687 = vand.u32 %v165, 4294901760
    %688 = vmatpush1.msra.mxu0 %v687
    %689 = vmatprep.subr.mxu0 0.0
    %v690 = vand.u32 %v160, 4294901760
    %691 = vmatpush1.msra.mxu0 %v690
    %692 = vmatprep.subr.mxu0 0.0
    %v693 = vand.u32 %v155, 4294901760
    %694 = vmatpush1.msra.mxu0 %v693
    %695 = vmatprep.subr.mxu0 0.0
    %696 = vmatpush2.msra.mxu0 0.0
    %697 = vmatprep.subr.mxu0 0.0
    %698 = vmatpush2.msra.mxu0 0.0
    %699 = vmatprep.subr.mxu0 0.0
    %700 = vmatpush2.msra.mxu0 0.0
    %701 = vmatprep.subr.mxu0 0.0
    %702 = vmatpush2.msra.mxu0 0.0
    %703 = vmatprep.subr.mxu0 0.0
    %704 = vmatpush2.msra.mxu0 0.0
    %705 = vmatprep.subr.mxu0 0.0
    %706 = vmatpush2.msra.mxu0 0.0
    %707 = vmatprep.subr.mxu0 0.0
    %708 = vmatpush2.msra.mxu0 0.0
    %709 = vmatprep.subr.mxu0 0.0
    %710 = vmatpush2.msra.mxu0 0.0
    %711 = vmatprep.subr.mxu0 0.0
    %712 = vmatpush2.msra.mxu0 0.0
    %713 = vmatprep.subr.mxu0 0.0
    %714 = vmatpush2.msra.mxu0 0.0
    %715 = vmatprep.subr.mxu0 0.0
    %716 = vmatpush2.msra.mxu0 0.0
    %717 = vmatprep.subr.mxu0 0.0
    %718 = vmatpush2.msra.mxu0 0.0
    %719 = vmatprep.subr.mxu0 0.0
    %720 = vmatpush2.msra.mxu0 0.0
    %721 = vmatprep.subr.mxu0 0.0
    %722 = vmatpush2.msra.mxu0 0.0
    %723 = vmatprep.subr.mxu0 0.0
    %724 = vmatpush2.msra.mxu0 0.0
    %725 = vmatprep.subr.mxu0 0.0
    %726 = vmatpush2.msra.mxu0 0.0
    %727 = vmatprep.mubr.f32.mxu0 0.0
    %v728 = vand.u32 %v195, 4294901760
    %729 = vmatmul.mubr.f32.gmra.mxu0 %v728
    %v730 = vpop.f32.mrf.mxu0
    %v731 = vadd.f32 %v652, %v730
    %v732 = vpop.f32.mrf.mxu0
    %733 = vdwg.mxu0
    %v734 = vmax.f32 %v731, 0.0
    %vm735 = vcmask 64512
    %v737 = vsel %vm735, %v64, 0
    %v740 = vsel %vm735, %v65, 0
    %v743 = vsel %vm735, %v66, 0
    %v746 = vsel %vm735, %v67, 0
    %v749 = vsel %vm735, %v68, 0
    %v752 = vsel %vm735, %v69, 0
    %v755 = vsel %vm735, %v70, 0
    %v758 = vsel %vm735, %v71, 0
    %760 = vmatprep.subr.mxu0 0.0
    %761 = vmatpush1.msra.mxu0 0.0
    %762 = vmatprep.subr.mxu0 0.0
    %763 = vmatpush1.msra.mxu0 0.0
    %764 = vmatprep.subr.mxu0 0.0
    %765 = vmatpush1.msra.mxu0 0.0
    %766 = vmatprep.subr.mxu0 0.0
    %767 = vmatpush1.msra.mxu0 0.0
    %768 = vmatprep.subr.mxu0 0.0
    %769 = vmatpush1.msra.mxu0 0.0
    %770 = vmatprep.subr.mxu0 0.0
    %771 = vmatpush1.msra.mxu0 0.0
    %772 = vmatprep.subr.mxu0 0.0
    %773 = vmatpush1.msra.mxu0 0.0
    %774 = vmatprep.subr.mxu0 0.0
    %775 = vmatpush1.msra.mxu0 0.0
    %776 = vmatprep.subr.mxu0 0.0
    %777 = vmatpush1.msra.mxu0 0.0
    %778 = vmatprep.subr.mxu0 0.0
    %779 = vmatpush1.msra.mxu0 0.0
    %780 = vmatprep.subr.mxu0 0.0
    %781 = vmatpush1.msra.mxu0 0.0
    %782 = vmatprep.subr.mxu0 0.0
    %783 = vmatpush1.msra.mxu0 0.0
    %784 = vmatprep.subr.mxu0 0.0
    %785 = vmatpush1.msra.mxu0 0.0
    %786 = vmatprep.subr.mxu0 0.0
    %787 = vmatpush1.msra.mxu0 0.0
    %788 = vmatprep.subr.mxu0 0.0
    %789 = vmatpush1.msra.mxu0 0.0
    %790 = vmatprep.subr.mxu0 0.0
    %v791 = vand.u32 %v734, 4294901760
    %792 = vmatpush1.msra.mxu0 %v791
    %793 = vmatprep.subr.mxu0 0.0
    %794 = vmatpush2.msra.mxu0 0.0
    %795 = vmatprep.subr.mxu0 0.0
    %796 = vmatpush2.msra.mxu0 0.0
    %797 = vmatprep.subr.mxu0 0.0
    %798 = vmatpush2.msra.mxu0 0.0
    %799 = vmatprep.subr.mxu0 0.0
    %800 = vmatpush2.msra.mxu0 0.0
    %801 = vmatprep.subr.mxu0 0.0
    %802 = vmatpush2.msra.mxu0 0.0
    %803 = vmatprep.subr.mxu0 0.0
    %804 = vmatpush2.msra.mxu0 0.0
    %805 = vmatprep.subr.mxu0 0.0
    %806 = vmatpush2.msra.mxu0 0.0
    %807 = vmatprep.subr.mxu0 0.0
    %808 = vmatpush2.msra.mxu0 0.0
    %809 = vmatprep.subr.mxu0 0.0
    %810 = vmatpush2.msra.mxu0 0.0
    %811 = vmatprep.subr.mxu0 0.0
    %812 = vmatpush2.msra.mxu0 0.0
    %813 = vmatprep.subr.mxu0 0.0
    %814 = vmatpush2.msra.mxu0 0.0
    %815 = vmatprep.subr.mxu0 0.0
    %816 = vmatpush2.msra.mxu0 0.0
    %817 = vmatprep.subr.mxu0 0.0
    %818 = vmatpush2.msra.mxu0 0.0
    %819 = vmatprep.subr.mxu0 0.0
    %820 = vmatpush2.msra.mxu0 0.0
    %821 = vmatprep.subr.mxu0 0.0
    %822 = vmatpush2.msra.mxu0 0.0
    %823 = vmatprep.subr.mxu0 0.0
    %824 = vmatpush2.msra.mxu0 0.0
    %825 = vmatprep.mubr.f32.mxu0 0.0
    %v826 = vand.u32 %v737, 4294901760
    %v827 = vsub.f32 %v737, %v826
    %v828 = vand.u32 %v827, 4294901760
    %v829 = vsub.f32 %v827, %v828
    %v830 = vand.u32 %v829, 4294901760
    %831 = vmatmul.mubr.f32.gmra.mxu0 %v830
    %v832 = vpop.f32.mrf.mxu0
    %v833 = vadd.f32 0.0, %v832
    %v834 = vpop.f32.mrf.mxu0
    %835 = vmatprep.mubr.f32.mxu0 0.0
    %v836 = vand.u32 %v740, 4294901760
    %v837 = vsub.f32 %v740, %v836
    %v838 = vand.u32 %v837, 4294901760
    %v839 = vsub.f32 %v837, %v838
    %v840 = vand.u32 %v839, 4294901760
    %841 = vmatmul.mubr.f32.gmra.mxu0 %v840
    %v842 = vpop.f32.mrf.mxu0
    %v843 = vadd.f32 0.0, %v842
    %v844 = vpop.f32.mrf.mxu0
    %845 = vmatprep.mubr.f32.mxu0 0.0
    %v846 = vand.u32 %v743, 4294901760
    %v847 = vsub.f32 %v743, %v846
    %v848 = vand.u32 %v847, 4294901760
    %v849 = vsub.f32 %v847, %v848
    %v850 = vand.u32 %v849, 4294901760
    %851 = vmatmul.mubr.f32.gmra.mxu0 %v850
    %v852 = vpop.f32.mrf.mxu0
    %v853 = vadd.f32 0.0, %v852
    %v854 = vpop.f32.mrf.mxu0
    %855 = vmatprep.mubr.f32.mxu0 0.0
    %v856 = vand.u32 %v746, 4294901760
    %v857 = vsub.f32 %v746, %v856
    %v858 = vand.u32 %v857, 4294901760
    %v859 = vsub.f32 %v857, %v858
    %v860 = vand.u32 %v859, 4294901760
    %861 = vmatmul.mubr.f32.gmra.mxu0 %v860
    %v862 = vpop.f32.mrf.mxu0
    %v863 = vadd.f32 0.0, %v862
    %v864 = vpop.f32.mrf.mxu0
    %865 = vmatprep.mubr.f32.mxu0 0.0
    %v866 = vand.u32 %v749, 4294901760
    %v867 = vsub.f32 %v749, %v866
    %v868 = vand.u32 %v867, 4294901760
    %v869 = vsub.f32 %v867, %v868
    %v870 = vand.u32 %v869, 4294901760
    %871 = vmatmul.mubr.f32.gmra.mxu0 %v870
    %v872 = vpop.f32.mrf.mxu0
    %v873 = vadd.f32 0.0, %v872
    %v874 = vpop.f32.mrf.mxu0
    %875 = vmatprep.mubr.f32.mxu0 0.0
    %v876 = vand.u32 %v752, 4294901760
    %v877 = vsub.f32 %v752, %v876
    %v878 = vand.u32 %v877, 4294901760
    %v879 = vsub.f32 %v877, %v878
    %v880 = vand.u32 %v879, 4294901760
    %881 = vmatmul.mubr.f32.gmra.mxu0 %v880
    %v882 = vpop.f32.mrf.mxu0
    %v883 = vadd.f32 0.0, %v882
    %v884 = vpop.f32.mrf.mxu0
    %885 = vmatprep.mubr.f32.mxu0 0.0
    %v886 = vand.u32 %v755, 4294901760
    %v887 = vsub.f32 %v755, %v886
    %v888 = vand.u32 %v887, 4294901760
    %v889 = vsub.f32 %v887, %v888
    %v890 = vand.u32 %v889, 4294901760
    %891 = vmatmul.mubr.f32.gmra.mxu0 %v890
    %v892 = vpop.f32.mrf.mxu0
    %v893 = vadd.f32 0.0, %v892
    %v894 = vpop.f32.mrf.mxu0
    %895 = vmatprep.mubr.f32.mxu0 0.0
    %v896 = vand.u32 %v758, 4294901760
    %v897 = vsub.f32 %v758, %v896
    %v898 = vand.u32 %v897, 4294901760
    %v899 = vsub.f32 %v897, %v898
    %v900 = vand.u32 %v899, 4294901760
    %901 = vmatmul.mubr.f32.gmra.mxu0 %v900
    %v902 = vpop.f32.mrf.mxu0
    %v903 = vadd.f32 0.0, %v902
    %v904 = vpop.f32.mrf.mxu0
    %905 = vdwg.mxu0
    %906 = vmatprep.subr.mxu0 0.0
    %907 = vmatpush1.msra.mxu0 0.0
    %908 = vmatprep.subr.mxu0 0.0
    %909 = vmatpush1.msra.mxu0 0.0
    %910 = vmatprep.subr.mxu0 0.0
    %911 = vmatpush1.msra.mxu0 0.0
    %912 = vmatprep.subr.mxu0 0.0
    %913 = vmatpush1.msra.mxu0 0.0
    %914 = vmatprep.subr.mxu0 0.0
    %915 = vmatpush1.msra.mxu0 0.0
    %916 = vmatprep.subr.mxu0 0.0
    %917 = vmatpush1.msra.mxu0 0.0
    %918 = vmatprep.subr.mxu0 0.0
    %919 = vmatpush1.msra.mxu0 0.0
    %920 = vmatprep.subr.mxu0 0.0
    %921 = vmatpush1.msra.mxu0 0.0
    %922 = vmatprep.subr.mxu0 0.0
    %923 = vmatpush1.msra.mxu0 0.0
    %924 = vmatprep.subr.mxu0 0.0
    %925 = vmatpush1.msra.mxu0 0.0
    %926 = vmatprep.subr.mxu0 0.0
    %927 = vmatpush1.msra.mxu0 0.0
    %928 = vmatprep.subr.mxu0 0.0
    %929 = vmatpush1.msra.mxu0 0.0
    %930 = vmatprep.subr.mxu0 0.0
    %931 = vmatpush1.msra.mxu0 0.0
    %932 = vmatprep.subr.mxu0 0.0
    %933 = vmatpush1.msra.mxu0 0.0
    %934 = vmatprep.subr.mxu0 0.0
    %935 = vmatpush1.msra.mxu0 0.0
    %936 = vmatprep.subr.mxu0 0.0
    %v937 = vand.u32 %v734, 4294901760
    %v938 = vsub.f32 %v734, %v937
    %v939 = vand.u32 %v938, 4294901760
    %v940 = vsub.f32 %v938, %v939
    %v941 = vand.u32 %v940, 4294901760
    %942 = vmatpush1.msra.mxu0 %v941
    %943 = vmatprep.subr.mxu0 0.0
    %944 = vmatpush2.msra.mxu0 0.0
    %945 = vmatprep.subr.mxu0 0.0
    %946 = vmatpush2.msra.mxu0 0.0
    %947 = vmatprep.subr.mxu0 0.0
    %948 = vmatpush2.msra.mxu0 0.0
    %949 = vmatprep.subr.mxu0 0.0
    %950 = vmatpush2.msra.mxu0 0.0
    %951 = vmatprep.subr.mxu0 0.0
    %952 = vmatpush2.msra.mxu0 0.0
    %953 = vmatprep.subr.mxu0 0.0
    %954 = vmatpush2.msra.mxu0 0.0
    %955 = vmatprep.subr.mxu0 0.0
    %956 = vmatpush2.msra.mxu0 0.0
    %957 = vmatprep.subr.mxu0 0.0
    %958 = vmatpush2.msra.mxu0 0.0
    %959 = vmatprep.subr.mxu0 0.0
    %960 = vmatpush2.msra.mxu0 0.0
    %961 = vmatprep.subr.mxu0 0.0
    %962 = vmatpush2.msra.mxu0 0.0
    %963 = vmatprep.subr.mxu0 0.0
    %964 = vmatpush2.msra.mxu0 0.0
    %965 = vmatprep.subr.mxu0 0.0
    %966 = vmatpush2.msra.mxu0 0.0
    %967 = vmatprep.subr.mxu0 0.0
    %968 = vmatpush2.msra.mxu0 0.0
    %969 = vmatprep.subr.mxu0 0.0
    %970 = vmatpush2.msra.mxu0 0.0
    %971 = vmatprep.subr.mxu0 0.0
    %972 = vmatpush2.msra.mxu0 0.0
    %973 = vmatprep.subr.mxu0 0.0
    %974 = vmatpush2.msra.mxu0 0.0
    %975 = vmatprep.mubr.f32.mxu0 0.0
    %v976 = vand.u32 %v737, 4294901760
    %977 = vmatmul.mubr.f32.gmra.mxu0 %v976
    %v978 = vpop.f32.mrf.mxu0
    %v979 = vadd.f32 %v833, %v978
    %v980 = vpop.f32.mrf.mxu0
    %981 = vmatprep.mubr.f32.mxu0 0.0
    %v982 = vand.u32 %v740, 4294901760
    %983 = vmatmul.mubr.f32.gmra.mxu0 %v982
    %v984 = vpop.f32.mrf.mxu0
    %v985 = vadd.f32 %v843, %v984
    %v986 = vpop.f32.mrf.mxu0
    %987 = vmatprep.mubr.f32.mxu0 0.0
    %v988 = vand.u32 %v743, 4294901760
    %989 = vmatmul.mubr.f32.gmra.mxu0 %v988
    %v990 = vpop.f32.mrf.mxu0
    %v991 = vadd.f32 %v853, %v990
    %v992 = vpop.f32.mrf.mxu0
    %993 = vmatprep.mubr.f32.mxu0 0.0
    %v994 = vand.u32 %v746, 4294901760
    %995 = vmatmul.mubr.f32.gmra.mxu0 %v994
    %v996 = vpop.f32.mrf.mxu0
    %v997 = vadd.f32 %v863, %v996
    %v998 = vpop.f32.mrf.mxu0
    %999 = vmatprep.mubr.f32.mxu0 0.0
    %v1000 = vand.u32 %v749, 4294901760
    %1001 = vmatmul.mubr.f32.gmra.mxu0 %v1000
    %v1002 = vpop.f32.mrf.mxu0
    %v1003 = vadd.f32 %v873, %v1002
    %v1004 = vpop.f32.mrf.mxu0
    %1005 = vmatprep.mubr.f32.mxu0 0.0
    %v1006 = vand.u32 %v752, 4294901760
    %1007 = vmatmul.mubr.f32.gmra.mxu0 %v1006
    %v1008 = vpop.f32.mrf.mxu0
    %v1009 = vadd.f32 %v883, %v1008
    %v1010 = vpop.f32.mrf.mxu0
    %1011 = vmatprep.mubr.f32.mxu0 0.0
    %v1012 = vand.u32 %v755, 4294901760
    %1013 = vmatmul.mubr.f32.gmra.mxu0 %v1012
    %v1014 = vpop.f32.mrf.mxu0
    %v1015 = vadd.f32 %v893, %v1014
    %v1016 = vpop.f32.mrf.mxu0
    %1017 = vmatprep.mubr.f32.mxu0 0.0
    %v1018 = vand.u32 %v758, 4294901760
    %1019 = vmatmul.mubr.f32.gmra.mxu0 %v1018
    %v1020 = vpop.f32.mrf.mxu0
    %v1021 = vadd.f32 %v903, %v1020
    %v1022 = vpop.f32.mrf.mxu0
    %1023 = vdwg.mxu0
    %1024 = vmatprep.subr.mxu0 0.0
    %1025 = vmatpush1.msra.mxu0 0.0
    %1026 = vmatprep.subr.mxu0 0.0
    %1027 = vmatpush1.msra.mxu0 0.0
    %1028 = vmatprep.subr.mxu0 0.0
    %1029 = vmatpush1.msra.mxu0 0.0
    %1030 = vmatprep.subr.mxu0 0.0
    %1031 = vmatpush1.msra.mxu0 0.0
    %1032 = vmatprep.subr.mxu0 0.0
    %1033 = vmatpush1.msra.mxu0 0.0
    %1034 = vmatprep.subr.mxu0 0.0
    %1035 = vmatpush1.msra.mxu0 0.0
    %1036 = vmatprep.subr.mxu0 0.0
    %1037 = vmatpush1.msra.mxu0 0.0
    %1038 = vmatprep.subr.mxu0 0.0
    %1039 = vmatpush1.msra.mxu0 0.0
    %1040 = vmatprep.subr.mxu0 0.0
    %1041 = vmatpush1.msra.mxu0 0.0
    %1042 = vmatprep.subr.mxu0 0.0
    %1043 = vmatpush1.msra.mxu0 0.0
    %1044 = vmatprep.subr.mxu0 0.0
    %1045 = vmatpush1.msra.mxu0 0.0
    %1046 = vmatprep.subr.mxu0 0.0
    %1047 = vmatpush1.msra.mxu0 0.0
    %1048 = vmatprep.subr.mxu0 0.0
    %1049 = vmatpush1.msra.mxu0 0.0
    %1050 = vmatprep.subr.mxu0 0.0
    %1051 = vmatpush1.msra.mxu0 0.0
    %1052 = vmatprep.subr.mxu0 0.0
    %1053 = vmatpush1.msra.mxu0 0.0
    %1054 = vmatprep.subr.mxu0 0.0
    %v1055 = vand.u32 %v734, 4294901760
    %v1056 = vsub.f32 %v734, %v1055
    %1057 = vmatpush1.msra.mxu0 %v1056
    %1058 = vmatprep.subr.mxu0 0.0
    %1059 = vmatpush2.msra.mxu0 0.0
    %1060 = vmatprep.subr.mxu0 0.0
    %1061 = vmatpush2.msra.mxu0 0.0
    %1062 = vmatprep.subr.mxu0 0.0
    %1063 = vmatpush2.msra.mxu0 0.0
    %1064 = vmatprep.subr.mxu0 0.0
    %1065 = vmatpush2.msra.mxu0 0.0
    %1066 = vmatprep.subr.mxu0 0.0
    %1067 = vmatpush2.msra.mxu0 0.0
    %1068 = vmatprep.subr.mxu0 0.0
    %1069 = vmatpush2.msra.mxu0 0.0
    %1070 = vmatprep.subr.mxu0 0.0
    %1071 = vmatpush2.msra.mxu0 0.0
    %1072 = vmatprep.subr.mxu0 0.0
    %1073 = vmatpush2.msra.mxu0 0.0
    %1074 = vmatprep.subr.mxu0 0.0
    %1075 = vmatpush2.msra.mxu0 0.0
    %1076 = vmatprep.subr.mxu0 0.0
    %1077 = vmatpush2.msra.mxu0 0.0
    %1078 = vmatprep.subr.mxu0 0.0
    %1079 = vmatpush2.msra.mxu0 0.0
    %1080 = vmatprep.subr.mxu0 0.0
    %1081 = vmatpush2.msra.mxu0 0.0
    %1082 = vmatprep.subr.mxu0 0.0
    %1083 = vmatpush2.msra.mxu0 0.0
    %1084 = vmatprep.subr.mxu0 0.0
    %1085 = vmatpush2.msra.mxu0 0.0
    %1086 = vmatprep.subr.mxu0 0.0
    %1087 = vmatpush2.msra.mxu0 0.0
    %1088 = vmatprep.subr.mxu0 0.0
    %1089 = vmatpush2.msra.mxu0 0.0
    %1090 = vmatprep.mubr.f32.mxu0 0.0
    %v1091 = vand.u32 %v737, 4294901760
    %v1092 = vsub.f32 %v737, %v1091
    %1093 = vmatmul.mubr.f32.gmra.mxu0 %v1092
    %v1094 = vpop.f32.mrf.mxu0
    %v1095 = vadd.f32 %v979, %v1094
    %v1096 = vpop.f32.mrf.mxu0
    %1097 = vmatprep.mubr.f32.mxu0 0.0
    %v1098 = vand.u32 %v740, 4294901760
    %v1099 = vsub.f32 %v740, %v1098
    %1100 = vmatmul.mubr.f32.gmra.mxu0 %v1099
    %v1101 = vpop.f32.mrf.mxu0
    %v1102 = vadd.f32 %v985, %v1101
    %v1103 = vpop.f32.mrf.mxu0
    %1104 = vmatprep.mubr.f32.mxu0 0.0
    %v1105 = vand.u32 %v743, 4294901760
    %v1106 = vsub.f32 %v743, %v1105
    %1107 = vmatmul.mubr.f32.gmra.mxu0 %v1106
    %v1108 = vpop.f32.mrf.mxu0
    %v1109 = vadd.f32 %v991, %v1108
    %v1110 = vpop.f32.mrf.mxu0
    %1111 = vmatprep.mubr.f32.mxu0 0.0
    %v1112 = vand.u32 %v746, 4294901760
    %v1113 = vsub.f32 %v746, %v1112
    %1114 = vmatmul.mubr.f32.gmra.mxu0 %v1113
    %v1115 = vpop.f32.mrf.mxu0
    %v1116 = vadd.f32 %v997, %v1115
    %v1117 = vpop.f32.mrf.mxu0
    %1118 = vmatprep.mubr.f32.mxu0 0.0
    %v1119 = vand.u32 %v749, 4294901760
    %v1120 = vsub.f32 %v749, %v1119
    %1121 = vmatmul.mubr.f32.gmra.mxu0 %v1120
    %v1122 = vpop.f32.mrf.mxu0
    %v1123 = vadd.f32 %v1003, %v1122
    %v1124 = vpop.f32.mrf.mxu0
    %1125 = vmatprep.mubr.f32.mxu0 0.0
    %v1126 = vand.u32 %v752, 4294901760
    %v1127 = vsub.f32 %v752, %v1126
    %1128 = vmatmul.mubr.f32.gmra.mxu0 %v1127
    %v1129 = vpop.f32.mrf.mxu0
    %v1130 = vadd.f32 %v1009, %v1129
    %v1131 = vpop.f32.mrf.mxu0
    %1132 = vmatprep.mubr.f32.mxu0 0.0
    %v1133 = vand.u32 %v755, 4294901760
    %v1134 = vsub.f32 %v755, %v1133
    %1135 = vmatmul.mubr.f32.gmra.mxu0 %v1134
    %v1136 = vpop.f32.mrf.mxu0
    %v1137 = vadd.f32 %v1015, %v1136
    %v1138 = vpop.f32.mrf.mxu0
    %1139 = vmatprep.mubr.f32.mxu0 0.0
    %v1140 = vand.u32 %v758, 4294901760
    %v1141 = vsub.f32 %v758, %v1140
    %1142 = vmatmul.mubr.f32.gmra.mxu0 %v1141
    %v1143 = vpop.f32.mrf.mxu0
    %v1144 = vadd.f32 %v1021, %v1143
    %v1145 = vpop.f32.mrf.mxu0
    %1146 = vdwg.mxu0
    %1147 = vmatprep.subr.mxu0 0.0
    %1148 = vmatpush1.msra.mxu0 0.0
    %1149 = vmatprep.subr.mxu0 0.0
    %1150 = vmatpush1.msra.mxu0 0.0
    %1151 = vmatprep.subr.mxu0 0.0
    %1152 = vmatpush1.msra.mxu0 0.0
    %1153 = vmatprep.subr.mxu0 0.0
    %1154 = vmatpush1.msra.mxu0 0.0
    %1155 = vmatprep.subr.mxu0 0.0
    %1156 = vmatpush1.msra.mxu0 0.0
    %1157 = vmatprep.subr.mxu0 0.0
    %1158 = vmatpush1.msra.mxu0 0.0
    %1159 = vmatprep.subr.mxu0 0.0
    %1160 = vmatpush1.msra.mxu0 0.0
    %1161 = vmatprep.subr.mxu0 0.0
    %1162 = vmatpush1.msra.mxu0 0.0
    %1163 = vmatprep.subr.mxu0 0.0
    %1164 = vmatpush1.msra.mxu0 0.0
    %1165 = vmatprep.subr.mxu0 0.0
    %1166 = vmatpush1.msra.mxu0 0.0
    %1167 = vmatprep.subr.mxu0 0.0
    %1168 = vmatpush1.msra.mxu0 0.0
    %1169 = vmatprep.subr.mxu0 0.0
    %1170 = vmatpush1.msra.mxu0 0.0
    %1171 = vmatprep.subr.mxu0 0.0
    %1172 = vmatpush1.msra.mxu0 0.0
    %1173 = vmatprep.subr.mxu0 0.0
    %1174 = vmatpush1.msra.mxu0 0.0
    %1175 = vmatprep.subr.mxu0 0.0
    %1176 = vmatpush1.msra.mxu0 0.0
    %1177 = vmatprep.subr.mxu0 0.0
    %v1178 = vand.u32 %v734, 4294901760
    %1179 = vmatpush1.msra.mxu0 %v1178
    %1180 = vmatprep.subr.mxu0 0.0
    %1181 = vmatpush2.msra.mxu0 0.0
    %1182 = vmatprep.subr.mxu0 0.0
    %1183 = vmatpush2.msra.mxu0 0.0
    %1184 = vmatprep.subr.mxu0 0.0
    %1185 = vmatpush2.msra.mxu0 0.0
    %1186 = vmatprep.subr.mxu0 0.0
    %1187 = vmatpush2.msra.mxu0 0.0
    %1188 = vmatprep.subr.mxu0 0.0
    %1189 = vmatpush2.msra.mxu0 0.0
    %1190 = vmatprep.subr.mxu0 0.0
    %1191 = vmatpush2.msra.mxu0 0.0
    %1192 = vmatprep.subr.mxu0 0.0
    %1193 = vmatpush2.msra.mxu0 0.0
    %1194 = vmatprep.subr.mxu0 0.0
    %1195 = vmatpush2.msra.mxu0 0.0
    %1196 = vmatprep.subr.mxu0 0.0
    %1197 = vmatpush2.msra.mxu0 0.0
    %1198 = vmatprep.subr.mxu0 0.0
    %1199 = vmatpush2.msra.mxu0 0.0
    %1200 = vmatprep.subr.mxu0 0.0
    %1201 = vmatpush2.msra.mxu0 0.0
    %1202 = vmatprep.subr.mxu0 0.0
    %1203 = vmatpush2.msra.mxu0 0.0
    %1204 = vmatprep.subr.mxu0 0.0
    %1205 = vmatpush2.msra.mxu0 0.0
    %1206 = vmatprep.subr.mxu0 0.0
    %1207 = vmatpush2.msra.mxu0 0.0
    %1208 = vmatprep.subr.mxu0 0.0
    %1209 = vmatpush2.msra.mxu0 0.0
    %1210 = vmatprep.subr.mxu0 0.0
    %1211 = vmatpush2.msra.mxu0 0.0
    %1212 = vmatprep.mubr.f32.mxu0 0.0
    %v1213 = vand.u32 %v737, 4294901760
    %v1214 = vsub.f32 %v737, %v1213
    %v1215 = vand.u32 %v1214, 4294901760
    %1216 = vmatmul.mubr.f32.gmra.mxu0 %v1215
    %v1217 = vpop.f32.mrf.mxu0
    %v1218 = vadd.f32 %v1095, %v1217
    %v1219 = vpop.f32.mrf.mxu0
    %1220 = vmatprep.mubr.f32.mxu0 0.0
    %v1221 = vand.u32 %v740, 4294901760
    %v1222 = vsub.f32 %v740, %v1221
    %v1223 = vand.u32 %v1222, 4294901760
    %1224 = vmatmul.mubr.f32.gmra.mxu0 %v1223
    %v1225 = vpop.f32.mrf.mxu0
    %v1226 = vadd.f32 %v1102, %v1225
    %v1227 = vpop.f32.mrf.mxu0
    %1228 = vmatprep.mubr.f32.mxu0 0.0
    %v1229 = vand.u32 %v743, 4294901760
    %v1230 = vsub.f32 %v743, %v1229
    %v1231 = vand.u32 %v1230, 4294901760
    %1232 = vmatmul.mubr.f32.gmra.mxu0 %v1231
    %v1233 = vpop.f32.mrf.mxu0
    %v1234 = vadd.f32 %v1109, %v1233
    %v1235 = vpop.f32.mrf.mxu0
    %1236 = vmatprep.mubr.f32.mxu0 0.0
    %v1237 = vand.u32 %v746, 4294901760
    %v1238 = vsub.f32 %v746, %v1237
    %v1239 = vand.u32 %v1238, 4294901760
    %1240 = vmatmul.mubr.f32.gmra.mxu0 %v1239
    %v1241 = vpop.f32.mrf.mxu0
    %v1242 = vadd.f32 %v1116, %v1241
    %v1243 = vpop.f32.mrf.mxu0
    %1244 = vmatprep.mubr.f32.mxu0 0.0
    %v1245 = vand.u32 %v749, 4294901760
    %v1246 = vsub.f32 %v749, %v1245
    %v1247 = vand.u32 %v1246, 4294901760
    %1248 = vmatmul.mubr.f32.gmra.mxu0 %v1247
    %v1249 = vpop.f32.mrf.mxu0
    %v1250 = vadd.f32 %v1123, %v1249
    %v1251 = vpop.f32.mrf.mxu0
    %1252 = vmatprep.mubr.f32.mxu0 0.0
    %v1253 = vand.u32 %v752, 4294901760
    %v1254 = vsub.f32 %v752, %v1253
    %v1255 = vand.u32 %v1254, 4294901760
    %1256 = vmatmul.mubr.f32.gmra.mxu0 %v1255
    %v1257 = vpop.f32.mrf.mxu0
    %v1258 = vadd.f32 %v1130, %v1257
    %v1259 = vpop.f32.mrf.mxu0
    %1260 = vmatprep.mubr.f32.mxu0 0.0
    %v1261 = vand.u32 %v755, 4294901760
    %v1262 = vsub.f32 %v755, %v1261
    %v1263 = vand.u32 %v1262, 4294901760
    %1264 = vmatmul.mubr.f32.gmra.mxu0 %v1263
    %v1265 = vpop.f32.mrf.mxu0
    %v1266 = vadd.f32 %v1137, %v1265
    %v1267 = vpop.f32.mrf.mxu0
    %1268 = vmatprep.mubr.f32.mxu0 0.0
    %v1269 = vand.u32 %v758, 4294901760
    %v1270 = vsub.f32 %v758, %v1269
    %v1271 = vand.u32 %v1270, 4294901760
    %1272 = vmatmul.mubr.f32.gmra.mxu0 %v1271
    %v1273 = vpop.f32.mrf.mxu0
    %v1274 = vadd.f32 %v1144, %v1273
    %v1275 = vpop.f32.mrf.mxu0
    %1276 = vdwg.mxu0
    %1277 = vmatprep.subr.mxu0 0.0
    %1278 = vmatpush1.msra.mxu0 0.0
    %1279 = vmatprep.subr.mxu0 0.0
    %1280 = vmatpush1.msra.mxu0 0.0
    %1281 = vmatprep.subr.mxu0 0.0
    %1282 = vmatpush1.msra.mxu0 0.0
    %1283 = vmatprep.subr.mxu0 0.0
    %1284 = vmatpush1.msra.mxu0 0.0
    %1285 = vmatprep.subr.mxu0 0.0
    %1286 = vmatpush1.msra.mxu0 0.0
    %1287 = vmatprep.subr.mxu0 0.0
    %1288 = vmatpush1.msra.mxu0 0.0
    %1289 = vmatprep.subr.mxu0 0.0
    %1290 = vmatpush1.msra.mxu0 0.0
    %1291 = vmatprep.subr.mxu0 0.0
    %1292 = vmatpush1.msra.mxu0 0.0
    %1293 = vmatprep.subr.mxu0 0.0
    %1294 = vmatpush1.msra.mxu0 0.0
    %1295 = vmatprep.subr.mxu0 0.0
    %1296 = vmatpush1.msra.mxu0 0.0
    %1297 = vmatprep.subr.mxu0 0.0
    %1298 = vmatpush1.msra.mxu0 0.0
    %1299 = vmatprep.subr.mxu0 0.0
    %1300 = vmatpush1.msra.mxu0 0.0
    %1301 = vmatprep.subr.mxu0 0.0
    %1302 = vmatpush1.msra.mxu0 0.0
    %1303 = vmatprep.subr.mxu0 0.0
    %1304 = vmatpush1.msra.mxu0 0.0
    %1305 = vmatprep.subr.mxu0 0.0
    %1306 = vmatpush1.msra.mxu0 0.0
    %1307 = vmatprep.subr.mxu0 0.0
    %v1308 = vand.u32 %v734, 4294901760
    %v1309 = vsub.f32 %v734, %v1308
    %v1310 = vand.u32 %v1309, 4294901760
    %1311 = vmatpush1.msra.mxu0 %v1310
    %1312 = vmatprep.subr.mxu0 0.0
    %1313 = vmatpush2.msra.mxu0 0.0
    %1314 = vmatprep.subr.mxu0 0.0
    %1315 = vmatpush2.msra.mxu0 0.0
    %1316 = vmatprep.subr.mxu0 0.0
    %1317 = vmatpush2.msra.mxu0 0.0
    %1318 = vmatprep.subr.mxu0 0.0
    %1319 = vmatpush2.msra.mxu0 0.0
    %1320 = vmatprep.subr.mxu0 0.0
    %1321 = vmatpush2.msra.mxu0 0.0
    %1322 = vmatprep.subr.mxu0 0.0
    %1323 = vmatpush2.msra.mxu0 0.0
    %1324 = vmatprep.subr.mxu0 0.0
    %1325 = vmatpush2.msra.mxu0 0.0
    %1326 = vmatprep.subr.mxu0 0.0
    %1327 = vmatpush2.msra.mxu0 0.0
    %1328 = vmatprep.subr.mxu0 0.0
    %1329 = vmatpush2.msra.mxu0 0.0
    %1330 = vmatprep.subr.mxu0 0.0
    %1331 = vmatpush2.msra.mxu0 0.0
    %1332 = vmatprep.subr.mxu0 0.0
    %1333 = vmatpush2.msra.mxu0 0.0
    %1334 = vmatprep.subr.mxu0 0.0
    %1335 = vmatpush2.msra.mxu0 0.0
    %1336 = vmatprep.subr.mxu0 0.0
    %1337 = vmatpush2.msra.mxu0 0.0
    %1338 = vmatprep.subr.mxu0 0.0
    %1339 = vmatpush2.msra.mxu0 0.0
    %1340 = vmatprep.subr.mxu0 0.0
    %1341 = vmatpush2.msra.mxu0 0.0
    %1342 = vmatprep.subr.mxu0 0.0
    %1343 = vmatpush2.msra.mxu0 0.0
    %1344 = vmatprep.mubr.f32.mxu0 0.0
    %v1345 = vand.u32 %v737, 4294901760
    %1346 = vmatmul.mubr.f32.gmra.mxu0 %v1345
    %v1347 = vpop.f32.mrf.mxu0
    %v1348 = vadd.f32 %v1218, %v1347
    %v1349 = vpop.f32.mrf.mxu0
    %1350 = vmatprep.mubr.f32.mxu0 0.0
    %v1351 = vand.u32 %v740, 4294901760
    %1352 = vmatmul.mubr.f32.gmra.mxu0 %v1351
    %v1353 = vpop.f32.mrf.mxu0
    %v1354 = vadd.f32 %v1226, %v1353
    %v1355 = vpop.f32.mrf.mxu0
    %1356 = vmatprep.mubr.f32.mxu0 0.0
    %v1357 = vand.u32 %v743, 4294901760
    %1358 = vmatmul.mubr.f32.gmra.mxu0 %v1357
    %v1359 = vpop.f32.mrf.mxu0
    %v1360 = vadd.f32 %v1234, %v1359
    %v1361 = vpop.f32.mrf.mxu0
    %1362 = vmatprep.mubr.f32.mxu0 0.0
    %v1363 = vand.u32 %v746, 4294901760
    %1364 = vmatmul.mubr.f32.gmra.mxu0 %v1363
    %v1365 = vpop.f32.mrf.mxu0
    %v1366 = vadd.f32 %v1242, %v1365
    %v1367 = vpop.f32.mrf.mxu0
    %1368 = vmatprep.mubr.f32.mxu0 0.0
    %v1369 = vand.u32 %v749, 4294901760
    %1370 = vmatmul.mubr.f32.gmra.mxu0 %v1369
    %v1371 = vpop.f32.mrf.mxu0
    %v1372 = vadd.f32 %v1250, %v1371
    %v1373 = vpop.f32.mrf.mxu0
    %1374 = vmatprep.mubr.f32.mxu0 0.0
    %v1375 = vand.u32 %v752, 4294901760
    %1376 = vmatmul.mubr.f32.gmra.mxu0 %v1375
    %v1377 = vpop.f32.mrf.mxu0
    %v1378 = vadd.f32 %v1258, %v1377
    %v1379 = vpop.f32.mrf.mxu0
    %1380 = vmatprep.mubr.f32.mxu0 0.0
    %v1381 = vand.u32 %v755, 4294901760
    %1382 = vmatmul.mubr.f32.gmra.mxu0 %v1381
    %v1383 = vpop.f32.mrf.mxu0
    %v1384 = vadd.f32 %v1266, %v1383
    %v1385 = vpop.f32.mrf.mxu0
    %1386 = vmatprep.mubr.f32.mxu0 0.0
    %v1387 = vand.u32 %v758, 4294901760
    %1388 = vmatmul.mubr.f32.gmra.mxu0 %v1387
    %v1389 = vpop.f32.mrf.mxu0
    %v1390 = vadd.f32 %v1274, %v1389
    %v1391 = vpop.f32.mrf.mxu0
    %1392 = vdwg.mxu0
    %1393 = vmatprep.subr.mxu0 0.0
    %1394 = vmatpush1.msra.mxu0 0.0
    %1395 = vmatprep.subr.mxu0 0.0
    %1396 = vmatpush1.msra.mxu0 0.0
    %1397 = vmatprep.subr.mxu0 0.0
    %1398 = vmatpush1.msra.mxu0 0.0
    %1399 = vmatprep.subr.mxu0 0.0
    %1400 = vmatpush1.msra.mxu0 0.0
    %1401 = vmatprep.subr.mxu0 0.0
    %1402 = vmatpush1.msra.mxu0 0.0
    %1403 = vmatprep.subr.mxu0 0.0
    %1404 = vmatpush1.msra.mxu0 0.0
    %1405 = vmatprep.subr.mxu0 0.0
    %1406 = vmatpush1.msra.mxu0 0.0
    %1407 = vmatprep.subr.mxu0 0.0
    %1408 = vmatpush1.msra.mxu0 0.0
    %1409 = vmatprep.subr.mxu0 0.0
    %1410 = vmatpush1.msra.mxu0 0.0
    %1411 = vmatprep.subr.mxu0 0.0
    %1412 = vmatpush1.msra.mxu0 0.0
    %1413 = vmatprep.subr.mxu0 0.0
    %1414 = vmatpush1.msra.mxu0 0.0
    %1415 = vmatprep.subr.mxu0 0.0
    %1416 = vmatpush1.msra.mxu0 0.0
    %1417 = vmatprep.subr.mxu0 0.0
    %1418 = vmatpush1.msra.mxu0 0.0
    %1419 = vmatprep.subr.mxu0 0.0
    %1420 = vmatpush1.msra.mxu0 0.0
    %1421 = vmatprep.subr.mxu0 0.0
    %1422 = vmatpush1.msra.mxu0 0.0
    %1423 = vmatprep.subr.mxu0 0.0
    %v1424 = vand.u32 %v734, 4294901760
    %1425 = vmatpush1.msra.mxu0 %v1424
    %1426 = vmatprep.subr.mxu0 0.0
    %1427 = vmatpush2.msra.mxu0 0.0
    %1428 = vmatprep.subr.mxu0 0.0
    %1429 = vmatpush2.msra.mxu0 0.0
    %1430 = vmatprep.subr.mxu0 0.0
    %1431 = vmatpush2.msra.mxu0 0.0
    %1432 = vmatprep.subr.mxu0 0.0
    %1433 = vmatpush2.msra.mxu0 0.0
    %1434 = vmatprep.subr.mxu0 0.0
    %1435 = vmatpush2.msra.mxu0 0.0
    %1436 = vmatprep.subr.mxu0 0.0
    %1437 = vmatpush2.msra.mxu0 0.0
    %1438 = vmatprep.subr.mxu0 0.0
    %1439 = vmatpush2.msra.mxu0 0.0
    %1440 = vmatprep.subr.mxu0 0.0
    %1441 = vmatpush2.msra.mxu0 0.0
    %1442 = vmatprep.subr.mxu0 0.0
    %1443 = vmatpush2.msra.mxu0 0.0
    %1444 = vmatprep.subr.mxu0 0.0
    %1445 = vmatpush2.msra.mxu0 0.0
    %1446 = vmatprep.subr.mxu0 0.0
    %1447 = vmatpush2.msra.mxu0 0.0
    %1448 = vmatprep.subr.mxu0 0.0
    %1449 = vmatpush2.msra.mxu0 0.0
    %1450 = vmatprep.subr.mxu0 0.0
    %1451 = vmatpush2.msra.mxu0 0.0
    %1452 = vmatprep.subr.mxu0 0.0
    %1453 = vmatpush2.msra.mxu0 0.0
    %1454 = vmatprep.subr.mxu0 0.0
    %1455 = vmatpush2.msra.mxu0 0.0
    %1456 = vmatprep.subr.mxu0 0.0
    %1457 = vmatpush2.msra.mxu0 0.0
    %1458 = vmatprep.mubr.f32.mxu0 0.0
    %v1459 = vand.u32 %v737, 4294901760
    %1460 = vmatmul.mubr.f32.gmra.mxu0 %v1459
    %v1461 = vpop.f32.mrf.mxu0
    %v1462 = vadd.f32 %v1348, %v1461
    %v1463 = vpop.f32.mrf.mxu0
    %1464 = vmatprep.mubr.f32.mxu0 0.0
    %v1465 = vand.u32 %v740, 4294901760
    %1466 = vmatmul.mubr.f32.gmra.mxu0 %v1465
    %v1467 = vpop.f32.mrf.mxu0
    %v1468 = vadd.f32 %v1354, %v1467
    %v1469 = vpop.f32.mrf.mxu0
    %1470 = vmatprep.mubr.f32.mxu0 0.0
    %v1471 = vand.u32 %v743, 4294901760
    %1472 = vmatmul.mubr.f32.gmra.mxu0 %v1471
    %v1473 = vpop.f32.mrf.mxu0
    %v1474 = vadd.f32 %v1360, %v1473
    %v1475 = vpop.f32.mrf.mxu0
    %1476 = vmatprep.mubr.f32.mxu0 0.0
    %v1477 = vand.u32 %v746, 4294901760
    %1478 = vmatmul.mubr.f32.gmra.mxu0 %v1477
    %v1479 = vpop.f32.mrf.mxu0
    %v1480 = vadd.f32 %v1366, %v1479
    %v1481 = vpop.f32.mrf.mxu0
    %1482 = vmatprep.mubr.f32.mxu0 0.0
    %v1483 = vand.u32 %v749, 4294901760
    %1484 = vmatmul.mubr.f32.gmra.mxu0 %v1483
    %v1485 = vpop.f32.mrf.mxu0
    %v1486 = vadd.f32 %v1372, %v1485
    %v1487 = vpop.f32.mrf.mxu0
    %1488 = vmatprep.mubr.f32.mxu0 0.0
    %v1489 = vand.u32 %v752, 4294901760
    %1490 = vmatmul.mubr.f32.gmra.mxu0 %v1489
    %v1491 = vpop.f32.mrf.mxu0
    %v1492 = vadd.f32 %v1378, %v1491
    %v1493 = vpop.f32.mrf.mxu0
    %1494 = vmatprep.mubr.f32.mxu0 0.0
    %v1495 = vand.u32 %v755, 4294901760
    %1496 = vmatmul.mubr.f32.gmra.mxu0 %v1495
    %v1497 = vpop.f32.mrf.mxu0
    %v1498 = vadd.f32 %v1384, %v1497
    %v1499 = vpop.f32.mrf.mxu0
    %1500 = vmatprep.mubr.f32.mxu0 0.0
    %v1501 = vand.u32 %v758, 4294901760
    %1502 = vmatmul.mubr.f32.gmra.mxu0 %v1501
    %v1503 = vpop.f32.mrf.mxu0
    %v1504 = vadd.f32 %v1390, %v1503
    %v1505 = vpop.f32.mrf.mxu0
    %1506 = vdwg.mxu0
    %v1507 = vxor.u32 %v1462, 2147483648
    %v1508 = vxor.u32 %v1468, 2147483648
    %v1509 = vxor.u32 %v1474, 2147483648
    %v1510 = vxor.u32 %v1480, 2147483648
    %v1511 = vxor.u32 %v1486, 2147483648
    %v1512 = vxor.u32 %v1492, 2147483648
    %v1513 = vxor.u32 %v1498, 2147483648
    %v1514 = vxor.u32 %v1504, 2147483648
    %v1515 = vmul.f32 %v1507, 1.442695
    %v1516 = vpow.pop %v1515
    %v1517 = vmul.f32 %v1508, 1.442695
    %v1518 = vpow.pop %v1517
    %v1519 = vmul.f32 %v1509, 1.442695
    %v1520 = vpow.pop %v1519
    %v1521 = vmul.f32 %v1510, 1.442695
    %v1522 = vpow.pop %v1521
    %v1523 = vmul.f32 %v1511, 1.442695
    %v1524 = vpow.pop %v1523
    %v1525 = vmul.f32 %v1512, 1.442695
    %v1526 = vpow.pop %v1525
    %v1527 = vmul.f32 %v1513, 1.442695
    %v1528 = vpow.pop %v1527
    %v1529 = vmul.f32 %v1514, 1.442695
    %v1530 = vpow.pop %v1529
    %v1531 = vadd.f32 %v1516, 1.0
    %v1532 = vadd.f32 %v1518, 1.0
    %v1533 = vadd.f32 %v1520, 1.0
    %v1534 = vadd.f32 %v1522, 1.0
    %v1535 = vadd.f32 %v1524, 1.0
    %v1536 = vadd.f32 %v1526, 1.0
    %v1537 = vadd.f32 %v1528, 1.0
    %v1538 = vadd.f32 %v1530, 1.0
    %v1539 = vrcp.pop %v1531
    %v1540 = vmul.f32 1.0, %v1539
    %v1541 = vrcp.pop %v1532
    %v1542 = vmul.f32 1.0, %v1541
    %v1543 = vrcp.pop %v1533
    %v1544 = vmul.f32 1.0, %v1543
    %v1545 = vrcp.pop %v1534
    %v1546 = vmul.f32 1.0, %v1545
    %v1547 = vrcp.pop %v1535
    %v1548 = vmul.f32 1.0, %v1547
    %v1549 = vrcp.pop %v1536
    %v1550 = vmul.f32 1.0, %v1549
    %v1551 = vrcp.pop %v1537
    %v1552 = vmul.f32 1.0, %v1551
    %v1553 = vrcp.pop %v1538
    %v1554 = vmul.f32 1.0, %v1553
    %1555 = vrot.lane.b32.xlu0 %v64, 120
    %v1556 = vpop.permute.xlu0 %1555
    %1557 = vrot.lane.b32.xlu0 %v65, 120
    %v1558 = vpop.permute.xlu0 %1557
    %1559 = vrot.lane.b32.xlu0 %v66, 120
    %v1560 = vpop.permute.xlu0 %1559
    %1561 = vrot.lane.b32.xlu0 %v67, 120
    %v1562 = vpop.permute.xlu0 %1561
    %1563 = vrot.lane.b32.xlu0 %v68, 120
    %v1564 = vpop.permute.xlu0 %1563
    %1565 = vrot.lane.b32.xlu0 %v69, 120
    %v1566 = vpop.permute.xlu0 %1565
    %1567 = vrot.lane.b32.xlu0 %v70, 120
    %v1568 = vpop.permute.xlu0 %1567
    %1569 = vrot.lane.b32.xlu0 %v71, 120
    %v1570 = vpop.permute.xlu0 %1569
    %1572 = vrot.lane.b32.xlu0 %v734, 112
    %v1573 = vpop.permute.xlu0 %1572
    %v1575 = vsel %vm735, %v1556, 0
    %v1577 = vsel %vm735, %v1558, 0
    %v1579 = vsel %vm735, %v1560, 0
    %v1581 = vsel %vm735, %v1562, 0
    %v1583 = vsel %vm735, %v1564, 0
    %v1585 = vsel %vm735, %v1566, 0
    %v1587 = vsel %vm735, %v1568, 0
    %v1589 = vsel %vm735, %v1570, 0
    %1591 = vmatprep.subr.mxu0 0.0
    %1592 = vmatpush1.msra.mxu0 0.0
    %1593 = vmatprep.subr.mxu0 0.0
    %1594 = vmatpush1.msra.mxu0 0.0
    %1595 = vmatprep.subr.mxu0 0.0
    %1596 = vmatpush1.msra.mxu0 0.0
    %1597 = vmatprep.subr.mxu0 0.0
    %1598 = vmatpush1.msra.mxu0 0.0
    %1599 = vmatprep.subr.mxu0 0.0
    %1600 = vmatpush1.msra.mxu0 0.0
    %1601 = vmatprep.subr.mxu0 0.0
    %1602 = vmatpush1.msra.mxu0 0.0
    %1603 = vmatprep.subr.mxu0 0.0
    %1604 = vmatpush1.msra.mxu0 0.0
    %1605 = vmatprep.subr.mxu0 0.0
    %1606 = vmatpush1.msra.mxu0 0.0
    %1607 = vmatprep.subr.mxu0 0.0
    %1608 = vmatpush1.msra.mxu0 0.0
    %1609 = vmatprep.subr.mxu0 0.0
    %1610 = vmatpush1.msra.mxu0 0.0
    %1611 = vmatprep.subr.mxu0 0.0
    %1612 = vmatpush1.msra.mxu0 0.0
    %1613 = vmatprep.subr.mxu0 0.0
    %1614 = vmatpush1.msra.mxu0 0.0
    %1615 = vmatprep.subr.mxu0 0.0
    %1616 = vmatpush1.msra.mxu0 0.0
    %1617 = vmatprep.subr.mxu0 0.0
    %1618 = vmatpush1.msra.mxu0 0.0
    %1619 = vmatprep.subr.mxu0 0.0
    %1620 = vmatpush1.msra.mxu0 0.0
    %1621 = vmatprep.subr.mxu0 0.0
    %v1622 = vand.u32 %v1573, 4294901760
    %1623 = vmatpush1.msra.mxu0 %v1622
    %1624 = vmatprep.subr.mxu0 0.0
    %1625 = vmatpush2.msra.mxu0 0.0
    %1626 = vmatprep.subr.mxu0 0.0
    %1627 = vmatpush2.msra.mxu0 0.0
    %1628 = vmatprep.subr.mxu0 0.0
    %1629 = vmatpush2.msra.mxu0 0.0
    %1630 = vmatprep.subr.mxu0 0.0
    %1631 = vmatpush2.msra.mxu0 0.0
    %1632 = vmatprep.subr.mxu0 0.0
    %1633 = vmatpush2.msra.mxu0 0.0
    %1634 = vmatprep.subr.mxu0 0.0
    %1635 = vmatpush2.msra.mxu0 0.0
    %1636 = vmatprep.subr.mxu0 0.0
    %1637 = vmatpush2.msra.mxu0 0.0
    %1638 = vmatprep.subr.mxu0 0.0
    %1639 = vmatpush2.msra.mxu0 0.0
    %1640 = vmatprep.subr.mxu0 0.0
    %1641 = vmatpush2.msra.mxu0 0.0
    %1642 = vmatprep.subr.mxu0 0.0
    %1643 = vmatpush2.msra.mxu0 0.0
    %1644 = vmatprep.subr.mxu0 0.0
    %1645 = vmatpush2.msra.mxu0 0.0
    %1646 = vmatprep.subr.mxu0 0.0
    %1647 = vmatpush2.msra.mxu0 0.0
    %1648 = vmatprep.subr.mxu0 0.0
    %1649 = vmatpush2.msra.mxu0 0.0
    %1650 = vmatprep.subr.mxu0 0.0
    %1651 = vmatpush2.msra.mxu0 0.0
    %1652 = vmatprep.subr.mxu0 0.0
    %1653 = vmatpush2.msra.mxu0 0.0
    %1654 = vmatprep.subr.mxu0 0.0
    %1655 = vmatpush2.msra.mxu0 0.0
    %1656 = vmatprep.mubr.f32.mxu0 0.0
    %v1657 = vand.u32 %v1575, 4294901760
    %v1658 = vsub.f32 %v1575, %v1657
    %v1659 = vand.u32 %v1658, 4294901760
    %v1660 = vsub.f32 %v1658, %v1659
    %v1661 = vand.u32 %v1660, 4294901760
    %1662 = vmatmul.mubr.f32.gmra.mxu0 %v1661
    %v1663 = vpop.f32.mrf.mxu0
    %v1664 = vadd.f32 0.0, %v1663
    %v1665 = vpop.f32.mrf.mxu0
    %1666 = vmatprep.mubr.f32.mxu0 0.0
    %v1667 = vand.u32 %v1577, 4294901760
    %v1668 = vsub.f32 %v1577, %v1667
    %v1669 = vand.u32 %v1668, 4294901760
    %v1670 = vsub.f32 %v1668, %v1669
    %v1671 = vand.u32 %v1670, 4294901760
    %1672 = vmatmul.mubr.f32.gmra.mxu0 %v1671
    %v1673 = vpop.f32.mrf.mxu0
    %v1674 = vadd.f32 0.0, %v1673
    %v1675 = vpop.f32.mrf.mxu0
    %1676 = vmatprep.mubr.f32.mxu0 0.0
    %v1677 = vand.u32 %v1579, 4294901760
    %v1678 = vsub.f32 %v1579, %v1677
    %v1679 = vand.u32 %v1678, 4294901760
    %v1680 = vsub.f32 %v1678, %v1679
    %v1681 = vand.u32 %v1680, 4294901760
    %1682 = vmatmul.mubr.f32.gmra.mxu0 %v1681
    %v1683 = vpop.f32.mrf.mxu0
    %v1684 = vadd.f32 0.0, %v1683
    %v1685 = vpop.f32.mrf.mxu0
    %1686 = vmatprep.mubr.f32.mxu0 0.0
    %v1687 = vand.u32 %v1581, 4294901760
    %v1688 = vsub.f32 %v1581, %v1687
    %v1689 = vand.u32 %v1688, 4294901760
    %v1690 = vsub.f32 %v1688, %v1689
    %v1691 = vand.u32 %v1690, 4294901760
    %1692 = vmatmul.mubr.f32.gmra.mxu0 %v1691
    %v1693 = vpop.f32.mrf.mxu0
    %v1694 = vadd.f32 0.0, %v1693
    %v1695 = vpop.f32.mrf.mxu0
    %1696 = vmatprep.mubr.f32.mxu0 0.0
    %v1697 = vand.u32 %v1583, 4294901760
    %v1698 = vsub.f32 %v1583, %v1697
    %v1699 = vand.u32 %v1698, 4294901760
    %v1700 = vsub.f32 %v1698, %v1699
    %v1701 = vand.u32 %v1700, 4294901760
    %1702 = vmatmul.mubr.f32.gmra.mxu0 %v1701
    %v1703 = vpop.f32.mrf.mxu0
    %v1704 = vadd.f32 0.0, %v1703
    %v1705 = vpop.f32.mrf.mxu0
    %1706 = vmatprep.mubr.f32.mxu0 0.0
    %v1707 = vand.u32 %v1585, 4294901760
    %v1708 = vsub.f32 %v1585, %v1707
    %v1709 = vand.u32 %v1708, 4294901760
    %v1710 = vsub.f32 %v1708, %v1709
    %v1711 = vand.u32 %v1710, 4294901760
    %1712 = vmatmul.mubr.f32.gmra.mxu0 %v1711
    %v1713 = vpop.f32.mrf.mxu0
    %v1714 = vadd.f32 0.0, %v1713
    %v1715 = vpop.f32.mrf.mxu0
    %1716 = vmatprep.mubr.f32.mxu0 0.0
    %v1717 = vand.u32 %v1587, 4294901760
    %v1718 = vsub.f32 %v1587, %v1717
    %v1719 = vand.u32 %v1718, 4294901760
    %v1720 = vsub.f32 %v1718, %v1719
    %v1721 = vand.u32 %v1720, 4294901760
    %1722 = vmatmul.mubr.f32.gmra.mxu0 %v1721
    %v1723 = vpop.f32.mrf.mxu0
    %v1724 = vadd.f32 0.0, %v1723
    %v1725 = vpop.f32.mrf.mxu0
    %1726 = vmatprep.mubr.f32.mxu0 0.0
    %v1727 = vand.u32 %v1589, 4294901760
    %v1728 = vsub.f32 %v1589, %v1727
    %v1729 = vand.u32 %v1728, 4294901760
    %v1730 = vsub.f32 %v1728, %v1729
    %v1731 = vand.u32 %v1730, 4294901760
    %1732 = vmatmul.mubr.f32.gmra.mxu0 %v1731
    %v1733 = vpop.f32.mrf.mxu0
    %v1734 = vadd.f32 0.0, %v1733
    %v1735 = vpop.f32.mrf.mxu0
    %1736 = vdwg.mxu0
    %1737 = vmatprep.subr.mxu0 0.0
    %1738 = vmatpush1.msra.mxu0 0.0
    %1739 = vmatprep.subr.mxu0 0.0
    %1740 = vmatpush1.msra.mxu0 0.0
    %1741 = vmatprep.subr.mxu0 0.0
    %1742 = vmatpush1.msra.mxu0 0.0
    %1743 = vmatprep.subr.mxu0 0.0
    %1744 = vmatpush1.msra.mxu0 0.0
    %1745 = vmatprep.subr.mxu0 0.0
    %1746 = vmatpush1.msra.mxu0 0.0
    %1747 = vmatprep.subr.mxu0 0.0
    %1748 = vmatpush1.msra.mxu0 0.0
    %1749 = vmatprep.subr.mxu0 0.0
    %1750 = vmatpush1.msra.mxu0 0.0
    %1751 = vmatprep.subr.mxu0 0.0
    %1752 = vmatpush1.msra.mxu0 0.0
    %1753 = vmatprep.subr.mxu0 0.0
    %1754 = vmatpush1.msra.mxu0 0.0
    %1755 = vmatprep.subr.mxu0 0.0
    %1756 = vmatpush1.msra.mxu0 0.0
    %1757 = vmatprep.subr.mxu0 0.0
    %1758 = vmatpush1.msra.mxu0 0.0
    %1759 = vmatprep.subr.mxu0 0.0
    %1760 = vmatpush1.msra.mxu0 0.0
    %1761 = vmatprep.subr.mxu0 0.0
    %1762 = vmatpush1.msra.mxu0 0.0
    %1763 = vmatprep.subr.mxu0 0.0
    %1764 = vmatpush1.msra.mxu0 0.0
    %1765 = vmatprep.subr.mxu0 0.0
    %1766 = vmatpush1.msra.mxu0 0.0
    %1767 = vmatprep.subr.mxu0 0.0
    %v1768 = vand.u32 %v1573, 4294901760
    %v1769 = vsub.f32 %v1573, %v1768
    %v1770 = vand.u32 %v1769, 4294901760
    %v1771 = vsub.f32 %v1769, %v1770
    %v1772 = vand.u32 %v1771, 4294901760
    %1773 = vmatpush1.msra.mxu0 %v1772
    %1774 = vmatprep.subr.mxu0 0.0
    %1775 = vmatpush2.msra.mxu0 0.0
    %1776 = vmatprep.subr.mxu0 0.0
    %1777 = vmatpush2.msra.mxu0 0.0
    %1778 = vmatprep.subr.mxu0 0.0
    %1779 = vmatpush2.msra.mxu0 0.0
    %1780 = vmatprep.subr.mxu0 0.0
    %1781 = vmatpush2.msra.mxu0 0.0
    %1782 = vmatprep.subr.mxu0 0.0
    %1783 = vmatpush2.msra.mxu0 0.0
    %1784 = vmatprep.subr.mxu0 0.0
    %1785 = vmatpush2.msra.mxu0 0.0
    %1786 = vmatprep.subr.mxu0 0.0
    %1787 = vmatpush2.msra.mxu0 0.0
    %1788 = vmatprep.subr.mxu0 0.0
    %1789 = vmatpush2.msra.mxu0 0.0
    %1790 = vmatprep.subr.mxu0 0.0
    %1791 = vmatpush2.msra.mxu0 0.0
    %1792 = vmatprep.subr.mxu0 0.0
    %1793 = vmatpush2.msra.mxu0 0.0
    %1794 = vmatprep.subr.mxu0 0.0
    %1795 = vmatpush2.msra.mxu0 0.0
    %1796 = vmatprep.subr.mxu0 0.0
    %1797 = vmatpush2.msra.mxu0 0.0
    %1798 = vmatprep.subr.mxu0 0.0
    %1799 = vmatpush2.msra.mxu0 0.0
    %1800 = vmatprep.subr.mxu0 0.0
    %1801 = vmatpush2.msra.mxu0 0.0
    %1802 = vmatprep.subr.mxu0 0.0
    %1803 = vmatpush2.msra.mxu0 0.0
    %1804 = vmatprep.subr.mxu0 0.0
    %1805 = vmatpush2.msra.mxu0 0.0
    %1806 = vmatprep.mubr.f32.mxu0 0.0
    %v1807 = vand.u32 %v1575, 4294901760
    %1808 = vmatmul.mubr.f32.gmra.mxu0 %v1807
    %v1809 = vpop.f32.mrf.mxu0
    %v1810 = vadd.f32 %v1664, %v1809
    %v1811 = vpop.f32.mrf.mxu0
    %1812 = vmatprep.mubr.f32.mxu0 0.0
    %v1813 = vand.u32 %v1577, 4294901760
    %1814 = vmatmul.mubr.f32.gmra.mxu0 %v1813
    %v1815 = vpop.f32.mrf.mxu0
    %v1816 = vadd.f32 %v1674, %v1815
    %v1817 = vpop.f32.mrf.mxu0
    %1818 = vmatprep.mubr.f32.mxu0 0.0
    %v1819 = vand.u32 %v1579, 4294901760
    %1820 = vmatmul.mubr.f32.gmra.mxu0 %v1819
    %v1821 = vpop.f32.mrf.mxu0
    %v1822 = vadd.f32 %v1684, %v1821
    %v1823 = vpop.f32.mrf.mxu0
    %1824 = vmatprep.mubr.f32.mxu0 0.0
    %v1825 = vand.u32 %v1581, 4294901760
    %1826 = vmatmul.mubr.f32.gmra.mxu0 %v1825
    %v1827 = vpop.f32.mrf.mxu0
    %v1828 = vadd.f32 %v1694, %v1827
    %v1829 = vpop.f32.mrf.mxu0
    %1830 = vmatprep.mubr.f32.mxu0 0.0
    %v1831 = vand.u32 %v1583, 4294901760
    %1832 = vmatmul.mubr.f32.gmra.mxu0 %v1831
    %v1833 = vpop.f32.mrf.mxu0
    %v1834 = vadd.f32 %v1704, %v1833
    %v1835 = vpop.f32.mrf.mxu0
    %1836 = vmatprep.mubr.f32.mxu0 0.0
    %v1837 = vand.u32 %v1585, 4294901760
    %1838 = vmatmul.mubr.f32.gmra.mxu0 %v1837
    %v1839 = vpop.f32.mrf.mxu0
    %v1840 = vadd.f32 %v1714, %v1839
    %v1841 = vpop.f32.mrf.mxu0
    %1842 = vmatprep.mubr.f32.mxu0 0.0
    %v1843 = vand.u32 %v1587, 4294901760
    %1844 = vmatmul.mubr.f32.gmra.mxu0 %v1843
    %v1845 = vpop.f32.mrf.mxu0
    %v1846 = vadd.f32 %v1724, %v1845
    %v1847 = vpop.f32.mrf.mxu0
    %1848 = vmatprep.mubr.f32.mxu0 0.0
    %v1849 = vand.u32 %v1589, 4294901760
    %1850 = vmatmul.mubr.f32.gmra.mxu0 %v1849
    %v1851 = vpop.f32.mrf.mxu0
    %v1852 = vadd.f32 %v1734, %v1851
    %v1853 = vpop.f32.mrf.mxu0
    %1854 = vdwg.mxu0
    %1855 = vmatprep.subr.mxu0 0.0
    %1856 = vmatpush1.msra.mxu0 0.0
    %1857 = vmatprep.subr.mxu0 0.0
    %1858 = vmatpush1.msra.mxu0 0.0
    %1859 = vmatprep.subr.mxu0 0.0
    %1860 = vmatpush1.msra.mxu0 0.0
    %1861 = vmatprep.subr.mxu0 0.0
    %1862 = vmatpush1.msra.mxu0 0.0
    %1863 = vmatprep.subr.mxu0 0.0
    %1864 = vmatpush1.msra.mxu0 0.0
    %1865 = vmatprep.subr.mxu0 0.0
    %1866 = vmatpush1.msra.mxu0 0.0
    %1867 = vmatprep.subr.mxu0 0.0
    %1868 = vmatpush1.msra.mxu0 0.0
    %1869 = vmatprep.subr.mxu0 0.0
    %1870 = vmatpush1.msra.mxu0 0.0
    %1871 = vmatprep.subr.mxu0 0.0
    %1872 = vmatpush1.msra.mxu0 0.0
    %1873 = vmatprep.subr.mxu0 0.0
    %1874 = vmatpush1.msra.mxu0 0.0
    %1875 = vmatprep.subr.mxu0 0.0
    %1876 = vmatpush1.msra.mxu0 0.0
    %1877 = vmatprep.subr.mxu0 0.0
    %1878 = vmatpush1.msra.mxu0 0.0
    %1879 = vmatprep.subr.mxu0 0.0
    %1880 = vmatpush1.msra.mxu0 0.0
    %1881 = vmatprep.subr.mxu0 0.0
    %1882 = vmatpush1.msra.mxu0 0.0
    %1883 = vmatprep.subr.mxu0 0.0
    %1884 = vmatpush1.msra.mxu0 0.0
    %1885 = vmatprep.subr.mxu0 0.0
    %v1886 = vand.u32 %v1573, 4294901760
    %v1887 = vsub.f32 %v1573, %v1886
    %1888 = vmatpush1.msra.mxu0 %v1887
    %1889 = vmatprep.subr.mxu0 0.0
    %1890 = vmatpush2.msra.mxu0 0.0
    %1891 = vmatprep.subr.mxu0 0.0
    %1892 = vmatpush2.msra.mxu0 0.0
    %1893 = vmatprep.subr.mxu0 0.0
    %1894 = vmatpush2.msra.mxu0 0.0
    %1895 = vmatprep.subr.mxu0 0.0
    %1896 = vmatpush2.msra.mxu0 0.0
    %1897 = vmatprep.subr.mxu0 0.0
    %1898 = vmatpush2.msra.mxu0 0.0
    %1899 = vmatprep.subr.mxu0 0.0
    %1900 = vmatpush2.msra.mxu0 0.0
    %1901 = vmatprep.subr.mxu0 0.0
    %1902 = vmatpush2.msra.mxu0 0.0
    %1903 = vmatprep.subr.mxu0 0.0
    %1904 = vmatpush2.msra.mxu0 0.0
    %1905 = vmatprep.subr.mxu0 0.0
    %1906 = vmatpush2.msra.mxu0 0.0
    %1907 = vmatprep.subr.mxu0 0.0
    %1908 = vmatpush2.msra.mxu0 0.0
    %1909 = vmatprep.subr.mxu0 0.0
    %1910 = vmatpush2.msra.mxu0 0.0
    %1911 = vmatprep.subr.mxu0 0.0
    %1912 = vmatpush2.msra.mxu0 0.0
    %1913 = vmatprep.subr.mxu0 0.0
    %1914 = vmatpush2.msra.mxu0 0.0
    %1915 = vmatprep.subr.mxu0 0.0
    %1916 = vmatpush2.msra.mxu0 0.0
    %1917 = vmatprep.subr.mxu0 0.0
    %1918 = vmatpush2.msra.mxu0 0.0
    %1919 = vmatprep.subr.mxu0 0.0
    %1920 = vmatpush2.msra.mxu0 0.0
    %1921 = vmatprep.mubr.f32.mxu0 0.0
    %v1922 = vand.u32 %v1575, 4294901760
    %v1923 = vsub.f32 %v1575, %v1922
    %1924 = vmatmul.mubr.f32.gmra.mxu0 %v1923
    %v1925 = vpop.f32.mrf.mxu0
    %v1926 = vadd.f32 %v1810, %v1925
    %v1927 = vpop.f32.mrf.mxu0
    %1928 = vmatprep.mubr.f32.mxu0 0.0
    %v1929 = vand.u32 %v1577, 4294901760
    %v1930 = vsub.f32 %v1577, %v1929
    %1931 = vmatmul.mubr.f32.gmra.mxu0 %v1930
    %v1932 = vpop.f32.mrf.mxu0
    %v1933 = vadd.f32 %v1816, %v1932
    %v1934 = vpop.f32.mrf.mxu0
    %1935 = vmatprep.mubr.f32.mxu0 0.0
    %v1936 = vand.u32 %v1579, 4294901760
    %v1937 = vsub.f32 %v1579, %v1936
    %1938 = vmatmul.mubr.f32.gmra.mxu0 %v1937
    %v1939 = vpop.f32.mrf.mxu0
    %v1940 = vadd.f32 %v1822, %v1939
    %v1941 = vpop.f32.mrf.mxu0
    %1942 = vmatprep.mubr.f32.mxu0 0.0
    %v1943 = vand.u32 %v1581, 4294901760
    %v1944 = vsub.f32 %v1581, %v1943
    %1945 = vmatmul.mubr.f32.gmra.mxu0 %v1944
    %v1946 = vpop.f32.mrf.mxu0
    %v1947 = vadd.f32 %v1828, %v1946
    %v1948 = vpop.f32.mrf.mxu0
    %1949 = vmatprep.mubr.f32.mxu0 0.0
    %v1950 = vand.u32 %v1583, 4294901760
    %v1951 = vsub.f32 %v1583, %v1950
    %1952 = vmatmul.mubr.f32.gmra.mxu0 %v1951
    %v1953 = vpop.f32.mrf.mxu0
    %v1954 = vadd.f32 %v1834, %v1953
    %v1955 = vpop.f32.mrf.mxu0
    %1956 = vmatprep.mubr.f32.mxu0 0.0
    %v1957 = vand.u32 %v1585, 4294901760
    %v1958 = vsub.f32 %v1585, %v1957
    %1959 = vmatmul.mubr.f32.gmra.mxu0 %v1958
    %v1960 = vpop.f32.mrf.mxu0
    %v1961 = vadd.f32 %v1840, %v1960
    %v1962 = vpop.f32.mrf.mxu0
    %1963 = vmatprep.mubr.f32.mxu0 0.0
    %v1964 = vand.u32 %v1587, 4294901760
    %v1965 = vsub.f32 %v1587, %v1964
    %1966 = vmatmul.mubr.f32.gmra.mxu0 %v1965
    %v1967 = vpop.f32.mrf.mxu0
    %v1968 = vadd.f32 %v1846, %v1967
    %v1969 = vpop.f32.mrf.mxu0
    %1970 = vmatprep.mubr.f32.mxu0 0.0
    %v1971 = vand.u32 %v1589, 4294901760
    %v1972 = vsub.f32 %v1589, %v1971
    %1973 = vmatmul.mubr.f32.gmra.mxu0 %v1972
    %v1974 = vpop.f32.mrf.mxu0
    %v1975 = vadd.f32 %v1852, %v1974
    %v1976 = vpop.f32.mrf.mxu0
    %1977 = vdwg.mxu0
    %1978 = vmatprep.subr.mxu0 0.0
    %1979 = vmatpush1.msra.mxu0 0.0
    %1980 = vmatprep.subr.mxu0 0.0
    %1981 = vmatpush1.msra.mxu0 0.0
    %1982 = vmatprep.subr.mxu0 0.0
    %1983 = vmatpush1.msra.mxu0 0.0
    %1984 = vmatprep.subr.mxu0 0.0
    %1985 = vmatpush1.msra.mxu0 0.0
    %1986 = vmatprep.subr.mxu0 0.0
    %1987 = vmatpush1.msra.mxu0 0.0
    %1988 = vmatprep.subr.mxu0 0.0
    %1989 = vmatpush1.msra.mxu0 0.0
    %1990 = vmatprep.subr.mxu0 0.0
    %1991 = vmatpush1.msra.mxu0 0.0
    %1992 = vmatprep.subr.mxu0 0.0
    %1993 = vmatpush1.msra.mxu0 0.0
    %1994 = vmatprep.subr.mxu0 0.0
    %1995 = vmatpush1.msra.mxu0 0.0
    %1996 = vmatprep.subr.mxu0 0.0
    %1997 = vmatpush1.msra.mxu0 0.0
    %1998 = vmatprep.subr.mxu0 0.0
    %1999 = vmatpush1.msra.mxu0 0.0
    %2000 = vmatprep.subr.mxu0 0.0
    %2001 = vmatpush1.msra.mxu0 0.0
    %2002 = vmatprep.subr.mxu0 0.0
    %2003 = vmatpush1.msra.mxu0 0.0
    %2004 = vmatprep.subr.mxu0 0.0
    %2005 = vmatpush1.msra.mxu0 0.0
    %2006 = vmatprep.subr.mxu0 0.0
    %2007 = vmatpush1.msra.mxu0 0.0
    %2008 = vmatprep.subr.mxu0 0.0
    %v2009 = vand.u32 %v1573, 4294901760
    %2010 = vmatpush1.msra.mxu0 %v2009
    %2011 = vmatprep.subr.mxu0 0.0
    %2012 = vmatpush2.msra.mxu0 0.0
    %2013 = vmatprep.subr.mxu0 0.0
    %2014 = vmatpush2.msra.mxu0 0.0
    %2015 = vmatprep.subr.mxu0 0.0
    %2016 = vmatpush2.msra.mxu0 0.0
    %2017 = vmatprep.subr.mxu0 0.0
    %2018 = vmatpush2.msra.mxu0 0.0
    %2019 = vmatprep.subr.mxu0 0.0
    %2020 = vmatpush2.msra.mxu0 0.0
    %2021 = vmatprep.subr.mxu0 0.0
    %2022 = vmatpush2.msra.mxu0 0.0
    %2023 = vmatprep.subr.mxu0 0.0
    %2024 = vmatpush2.msra.mxu0 0.0
    %2025 = vmatprep.subr.mxu0 0.0
    %2026 = vmatpush2.msra.mxu0 0.0
    %2027 = vmatprep.subr.mxu0 0.0
    %2028 = vmatpush2.msra.mxu0 0.0
    %2029 = vmatprep.subr.mxu0 0.0
    %2030 = vmatpush2.msra.mxu0 0.0
    %2031 = vmatprep.subr.mxu0 0.0
    %2032 = vmatpush2.msra.mxu0 0.0
    %2033 = vmatprep.subr.mxu0 0.0
    %2034 = vmatpush2.msra.mxu0 0.0
    %2035 = vmatprep.subr.mxu0 0.0
    %2036 = vmatpush2.msra.mxu0 0.0
    %2037 = vmatprep.subr.mxu0 0.0
    %2038 = vmatpush2.msra.mxu0 0.0
    %2039 = vmatprep.subr.mxu0 0.0
    %2040 = vmatpush2.msra.mxu0 0.0
    %2041 = vmatprep.subr.mxu0 0.0
    %2042 = vmatpush2.msra.mxu0 0.0
    %2043 = vmatprep.mubr.f32.mxu0 0.0
    %v2044 = vand.u32 %v1575, 4294901760
    %v2045 = vsub.f32 %v1575, %v2044
    %v2046 = vand.u32 %v2045, 4294901760
    %2047 = vmatmul.mubr.f32.gmra.mxu0 %v2046
    %v2048 = vpop.f32.mrf.mxu0
    %v2049 = vadd.f32 %v1926, %v2048
    %v2050 = vpop.f32.mrf.mxu0
    %2051 = vmatprep.mubr.f32.mxu0 0.0
    %v2052 = vand.u32 %v1577, 4294901760
    %v2053 = vsub.f32 %v1577, %v2052
    %v2054 = vand.u32 %v2053, 4294901760
    %2055 = vmatmul.mubr.f32.gmra.mxu0 %v2054
    %v2056 = vpop.f32.mrf.mxu0
    %v2057 = vadd.f32 %v1933, %v2056
    %v2058 = vpop.f32.mrf.mxu0
    %2059 = vmatprep.mubr.f32.mxu0 0.0
    %v2060 = vand.u32 %v1579, 4294901760
    %v2061 = vsub.f32 %v1579, %v2060
    %v2062 = vand.u32 %v2061, 4294901760
    %2063 = vmatmul.mubr.f32.gmra.mxu0 %v2062
    %v2064 = vpop.f32.mrf.mxu0
    %v2065 = vadd.f32 %v1940, %v2064
    %v2066 = vpop.f32.mrf.mxu0
    %2067 = vmatprep.mubr.f32.mxu0 0.0
    %v2068 = vand.u32 %v1581, 4294901760
    %v2069 = vsub.f32 %v1581, %v2068
    %v2070 = vand.u32 %v2069, 4294901760
    %2071 = vmatmul.mubr.f32.gmra.mxu0 %v2070
    %v2072 = vpop.f32.mrf.mxu0
    %v2073 = vadd.f32 %v1947, %v2072
    %v2074 = vpop.f32.mrf.mxu0
    %2075 = vmatprep.mubr.f32.mxu0 0.0
    %v2076 = vand.u32 %v1583, 4294901760
    %v2077 = vsub.f32 %v1583, %v2076
    %v2078 = vand.u32 %v2077, 4294901760
    %2079 = vmatmul.mubr.f32.gmra.mxu0 %v2078
    %v2080 = vpop.f32.mrf.mxu0
    %v2081 = vadd.f32 %v1954, %v2080
    %v2082 = vpop.f32.mrf.mxu0
    %2083 = vmatprep.mubr.f32.mxu0 0.0
    %v2084 = vand.u32 %v1585, 4294901760
    %v2085 = vsub.f32 %v1585, %v2084
    %v2086 = vand.u32 %v2085, 4294901760
    %2087 = vmatmul.mubr.f32.gmra.mxu0 %v2086
    %v2088 = vpop.f32.mrf.mxu0
    %v2089 = vadd.f32 %v1961, %v2088
    %v2090 = vpop.f32.mrf.mxu0
    %2091 = vmatprep.mubr.f32.mxu0 0.0
    %v2092 = vand.u32 %v1587, 4294901760
    %v2093 = vsub.f32 %v1587, %v2092
    %v2094 = vand.u32 %v2093, 4294901760
    %2095 = vmatmul.mubr.f32.gmra.mxu0 %v2094
    %v2096 = vpop.f32.mrf.mxu0
    %v2097 = vadd.f32 %v1968, %v2096
    %v2098 = vpop.f32.mrf.mxu0
    %2099 = vmatprep.mubr.f32.mxu0 0.0
    %v2100 = vand.u32 %v1589, 4294901760
    %v2101 = vsub.f32 %v1589, %v2100
    %v2102 = vand.u32 %v2101, 4294901760
    %2103 = vmatmul.mubr.f32.gmra.mxu0 %v2102
    %v2104 = vpop.f32.mrf.mxu0
    %v2105 = vadd.f32 %v1975, %v2104
    %v2106 = vpop.f32.mrf.mxu0
    %2107 = vdwg.mxu0
    %2108 = vmatprep.subr.mxu0 0.0
    %2109 = vmatpush1.msra.mxu0 0.0
    %2110 = vmatprep.subr.mxu0 0.0
    %2111 = vmatpush1.msra.mxu0 0.0
    %2112 = vmatprep.subr.mxu0 0.0
    %2113 = vmatpush1.msra.mxu0 0.0
    %2114 = vmatprep.subr.mxu0 0.0
    %2115 = vmatpush1.msra.mxu0 0.0
    %2116 = vmatprep.subr.mxu0 0.0
    %2117 = vmatpush1.msra.mxu0 0.0
    %2118 = vmatprep.subr.mxu0 0.0
    %2119 = vmatpush1.msra.mxu0 0.0
    %2120 = vmatprep.subr.mxu0 0.0
    %2121 = vmatpush1.msra.mxu0 0.0
    %2122 = vmatprep.subr.mxu0 0.0
    %2123 = vmatpush1.msra.mxu0 0.0
    %2124 = vmatprep.subr.mxu0 0.0
    %2125 = vmatpush1.msra.mxu0 0.0
    %2126 = vmatprep.subr.mxu0 0.0
    %2127 = vmatpush1.msra.mxu0 0.0
    %2128 = vmatprep.subr.mxu0 0.0
    %2129 = vmatpush1.msra.mxu0 0.0
    %2130 = vmatprep.subr.mxu0 0.0
    %2131 = vmatpush1.msra.mxu0 0.0
    %2132 = vmatprep.subr.mxu0 0.0
    %2133 = vmatpush1.msra.mxu0 0.0
    %2134 = vmatprep.subr.mxu0 0.0
    %2135 = vmatpush1.msra.mxu0 0.0
    %2136 = vmatprep.subr.mxu0 0.0
    %2137 = vmatpush1.msra.mxu0 0.0
    %2138 = vmatprep.subr.mxu0 0.0
    %v2139 = vand.u32 %v1573, 4294901760
    %v2140 = vsub.f32 %v1573, %v2139
    %v2141 = vand.u32 %v2140, 4294901760
    %2142 = vmatpush1.msra.mxu0 %v2141
    %2143 = vmatprep.subr.mxu0 0.0
    %2144 = vmatpush2.msra.mxu0 0.0
    %2145 = vmatprep.subr.mxu0 0.0
    %2146 = vmatpush2.msra.mxu0 0.0
    %2147 = vmatprep.subr.mxu0 0.0
    %2148 = vmatpush2.msra.mxu0 0.0
    %2149 = vmatprep.subr.mxu0 0.0
    %2150 = vmatpush2.msra.mxu0 0.0
    %2151 = vmatprep.subr.mxu0 0.0
    %2152 = vmatpush2.msra.mxu0 0.0
    %2153 = vmatprep.subr.mxu0 0.0
    %2154 = vmatpush2.msra.mxu0 0.0
    %2155 = vmatprep.subr.mxu0 0.0
    %2156 = vmatpush2.msra.mxu0 0.0
    %2157 = vmatprep.subr.mxu0 0.0
    %2158 = vmatpush2.msra.mxu0 0.0
    %2159 = vmatprep.subr.mxu0 0.0
    %2160 = vmatpush2.msra.mxu0 0.0
    %2161 = vmatprep.subr.mxu0 0.0
    %2162 = vmatpush2.msra.mxu0 0.0
    %2163 = vmatprep.subr.mxu0 0.0
    %2164 = vmatpush2.msra.mxu0 0.0
    %2165 = vmatprep.subr.mxu0 0.0
    %2166 = vmatpush2.msra.mxu0 0.0
    %2167 = vmatprep.subr.mxu0 0.0
    %2168 = vmatpush2.msra.mxu0 0.0
    %2169 = vmatprep.subr.mxu0 0.0
    %2170 = vmatpush2.msra.mxu0 0.0
    %2171 = vmatprep.subr.mxu0 0.0
    %2172 = vmatpush2.msra.mxu0 0.0
    %2173 = vmatprep.subr.mxu0 0.0
    %2174 = vmatpush2.msra.mxu0 0.0
    %2175 = vmatprep.mubr.f32.mxu0 0.0
    %v2176 = vand.u32 %v1575, 4294901760
    %2177 = vmatmul.mubr.f32.gmra.mxu0 %v2176
    %v2178 = vpop.f32.mrf.mxu0
    %v2179 = vadd.f32 %v2049, %v2178
    %v2180 = vpop.f32.mrf.mxu0
    %2181 = vmatprep.mubr.f32.mxu0 0.0
    %v2182 = vand.u32 %v1577, 4294901760
    %2183 = vmatmul.mubr.f32.gmra.mxu0 %v2182
    %v2184 = vpop.f32.mrf.mxu0
    %v2185 = vadd.f32 %v2057, %v2184
    %v2186 = vpop.f32.mrf.mxu0
    %2187 = vmatprep.mubr.f32.mxu0 0.0
    %v2188 = vand.u32 %v1579, 4294901760
    %2189 = vmatmul.mubr.f32.gmra.mxu0 %v2188
    %v2190 = vpop.f32.mrf.mxu0
    %v2191 = vadd.f32 %v2065, %v2190
    %v2192 = vpop.f32.mrf.mxu0
    %2193 = vmatprep.mubr.f32.mxu0 0.0
    %v2194 = vand.u32 %v1581, 4294901760
    %2195 = vmatmul.mubr.f32.gmra.mxu0 %v2194
    %v2196 = vpop.f32.mrf.mxu0
    %v2197 = vadd.f32 %v2073, %v2196
    %v2198 = vpop.f32.mrf.mxu0
    %2199 = vmatprep.mubr.f32.mxu0 0.0
    %v2200 = vand.u32 %v1583, 4294901760
    %2201 = vmatmul.mubr.f32.gmra.mxu0 %v2200
    %v2202 = vpop.f32.mrf.mxu0
    %v2203 = vadd.f32 %v2081, %v2202
    %v2204 = vpop.f32.mrf.mxu0
    %2205 = vmatprep.mubr.f32.mxu0 0.0
    %v2206 = vand.u32 %v1585, 4294901760
    %2207 = vmatmul.mubr.f32.gmra.mxu0 %v2206
    %v2208 = vpop.f32.mrf.mxu0
    %v2209 = vadd.f32 %v2089, %v2208
    %v2210 = vpop.f32.mrf.mxu0
    %2211 = vmatprep.mubr.f32.mxu0 0.0
    %v2212 = vand.u32 %v1587, 4294901760
    %2213 = vmatmul.mubr.f32.gmra.mxu0 %v2212
    %v2214 = vpop.f32.mrf.mxu0
    %v2215 = vadd.f32 %v2097, %v2214
    %v2216 = vpop.f32.mrf.mxu0
    %2217 = vmatprep.mubr.f32.mxu0 0.0
    %v2218 = vand.u32 %v1589, 4294901760
    %2219 = vmatmul.mubr.f32.gmra.mxu0 %v2218
    %v2220 = vpop.f32.mrf.mxu0
    %v2221 = vadd.f32 %v2105, %v2220
    %v2222 = vpop.f32.mrf.mxu0
    %2223 = vdwg.mxu0
    %2224 = vmatprep.subr.mxu0 0.0
    %2225 = vmatpush1.msra.mxu0 0.0
    %2226 = vmatprep.subr.mxu0 0.0
    %2227 = vmatpush1.msra.mxu0 0.0
    %2228 = vmatprep.subr.mxu0 0.0
    %2229 = vmatpush1.msra.mxu0 0.0
    %2230 = vmatprep.subr.mxu0 0.0
    %2231 = vmatpush1.msra.mxu0 0.0
    %2232 = vmatprep.subr.mxu0 0.0
    %2233 = vmatpush1.msra.mxu0 0.0
    %2234 = vmatprep.subr.mxu0 0.0
    %2235 = vmatpush1.msra.mxu0 0.0
    %2236 = vmatprep.subr.mxu0 0.0
    %2237 = vmatpush1.msra.mxu0 0.0
    %2238 = vmatprep.subr.mxu0 0.0
    %2239 = vmatpush1.msra.mxu0 0.0
    %2240 = vmatprep.subr.mxu0 0.0
    %2241 = vmatpush1.msra.mxu0 0.0
    %2242 = vmatprep.subr.mxu0 0.0
    %2243 = vmatpush1.msra.mxu0 0.0
    %2244 = vmatprep.subr.mxu0 0.0
    %2245 = vmatpush1.msra.mxu0 0.0
    %2246 = vmatprep.subr.mxu0 0.0
    %2247 = vmatpush1.msra.mxu0 0.0
    %2248 = vmatprep.subr.mxu0 0.0
    %2249 = vmatpush1.msra.mxu0 0.0
    %2250 = vmatprep.subr.mxu0 0.0
    %2251 = vmatpush1.msra.mxu0 0.0
    %2252 = vmatprep.subr.mxu0 0.0
    %2253 = vmatpush1.msra.mxu0 0.0
    %2254 = vmatprep.subr.mxu0 0.0
    %v2255 = vand.u32 %v1573, 4294901760
    %2256 = vmatpush1.msra.mxu0 %v2255
    %2257 = vmatprep.subr.mxu0 0.0
    %2258 = vmatpush2.msra.mxu0 0.0
    %2259 = vmatprep.subr.mxu0 0.0
    %2260 = vmatpush2.msra.mxu0 0.0
    %2261 = vmatprep.subr.mxu0 0.0
    %2262 = vmatpush2.msra.mxu0 0.0
    %2263 = vmatprep.subr.mxu0 0.0
    %2264 = vmatpush2.msra.mxu0 0.0
    %2265 = vmatprep.subr.mxu0 0.0
    %2266 = vmatpush2.msra.mxu0 0.0
    %2267 = vmatprep.subr.mxu0 0.0
    %2268 = vmatpush2.msra.mxu0 0.0
    %2269 = vmatprep.subr.mxu0 0.0
    %2270 = vmatpush2.msra.mxu0 0.0
    %2271 = vmatprep.subr.mxu0 0.0
    %2272 = vmatpush2.msra.mxu0 0.0
    %2273 = vmatprep.subr.mxu0 0.0
    %2274 = vmatpush2.msra.mxu0 0.0
    %2275 = vmatprep.subr.mxu0 0.0
    %2276 = vmatpush2.msra.mxu0 0.0
    %2277 = vmatprep.subr.mxu0 0.0
    %2278 = vmatpush2.msra.mxu0 0.0
    %2279 = vmatprep.subr.mxu0 0.0
    %2280 = vmatpush2.msra.mxu0 0.0
    %2281 = vmatprep.subr.mxu0 0.0
    %2282 = vmatpush2.msra.mxu0 0.0
    %2283 = vmatprep.subr.mxu0 0.0
    %2284 = vmatpush2.msra.mxu0 0.0
    %2285 = vmatprep.subr.mxu0 0.0
    %2286 = vmatpush2.msra.mxu0 0.0
    %2287 = vmatprep.subr.mxu0 0.0
    %2288 = vmatpush2.msra.mxu0 0.0
    %2289 = vmatprep.mubr.f32.mxu0 0.0
    %v2290 = vand.u32 %v1575, 4294901760
    %2291 = vmatmul.mubr.f32.gmra.mxu0 %v2290
    %v2292 = vpop.f32.mrf.mxu0
    %v2293 = vadd.f32 %v2179, %v2292
    %v2294 = vpop.f32.mrf.mxu0
    %2295 = vmatprep.mubr.f32.mxu0 0.0
    %v2296 = vand.u32 %v1577, 4294901760
    %2297 = vmatmul.mubr.f32.gmra.mxu0 %v2296
    %v2298 = vpop.f32.mrf.mxu0
    %v2299 = vadd.f32 %v2185, %v2298
    %v2300 = vpop.f32.mrf.mxu0
    %2301 = vmatprep.mubr.f32.mxu0 0.0
    %v2302 = vand.u32 %v1579, 4294901760
    %2303 = vmatmul.mubr.f32.gmra.mxu0 %v2302
    %v2304 = vpop.f32.mrf.mxu0
    %v2305 = vadd.f32 %v2191, %v2304
    %v2306 = vpop.f32.mrf.mxu0
    %2307 = vmatprep.mubr.f32.mxu0 0.0
    %v2308 = vand.u32 %v1581, 4294901760
    %2309 = vmatmul.mubr.f32.gmra.mxu0 %v2308
    %v2310 = vpop.f32.mrf.mxu0
    %v2311 = vadd.f32 %v2197, %v2310
    %v2312 = vpop.f32.mrf.mxu0
    %2313 = vmatprep.mubr.f32.mxu0 0.0
    %v2314 = vand.u32 %v1583, 4294901760
    %2315 = vmatmul.mubr.f32.gmra.mxu0 %v2314
    %v2316 = vpop.f32.mrf.mxu0
    %v2317 = vadd.f32 %v2203, %v2316
    %v2318 = vpop.f32.mrf.mxu0
    %2319 = vmatprep.mubr.f32.mxu0 0.0
    %v2320 = vand.u32 %v1585, 4294901760
    %2321 = vmatmul.mubr.f32.gmra.mxu0 %v2320
    %v2322 = vpop.f32.mrf.mxu0
    %v2323 = vadd.f32 %v2209, %v2322
    %v2324 = vpop.f32.mrf.mxu0
    %2325 = vmatprep.mubr.f32.mxu0 0.0
    %v2326 = vand.u32 %v1587, 4294901760
    %2327 = vmatmul.mubr.f32.gmra.mxu0 %v2326
    %v2328 = vpop.f32.mrf.mxu0
    %v2329 = vadd.f32 %v2215, %v2328
    %v2330 = vpop.f32.mrf.mxu0
    %2331 = vmatprep.mubr.f32.mxu0 0.0
    %v2332 = vand.u32 %v1589, 4294901760
    %2333 = vmatmul.mubr.f32.gmra.mxu0 %v2332
    %v2334 = vpop.f32.mrf.mxu0
    %v2335 = vadd.f32 %v2221, %v2334
    %v2336 = vpop.f32.mrf.mxu0
    %2337 = vdwg.mxu0
    %v2338 = vxor.u32 %v2293, 2147483648
    %v2339 = vxor.u32 %v2299, 2147483648
    %v2340 = vxor.u32 %v2305, 2147483648
    %v2341 = vxor.u32 %v2311, 2147483648
    %v2342 = vxor.u32 %v2317, 2147483648
    %v2343 = vxor.u32 %v2323, 2147483648
    %v2344 = vxor.u32 %v2329, 2147483648
    %v2345 = vxor.u32 %v2335, 2147483648
    %v2346 = vmul.f32 %v2338, 1.442695
    %v2347 = vpow.pop %v2346
    %v2348 = vmul.f32 %v2339, 1.442695
    %v2349 = vpow.pop %v2348
    %v2350 = vmul.f32 %v2340, 1.442695
    %v2351 = vpow.pop %v2350
    %v2352 = vmul.f32 %v2341, 1.442695
    %v2353 = vpow.pop %v2352
    %v2354 = vmul.f32 %v2342, 1.442695
    %v2355 = vpow.pop %v2354
    %v2356 = vmul.f32 %v2343, 1.442695
    %v2357 = vpow.pop %v2356
    %v2358 = vmul.f32 %v2344, 1.442695
    %v2359 = vpow.pop %v2358
    %v2360 = vmul.f32 %v2345, 1.442695
    %v2361 = vpow.pop %v2360
    %v2362 = vadd.f32 %v2347, 1.0
    %v2363 = vadd.f32 %v2349, 1.0
    %v2364 = vadd.f32 %v2351, 1.0
    %v2365 = vadd.f32 %v2353, 1.0
    %v2366 = vadd.f32 %v2355, 1.0
    %v2367 = vadd.f32 %v2357, 1.0
    %v2368 = vadd.f32 %v2359, 1.0
    %v2369 = vadd.f32 %v2361, 1.0
    %v2370 = vrcp.pop %v2362
    %v2371 = vmul.f32 1.0, %v2370
    %v2372 = vrcp.pop %v2363
    %v2373 = vmul.f32 1.0, %v2372
    %v2374 = vrcp.pop %v2364
    %v2375 = vmul.f32 1.0, %v2374
    %v2376 = vrcp.pop %v2365
    %v2377 = vmul.f32 1.0, %v2376
    %v2378 = vrcp.pop %v2366
    %v2379 = vmul.f32 1.0, %v2378
    %v2380 = vrcp.pop %v2367
    %v2381 = vmul.f32 1.0, %v2380
    %v2382 = vrcp.pop %v2368
    %v2383 = vmul.f32 1.0, %v2382
    %v2384 = vrcp.pop %v2369
    %v2385 = vmul.f32 1.0, %v2384
    %vm2386 = vcmask 130048
    %v2387 = vsel %vm2386, %v155, 0.0
    %2388 = vadd.xlane.f32.xlu0 %v2387
    %v2389 = vpop.xlane.xlu0 %2388
    %v2390 = vsel %vm2386, %v160, 0.0
    %2391 = vadd.xlane.f32.xlu0 %v2390
    %v2392 = vpop.xlane.xlu0 %2391
    %v2393 = vsel %vm2386, %v165, 0.0
    %2394 = vadd.xlane.f32.xlu0 %v2393
    %v2395 = vpop.xlane.xlu0 %2394
    %v2396 = vsel %vm2386, %v170, 0.0
    %2397 = vadd.xlane.f32.xlu0 %v2396
    %v2398 = vpop.xlane.xlu0 %2397
    %v2399 = vsel %vm2386, %v175, 0.0
    %2400 = vadd.xlane.f32.xlu0 %v2399
    %v2401 = vpop.xlane.xlu0 %2400
    %v2402 = vsel %vm2386, %v180, 0.0
    %2403 = vadd.xlane.f32.xlu0 %v2402
    %v2404 = vpop.xlane.xlu0 %2403
    %v2405 = vsel %vm2386, %v185, 0.0
    %2406 = vadd.xlane.f32.xlu0 %v2405
    %v2407 = vpop.xlane.xlu0 %2406
    %v2408 = vsel %vm2386, %v190, 0.0
    %2409 = vadd.xlane.f32.xlu0 %v2408
    %v2410 = vpop.xlane.xlu0 %2409
    %v2411 = vrcp.pop 16.0
    %v2412 = vmul.f32 %v2389, %v2411
    %v2413 = vmul.f32 %v2392, %v2411
    %v2414 = vmul.f32 %v2395, %v2411
    %v2415 = vmul.f32 %v2398, %v2411
    %v2416 = vmul.f32 %v2401, %v2411
    %v2417 = vmul.f32 %v2404, %v2411
    %v2418 = vmul.f32 %v2407, %v2411
    %v2419 = vmul.f32 %v2410, %v2411
    %v2421 = vsel %vm193, %v62, 0
    %2423 = vmatprep.subr.mxu0 0.0
    %2424 = vmatpush1.msra.mxu0 0.0
    %2425 = vmatprep.subr.mxu0 0.0
    %2426 = vmatpush1.msra.mxu0 0.0
    %2427 = vmatprep.subr.mxu0 0.0
    %2428 = vmatpush1.msra.mxu0 0.0
    %2429 = vmatprep.subr.mxu0 0.0
    %2430 = vmatpush1.msra.mxu0 0.0
    %2431 = vmatprep.subr.mxu0 0.0
    %2432 = vmatpush1.msra.mxu0 0.0
    %2433 = vmatprep.subr.mxu0 0.0
    %2434 = vmatpush1.msra.mxu0 0.0
    %2435 = vmatprep.subr.mxu0 0.0
    %2436 = vmatpush1.msra.mxu0 0.0
    %2437 = vmatprep.subr.mxu0 0.0
    %2438 = vmatpush1.msra.mxu0 0.0
    %2439 = vmatprep.subr.mxu0 0.0
    %v2440 = vand.u32 %v2419, 4294901760
    %2441 = vmatpush1.msra.mxu0 %v2440
    %2442 = vmatprep.subr.mxu0 0.0
    %v2443 = vand.u32 %v2418, 4294901760
    %2444 = vmatpush1.msra.mxu0 %v2443
    %2445 = vmatprep.subr.mxu0 0.0
    %v2446 = vand.u32 %v2417, 4294901760
    %2447 = vmatpush1.msra.mxu0 %v2446
    %2448 = vmatprep.subr.mxu0 0.0
    %v2449 = vand.u32 %v2416, 4294901760
    %2450 = vmatpush1.msra.mxu0 %v2449
    %2451 = vmatprep.subr.mxu0 0.0
    %v2452 = vand.u32 %v2415, 4294901760
    %2453 = vmatpush1.msra.mxu0 %v2452
    %2454 = vmatprep.subr.mxu0 0.0
    %v2455 = vand.u32 %v2414, 4294901760
    %2456 = vmatpush1.msra.mxu0 %v2455
    %2457 = vmatprep.subr.mxu0 0.0
    %v2458 = vand.u32 %v2413, 4294901760
    %2459 = vmatpush1.msra.mxu0 %v2458
    %2460 = vmatprep.subr.mxu0 0.0
    %v2461 = vand.u32 %v2412, 4294901760
    %2462 = vmatpush1.msra.mxu0 %v2461
    %2463 = vmatprep.subr.mxu0 0.0
    %2464 = vmatpush2.msra.mxu0 0.0
    %2465 = vmatprep.subr.mxu0 0.0
    %2466 = vmatpush2.msra.mxu0 0.0
    %2467 = vmatprep.subr.mxu0 0.0
    %2468 = vmatpush2.msra.mxu0 0.0
    %2469 = vmatprep.subr.mxu0 0.0
    %2470 = vmatpush2.msra.mxu0 0.0
    %2471 = vmatprep.subr.mxu0 0.0
    %2472 = vmatpush2.msra.mxu0 0.0
    %2473 = vmatprep.subr.mxu0 0.0
    %2474 = vmatpush2.msra.mxu0 0.0
    %2475 = vmatprep.subr.mxu0 0.0
    %2476 = vmatpush2.msra.mxu0 0.0
    %2477 = vmatprep.subr.mxu0 0.0
    %2478 = vmatpush2.msra.mxu0 0.0
    %2479 = vmatprep.subr.mxu0 0.0
    %2480 = vmatpush2.msra.mxu0 0.0
    %2481 = vmatprep.subr.mxu0 0.0
    %2482 = vmatpush2.msra.mxu0 0.0
    %2483 = vmatprep.subr.mxu0 0.0
    %2484 = vmatpush2.msra.mxu0 0.0
    %2485 = vmatprep.subr.mxu0 0.0
    %2486 = vmatpush2.msra.mxu0 0.0
    %2487 = vmatprep.subr.mxu0 0.0
    %2488 = vmatpush2.msra.mxu0 0.0
    %2489 = vmatprep.subr.mxu0 0.0
    %2490 = vmatpush2.msra.mxu0 0.0
    %2491 = vmatprep.subr.mxu0 0.0
    %2492 = vmatpush2.msra.mxu0 0.0
    %2493 = vmatprep.subr.mxu0 0.0
    %2494 = vmatpush2.msra.mxu0 0.0
    %2495 = vmatprep.mubr.f32.mxu0 0.0
    %v2496 = vand.u32 %v2421, 4294901760
    %v2497 = vsub.f32 %v2421, %v2496
    %v2498 = vand.u32 %v2497, 4294901760
    %v2499 = vsub.f32 %v2497, %v2498
    %v2500 = vand.u32 %v2499, 4294901760
    %2501 = vmatmul.mubr.f32.gmra.mxu0 %v2500
    %v2502 = vpop.f32.mrf.mxu0
    %v2503 = vadd.f32 0.0, %v2502
    %v2504 = vpop.f32.mrf.mxu0
    %2505 = vdwg.mxu0
    %2506 = vmatprep.subr.mxu0 0.0
    %2507 = vmatpush1.msra.mxu0 0.0
    %2508 = vmatprep.subr.mxu0 0.0
    %2509 = vmatpush1.msra.mxu0 0.0
    %2510 = vmatprep.subr.mxu0 0.0
    %2511 = vmatpush1.msra.mxu0 0.0
    %2512 = vmatprep.subr.mxu0 0.0
    %2513 = vmatpush1.msra.mxu0 0.0
    %2514 = vmatprep.subr.mxu0 0.0
    %2515 = vmatpush1.msra.mxu0 0.0
    %2516 = vmatprep.subr.mxu0 0.0
    %2517 = vmatpush1.msra.mxu0 0.0
    %2518 = vmatprep.subr.mxu0 0.0
    %2519 = vmatpush1.msra.mxu0 0.0
    %2520 = vmatprep.subr.mxu0 0.0
    %2521 = vmatpush1.msra.mxu0 0.0
    %2522 = vmatprep.subr.mxu0 0.0
    %v2523 = vand.u32 %v2419, 4294901760
    %v2524 = vsub.f32 %v2419, %v2523
    %v2525 = vand.u32 %v2524, 4294901760
    %v2526 = vsub.f32 %v2524, %v2525
    %v2527 = vand.u32 %v2526, 4294901760
    %2528 = vmatpush1.msra.mxu0 %v2527
    %2529 = vmatprep.subr.mxu0 0.0
    %v2530 = vand.u32 %v2418, 4294901760
    %v2531 = vsub.f32 %v2418, %v2530
    %v2532 = vand.u32 %v2531, 4294901760
    %v2533 = vsub.f32 %v2531, %v2532
    %v2534 = vand.u32 %v2533, 4294901760
    %2535 = vmatpush1.msra.mxu0 %v2534
    %2536 = vmatprep.subr.mxu0 0.0
    %v2537 = vand.u32 %v2417, 4294901760
    %v2538 = vsub.f32 %v2417, %v2537
    %v2539 = vand.u32 %v2538, 4294901760
    %v2540 = vsub.f32 %v2538, %v2539
    %v2541 = vand.u32 %v2540, 4294901760
    %2542 = vmatpush1.msra.mxu0 %v2541
    %2543 = vmatprep.subr.mxu0 0.0
    %v2544 = vand.u32 %v2416, 4294901760
    %v2545 = vsub.f32 %v2416, %v2544
    %v2546 = vand.u32 %v2545, 4294901760
    %v2547 = vsub.f32 %v2545, %v2546
    %v2548 = vand.u32 %v2547, 4294901760
    %2549 = vmatpush1.msra.mxu0 %v2548
    %2550 = vmatprep.subr.mxu0 0.0
    %v2551 = vand.u32 %v2415, 4294901760
    %v2552 = vsub.f32 %v2415, %v2551
    %v2553 = vand.u32 %v2552, 4294901760
    %v2554 = vsub.f32 %v2552, %v2553
    %v2555 = vand.u32 %v2554, 4294901760
    %2556 = vmatpush1.msra.mxu0 %v2555
    %2557 = vmatprep.subr.mxu0 0.0
    %v2558 = vand.u32 %v2414, 4294901760
    %v2559 = vsub.f32 %v2414, %v2558
    %v2560 = vand.u32 %v2559, 4294901760
    %v2561 = vsub.f32 %v2559, %v2560
    %v2562 = vand.u32 %v2561, 4294901760
    %2563 = vmatpush1.msra.mxu0 %v2562
    %2564 = vmatprep.subr.mxu0 0.0
    %v2565 = vand.u32 %v2413, 4294901760
    %v2566 = vsub.f32 %v2413, %v2565
    %v2567 = vand.u32 %v2566, 4294901760
    %v2568 = vsub.f32 %v2566, %v2567
    %v2569 = vand.u32 %v2568, 4294901760
    %2570 = vmatpush1.msra.mxu0 %v2569
    %2571 = vmatprep.subr.mxu0 0.0
    %v2572 = vand.u32 %v2412, 4294901760
    %v2573 = vsub.f32 %v2412, %v2572
    %v2574 = vand.u32 %v2573, 4294901760
    %v2575 = vsub.f32 %v2573, %v2574
    %v2576 = vand.u32 %v2575, 4294901760
    %2577 = vmatpush1.msra.mxu0 %v2576
    %2578 = vmatprep.subr.mxu0 0.0
    %2579 = vmatpush2.msra.mxu0 0.0
    %2580 = vmatprep.subr.mxu0 0.0
    %2581 = vmatpush2.msra.mxu0 0.0
    %2582 = vmatprep.subr.mxu0 0.0
    %2583 = vmatpush2.msra.mxu0 0.0
    %2584 = vmatprep.subr.mxu0 0.0
    %2585 = vmatpush2.msra.mxu0 0.0
    %2586 = vmatprep.subr.mxu0 0.0
    %2587 = vmatpush2.msra.mxu0 0.0
    %2588 = vmatprep.subr.mxu0 0.0
    %2589 = vmatpush2.msra.mxu0 0.0
    %2590 = vmatprep.subr.mxu0 0.0
    %2591 = vmatpush2.msra.mxu0 0.0
    %2592 = vmatprep.subr.mxu0 0.0
    %2593 = vmatpush2.msra.mxu0 0.0
    %2594 = vmatprep.subr.mxu0 0.0
    %2595 = vmatpush2.msra.mxu0 0.0
    %2596 = vmatprep.subr.mxu0 0.0
    %2597 = vmatpush2.msra.mxu0 0.0
    %2598 = vmatprep.subr.mxu0 0.0
    %2599 = vmatpush2.msra.mxu0 0.0
    %2600 = vmatprep.subr.mxu0 0.0
    %2601 = vmatpush2.msra.mxu0 0.0
    %2602 = vmatprep.subr.mxu0 0.0
    %2603 = vmatpush2.msra.mxu0 0.0
    %2604 = vmatprep.subr.mxu0 0.0
    %2605 = vmatpush2.msra.mxu0 0.0
    %2606 = vmatprep.subr.mxu0 0.0
    %2607 = vmatpush2.msra.mxu0 0.0
    %2608 = vmatprep.subr.mxu0 0.0
    %2609 = vmatpush2.msra.mxu0 0.0
    %2610 = vmatprep.mubr.f32.mxu0 0.0
    %v2611 = vand.u32 %v2421, 4294901760
    %2612 = vmatmul.mubr.f32.gmra.mxu0 %v2611
    %v2613 = vpop.f32.mrf.mxu0
    %v2614 = vadd.f32 %v2503, %v2613
    %v2615 = vpop.f32.mrf.mxu0
    %2616 = vdwg.mxu0
    %2617 = vmatprep.subr.mxu0 0.0
    %2618 = vmatpush1.msra.mxu0 0.0
    %2619 = vmatprep.subr.mxu0 0.0
    %2620 = vmatpush1.msra.mxu0 0.0
    %2621 = vmatprep.subr.mxu0 0.0
    %2622 = vmatpush1.msra.mxu0 0.0
    %2623 = vmatprep.subr.mxu0 0.0
    %2624 = vmatpush1.msra.mxu0 0.0
    %2625 = vmatprep.subr.mxu0 0.0
    %2626 = vmatpush1.msra.mxu0 0.0
    %2627 = vmatprep.subr.mxu0 0.0
    %2628 = vmatpush1.msra.mxu0 0.0
    %2629 = vmatprep.subr.mxu0 0.0
    %2630 = vmatpush1.msra.mxu0 0.0
    %2631 = vmatprep.subr.mxu0 0.0
    %2632 = vmatpush1.msra.mxu0 0.0
    %2633 = vmatprep.subr.mxu0 0.0
    %v2634 = vand.u32 %v2419, 4294901760
    %v2635 = vsub.f32 %v2419, %v2634
    %2636 = vmatpush1.msra.mxu0 %v2635
    %2637 = vmatprep.subr.mxu0 0.0
    %v2638 = vand.u32 %v2418, 4294901760
    %v2639 = vsub.f32 %v2418, %v2638
    %2640 = vmatpush1.msra.mxu0 %v2639
    %2641 = vmatprep.subr.mxu0 0.0
    %v2642 = vand.u32 %v2417, 4294901760
    %v2643 = vsub.f32 %v2417, %v2642
    %2644 = vmatpush1.msra.mxu0 %v2643
    %2645 = vmatprep.subr.mxu0 0.0
    %v2646 = vand.u32 %v2416, 4294901760
    %v2647 = vsub.f32 %v2416, %v2646
    %2648 = vmatpush1.msra.mxu0 %v2647
    %2649 = vmatprep.subr.mxu0 0.0
    %v2650 = vand.u32 %v2415, 4294901760
    %v2651 = vsub.f32 %v2415, %v2650
    %2652 = vmatpush1.msra.mxu0 %v2651
    %2653 = vmatprep.subr.mxu0 0.0
    %v2654 = vand.u32 %v2414, 4294901760
    %v2655 = vsub.f32 %v2414, %v2654
    %2656 = vmatpush1.msra.mxu0 %v2655
    %2657 = vmatprep.subr.mxu0 0.0
    %v2658 = vand.u32 %v2413, 4294901760
    %v2659 = vsub.f32 %v2413, %v2658
    %2660 = vmatpush1.msra.mxu0 %v2659
    %2661 = vmatprep.subr.mxu0 0.0
    %v2662 = vand.u32 %v2412, 4294901760
    %v2663 = vsub.f32 %v2412, %v2662
    %2664 = vmatpush1.msra.mxu0 %v2663
    %2665 = vmatprep.subr.mxu0 0.0
    %2666 = vmatpush2.msra.mxu0 0.0
    %2667 = vmatprep.subr.mxu0 0.0
    %2668 = vmatpush2.msra.mxu0 0.0
    %2669 = vmatprep.subr.mxu0 0.0
    %2670 = vmatpush2.msra.mxu0 0.0
    %2671 = vmatprep.subr.mxu0 0.0
    %2672 = vmatpush2.msra.mxu0 0.0
    %2673 = vmatprep.subr.mxu0 0.0
    %2674 = vmatpush2.msra.mxu0 0.0
    %2675 = vmatprep.subr.mxu0 0.0
    %2676 = vmatpush2.msra.mxu0 0.0
    %2677 = vmatprep.subr.mxu0 0.0
    %2678 = vmatpush2.msra.mxu0 0.0
    %2679 = vmatprep.subr.mxu0 0.0
    %2680 = vmatpush2.msra.mxu0 0.0
    %2681 = vmatprep.subr.mxu0 0.0
    %2682 = vmatpush2.msra.mxu0 0.0
    %2683 = vmatprep.subr.mxu0 0.0
    %2684 = vmatpush2.msra.mxu0 0.0
    %2685 = vmatprep.subr.mxu0 0.0
    %2686 = vmatpush2.msra.mxu0 0.0
    %2687 = vmatprep.subr.mxu0 0.0
    %2688 = vmatpush2.msra.mxu0 0.0
    %2689 = vmatprep.subr.mxu0 0.0
    %2690 = vmatpush2.msra.mxu0 0.0
    %2691 = vmatprep.subr.mxu0 0.0
    %2692 = vmatpush2.msra.mxu0 0.0
    %2693 = vmatprep.subr.mxu0 0.0
    %2694 = vmatpush2.msra.mxu0 0.0
    %2695 = vmatprep.subr.mxu0 0.0
    %2696 = vmatpush2.msra.mxu0 0.0
    %2697 = vmatprep.mubr.f32.mxu0 0.0
    %v2698 = vand.u32 %v2421, 4294901760
    %v2699 = vsub.f32 %v2421, %v2698
    %2700 = vmatmul.mubr.f32.gmra.mxu0 %v2699
    %v2701 = vpop.f32.mrf.mxu0
    %v2702 = vadd.f32 %v2614, %v2701
    %v2703 = vpop.f32.mrf.mxu0
    %2704 = vdwg.mxu0
    %2705 = vmatprep.subr.mxu0 0.0
    %2706 = vmatpush1.msra.mxu0 0.0
    %2707 = vmatprep.subr.mxu0 0.0
    %2708 = vmatpush1.msra.mxu0 0.0
    %2709 = vmatprep.subr.mxu0 0.0
    %2710 = vmatpush1.msra.mxu0 0.0
    %2711 = vmatprep.subr.mxu0 0.0
    %2712 = vmatpush1.msra.mxu0 0.0
    %2713 = vmatprep.subr.mxu0 0.0
    %2714 = vmatpush1.msra.mxu0 0.0
    %2715 = vmatprep.subr.mxu0 0.0
    %2716 = vmatpush1.msra.mxu0 0.0
    %2717 = vmatprep.subr.mxu0 0.0
    %2718 = vmatpush1.msra.mxu0 0.0
    %2719 = vmatprep.subr.mxu0 0.0
    %2720 = vmatpush1.msra.mxu0 0.0
    %2721 = vmatprep.subr.mxu0 0.0
    %v2722 = vand.u32 %v2419, 4294901760
    %2723 = vmatpush1.msra.mxu0 %v2722
    %2724 = vmatprep.subr.mxu0 0.0
    %v2725 = vand.u32 %v2418, 4294901760
    %2726 = vmatpush1.msra.mxu0 %v2725
    %2727 = vmatprep.subr.mxu0 0.0
    %v2728 = vand.u32 %v2417, 4294901760
    %2729 = vmatpush1.msra.mxu0 %v2728
    %2730 = vmatprep.subr.mxu0 0.0
    %v2731 = vand.u32 %v2416, 4294901760
    %2732 = vmatpush1.msra.mxu0 %v2731
    %2733 = vmatprep.subr.mxu0 0.0
    %v2734 = vand.u32 %v2415, 4294901760
    %2735 = vmatpush1.msra.mxu0 %v2734
    %2736 = vmatprep.subr.mxu0 0.0
    %v2737 = vand.u32 %v2414, 4294901760
    %2738 = vmatpush1.msra.mxu0 %v2737
    %2739 = vmatprep.subr.mxu0 0.0
    %v2740 = vand.u32 %v2413, 4294901760
    %2741 = vmatpush1.msra.mxu0 %v2740
    %2742 = vmatprep.subr.mxu0 0.0
    %v2743 = vand.u32 %v2412, 4294901760
    %2744 = vmatpush1.msra.mxu0 %v2743
    %2745 = vmatprep.subr.mxu0 0.0
    %2746 = vmatpush2.msra.mxu0 0.0
    %2747 = vmatprep.subr.mxu0 0.0
    %2748 = vmatpush2.msra.mxu0 0.0
    %2749 = vmatprep.subr.mxu0 0.0
    %2750 = vmatpush2.msra.mxu0 0.0
    %2751 = vmatprep.subr.mxu0 0.0
    %2752 = vmatpush2.msra.mxu0 0.0
    %2753 = vmatprep.subr.mxu0 0.0
    %2754 = vmatpush2.msra.mxu0 0.0
    %2755 = vmatprep.subr.mxu0 0.0
    %2756 = vmatpush2.msra.mxu0 0.0
    %2757 = vmatprep.subr.mxu0 0.0
    %2758 = vmatpush2.msra.mxu0 0.0
    %2759 = vmatprep.subr.mxu0 0.0
    %2760 = vmatpush2.msra.mxu0 0.0
    %2761 = vmatprep.subr.mxu0 0.0
    %2762 = vmatpush2.msra.mxu0 0.0
    %2763 = vmatprep.subr.mxu0 0.0
    %2764 = vmatpush2.msra.mxu0 0.0
    %2765 = vmatprep.subr.mxu0 0.0
    %2766 = vmatpush2.msra.mxu0 0.0
    %2767 = vmatprep.subr.mxu0 0.0
    %2768 = vmatpush2.msra.mxu0 0.0
    %2769 = vmatprep.subr.mxu0 0.0
    %2770 = vmatpush2.msra.mxu0 0.0
    %2771 = vmatprep.subr.mxu0 0.0
    %2772 = vmatpush2.msra.mxu0 0.0
    %2773 = vmatprep.subr.mxu0 0.0
    %2774 = vmatpush2.msra.mxu0 0.0
    %2775 = vmatprep.subr.mxu0 0.0
    %2776 = vmatpush2.msra.mxu0 0.0
    %2777 = vmatprep.mubr.f32.mxu0 0.0
    %v2778 = vand.u32 %v2421, 4294901760
    %v2779 = vsub.f32 %v2421, %v2778
    %v2780 = vand.u32 %v2779, 4294901760
    %2781 = vmatmul.mubr.f32.gmra.mxu0 %v2780
    %v2782 = vpop.f32.mrf.mxu0
    %v2783 = vadd.f32 %v2702, %v2782
    %v2784 = vpop.f32.mrf.mxu0
    %2785 = vdwg.mxu0
    %2786 = vmatprep.subr.mxu0 0.0
    %2787 = vmatpush1.msra.mxu0 0.0
    %2788 = vmatprep.subr.mxu0 0.0
    %2789 = vmatpush1.msra.mxu0 0.0
    %2790 = vmatprep.subr.mxu0 0.0
    %2791 = vmatpush1.msra.mxu0 0.0
    %2792 = vmatprep.subr.mxu0 0.0
    %2793 = vmatpush1.msra.mxu0 0.0
    %2794 = vmatprep.subr.mxu0 0.0
    %2795 = vmatpush1.msra.mxu0 0.0
    %2796 = vmatprep.subr.mxu0 0.0
    %2797 = vmatpush1.msra.mxu0 0.0
    %2798 = vmatprep.subr.mxu0 0.0
    %2799 = vmatpush1.msra.mxu0 0.0
    %2800 = vmatprep.subr.mxu0 0.0
    %2801 = vmatpush1.msra.mxu0 0.0
    %2802 = vmatprep.subr.mxu0 0.0
    %v2803 = vand.u32 %v2419, 4294901760
    %v2804 = vsub.f32 %v2419, %v2803
    %v2805 = vand.u32 %v2804, 4294901760
    %2806 = vmatpush1.msra.mxu0 %v2805
    %2807 = vmatprep.subr.mxu0 0.0
    %v2808 = vand.u32 %v2418, 4294901760
    %v2809 = vsub.f32 %v2418, %v2808
    %v2810 = vand.u32 %v2809, 4294901760
    %2811 = vmatpush1.msra.mxu0 %v2810
    %2812 = vmatprep.subr.mxu0 0.0
    %v2813 = vand.u32 %v2417, 4294901760
    %v2814 = vsub.f32 %v2417, %v2813
    %v2815 = vand.u32 %v2814, 4294901760
    %2816 = vmatpush1.msra.mxu0 %v2815
    %2817 = vmatprep.subr.mxu0 0.0
    %v2818 = vand.u32 %v2416, 4294901760
    %v2819 = vsub.f32 %v2416, %v2818
    %v2820 = vand.u32 %v2819, 4294901760
    %2821 = vmatpush1.msra.mxu0 %v2820
    %2822 = vmatprep.subr.mxu0 0.0
    %v2823 = vand.u32 %v2415, 4294901760
    %v2824 = vsub.f32 %v2415, %v2823
    %v2825 = vand.u32 %v2824, 4294901760
    %2826 = vmatpush1.msra.mxu0 %v2825
    %2827 = vmatprep.subr.mxu0 0.0
    %v2828 = vand.u32 %v2414, 4294901760
    %v2829 = vsub.f32 %v2414, %v2828
    %v2830 = vand.u32 %v2829, 4294901760
    %2831 = vmatpush1.msra.mxu0 %v2830
    %2832 = vmatprep.subr.mxu0 0.0
    %v2833 = vand.u32 %v2413, 4294901760
    %v2834 = vsub.f32 %v2413, %v2833
    %v2835 = vand.u32 %v2834, 4294901760
    %2836 = vmatpush1.msra.mxu0 %v2835
    %2837 = vmatprep.subr.mxu0 0.0
    %v2838 = vand.u32 %v2412, 4294901760
    %v2839 = vsub.f32 %v2412, %v2838
    %v2840 = vand.u32 %v2839, 4294901760
    %2841 = vmatpush1.msra.mxu0 %v2840
    %2842 = vmatprep.subr.mxu0 0.0
    %2843 = vmatpush2.msra.mxu0 0.0
    %2844 = vmatprep.subr.mxu0 0.0
    %2845 = vmatpush2.msra.mxu0 0.0
    %2846 = vmatprep.subr.mxu0 0.0
    %2847 = vmatpush2.msra.mxu0 0.0
    %2848 = vmatprep.subr.mxu0 0.0
    %2849 = vmatpush2.msra.mxu0 0.0
    %2850 = vmatprep.subr.mxu0 0.0
    %2851 = vmatpush2.msra.mxu0 0.0
    %2852 = vmatprep.subr.mxu0 0.0
    %2853 = vmatpush2.msra.mxu0 0.0
    %2854 = vmatprep.subr.mxu0 0.0
    %2855 = vmatpush2.msra.mxu0 0.0
    %2856 = vmatprep.subr.mxu0 0.0
    %2857 = vmatpush2.msra.mxu0 0.0
    %2858 = vmatprep.subr.mxu0 0.0
    %2859 = vmatpush2.msra.mxu0 0.0
    %2860 = vmatprep.subr.mxu0 0.0
    %2861 = vmatpush2.msra.mxu0 0.0
    %2862 = vmatprep.subr.mxu0 0.0
    %2863 = vmatpush2.msra.mxu0 0.0
    %2864 = vmatprep.subr.mxu0 0.0
    %2865 = vmatpush2.msra.mxu0 0.0
    %2866 = vmatprep.subr.mxu0 0.0
    %2867 = vmatpush2.msra.mxu0 0.0
    %2868 = vmatprep.subr.mxu0 0.0
    %2869 = vmatpush2.msra.mxu0 0.0
    %2870 = vmatprep.subr.mxu0 0.0
    %2871 = vmatpush2.msra.mxu0 0.0
    %2872 = vmatprep.subr.mxu0 0.0
    %2873 = vmatpush2.msra.mxu0 0.0
    %2874 = vmatprep.mubr.f32.mxu0 0.0
    %v2875 = vand.u32 %v2421, 4294901760
    %2876 = vmatmul.mubr.f32.gmra.mxu0 %v2875
    %v2877 = vpop.f32.mrf.mxu0
    %v2878 = vadd.f32 %v2783, %v2877
    %v2879 = vpop.f32.mrf.mxu0
    %2880 = vdwg.mxu0
    %2881 = vmatprep.subr.mxu0 0.0
    %2882 = vmatpush1.msra.mxu0 0.0
    %2883 = vmatprep.subr.mxu0 0.0
    %2884 = vmatpush1.msra.mxu0 0.0
    %2885 = vmatprep.subr.mxu0 0.0
    %2886 = vmatpush1.msra.mxu0 0.0
    %2887 = vmatprep.subr.mxu0 0.0
    %2888 = vmatpush1.msra.mxu0 0.0
    %2889 = vmatprep.subr.mxu0 0.0
    %2890 = vmatpush1.msra.mxu0 0.0
    %2891 = vmatprep.subr.mxu0 0.0
    %2892 = vmatpush1.msra.mxu0 0.0
    %2893 = vmatprep.subr.mxu0 0.0
    %2894 = vmatpush1.msra.mxu0 0.0
    %2895 = vmatprep.subr.mxu0 0.0
    %2896 = vmatpush1.msra.mxu0 0.0
    %2897 = vmatprep.subr.mxu0 0.0
    %v2898 = vand.u32 %v2419, 4294901760
    %2899 = vmatpush1.msra.mxu0 %v2898
    %2900 = vmatprep.subr.mxu0 0.0
    %v2901 = vand.u32 %v2418, 4294901760
    %2902 = vmatpush1.msra.mxu0 %v2901
    %2903 = vmatprep.subr.mxu0 0.0
    %v2904 = vand.u32 %v2417, 4294901760
    %2905 = vmatpush1.msra.mxu0 %v2904
    %2906 = vmatprep.subr.mxu0 0.0
    %v2907 = vand.u32 %v2416, 4294901760
    %2908 = vmatpush1.msra.mxu0 %v2907
    %2909 = vmatprep.subr.mxu0 0.0
    %v2910 = vand.u32 %v2415, 4294901760
    %2911 = vmatpush1.msra.mxu0 %v2910
    %2912 = vmatprep.subr.mxu0 0.0
    %v2913 = vand.u32 %v2414, 4294901760
    %2914 = vmatpush1.msra.mxu0 %v2913
    %2915 = vmatprep.subr.mxu0 0.0
    %v2916 = vand.u32 %v2413, 4294901760
    %2917 = vmatpush1.msra.mxu0 %v2916
    %2918 = vmatprep.subr.mxu0 0.0
    %v2919 = vand.u32 %v2412, 4294901760
    %2920 = vmatpush1.msra.mxu0 %v2919
    %2921 = vmatprep.subr.mxu0 0.0
    %2922 = vmatpush2.msra.mxu0 0.0
    %2923 = vmatprep.subr.mxu0 0.0
    %2924 = vmatpush2.msra.mxu0 0.0
    %2925 = vmatprep.subr.mxu0 0.0
    %2926 = vmatpush2.msra.mxu0 0.0
    %2927 = vmatprep.subr.mxu0 0.0
    %2928 = vmatpush2.msra.mxu0 0.0
    %2929 = vmatprep.subr.mxu0 0.0
    %2930 = vmatpush2.msra.mxu0 0.0
    %2931 = vmatprep.subr.mxu0 0.0
    %2932 = vmatpush2.msra.mxu0 0.0
    %2933 = vmatprep.subr.mxu0 0.0
    %2934 = vmatpush2.msra.mxu0 0.0
    %2935 = vmatprep.subr.mxu0 0.0
    %2936 = vmatpush2.msra.mxu0 0.0
    %2937 = vmatprep.subr.mxu0 0.0
    %2938 = vmatpush2.msra.mxu0 0.0
    %2939 = vmatprep.subr.mxu0 0.0
    %2940 = vmatpush2.msra.mxu0 0.0
    %2941 = vmatprep.subr.mxu0 0.0
    %2942 = vmatpush2.msra.mxu0 0.0
    %2943 = vmatprep.subr.mxu0 0.0
    %2944 = vmatpush2.msra.mxu0 0.0
    %2945 = vmatprep.subr.mxu0 0.0
    %2946 = vmatpush2.msra.mxu0 0.0
    %2947 = vmatprep.subr.mxu0 0.0
    %2948 = vmatpush2.msra.mxu0 0.0
    %2949 = vmatprep.subr.mxu0 0.0
    %2950 = vmatpush2.msra.mxu0 0.0
    %2951 = vmatprep.subr.mxu0 0.0
    %2952 = vmatpush2.msra.mxu0 0.0
    %2953 = vmatprep.mubr.f32.mxu0 0.0
    %v2954 = vand.u32 %v2421, 4294901760
    %2955 = vmatmul.mubr.f32.gmra.mxu0 %v2954
    %v2956 = vpop.f32.mrf.mxu0
    %v2957 = vadd.f32 %v2878, %v2956
    %v2958 = vpop.f32.mrf.mxu0
    %2959 = vdwg.mxu0
    %vm2960 = vcmp.ge.f32.partialorder %v2957, 0.0
    %v2961 = vmul.f32 %v2957, 0.1
    %v2962 = vsel %vm2960, %v2957, %v2961
    %2963 = vrot.lane.b32.xlu0 %v64, 112
    %v2964 = vpop.permute.xlu0 %2963
    %2965 = vrot.lane.b32.xlu0 %v65, 112
    %v2966 = vpop.permute.xlu0 %2965
    %2967 = vrot.lane.b32.xlu0 %v66, 112
    %v2968 = vpop.permute.xlu0 %2967
    %2969 = vrot.lane.b32.xlu0 %v67, 112
    %v2970 = vpop.permute.xlu0 %2969
    %2971 = vrot.lane.b32.xlu0 %v68, 112
    %v2972 = vpop.permute.xlu0 %2971
    %2973 = vrot.lane.b32.xlu0 %v69, 112
    %v2974 = vpop.permute.xlu0 %2973
    %2975 = vrot.lane.b32.xlu0 %v70, 112
    %v2976 = vpop.permute.xlu0 %2975
    %2977 = vrot.lane.b32.xlu0 %v71, 112
    %v2978 = vpop.permute.xlu0 %2977
    %v2979 = vsel %vm735, %v2964, 0
    %v2981 = vsel %vm735, %v2966, 0
    %v2983 = vsel %vm735, %v2968, 0
    %v2985 = vsel %vm735, %v2970, 0
    %v2987 = vsel %vm735, %v2972, 0
    %v2989 = vsel %vm735, %v2974, 0
    %v2991 = vsel %vm735, %v2976, 0
    %v2993 = vsel %vm735, %v2978, 0
    %2995 = vmatprep.subr.mxu0 0.0
    %2996 = vmatpush1.msra.mxu0 0.0
    %2997 = vmatprep.subr.mxu0 0.0
    %2998 = vmatpush1.msra.mxu0 0.0
    %2999 = vmatprep.subr.mxu0 0.0
    %3000 = vmatpush1.msra.mxu0 0.0
    %3001 = vmatprep.subr.mxu0 0.0
    %3002 = vmatpush1.msra.mxu0 0.0
    %3003 = vmatprep.subr.mxu0 0.0
    %3004 = vmatpush1.msra.mxu0 0.0
    %3005 = vmatprep.subr.mxu0 0.0
    %3006 = vmatpush1.msra.mxu0 0.0
    %3007 = vmatprep.subr.mxu0 0.0
    %3008 = vmatpush1.msra.mxu0 0.0
    %3009 = vmatprep.subr.mxu0 0.0
    %3010 = vmatpush1.msra.mxu0 0.0
    %3011 = vmatprep.subr.mxu0 0.0
    %3012 = vmatpush1.msra.mxu0 0.0
    %3013 = vmatprep.subr.mxu0 0.0
    %3014 = vmatpush1.msra.mxu0 0.0
    %3015 = vmatprep.subr.mxu0 0.0
    %3016 = vmatpush1.msra.mxu0 0.0
    %3017 = vmatprep.subr.mxu0 0.0
    %3018 = vmatpush1.msra.mxu0 0.0
    %3019 = vmatprep.subr.mxu0 0.0
    %3020 = vmatpush1.msra.mxu0 0.0
    %3021 = vmatprep.subr.mxu0 0.0
    %3022 = vmatpush1.msra.mxu0 0.0
    %3023 = vmatprep.subr.mxu0 0.0
    %3024 = vmatpush1.msra.mxu0 0.0
    %3025 = vmatprep.subr.mxu0 0.0
    %v3026 = vand.u32 %v2962, 4294901760
    %3027 = vmatpush1.msra.mxu0 %v3026
    %3028 = vmatprep.subr.mxu0 0.0
    %3029 = vmatpush2.msra.mxu0 0.0
    %3030 = vmatprep.subr.mxu0 0.0
    %3031 = vmatpush2.msra.mxu0 0.0
    %3032 = vmatprep.subr.mxu0 0.0
    %3033 = vmatpush2.msra.mxu0 0.0
    %3034 = vmatprep.subr.mxu0 0.0
    %3035 = vmatpush2.msra.mxu0 0.0
    %3036 = vmatprep.subr.mxu0 0.0
    %3037 = vmatpush2.msra.mxu0 0.0
    %3038 = vmatprep.subr.mxu0 0.0
    %3039 = vmatpush2.msra.mxu0 0.0
    %3040 = vmatprep.subr.mxu0 0.0
    %3041 = vmatpush2.msra.mxu0 0.0
    %3042 = vmatprep.subr.mxu0 0.0
    %3043 = vmatpush2.msra.mxu0 0.0
    %3044 = vmatprep.subr.mxu0 0.0
    %3045 = vmatpush2.msra.mxu0 0.0
    %3046 = vmatprep.subr.mxu0 0.0
    %3047 = vmatpush2.msra.mxu0 0.0
    %3048 = vmatprep.subr.mxu0 0.0
    %3049 = vmatpush2.msra.mxu0 0.0
    %3050 = vmatprep.subr.mxu0 0.0
    %3051 = vmatpush2.msra.mxu0 0.0
    %3052 = vmatprep.subr.mxu0 0.0
    %3053 = vmatpush2.msra.mxu0 0.0
    %3054 = vmatprep.subr.mxu0 0.0
    %3055 = vmatpush2.msra.mxu0 0.0
    %3056 = vmatprep.subr.mxu0 0.0
    %3057 = vmatpush2.msra.mxu0 0.0
    %3058 = vmatprep.subr.mxu0 0.0
    %3059 = vmatpush2.msra.mxu0 0.0
    %3060 = vmatprep.mubr.f32.mxu0 0.0
    %v3061 = vand.u32 %v2979, 4294901760
    %v3062 = vsub.f32 %v2979, %v3061
    %v3063 = vand.u32 %v3062, 4294901760
    %v3064 = vsub.f32 %v3062, %v3063
    %v3065 = vand.u32 %v3064, 4294901760
    %3066 = vmatmul.mubr.f32.gmra.mxu0 %v3065
    %v3067 = vpop.f32.mrf.mxu0
    %v3068 = vadd.f32 0.0, %v3067
    %v3069 = vpop.f32.mrf.mxu0
    %3070 = vmatprep.mubr.f32.mxu0 0.0
    %v3071 = vand.u32 %v2981, 4294901760
    %v3072 = vsub.f32 %v2981, %v3071
    %v3073 = vand.u32 %v3072, 4294901760
    %v3074 = vsub.f32 %v3072, %v3073
    %v3075 = vand.u32 %v3074, 4294901760
    %3076 = vmatmul.mubr.f32.gmra.mxu0 %v3075
    %v3077 = vpop.f32.mrf.mxu0
    %v3078 = vadd.f32 0.0, %v3077
    %v3079 = vpop.f32.mrf.mxu0
    %3080 = vmatprep.mubr.f32.mxu0 0.0
    %v3081 = vand.u32 %v2983, 4294901760
    %v3082 = vsub.f32 %v2983, %v3081
    %v3083 = vand.u32 %v3082, 4294901760
    %v3084 = vsub.f32 %v3082, %v3083
    %v3085 = vand.u32 %v3084, 4294901760
    %3086 = vmatmul.mubr.f32.gmra.mxu0 %v3085
    %v3087 = vpop.f32.mrf.mxu0
    %v3088 = vadd.f32 0.0, %v3087
    %v3089 = vpop.f32.mrf.mxu0
    %3090 = vmatprep.mubr.f32.mxu0 0.0
    %v3091 = vand.u32 %v2985, 4294901760
    %v3092 = vsub.f32 %v2985, %v3091
    %v3093 = vand.u32 %v3092, 4294901760
    %v3094 = vsub.f32 %v3092, %v3093
    %v3095 = vand.u32 %v3094, 4294901760
    %3096 = vmatmul.mubr.f32.gmra.mxu0 %v3095
    %v3097 = vpop.f32.mrf.mxu0
    %v3098 = vadd.f32 0.0, %v3097
    %v3099 = vpop.f32.mrf.mxu0
    %3100 = vmatprep.mubr.f32.mxu0 0.0
    %v3101 = vand.u32 %v2987, 4294901760
    %v3102 = vsub.f32 %v2987, %v3101
    %v3103 = vand.u32 %v3102, 4294901760
    %v3104 = vsub.f32 %v3102, %v3103
    %v3105 = vand.u32 %v3104, 4294901760
    %3106 = vmatmul.mubr.f32.gmra.mxu0 %v3105
    %v3107 = vpop.f32.mrf.mxu0
    %v3108 = vadd.f32 0.0, %v3107
    %v3109 = vpop.f32.mrf.mxu0
    %3110 = vmatprep.mubr.f32.mxu0 0.0
    %v3111 = vand.u32 %v2989, 4294901760
    %v3112 = vsub.f32 %v2989, %v3111
    %v3113 = vand.u32 %v3112, 4294901760
    %v3114 = vsub.f32 %v3112, %v3113
    %v3115 = vand.u32 %v3114, 4294901760
    %3116 = vmatmul.mubr.f32.gmra.mxu0 %v3115
    %v3117 = vpop.f32.mrf.mxu0
    %v3118 = vadd.f32 0.0, %v3117
    %v3119 = vpop.f32.mrf.mxu0
    %3120 = vmatprep.mubr.f32.mxu0 0.0
    %v3121 = vand.u32 %v2991, 4294901760
    %v3122 = vsub.f32 %v2991, %v3121
    %v3123 = vand.u32 %v3122, 4294901760
    %v3124 = vsub.f32 %v3122, %v3123
    %v3125 = vand.u32 %v3124, 4294901760
    %3126 = vmatmul.mubr.f32.gmra.mxu0 %v3125
    %v3127 = vpop.f32.mrf.mxu0
    %v3128 = vadd.f32 0.0, %v3127
    %v3129 = vpop.f32.mrf.mxu0
    %3130 = vmatprep.mubr.f32.mxu0 0.0
    %v3131 = vand.u32 %v2993, 4294901760
    %v3132 = vsub.f32 %v2993, %v3131
    %v3133 = vand.u32 %v3132, 4294901760
    %v3134 = vsub.f32 %v3132, %v3133
    %v3135 = vand.u32 %v3134, 4294901760
    %3136 = vmatmul.mubr.f32.gmra.mxu0 %v3135
    %v3137 = vpop.f32.mrf.mxu0
    %v3138 = vadd.f32 0.0, %v3137
    %v3139 = vpop.f32.mrf.mxu0
    %3140 = vdwg.mxu0
    %3141 = vmatprep.subr.mxu0 0.0
    %3142 = vmatpush1.msra.mxu0 0.0
    %3143 = vmatprep.subr.mxu0 0.0
    %3144 = vmatpush1.msra.mxu0 0.0
    %3145 = vmatprep.subr.mxu0 0.0
    %3146 = vmatpush1.msra.mxu0 0.0
    %3147 = vmatprep.subr.mxu0 0.0
    %3148 = vmatpush1.msra.mxu0 0.0
    %3149 = vmatprep.subr.mxu0 0.0
    %3150 = vmatpush1.msra.mxu0 0.0
    %3151 = vmatprep.subr.mxu0 0.0
    %3152 = vmatpush1.msra.mxu0 0.0
    %3153 = vmatprep.subr.mxu0 0.0
    %3154 = vmatpush1.msra.mxu0 0.0
    %3155 = vmatprep.subr.mxu0 0.0
    %3156 = vmatpush1.msra.mxu0 0.0
    %3157 = vmatprep.subr.mxu0 0.0
    %3158 = vmatpush1.msra.mxu0 0.0
    %3159 = vmatprep.subr.mxu0 0.0
    %3160 = vmatpush1.msra.mxu0 0.0
    %3161 = vmatprep.subr.mxu0 0.0
    %3162 = vmatpush1.msra.mxu0 0.0
    %3163 = vmatprep.subr.mxu0 0.0
    %3164 = vmatpush1.msra.mxu0 0.0
    %3165 = vmatprep.subr.mxu0 0.0
    %3166 = vmatpush1.msra.mxu0 0.0
    %3167 = vmatprep.subr.mxu0 0.0
    %3168 = vmatpush1.msra.mxu0 0.0
    %3169 = vmatprep.subr.mxu0 0.0
    %3170 = vmatpush1.msra.mxu0 0.0
    %3171 = vmatprep.subr.mxu0 0.0
    %v3172 = vand.u32 %v2962, 4294901760
    %v3173 = vsub.f32 %v2962, %v3172
    %v3174 = vand.u32 %v3173, 4294901760
    %v3175 = vsub.f32 %v3173, %v3174
    %v3176 = vand.u32 %v3175, 4294901760
    %3177 = vmatpush1.msra.mxu0 %v3176
    %3178 = vmatprep.subr.mxu0 0.0
    %3179 = vmatpush2.msra.mxu0 0.0
    %3180 = vmatprep.subr.mxu0 0.0
    %3181 = vmatpush2.msra.mxu0 0.0
    %3182 = vmatprep.subr.mxu0 0.0
    %3183 = vmatpush2.msra.mxu0 0.0
    %3184 = vmatprep.subr.mxu0 0.0
    %3185 = vmatpush2.msra.mxu0 0.0
    %3186 = vmatprep.subr.mxu0 0.0
    %3187 = vmatpush2.msra.mxu0 0.0
    %3188 = vmatprep.subr.mxu0 0.0
    %3189 = vmatpush2.msra.mxu0 0.0
    %3190 = vmatprep.subr.mxu0 0.0
    %3191 = vmatpush2.msra.mxu0 0.0
    %3192 = vmatprep.subr.mxu0 0.0
    %3193 = vmatpush2.msra.mxu0 0.0
    %3194 = vmatprep.subr.mxu0 0.0
    %3195 = vmatpush2.msra.mxu0 0.0
    %3196 = vmatprep.subr.mxu0 0.0
    %3197 = vmatpush2.msra.mxu0 0.0
    %3198 = vmatprep.subr.mxu0 0.0
    %3199 = vmatpush2.msra.mxu0 0.0
    %3200 = vmatprep.subr.mxu0 0.0
    %3201 = vmatpush2.msra.mxu0 0.0
    %3202 = vmatprep.subr.mxu0 0.0
    %3203 = vmatpush2.msra.mxu0 0.0
    %3204 = vmatprep.subr.mxu0 0.0
    %3205 = vmatpush2.msra.mxu0 0.0
    %3206 = vmatprep.subr.mxu0 0.0
    %3207 = vmatpush2.msra.mxu0 0.0
    %3208 = vmatprep.subr.mxu0 0.0
    %3209 = vmatpush2.msra.mxu0 0.0
    %3210 = vmatprep.mubr.f32.mxu0 0.0
    %v3211 = vand.u32 %v2979, 4294901760
    %3212 = vmatmul.mubr.f32.gmra.mxu0 %v3211
    %v3213 = vpop.f32.mrf.mxu0
    %v3214 = vadd.f32 %v3068, %v3213
    %v3215 = vpop.f32.mrf.mxu0
    %3216 = vmatprep.mubr.f32.mxu0 0.0
    %v3217 = vand.u32 %v2981, 4294901760
    %3218 = vmatmul.mubr.f32.gmra.mxu0 %v3217
    %v3219 = vpop.f32.mrf.mxu0
    %v3220 = vadd.f32 %v3078, %v3219
    %v3221 = vpop.f32.mrf.mxu0
    %3222 = vmatprep.mubr.f32.mxu0 0.0
    %v3223 = vand.u32 %v2983, 4294901760
    %3224 = vmatmul.mubr.f32.gmra.mxu0 %v3223
    %v3225 = vpop.f32.mrf.mxu0
    %v3226 = vadd.f32 %v3088, %v3225
    %v3227 = vpop.f32.mrf.mxu0
    %3228 = vmatprep.mubr.f32.mxu0 0.0
    %v3229 = vand.u32 %v2985, 4294901760
    %3230 = vmatmul.mubr.f32.gmra.mxu0 %v3229
    %v3231 = vpop.f32.mrf.mxu0
    %v3232 = vadd.f32 %v3098, %v3231
    %v3233 = vpop.f32.mrf.mxu0
    %3234 = vmatprep.mubr.f32.mxu0 0.0
    %v3235 = vand.u32 %v2987, 4294901760
    %3236 = vmatmul.mubr.f32.gmra.mxu0 %v3235
    %v3237 = vpop.f32.mrf.mxu0
    %v3238 = vadd.f32 %v3108, %v3237
    %v3239 = vpop.f32.mrf.mxu0
    %3240 = vmatprep.mubr.f32.mxu0 0.0
    %v3241 = vand.u32 %v2989, 4294901760
    %3242 = vmatmul.mubr.f32.gmra.mxu0 %v3241
    %v3243 = vpop.f32.mrf.mxu0
    %v3244 = vadd.f32 %v3118, %v3243
    %v3245 = vpop.f32.mrf.mxu0
    %3246 = vmatprep.mubr.f32.mxu0 0.0
    %v3247 = vand.u32 %v2991, 4294901760
    %3248 = vmatmul.mubr.f32.gmra.mxu0 %v3247
    %v3249 = vpop.f32.mrf.mxu0
    %v3250 = vadd.f32 %v3128, %v3249
    %v3251 = vpop.f32.mrf.mxu0
    %3252 = vmatprep.mubr.f32.mxu0 0.0
    %v3253 = vand.u32 %v2993, 4294901760
    %3254 = vmatmul.mubr.f32.gmra.mxu0 %v3253
    %v3255 = vpop.f32.mrf.mxu0
    %v3256 = vadd.f32 %v3138, %v3255
    %v3257 = vpop.f32.mrf.mxu0
    %3258 = vdwg.mxu0
    %3259 = vmatprep.subr.mxu0 0.0
    %3260 = vmatpush1.msra.mxu0 0.0
    %3261 = vmatprep.subr.mxu0 0.0
    %3262 = vmatpush1.msra.mxu0 0.0
    %3263 = vmatprep.subr.mxu0 0.0
    %3264 = vmatpush1.msra.mxu0 0.0
    %3265 = vmatprep.subr.mxu0 0.0
    %3266 = vmatpush1.msra.mxu0 0.0
    %3267 = vmatprep.subr.mxu0 0.0
    %3268 = vmatpush1.msra.mxu0 0.0
    %3269 = vmatprep.subr.mxu0 0.0
    %3270 = vmatpush1.msra.mxu0 0.0
    %3271 = vmatprep.subr.mxu0 0.0
    %3272 = vmatpush1.msra.mxu0 0.0
    %3273 = vmatprep.subr.mxu0 0.0
    %3274 = vmatpush1.msra.mxu0 0.0
    %3275 = vmatprep.subr.mxu0 0.0
    %3276 = vmatpush1.msra.mxu0 0.0
    %3277 = vmatprep.subr.mxu0 0.0
    %3278 = vmatpush1.msra.mxu0 0.0
    %3279 = vmatprep.subr.mxu0 0.0
    %3280 = vmatpush1.msra.mxu0 0.0
    %3281 = vmatprep.subr.mxu0 0.0
    %3282 = vmatpush1.msra.mxu0 0.0
    %3283 = vmatprep.subr.mxu0 0.0
    %3284 = vmatpush1.msra.mxu0 0.0
    %3285 = vmatprep.subr.mxu0 0.0
    %3286 = vmatpush1.msra.mxu0 0.0
    %3287 = vmatprep.subr.mxu0 0.0
    %3288 = vmatpush1.msra.mxu0 0.0
    %3289 = vmatprep.subr.mxu0 0.0
    %v3290 = vand.u32 %v2962, 4294901760
    %v3291 = vsub.f32 %v2962, %v3290
    %3292 = vmatpush1.msra.mxu0 %v3291
    %3293 = vmatprep.subr.mxu0 0.0
    %3294 = vmatpush2.msra.mxu0 0.0
    %3295 = vmatprep.subr.mxu0 0.0
    %3296 = vmatpush2.msra.mxu0 0.0
    %3297 = vmatprep.subr.mxu0 0.0
    %3298 = vmatpush2.msra.mxu0 0.0
    %3299 = vmatprep.subr.mxu0 0.0
    %3300 = vmatpush2.msra.mxu0 0.0
    %3301 = vmatprep.subr.mxu0 0.0
    %3302 = vmatpush2.msra.mxu0 0.0
    %3303 = vmatprep.subr.mxu0 0.0
    %3304 = vmatpush2.msra.mxu0 0.0
    %3305 = vmatprep.subr.mxu0 0.0
    %3306 = vmatpush2.msra.mxu0 0.0
    %3307 = vmatprep.subr.mxu0 0.0
    %3308 = vmatpush2.msra.mxu0 0.0
    %3309 = vmatprep.subr.mxu0 0.0
    %3310 = vmatpush2.msra.mxu0 0.0
    %3311 = vmatprep.subr.mxu0 0.0
    %3312 = vmatpush2.msra.mxu0 0.0
    %3313 = vmatprep.subr.mxu0 0.0
    %3314 = vmatpush2.msra.mxu0 0.0
    %3315 = vmatprep.subr.mxu0 0.0
    %3316 = vmatpush2.msra.mxu0 0.0
    %3317 = vmatprep.subr.mxu0 0.0
    %3318 = vmatpush2.msra.mxu0 0.0
    %3319 = vmatprep.subr.mxu0 0.0
    %3320 = vmatpush2.msra.mxu0 0.0
    %3321 = vmatprep.subr.mxu0 0.0
    %3322 = vmatpush2.msra.mxu0 0.0
    %3323 = vmatprep.subr.mxu0 0.0
    %3324 = vmatpush2.msra.mxu0 0.0
    %3325 = vmatprep.mubr.f32.mxu0 0.0
    %v3326 = vand.u32 %v2979, 4294901760
    %v3327 = vsub.f32 %v2979, %v3326
    %3328 = vmatmul.mubr.f32.gmra.mxu0 %v3327
    %v3329 = vpop.f32.mrf.mxu0
    %v3330 = vadd.f32 %v3214, %v3329
    %v3331 = vpop.f32.mrf.mxu0
    %3332 = vmatprep.mubr.f32.mxu0 0.0
    %v3333 = vand.u32 %v2981, 4294901760
    %v3334 = vsub.f32 %v2981, %v3333
    %3335 = vmatmul.mubr.f32.gmra.mxu0 %v3334
    %v3336 = vpop.f32.mrf.mxu0
    %v3337 = vadd.f32 %v3220, %v3336
    %v3338 = vpop.f32.mrf.mxu0
    %3339 = vmatprep.mubr.f32.mxu0 0.0
    %v3340 = vand.u32 %v2983, 4294901760
    %v3341 = vsub.f32 %v2983, %v3340
    %3342 = vmatmul.mubr.f32.gmra.mxu0 %v3341
    %v3343 = vpop.f32.mrf.mxu0
    %v3344 = vadd.f32 %v3226, %v3343
    %v3345 = vpop.f32.mrf.mxu0
    %3346 = vmatprep.mubr.f32.mxu0 0.0
    %v3347 = vand.u32 %v2985, 4294901760
    %v3348 = vsub.f32 %v2985, %v3347
    %3349 = vmatmul.mubr.f32.gmra.mxu0 %v3348
    %v3350 = vpop.f32.mrf.mxu0
    %v3351 = vadd.f32 %v3232, %v3350
    %v3352 = vpop.f32.mrf.mxu0
    %3353 = vmatprep.mubr.f32.mxu0 0.0
    %v3354 = vand.u32 %v2987, 4294901760
    %v3355 = vsub.f32 %v2987, %v3354
    %3356 = vmatmul.mubr.f32.gmra.mxu0 %v3355
    %v3357 = vpop.f32.mrf.mxu0
    %v3358 = vadd.f32 %v3238, %v3357
    %v3359 = vpop.f32.mrf.mxu0
    %3360 = vmatprep.mubr.f32.mxu0 0.0
    %v3361 = vand.u32 %v2989, 4294901760
    %v3362 = vsub.f32 %v2989, %v3361
    %3363 = vmatmul.mubr.f32.gmra.mxu0 %v3362
    %v3364 = vpop.f32.mrf.mxu0
    %v3365 = vadd.f32 %v3244, %v3364
    %v3366 = vpop.f32.mrf.mxu0
    %3367 = vmatprep.mubr.f32.mxu0 0.0
    %v3368 = vand.u32 %v2991, 4294901760
    %v3369 = vsub.f32 %v2991, %v3368
    %3370 = vmatmul.mubr.f32.gmra.mxu0 %v3369
    %v3371 = vpop.f32.mrf.mxu0
    %v3372 = vadd.f32 %v3250, %v3371
    %v3373 = vpop.f32.mrf.mxu0
    %3374 = vmatprep.mubr.f32.mxu0 0.0
    %v3375 = vand.u32 %v2993, 4294901760
    %v3376 = vsub.f32 %v2993, %v3375
    %3377 = vmatmul.mubr.f32.gmra.mxu0 %v3376
    %v3378 = vpop.f32.mrf.mxu0
    %v3379 = vadd.f32 %v3256, %v3378
    %v3380 = vpop.f32.mrf.mxu0
    %3381 = vdwg.mxu0
    %3382 = vmatprep.subr.mxu0 0.0
    %3383 = vmatpush1.msra.mxu0 0.0
    %3384 = vmatprep.subr.mxu0 0.0
    %3385 = vmatpush1.msra.mxu0 0.0
    %3386 = vmatprep.subr.mxu0 0.0
    %3387 = vmatpush1.msra.mxu0 0.0
    %3388 = vmatprep.subr.mxu0 0.0
    %3389 = vmatpush1.msra.mxu0 0.0
    %3390 = vmatprep.subr.mxu0 0.0
    %3391 = vmatpush1.msra.mxu0 0.0
    %3392 = vmatprep.subr.mxu0 0.0
    %3393 = vmatpush1.msra.mxu0 0.0
    %3394 = vmatprep.subr.mxu0 0.0
    %3395 = vmatpush1.msra.mxu0 0.0
    %3396 = vmatprep.subr.mxu0 0.0
    %3397 = vmatpush1.msra.mxu0 0.0
    %3398 = vmatprep.subr.mxu0 0.0
    %3399 = vmatpush1.msra.mxu0 0.0
    %3400 = vmatprep.subr.mxu0 0.0
    %3401 = vmatpush1.msra.mxu0 0.0
    %3402 = vmatprep.subr.mxu0 0.0
    %3403 = vmatpush1.msra.mxu0 0.0
    %3404 = vmatprep.subr.mxu0 0.0
    %3405 = vmatpush1.msra.mxu0 0.0
    %3406 = vmatprep.subr.mxu0 0.0
    %3407 = vmatpush1.msra.mxu0 0.0
    %3408 = vmatprep.subr.mxu0 0.0
    %3409 = vmatpush1.msra.mxu0 0.0
    %3410 = vmatprep.subr.mxu0 0.0
    %3411 = vmatpush1.msra.mxu0 0.0
    %3412 = vmatprep.subr.mxu0 0.0
    %v3413 = vand.u32 %v2962, 4294901760
    %3414 = vmatpush1.msra.mxu0 %v3413
    %3415 = vmatprep.subr.mxu0 0.0
    %3416 = vmatpush2.msra.mxu0 0.0
    %3417 = vmatprep.subr.mxu0 0.0
    %3418 = vmatpush2.msra.mxu0 0.0
    %3419 = vmatprep.subr.mxu0 0.0
    %3420 = vmatpush2.msra.mxu0 0.0
    %3421 = vmatprep.subr.mxu0 0.0
    %3422 = vmatpush2.msra.mxu0 0.0
    %3423 = vmatprep.subr.mxu0 0.0
    %3424 = vmatpush2.msra.mxu0 0.0
    %3425 = vmatprep.subr.mxu0 0.0
    %3426 = vmatpush2.msra.mxu0 0.0
    %3427 = vmatprep.subr.mxu0 0.0
    %3428 = vmatpush2.msra.mxu0 0.0
    %3429 = vmatprep.subr.mxu0 0.0
    %3430 = vmatpush2.msra.mxu0 0.0
    %3431 = vmatprep.subr.mxu0 0.0
    %3432 = vmatpush2.msra.mxu0 0.0
    %3433 = vmatprep.subr.mxu0 0.0
    %3434 = vmatpush2.msra.mxu0 0.0
    %3435 = vmatprep.subr.mxu0 0.0
    %3436 = vmatpush2.msra.mxu0 0.0
    %3437 = vmatprep.subr.mxu0 0.0
    %3438 = vmatpush2.msra.mxu0 0.0
    %3439 = vmatprep.subr.mxu0 0.0
    %3440 = vmatpush2.msra.mxu0 0.0
    %3441 = vmatprep.subr.mxu0 0.0
    %3442 = vmatpush2.msra.mxu0 0.0
    %3443 = vmatprep.subr.mxu0 0.0
    %3444 = vmatpush2.msra.mxu0 0.0
    %3445 = vmatprep.subr.mxu0 0.0
    %3446 = vmatpush2.msra.mxu0 0.0
    %3447 = vmatprep.mubr.f32.mxu0 0.0
    %v3448 = vand.u32 %v2979, 4294901760
    %v3449 = vsub.f32 %v2979, %v3448
    %v3450 = vand.u32 %v3449, 4294901760
    %3451 = vmatmul.mubr.f32.gmra.mxu0 %v3450
    %v3452 = vpop.f32.mrf.mxu0
    %v3453 = vadd.f32 %v3330, %v3452
    %v3454 = vpop.f32.mrf.mxu0
    %3455 = vmatprep.mubr.f32.mxu0 0.0
    %v3456 = vand.u32 %v2981, 4294901760
    %v3457 = vsub.f32 %v2981, %v3456
    %v3458 = vand.u32 %v3457, 4294901760
    %3459 = vmatmul.mubr.f32.gmra.mxu0 %v3458
    %v3460 = vpop.f32.mrf.mxu0
    %v3461 = vadd.f32 %v3337, %v3460
    %v3462 = vpop.f32.mrf.mxu0
    %3463 = vmatprep.mubr.f32.mxu0 0.0
    %v3464 = vand.u32 %v2983, 4294901760
    %v3465 = vsub.f32 %v2983, %v3464
    %v3466 = vand.u32 %v3465, 4294901760
    %3467 = vmatmul.mubr.f32.gmra.mxu0 %v3466
    %v3468 = vpop.f32.mrf.mxu0
    %v3469 = vadd.f32 %v3344, %v3468
    %v3470 = vpop.f32.mrf.mxu0
    %3471 = vmatprep.mubr.f32.mxu0 0.0
    %v3472 = vand.u32 %v2985, 4294901760
    %v3473 = vsub.f32 %v2985, %v3472
    %v3474 = vand.u32 %v3473, 4294901760
    %3475 = vmatmul.mubr.f32.gmra.mxu0 %v3474
    %v3476 = vpop.f32.mrf.mxu0
    %v3477 = vadd.f32 %v3351, %v3476
    %v3478 = vpop.f32.mrf.mxu0
    %3479 = vmatprep.mubr.f32.mxu0 0.0
    %v3480 = vand.u32 %v2987, 4294901760
    %v3481 = vsub.f32 %v2987, %v3480
    %v3482 = vand.u32 %v3481, 4294901760
    %3483 = vmatmul.mubr.f32.gmra.mxu0 %v3482
    %v3484 = vpop.f32.mrf.mxu0
    %v3485 = vadd.f32 %v3358, %v3484
    %v3486 = vpop.f32.mrf.mxu0
    %3487 = vmatprep.mubr.f32.mxu0 0.0
    %v3488 = vand.u32 %v2989, 4294901760
    %v3489 = vsub.f32 %v2989, %v3488
    %v3490 = vand.u32 %v3489, 4294901760
    %3491 = vmatmul.mubr.f32.gmra.mxu0 %v3490
    %v3492 = vpop.f32.mrf.mxu0
    %v3493 = vadd.f32 %v3365, %v3492
    %v3494 = vpop.f32.mrf.mxu0
    %3495 = vmatprep.mubr.f32.mxu0 0.0
    %v3496 = vand.u32 %v2991, 4294901760
    %v3497 = vsub.f32 %v2991, %v3496
    %v3498 = vand.u32 %v3497, 4294901760
    %3499 = vmatmul.mubr.f32.gmra.mxu0 %v3498
    %v3500 = vpop.f32.mrf.mxu0
    %v3501 = vadd.f32 %v3372, %v3500
    %v3502 = vpop.f32.mrf.mxu0
    %3503 = vmatprep.mubr.f32.mxu0 0.0
    %v3504 = vand.u32 %v2993, 4294901760
    %v3505 = vsub.f32 %v2993, %v3504
    %v3506 = vand.u32 %v3505, 4294901760
    %3507 = vmatmul.mubr.f32.gmra.mxu0 %v3506
    %v3508 = vpop.f32.mrf.mxu0
    %v3509 = vadd.f32 %v3379, %v3508
    %v3510 = vpop.f32.mrf.mxu0
    %3511 = vdwg.mxu0
    %3512 = vmatprep.subr.mxu0 0.0
    %3513 = vmatpush1.msra.mxu0 0.0
    %3514 = vmatprep.subr.mxu0 0.0
    %3515 = vmatpush1.msra.mxu0 0.0
    %3516 = vmatprep.subr.mxu0 0.0
    %3517 = vmatpush1.msra.mxu0 0.0
    %3518 = vmatprep.subr.mxu0 0.0
    %3519 = vmatpush1.msra.mxu0 0.0
    %3520 = vmatprep.subr.mxu0 0.0
    %3521 = vmatpush1.msra.mxu0 0.0
    %3522 = vmatprep.subr.mxu0 0.0
    %3523 = vmatpush1.msra.mxu0 0.0
    %3524 = vmatprep.subr.mxu0 0.0
    %3525 = vmatpush1.msra.mxu0 0.0
    %3526 = vmatprep.subr.mxu0 0.0
    %3527 = vmatpush1.msra.mxu0 0.0
    %3528 = vmatprep.subr.mxu0 0.0
    %3529 = vmatpush1.msra.mxu0 0.0
    %3530 = vmatprep.subr.mxu0 0.0
    %3531 = vmatpush1.msra.mxu0 0.0
    %3532 = vmatprep.subr.mxu0 0.0
    %3533 = vmatpush1.msra.mxu0 0.0
    %3534 = vmatprep.subr.mxu0 0.0
    %3535 = vmatpush1.msra.mxu0 0.0
    %3536 = vmatprep.subr.mxu0 0.0
    %3537 = vmatpush1.msra.mxu0 0.0
    %3538 = vmatprep.subr.mxu0 0.0
    %3539 = vmatpush1.msra.mxu0 0.0
    %3540 = vmatprep.subr.mxu0 0.0
    %3541 = vmatpush1.msra.mxu0 0.0
    %3542 = vmatprep.subr.mxu0 0.0
    %v3543 = vand.u32 %v2962, 4294901760
    %v3544 = vsub.f32 %v2962, %v3543
    %v3545 = vand.u32 %v3544, 4294901760
    %3546 = vmatpush1.msra.mxu0 %v3545
    %3547 = vmatprep.subr.mxu0 0.0
    %3548 = vmatpush2.msra.mxu0 0.0
    %3549 = vmatprep.subr.mxu0 0.0
    %3550 = vmatpush2.msra.mxu0 0.0
    %3551 = vmatprep.subr.mxu0 0.0
    %3552 = vmatpush2.msra.mxu0 0.0
    %3553 = vmatprep.subr.mxu0 0.0
    %3554 = vmatpush2.msra.mxu0 0.0
    %3555 = vmatprep.subr.mxu0 0.0
    %3556 = vmatpush2.msra.mxu0 0.0
    %3557 = vmatprep.subr.mxu0 0.0
    %3558 = vmatpush2.msra.mxu0 0.0
    %3559 = vmatprep.subr.mxu0 0.0
    %3560 = vmatpush2.msra.mxu0 0.0
    %3561 = vmatprep.subr.mxu0 0.0
    %3562 = vmatpush2.msra.mxu0 0.0
    %3563 = vmatprep.subr.mxu0 0.0
    %3564 = vmatpush2.msra.mxu0 0.0
    %3565 = vmatprep.subr.mxu0 0.0
    %3566 = vmatpush2.msra.mxu0 0.0
    %3567 = vmatprep.subr.mxu0 0.0
    %3568 = vmatpush2.msra.mxu0 0.0
    %3569 = vmatprep.subr.mxu0 0.0
    %3570 = vmatpush2.msra.mxu0 0.0
    %3571 = vmatprep.subr.mxu0 0.0
    %3572 = vmatpush2.msra.mxu0 0.0
    %3573 = vmatprep.subr.mxu0 0.0
    %3574 = vmatpush2.msra.mxu0 0.0
    %3575 = vmatprep.subr.mxu0 0.0
    %3576 = vmatpush2.msra.mxu0 0.0
    %3577 = vmatprep.subr.mxu0 0.0
    %3578 = vmatpush2.msra.mxu0 0.0
    %3579 = vmatprep.mubr.f32.mxu0 0.0
    %v3580 = vand.u32 %v2979, 4294901760
    %3581 = vmatmul.mubr.f32.gmra.mxu0 %v3580
    %v3582 = vpop.f32.mrf.mxu0
    %v3583 = vadd.f32 %v3453, %v3582
    %v3584 = vpop.f32.mrf.mxu0
    %3585 = vmatprep.mubr.f32.mxu0 0.0
    %v3586 = vand.u32 %v2981, 4294901760
    %3587 = vmatmul.mubr.f32.gmra.mxu0 %v3586
    %v3588 = vpop.f32.mrf.mxu0
    %v3589 = vadd.f32 %v3461, %v3588
    %v3590 = vpop.f32.mrf.mxu0
    %3591 = vmatprep.mubr.f32.mxu0 0.0
    %v3592 = vand.u32 %v2983, 4294901760
    %3593 = vmatmul.mubr.f32.gmra.mxu0 %v3592
    %v3594 = vpop.f32.mrf.mxu0
    %v3595 = vadd.f32 %v3469, %v3594
    %v3596 = vpop.f32.mrf.mxu0
    %3597 = vmatprep.mubr.f32.mxu0 0.0
    %v3598 = vand.u32 %v2985, 4294901760
    %3599 = vmatmul.mubr.f32.gmra.mxu0 %v3598
    %v3600 = vpop.f32.mrf.mxu0
    %v3601 = vadd.f32 %v3477, %v3600
    %v3602 = vpop.f32.mrf.mxu0
    %3603 = vmatprep.mubr.f32.mxu0 0.0
    %v3604 = vand.u32 %v2987, 4294901760
    %3605 = vmatmul.mubr.f32.gmra.mxu0 %v3604
    %v3606 = vpop.f32.mrf.mxu0
    %v3607 = vadd.f32 %v3485, %v3606
    %v3608 = vpop.f32.mrf.mxu0
    %3609 = vmatprep.mubr.f32.mxu0 0.0
    %v3610 = vand.u32 %v2989, 4294901760
    %3611 = vmatmul.mubr.f32.gmra.mxu0 %v3610
    %v3612 = vpop.f32.mrf.mxu0
    %v3613 = vadd.f32 %v3493, %v3612
    %v3614 = vpop.f32.mrf.mxu0
    %3615 = vmatprep.mubr.f32.mxu0 0.0
    %v3616 = vand.u32 %v2991, 4294901760
    %3617 = vmatmul.mubr.f32.gmra.mxu0 %v3616
    %v3618 = vpop.f32.mrf.mxu0
    %v3619 = vadd.f32 %v3501, %v3618
    %v3620 = vpop.f32.mrf.mxu0
    %3621 = vmatprep.mubr.f32.mxu0 0.0
    %v3622 = vand.u32 %v2993, 4294901760
    %3623 = vmatmul.mubr.f32.gmra.mxu0 %v3622
    %v3624 = vpop.f32.mrf.mxu0
    %v3625 = vadd.f32 %v3509, %v3624
    %v3626 = vpop.f32.mrf.mxu0
    %3627 = vdwg.mxu0
    %3628 = vmatprep.subr.mxu0 0.0
    %3629 = vmatpush1.msra.mxu0 0.0
    %3630 = vmatprep.subr.mxu0 0.0
    %3631 = vmatpush1.msra.mxu0 0.0
    %3632 = vmatprep.subr.mxu0 0.0
    %3633 = vmatpush1.msra.mxu0 0.0
    %3634 = vmatprep.subr.mxu0 0.0
    %3635 = vmatpush1.msra.mxu0 0.0
    %3636 = vmatprep.subr.mxu0 0.0
    %3637 = vmatpush1.msra.mxu0 0.0
    %3638 = vmatprep.subr.mxu0 0.0
    %3639 = vmatpush1.msra.mxu0 0.0
    %3640 = vmatprep.subr.mxu0 0.0
    %3641 = vmatpush1.msra.mxu0 0.0
    %3642 = vmatprep.subr.mxu0 0.0
    %3643 = vmatpush1.msra.mxu0 0.0
    %3644 = vmatprep.subr.mxu0 0.0
    %3645 = vmatpush1.msra.mxu0 0.0
    %3646 = vmatprep.subr.mxu0 0.0
    %3647 = vmatpush1.msra.mxu0 0.0
    %3648 = vmatprep.subr.mxu0 0.0
    %3649 = vmatpush1.msra.mxu0 0.0
    %3650 = vmatprep.subr.mxu0 0.0
    %3651 = vmatpush1.msra.mxu0 0.0
    %3652 = vmatprep.subr.mxu0 0.0
    %3653 = vmatpush1.msra.mxu0 0.0
    %3654 = vmatprep.subr.mxu0 0.0
    %3655 = vmatpush1.msra.mxu0 0.0
    %3656 = vmatprep.subr.mxu0 0.0
    %3657 = vmatpush1.msra.mxu0 0.0
    %3658 = vmatprep.subr.mxu0 0.0
    %v3659 = vand.u32 %v2962, 4294901760
    %3660 = vmatpush1.msra.mxu0 %v3659
    %3661 = vmatprep.subr.mxu0 0.0
    %3662 = vmatpush2.msra.mxu0 0.0
    %3663 = vmatprep.subr.mxu0 0.0
    %3664 = vmatpush2.msra.mxu0 0.0
    %3665 = vmatprep.subr.mxu0 0.0
    %3666 = vmatpush2.msra.mxu0 0.0
    %3667 = vmatprep.subr.mxu0 0.0
    %3668 = vmatpush2.msra.mxu0 0.0
    %3669 = vmatprep.subr.mxu0 0.0
    %3670 = vmatpush2.msra.mxu0 0.0
    %3671 = vmatprep.subr.mxu0 0.0
    %3672 = vmatpush2.msra.mxu0 0.0
    %3673 = vmatprep.subr.mxu0 0.0
    %3674 = vmatpush2.msra.mxu0 0.0
    %3675 = vmatprep.subr.mxu0 0.0
    %3676 = vmatpush2.msra.mxu0 0.0
    %3677 = vmatprep.subr.mxu0 0.0
    %3678 = vmatpush2.msra.mxu0 0.0
    %3679 = vmatprep.subr.mxu0 0.0
    %3680 = vmatpush2.msra.mxu0 0.0
    %3681 = vmatprep.subr.mxu0 0.0
    %3682 = vmatpush2.msra.mxu0 0.0
    %3683 = vmatprep.subr.mxu0 0.0
    %3684 = vmatpush2.msra.mxu0 0.0
    %3685 = vmatprep.subr.mxu0 0.0
    %3686 = vmatpush2.msra.mxu0 0.0
    %3687 = vmatprep.subr.mxu0 0.0
    %3688 = vmatpush2.msra.mxu0 0.0
    %3689 = vmatprep.subr.mxu0 0.0
    %3690 = vmatpush2.msra.mxu0 0.0
    %3691 = vmatprep.subr.mxu0 0.0
    %3692 = vmatpush2.msra.mxu0 0.0
    %3693 = vmatprep.mubr.f32.mxu0 0.0
    %v3694 = vand.u32 %v2979, 4294901760
    %3695 = vmatmul.mubr.f32.gmra.mxu0 %v3694
    %v3696 = vpop.f32.mrf.mxu0
    %v3697 = vadd.f32 %v3583, %v3696
    %v3698 = vpop.f32.mrf.mxu0
    %3699 = vmatprep.mubr.f32.mxu0 0.0
    %v3700 = vand.u32 %v2981, 4294901760
    %3701 = vmatmul.mubr.f32.gmra.mxu0 %v3700
    %v3702 = vpop.f32.mrf.mxu0
    %v3703 = vadd.f32 %v3589, %v3702
    %v3704 = vpop.f32.mrf.mxu0
    %3705 = vmatprep.mubr.f32.mxu0 0.0
    %v3706 = vand.u32 %v2983, 4294901760
    %3707 = vmatmul.mubr.f32.gmra.mxu0 %v3706
    %v3708 = vpop.f32.mrf.mxu0
    %v3709 = vadd.f32 %v3595, %v3708
    %v3710 = vpop.f32.mrf.mxu0
    %3711 = vmatprep.mubr.f32.mxu0 0.0
    %v3712 = vand.u32 %v2985, 4294901760
    %3713 = vmatmul.mubr.f32.gmra.mxu0 %v3712
    %v3714 = vpop.f32.mrf.mxu0
    %v3715 = vadd.f32 %v3601, %v3714
    %v3716 = vpop.f32.mrf.mxu0
    %3717 = vmatprep.mubr.f32.mxu0 0.0
    %v3718 = vand.u32 %v2987, 4294901760
    %3719 = vmatmul.mubr.f32.gmra.mxu0 %v3718
    %v3720 = vpop.f32.mrf.mxu0
    %v3721 = vadd.f32 %v3607, %v3720
    %v3722 = vpop.f32.mrf.mxu0
    %3723 = vmatprep.mubr.f32.mxu0 0.0
    %v3724 = vand.u32 %v2989, 4294901760
    %3725 = vmatmul.mubr.f32.gmra.mxu0 %v3724
    %v3726 = vpop.f32.mrf.mxu0
    %v3727 = vadd.f32 %v3613, %v3726
    %v3728 = vpop.f32.mrf.mxu0
    %3729 = vmatprep.mubr.f32.mxu0 0.0
    %v3730 = vand.u32 %v2991, 4294901760
    %3731 = vmatmul.mubr.f32.gmra.mxu0 %v3730
    %v3732 = vpop.f32.mrf.mxu0
    %v3733 = vadd.f32 %v3619, %v3732
    %v3734 = vpop.f32.mrf.mxu0
    %3735 = vmatprep.mubr.f32.mxu0 0.0
    %v3736 = vand.u32 %v2993, 4294901760
    %3737 = vmatmul.mubr.f32.gmra.mxu0 %v3736
    %v3738 = vpop.f32.mrf.mxu0
    %v3739 = vadd.f32 %v3625, %v3738
    %v3740 = vpop.f32.mrf.mxu0
    %3741 = vdwg.mxu0
    %v3742 = vxor.u32 %v3697, 2147483648
    %v3743 = vxor.u32 %v3703, 2147483648
    %v3744 = vxor.u32 %v3709, 2147483648
    %v3745 = vxor.u32 %v3715, 2147483648
    %v3746 = vxor.u32 %v3721, 2147483648
    %v3747 = vxor.u32 %v3727, 2147483648
    %v3748 = vxor.u32 %v3733, 2147483648
    %v3749 = vxor.u32 %v3739, 2147483648
    %v3750 = vmul.f32 %v3742, 1.442695
    %v3751 = vpow.pop %v3750
    %v3752 = vmul.f32 %v3743, 1.442695
    %v3753 = vpow.pop %v3752
    %v3754 = vmul.f32 %v3744, 1.442695
    %v3755 = vpow.pop %v3754
    %v3756 = vmul.f32 %v3745, 1.442695
    %v3757 = vpow.pop %v3756
    %v3758 = vmul.f32 %v3746, 1.442695
    %v3759 = vpow.pop %v3758
    %v3760 = vmul.f32 %v3747, 1.442695
    %v3761 = vpow.pop %v3760
    %v3762 = vmul.f32 %v3748, 1.442695
    %v3763 = vpow.pop %v3762
    %v3764 = vmul.f32 %v3749, 1.442695
    %v3765 = vpow.pop %v3764
    %v3766 = vadd.f32 %v3751, 1.0
    %v3767 = vadd.f32 %v3753, 1.0
    %v3768 = vadd.f32 %v3755, 1.0
    %v3769 = vadd.f32 %v3757, 1.0
    %v3770 = vadd.f32 %v3759, 1.0
    %v3771 = vadd.f32 %v3761, 1.0
    %v3772 = vadd.f32 %v3763, 1.0
    %v3773 = vadd.f32 %v3765, 1.0
    %v3774 = vrcp.pop %v3766
    %v3775 = vmul.f32 1.0, %v3774
    %v3776 = vrcp.pop %v3767
    %v3777 = vmul.f32 1.0, %v3776
    %v3778 = vrcp.pop %v3768
    %v3779 = vmul.f32 1.0, %v3778
    %v3780 = vrcp.pop %v3769
    %v3781 = vmul.f32 1.0, %v3780
    %v3782 = vrcp.pop %v3770
    %v3783 = vmul.f32 1.0, %v3782
    %v3784 = vrcp.pop %v3771
    %v3785 = vmul.f32 1.0, %v3784
    %v3786 = vrcp.pop %v3772
    %v3787 = vmul.f32 1.0, %v3786
    %v3788 = vrcp.pop %v3773
    %v3789 = vmul.f32 1.0, %v3788
    %v3791 = vsel %vm193, %v63, 0
    %3793 = vmatprep.subr.mxu0 0.0
    %3794 = vmatpush1.msra.mxu0 0.0
    %3795 = vmatprep.subr.mxu0 0.0
    %3796 = vmatpush1.msra.mxu0 0.0
    %3797 = vmatprep.subr.mxu0 0.0
    %3798 = vmatpush1.msra.mxu0 0.0
    %3799 = vmatprep.subr.mxu0 0.0
    %3800 = vmatpush1.msra.mxu0 0.0
    %3801 = vmatprep.subr.mxu0 0.0
    %3802 = vmatpush1.msra.mxu0 0.0
    %3803 = vmatprep.subr.mxu0 0.0
    %3804 = vmatpush1.msra.mxu0 0.0
    %3805 = vmatprep.subr.mxu0 0.0
    %3806 = vmatpush1.msra.mxu0 0.0
    %3807 = vmatprep.subr.mxu0 0.0
    %3808 = vmatpush1.msra.mxu0 0.0
    %3809 = vmatprep.subr.mxu0 %v87
    %3810 = vmatpush1.msra.mxu0 %v86
    %3811 = vmatprep.subr.mxu0 %v85
    %3812 = vmatpush1.msra.mxu0 %v84
    %3813 = vmatprep.subr.mxu0 %v83
    %3814 = vmatpush1.msra.mxu0 %v82
    %3815 = vmatprep.subr.mxu0 %v81
    %3816 = vmatpush1.msra.mxu0 %v80
    %3817 = vmatprep.subr.mxu0 %v79
    %3818 = vmatpush1.msra.mxu0 %v78
    %3819 = vmatprep.subr.mxu0 %v77
    %3820 = vmatpush1.msra.mxu0 %v76
    %3821 = vmatprep.subr.mxu0 %v75
    %3822 = vmatpush1.msra.mxu0 %v74
    %3823 = vmatprep.subr.mxu0 %v73
    %3824 = vmatpush1.msra.mxu0 %v72
    %3825 = vmatprep.subr.mxu0 0.0
    %3826 = vmatpush2.msra.mxu0 0.0
    %3827 = vmatprep.subr.mxu0 0.0
    %3828 = vmatpush2.msra.mxu0 0.0
    %3829 = vmatprep.subr.mxu0 0.0
    %3830 = vmatpush2.msra.mxu0 0.0
    %3831 = vmatprep.subr.mxu0 0.0
    %3832 = vmatpush2.msra.mxu0 0.0
    %3833 = vmatprep.subr.mxu0 0.0
    %3834 = vmatpush2.msra.mxu0 0.0
    %3835 = vmatprep.subr.mxu0 0.0
    %3836 = vmatpush2.msra.mxu0 0.0
    %3837 = vmatprep.subr.mxu0 0.0
    %3838 = vmatpush2.msra.mxu0 0.0
    %3839 = vmatprep.subr.mxu0 0.0
    %3840 = vmatpush2.msra.mxu0 0.0
    %3841 = vmatprep.subr.mxu0 0.0
    %3842 = vmatpush2.msra.mxu0 0.0
    %3843 = vmatprep.subr.mxu0 0.0
    %3844 = vmatpush2.msra.mxu0 0.0
    %3845 = vmatprep.subr.mxu0 0.0
    %3846 = vmatpush2.msra.mxu0 0.0
    %3847 = vmatprep.subr.mxu0 0.0
    %3848 = vmatpush2.msra.mxu0 0.0
    %3849 = vmatprep.subr.mxu0 0.0
    %3850 = vmatpush2.msra.mxu0 0.0
    %3851 = vmatprep.subr.mxu0 0.0
    %3852 = vmatpush2.msra.mxu0 0.0
    %3853 = vmatprep.subr.mxu0 0.0
    %3854 = vmatpush2.msra.mxu0 0.0
    %3855 = vmatprep.subr.mxu0 0.0
    %3856 = vmatpush2.msra.mxu0 0.0
    %3857 = vmatprep.mubr.f32.mxu0 0.0
    %3858 = vmatmul.mubr.f32.gmra.mxu0 %v3791
    %v3859 = vpop.f32.mrf.mxu0
    %v3860 = vadd.f32 0.0, %v3859
    %v3861 = vpop.f32.mrf.mxu0
    %v3862 = vadd.f32 0.0, %v3861
    %3863 = vdwg.mxu0
    %vm3864 = vcmp.ge.f32.partialorder %v3860, 0.0
    %vm3865 = vcmp.ge.f32.partialorder %v3862, 0.0
    %v3866 = vmul.f32 %v3860, 0.1
    %v3867 = vmul.f32 %v3862, 0.1
    %v3868 = vsel %vm3864, %v3860, %v3866
    %v3869 = vsel %vm3865, %v3862, %v3867
    %3870 = vrot.lane.b32.xlu0 %v64, 104
    %v3871 = vpop.permute.xlu0 %3870
    %3872 = vrot.lane.b32.xlu0 %v65, 104
    %v3873 = vpop.permute.xlu0 %3872
    %3874 = vrot.lane.b32.xlu0 %v66, 104
    %v3875 = vpop.permute.xlu0 %3874
    %3876 = vrot.lane.b32.xlu0 %v67, 104
    %v3877 = vpop.permute.xlu0 %3876
    %3878 = vrot.lane.b32.xlu0 %v68, 104
    %v3879 = vpop.permute.xlu0 %3878
    %3880 = vrot.lane.b32.xlu0 %v69, 104
    %v3881 = vpop.permute.xlu0 %3880
    %3882 = vrot.lane.b32.xlu0 %v70, 104
    %v3883 = vpop.permute.xlu0 %3882
    %3884 = vrot.lane.b32.xlu0 %v71, 104
    %v3885 = vpop.permute.xlu0 %3884
    %v3886 = vsel %vm735, %v3871, 0
    %v3888 = vsel %vm735, %v3873, 0
    %v3890 = vsel %vm735, %v3875, 0
    %v3892 = vsel %vm735, %v3877, 0
    %v3894 = vsel %vm735, %v3879, 0
    %v3896 = vsel %vm735, %v3881, 0
    %v3898 = vsel %vm735, %v3883, 0
    %v3900 = vsel %vm735, %v3885, 0
    %3902 = vmatprep.subr.mxu0 0.0
    %3903 = vmatpush1.msra.mxu0 0.0
    %3904 = vmatprep.subr.mxu0 0.0
    %3905 = vmatpush1.msra.mxu0 0.0
    %3906 = vmatprep.subr.mxu0 0.0
    %3907 = vmatpush1.msra.mxu0 0.0
    %3908 = vmatprep.subr.mxu0 0.0
    %3909 = vmatpush1.msra.mxu0 0.0
    %3910 = vmatprep.subr.mxu0 0.0
    %3911 = vmatpush1.msra.mxu0 0.0
    %3912 = vmatprep.subr.mxu0 0.0
    %3913 = vmatpush1.msra.mxu0 0.0
    %3914 = vmatprep.subr.mxu0 0.0
    %3915 = vmatpush1.msra.mxu0 0.0
    %3916 = vmatprep.subr.mxu0 0.0
    %3917 = vmatpush1.msra.mxu0 0.0
    %3918 = vmatprep.subr.mxu0 0.0
    %3919 = vmatpush1.msra.mxu0 0.0
    %3920 = vmatprep.subr.mxu0 0.0
    %3921 = vmatpush1.msra.mxu0 0.0
    %3922 = vmatprep.subr.mxu0 0.0
    %3923 = vmatpush1.msra.mxu0 0.0
    %3924 = vmatprep.subr.mxu0 0.0
    %3925 = vmatpush1.msra.mxu0 0.0
    %3926 = vmatprep.subr.mxu0 0.0
    %3927 = vmatpush1.msra.mxu0 0.0
    %3928 = vmatprep.subr.mxu0 0.0
    %3929 = vmatpush1.msra.mxu0 0.0
    %3930 = vmatprep.subr.mxu0 0.0
    %3931 = vmatpush1.msra.mxu0 0.0
    %3932 = vmatprep.subr.mxu0 %v3869
    %3933 = vmatpush1.msra.mxu0 %v3868
    %3934 = vmatprep.subr.mxu0 0.0
    %3935 = vmatpush2.msra.mxu0 0.0
    %3936 = vmatprep.subr.mxu0 0.0
    %3937 = vmatpush2.msra.mxu0 0.0
    %3938 = vmatprep.subr.mxu0 0.0
    %3939 = vmatpush2.msra.mxu0 0.0
    %3940 = vmatprep.subr.mxu0 0.0
    %3941 = vmatpush2.msra.mxu0 0.0
    %3942 = vmatprep.subr.mxu0 0.0
    %3943 = vmatpush2.msra.mxu0 0.0
    %3944 = vmatprep.subr.mxu0 0.0
    %3945 = vmatpush2.msra.mxu0 0.0
    %3946 = vmatprep.subr.mxu0 0.0
    %3947 = vmatpush2.msra.mxu0 0.0
    %3948 = vmatprep.subr.mxu0 0.0
    %3949 = vmatpush2.msra.mxu0 0.0
    %3950 = vmatprep.subr.mxu0 0.0
    %3951 = vmatpush2.msra.mxu0 0.0
    %3952 = vmatprep.subr.mxu0 0.0
    %3953 = vmatpush2.msra.mxu0 0.0
    %3954 = vmatprep.subr.mxu0 0.0
    %3955 = vmatpush2.msra.mxu0 0.0
    %3956 = vmatprep.subr.mxu0 0.0
    %3957 = vmatpush2.msra.mxu0 0.0
    %3958 = vmatprep.subr.mxu0 0.0
    %3959 = vmatpush2.msra.mxu0 0.0
    %3960 = vmatprep.subr.mxu0 0.0
    %3961 = vmatpush2.msra.mxu0 0.0
    %3962 = vmatprep.subr.mxu0 0.0
    %3963 = vmatpush2.msra.mxu0 0.0
    %3964 = vmatprep.subr.mxu0 0.0
    %3965 = vmatpush2.msra.mxu0 0.0
    %3966 = vmatprep.mubr.f32.mxu0 0.0
    %3967 = vmatmul.mubr.f32.gmra.mxu0 %v3886
    %v3968 = vpop.f32.mrf.mxu0
    %v3969 = vadd.f32 0.0, %v3968
    %v3970 = vpop.f32.mrf.mxu0
    %v3971 = vadd.f32 0.0, %v3970
    %3972 = vmatprep.mubr.f32.mxu0 0.0
    %3973 = vmatmul.mubr.f32.gmra.mxu0 %v3888
    %v3974 = vpop.f32.mrf.mxu0
    %v3975 = vadd.f32 0.0, %v3974
    %v3976 = vpop.f32.mrf.mxu0
    %v3977 = vadd.f32 0.0, %v3976
    %3978 = vmatprep.mubr.f32.mxu0 0.0
    %3979 = vmatmul.mubr.f32.gmra.mxu0 %v3890
    %v3980 = vpop.f32.mrf.mxu0
    %v3981 = vadd.f32 0.0, %v3980
    %v3982 = vpop.f32.mrf.mxu0
    %v3983 = vadd.f32 0.0, %v3982
    %3984 = vmatprep.mubr.f32.mxu0 0.0
    %3985 = vmatmul.mubr.f32.gmra.mxu0 %v3892
    %v3986 = vpop.f32.mrf.mxu0
    %v3987 = vadd.f32 0.0, %v3986
    %v3988 = vpop.f32.mrf.mxu0
    %v3989 = vadd.f32 0.0, %v3988
    %3990 = vmatprep.mubr.f32.mxu0 0.0
    %3991 = vmatmul.mubr.f32.gmra.mxu0 %v3894
    %v3992 = vpop.f32.mrf.mxu0
    %v3993 = vadd.f32 0.0, %v3992
    %v3994 = vpop.f32.mrf.mxu0
    %v3995 = vadd.f32 0.0, %v3994
    %3996 = vmatprep.mubr.f32.mxu0 0.0
    %3997 = vmatmul.mubr.f32.gmra.mxu0 %v3896
    %v3998 = vpop.f32.mrf.mxu0
    %v3999 = vadd.f32 0.0, %v3998
    %v4000 = vpop.f32.mrf.mxu0
    %v4001 = vadd.f32 0.0, %v4000
    %4002 = vmatprep.mubr.f32.mxu0 0.0
    %4003 = vmatmul.mubr.f32.gmra.mxu0 %v3898
    %v4004 = vpop.f32.mrf.mxu0
    %v4005 = vadd.f32 0.0, %v4004
    %v4006 = vpop.f32.mrf.mxu0
    %v4007 = vadd.f32 0.0, %v4006
    %4008 = vmatprep.mubr.f32.mxu0 0.0
    %4009 = vmatmul.mubr.f32.gmra.mxu0 %v3900
    %v4010 = vpop.f32.mrf.mxu0
    %v4011 = vadd.f32 0.0, %v4010
    %v4012 = vpop.f32.mrf.mxu0
    %v4013 = vadd.f32 0.0, %v4012
    %4014 = vdwg.mxu0
    %4016 = vset.pattern.permute.xlu0 0
    %4017 = vperm.xlu0 %4016, %v3775
    %v4018 = vpop.permute.xlu0 %4017
    %4021 = vset.pattern.permute.xlu0 0
    %4022 = vperm.xlu0 %4021, %v3777
    %v4023 = vpop.permute.xlu0 %4022
    %4026 = vset.pattern.permute.xlu0 0
    %4027 = vperm.xlu0 %4026, %v3779
    %v4028 = vpop.permute.xlu0 %4027
    %4031 = vset.pattern.permute.xlu0 0
    %4032 = vperm.xlu0 %4031, %v3781
    %v4033 = vpop.permute.xlu0 %4032
    %4036 = vset.pattern.permute.xlu0 0
    %4037 = vperm.xlu0 %4036, %v3783
    %v4038 = vpop.permute.xlu0 %4037
    %4041 = vset.pattern.permute.xlu0 0
    %4042 = vperm.xlu0 %4041, %v3785
    %v4043 = vpop.permute.xlu0 %4042
    %4046 = vset.pattern.permute.xlu0 0
    %4047 = vperm.xlu0 %4046, %v3787
    %v4048 = vpop.permute.xlu0 %4047
    %4051 = vset.pattern.permute.xlu0 0
    %4052 = vperm.xlu0 %4051, %v3789
    %v4053 = vpop.permute.xlu0 %4052
    %v4055 = vmul.f32 %v1540, %v4018
    %v4056 = vmul.f32 %v1542, %v4023
    %v4057 = vmul.f32 %v1544, %v4028
    %v4058 = vmul.f32 %v1546, %v4033
    %v4059 = vmul.f32 %v1548, %v4038
    %v4060 = vmul.f32 %v1550, %v4043
    %v4061 = vmul.f32 %v1552, %v4048
    %v4062 = vmul.f32 %v1554, %v4053
    %v4064 = vsel %vm2386, %v4055, 0
    %v4067 = vsel %vm2386, %v4056, 0
    %v4070 = vsel %vm2386, %v4057, 0
    %v4073 = vsel %vm2386, %v4058, 0
    %v4076 = vsel %vm2386, %v4059, 0
    %v4079 = vsel %vm2386, %v4060, 0
    %v4082 = vsel %vm2386, %v4061, 0
    %v4085 = vsel %vm2386, %v4062, 0
    %4087 = vmatprep.subr.mxu0 0.0
    %4088 = vmatpush1.msra.mxu0 0.0
    %4089 = vmatprep.subr.mxu0 0.0
    %4090 = vmatpush1.msra.mxu0 0.0
    %4091 = vmatprep.subr.mxu0 0.0
    %4092 = vmatpush1.msra.mxu0 0.0
    %4093 = vmatprep.subr.mxu0 0.0
    %4094 = vmatpush1.msra.mxu0 0.0
    %4095 = vmatprep.subr.mxu0 0.0
    %4096 = vmatpush1.msra.mxu0 0.0
    %4097 = vmatprep.subr.mxu0 0.0
    %4098 = vmatpush1.msra.mxu0 0.0
    %4099 = vmatprep.subr.mxu0 0.0
    %4100 = vmatpush1.msra.mxu0 0.0
    %4101 = vmatprep.subr.mxu0 0.0
    %4102 = vmatpush1.msra.mxu0 0.0
    %4103 = vmatprep.subr.mxu0 0.0
    %4104 = vmatpush1.msra.mxu0 0.0
    %4105 = vmatprep.subr.mxu0 0.0
    %4106 = vmatpush1.msra.mxu0 0.0
    %4107 = vmatprep.subr.mxu0 0.0
    %4108 = vmatpush1.msra.mxu0 0.0
    %4109 = vmatprep.subr.mxu0 0.0
    %4110 = vmatpush1.msra.mxu0 0.0
    %4111 = vmatprep.subr.mxu0 0.0
    %4112 = vmatpush1.msra.mxu0 0.0
    %4113 = vmatprep.subr.mxu0 0.0
    %4114 = vmatpush1.msra.mxu0 0.0
    %4115 = vmatprep.subr.mxu0 %v56
    %4116 = vmatpush1.msra.mxu0 %v55
    %4117 = vmatprep.subr.mxu0 %v54
    %4118 = vmatpush1.msra.mxu0 %v53
    %4119 = vmatprep.subr.mxu0 0.0
    %4120 = vmatpush2.msra.mxu0 0.0
    %4121 = vmatprep.subr.mxu0 0.0
    %4122 = vmatpush2.msra.mxu0 0.0
    %4123 = vmatprep.subr.mxu0 0.0
    %4124 = vmatpush2.msra.mxu0 0.0
    %4125 = vmatprep.subr.mxu0 0.0
    %4126 = vmatpush2.msra.mxu0 0.0
    %4127 = vmatprep.subr.mxu0 0.0
    %4128 = vmatpush2.msra.mxu0 0.0
    %4129 = vmatprep.subr.mxu0 0.0
    %4130 = vmatpush2.msra.mxu0 0.0
    %4131 = vmatprep.subr.mxu0 0.0
    %4132 = vmatpush2.msra.mxu0 0.0
    %4133 = vmatprep.subr.mxu0 0.0
    %4134 = vmatpush2.msra.mxu0 0.0
    %4135 = vmatprep.subr.mxu0 0.0
    %4136 = vmatpush2.msra.mxu0 0.0
    %4137 = vmatprep.subr.mxu0 0.0
    %4138 = vmatpush2.msra.mxu0 0.0
    %4139 = vmatprep.subr.mxu0 0.0
    %4140 = vmatpush2.msra.mxu0 0.0
    %4141 = vmatprep.subr.mxu0 0.0
    %4142 = vmatpush2.msra.mxu0 0.0
    %4143 = vmatprep.subr.mxu0 0.0
    %4144 = vmatpush2.msra.mxu0 0.0
    %4145 = vmatprep.subr.mxu0 0.0
    %4146 = vmatpush2.msra.mxu0 0.0
    %4147 = vmatprep.subr.mxu0 0.0
    %4148 = vmatpush2.msra.mxu0 0.0
    %4149 = vmatprep.subr.mxu0 0.0
    %4150 = vmatpush2.msra.mxu0 0.0
    %4151 = vmatprep.mubr.f32.mxu0 0.0
    %4152 = vmatmul.mubr.f32.gmra.mxu0 %v4064
    %v4153 = vpop.f32.mrf.mxu0
    %v4154 = vadd.f32 0.0, %v4153
    %v4155 = vpop.f32.mrf.mxu0
    %v4156 = vadd.f32 0.0, %v4155
    %4157 = vmatprep.mubr.f32.mxu0 0.0
    %4158 = vmatmul.mubr.f32.gmra.mxu0 %v4067
    %v4159 = vpop.f32.mrf.mxu0
    %v4160 = vadd.f32 0.0, %v4159
    %v4161 = vpop.f32.mrf.mxu0
    %v4162 = vadd.f32 0.0, %v4161
    %4163 = vmatprep.mubr.f32.mxu0 0.0
    %4164 = vmatmul.mubr.f32.gmra.mxu0 %v4070
    %v4165 = vpop.f32.mrf.mxu0
    %v4166 = vadd.f32 0.0, %v4165
    %v4167 = vpop.f32.mrf.mxu0
    %v4168 = vadd.f32 0.0, %v4167
    %4169 = vmatprep.mubr.f32.mxu0 0.0
    %4170 = vmatmul.mubr.f32.gmra.mxu0 %v4073
    %v4171 = vpop.f32.mrf.mxu0
    %v4172 = vadd.f32 0.0, %v4171
    %v4173 = vpop.f32.mrf.mxu0
    %v4174 = vadd.f32 0.0, %v4173
    %4175 = vmatprep.mubr.f32.mxu0 0.0
    %4176 = vmatmul.mubr.f32.gmra.mxu0 %v4076
    %v4177 = vpop.f32.mrf.mxu0
    %v4178 = vadd.f32 0.0, %v4177
    %v4179 = vpop.f32.mrf.mxu0
    %v4180 = vadd.f32 0.0, %v4179
    %4181 = vmatprep.mubr.f32.mxu0 0.0
    %4182 = vmatmul.mubr.f32.gmra.mxu0 %v4079
    %v4183 = vpop.f32.mrf.mxu0
    %v4184 = vadd.f32 0.0, %v4183
    %v4185 = vpop.f32.mrf.mxu0
    %v4186 = vadd.f32 0.0, %v4185
    %4187 = vmatprep.mubr.f32.mxu0 0.0
    %4188 = vmatmul.mubr.f32.gmra.mxu0 %v4082
    %v4189 = vpop.f32.mrf.mxu0
    %v4190 = vadd.f32 0.0, %v4189
    %v4191 = vpop.f32.mrf.mxu0
    %v4192 = vadd.f32 0.0, %v4191
    %4193 = vmatprep.mubr.f32.mxu0 0.0
    %4194 = vmatmul.mubr.f32.gmra.mxu0 %v4085
    %v4195 = vpop.f32.mrf.mxu0
    %v4196 = vadd.f32 0.0, %v4195
    %v4197 = vpop.f32.mrf.mxu0
    %v4198 = vadd.f32 0.0, %v4197
    %4199 = vdwg.mxu0
    %v4201 = vsel %vm2386, %v2371, 0
    %v4204 = vsel %vm2386, %v2373, 0
    %v4207 = vsel %vm2386, %v2375, 0
    %v4210 = vsel %vm2386, %v2377, 0
    %v4213 = vsel %vm2386, %v2379, 0
    %v4216 = vsel %vm2386, %v2381, 0
    %v4219 = vsel %vm2386, %v2383, 0
    %v4222 = vsel %vm2386, %v2385, 0
    %4224 = vmatprep.subr.mxu0 0.0
    %4225 = vmatpush1.msra.mxu0 0.0
    %4226 = vmatprep.subr.mxu0 0.0
    %4227 = vmatpush1.msra.mxu0 0.0
    %4228 = vmatprep.subr.mxu0 0.0
    %4229 = vmatpush1.msra.mxu0 0.0
    %4230 = vmatprep.subr.mxu0 0.0
    %4231 = vmatpush1.msra.mxu0 0.0
    %4232 = vmatprep.subr.mxu0 0.0
    %4233 = vmatpush1.msra.mxu0 0.0
    %4234 = vmatprep.subr.mxu0 0.0
    %4235 = vmatpush1.msra.mxu0 0.0
    %4236 = vmatprep.subr.mxu0 0.0
    %4237 = vmatpush1.msra.mxu0 0.0
    %4238 = vmatprep.subr.mxu0 0.0
    %4239 = vmatpush1.msra.mxu0 0.0
    %4240 = vmatprep.subr.mxu0 0.0
    %4241 = vmatpush1.msra.mxu0 0.0
    %4242 = vmatprep.subr.mxu0 0.0
    %4243 = vmatpush1.msra.mxu0 0.0
    %4244 = vmatprep.subr.mxu0 0.0
    %4245 = vmatpush1.msra.mxu0 0.0
    %4246 = vmatprep.subr.mxu0 0.0
    %4247 = vmatpush1.msra.mxu0 0.0
    %4248 = vmatprep.subr.mxu0 0.0
    %4249 = vmatpush1.msra.mxu0 0.0
    %4250 = vmatprep.subr.mxu0 0.0
    %4251 = vmatpush1.msra.mxu0 0.0
    %4252 = vmatprep.subr.mxu0 %v60
    %4253 = vmatpush1.msra.mxu0 %v59
    %4254 = vmatprep.subr.mxu0 %v58
    %4255 = vmatpush1.msra.mxu0 %v57
    %4256 = vmatprep.subr.mxu0 0.0
    %4257 = vmatpush2.msra.mxu0 0.0
    %4258 = vmatprep.subr.mxu0 0.0
    %4259 = vmatpush2.msra.mxu0 0.0
    %4260 = vmatprep.subr.mxu0 0.0
    %4261 = vmatpush2.msra.mxu0 0.0
    %4262 = vmatprep.subr.mxu0 0.0
    %4263 = vmatpush2.msra.mxu0 0.0
    %4264 = vmatprep.subr.mxu0 0.0
    %4265 = vmatpush2.msra.mxu0 0.0
    %4266 = vmatprep.subr.mxu0 0.0
    %4267 = vmatpush2.msra.mxu0 0.0
    %4268 = vmatprep.subr.mxu0 0.0
    %4269 = vmatpush2.msra.mxu0 0.0
    %4270 = vmatprep.subr.mxu0 0.0
    %4271 = vmatpush2.msra.mxu0 0.0
    %4272 = vmatprep.subr.mxu0 0.0
    %4273 = vmatpush2.msra.mxu0 0.0
    %4274 = vmatprep.subr.mxu0 0.0
    %4275 = vmatpush2.msra.mxu0 0.0
    %4276 = vmatprep.subr.mxu0 0.0
    %4277 = vmatpush2.msra.mxu0 0.0
    %4278 = vmatprep.subr.mxu0 0.0
    %4279 = vmatpush2.msra.mxu0 0.0
    %4280 = vmatprep.subr.mxu0 0.0
    %4281 = vmatpush2.msra.mxu0 0.0
    %4282 = vmatprep.subr.mxu0 0.0
    %4283 = vmatpush2.msra.mxu0 0.0
    %4284 = vmatprep.subr.mxu0 0.0
    %4285 = vmatpush2.msra.mxu0 0.0
    %4286 = vmatprep.subr.mxu0 0.0
    %4287 = vmatpush2.msra.mxu0 0.0
    %4288 = vmatprep.mubr.f32.mxu0 0.0
    %4289 = vmatmul.mubr.f32.gmra.mxu0 %v4201
    %v4290 = vpop.f32.mrf.mxu0
    %v4291 = vadd.f32 0.0, %v4290
    %v4292 = vpop.f32.mrf.mxu0
    %v4293 = vadd.f32 0.0, %v4292
    %4294 = vmatprep.mubr.f32.mxu0 0.0
    %4295 = vmatmul.mubr.f32.gmra.mxu0 %v4204
    %v4296 = vpop.f32.mrf.mxu0
    %v4297 = vadd.f32 0.0, %v4296
    %v4298 = vpop.f32.mrf.mxu0
    %v4299 = vadd.f32 0.0, %v4298
    %4300 = vmatprep.mubr.f32.mxu0 0.0
    %4301 = vmatmul.mubr.f32.gmra.mxu0 %v4207
    %v4302 = vpop.f32.mrf.mxu0
    %v4303 = vadd.f32 0.0, %v4302
    %v4304 = vpop.f32.mrf.mxu0
    %v4305 = vadd.f32 0.0, %v4304
    %4306 = vmatprep.mubr.f32.mxu0 0.0
    %4307 = vmatmul.mubr.f32.gmra.mxu0 %v4210
    %v4308 = vpop.f32.mrf.mxu0
    %v4309 = vadd.f32 0.0, %v4308
    %v4310 = vpop.f32.mrf.mxu0
    %v4311 = vadd.f32 0.0, %v4310
    %4312 = vmatprep.mubr.f32.mxu0 0.0
    %4313 = vmatmul.mubr.f32.gmra.mxu0 %v4213
    %v4314 = vpop.f32.mrf.mxu0
    %v4315 = vadd.f32 0.0, %v4314
    %v4316 = vpop.f32.mrf.mxu0
    %v4317 = vadd.f32 0.0, %v4316
    %4318 = vmatprep.mubr.f32.mxu0 0.0
    %4319 = vmatmul.mubr.f32.gmra.mxu0 %v4216
    %v4320 = vpop.f32.mrf.mxu0
    %v4321 = vadd.f32 0.0, %v4320
    %v4322 = vpop.f32.mrf.mxu0
    %v4323 = vadd.f32 0.0, %v4322
    %4324 = vmatprep.mubr.f32.mxu0 0.0
    %4325 = vmatmul.mubr.f32.gmra.mxu0 %v4219
    %v4326 = vpop.f32.mrf.mxu0
    %v4327 = vadd.f32 0.0, %v4326
    %v4328 = vpop.f32.mrf.mxu0
    %v4329 = vadd.f32 0.0, %v4328
    %4330 = vmatprep.mubr.f32.mxu0 0.0
    %4331 = vmatmul.mubr.f32.gmra.mxu0 %v4222
    %v4332 = vpop.f32.mrf.mxu0
    %v4333 = vadd.f32 0.0, %v4332
    %v4334 = vpop.f32.mrf.mxu0
    %v4335 = vadd.f32 0.0, %v4334
    %4336 = vdwg.mxu0
    %v4337 = vmul.f32 %v72, %v4154
    %v4338 = vmul.f32 %v73, %v4156
    %v4339 = vmul.f32 %v74, %v4160
    %v4340 = vmul.f32 %v75, %v4162
    %v4341 = vmul.f32 %v76, %v4166
    %v4342 = vmul.f32 %v77, %v4168
    %v4343 = vmul.f32 %v78, %v4172
    %v4344 = vmul.f32 %v79, %v4174
    %v4345 = vmul.f32 %v80, %v4178
    %v4346 = vmul.f32 %v81, %v4180
    %v4347 = vmul.f32 %v82, %v4184
    %v4348 = vmul.f32 %v83, %v4186
    %v4349 = vmul.f32 %v84, %v4190
    %v4350 = vmul.f32 %v85, %v4192
    %v4351 = vmul.f32 %v86, %v4196
    %v4352 = vmul.f32 %v87, %v4198
    %v4353 = vmul.f32 %v4337, %v4291
    %v4354 = vmul.f32 %v4338, %v4293
    %v4355 = vmul.f32 %v4339, %v4297
    %v4356 = vmul.f32 %v4340, %v4299
    %v4357 = vmul.f32 %v4341, %v4303
    %v4358 = vmul.f32 %v4342, %v4305
    %v4359 = vmul.f32 %v4343, %v4309
    %v4360 = vmul.f32 %v4344, %v4311
    %v4361 = vmul.f32 %v4345, %v4315
    %v4362 = vmul.f32 %v4346, %v4317
    %v4363 = vmul.f32 %v4347, %v4321
    %v4364 = vmul.f32 %v4348, %v4323
    %v4365 = vmul.f32 %v4349, %v4327
    %v4366 = vmul.f32 %v4350, %v4329
    %v4367 = vmul.f32 %v4351, %v4333
    %v4368 = vmul.f32 %v4352, %v4335
    %v4369 = vadd.f32 %v72, %v3969
    %v4370 = vadd.f32 %v73, %v3971
    %v4371 = vadd.f32 %v74, %v3975
    %v4372 = vadd.f32 %v75, %v3977
    %v4373 = vadd.f32 %v76, %v3981
    %v4374 = vadd.f32 %v77, %v3983
    %v4375 = vadd.f32 %v78, %v3987
    %v4376 = vadd.f32 %v79, %v3989
    %v4377 = vadd.f32 %v80, %v3993
    %v4378 = vadd.f32 %v81, %v3995
    %v4379 = vadd.f32 %v82, %v3999
    %v4380 = vadd.f32 %v83, %v4001
    %v4381 = vadd.f32 %v84, %v4005
    %v4382 = vadd.f32 %v85, %v4007
    %v4383 = vadd.f32 %v86, %v4011
    %v4384 = vadd.f32 %v87, %v4013
    %v4385 = vmul.f32 %v4353, %v4369
    %v4386 = vmul.f32 %v4354, %v4370
    %v4387 = vmul.f32 %v4355, %v4371
    %v4388 = vmul.f32 %v4356, %v4372
    %v4389 = vmul.f32 %v4357, %v4373
    %v4390 = vmul.f32 %v4358, %v4374
    %v4391 = vmul.f32 %v4359, %v4375
    %v4392 = vmul.f32 %v4360, %v4376
    %v4393 = vmul.f32 %v4361, %v4377
    %v4394 = vmul.f32 %v4362, %v4378
    %v4395 = vmul.f32 %v4363, %v4379
    %v4396 = vmul.f32 %v4364, %v4380
    %v4397 = vmul.f32 %v4365, %v4381
    %v4398 = vmul.f32 %v4366, %v4382
    %v4399 = vmul.f32 %v4367, %v4383
    %v4400 = vmul.f32 %v4368, %v4384
    %4401 = vst [vmem:[#allocation2] sm:$0xff] %v4385
    %4402 = vst [vmem:[#allocation2 + $0x8] sm:$0xff] %v4386
    %4403 = vst [vmem:[#allocation2 + $0x10] sm:$0xff] %v4387
    %4404 = vst [vmem:[#allocation2 + $0x18] sm:$0xff] %v4388
    %4405 = vst [vmem:[#allocation2 + $0x20] sm:$0xff] %v4389
    %4406 = vst [vmem:[#allocation2 + $0x28] sm:$0xff] %v4390
    %4407 = vst [vmem:[#allocation2 + $0x30] sm:$0xff] %v4391
    %4408 = vst [vmem:[#allocation2 + $0x38] sm:$0xff] %v4392
    %4409 = vst [vmem:[#allocation2 + $0x40] sm:$0xff] %v4393
    %4410 = vst [vmem:[#allocation2 + $0x48] sm:$0xff] %v4394
    %4411 = vst [vmem:[#allocation2 + $0x50] sm:$0xff] %v4395
    %4412 = vst [vmem:[#allocation2 + $0x58] sm:$0xff] %v4396
    %4413 = vst [vmem:[#allocation2 + $0x60] sm:$0xff] %v4397
    %4414 = vst [vmem:[#allocation2 + $0x68] sm:$0xff] %v4398
    %4415 = vst [vmem:[#allocation2 + $0x70] sm:$0xff] %v4399
    %4416 = vst [vmem:[#allocation2 + $0x78] sm:$0xff] %v4400
    %s4417 = scalar_lea.vmem %s0, 128
    %v4418 = vld [vmem:[%s4417] sm:$0xff]
    %v4419 = vld [vmem:[%s4417 + $0x8] sm:$0xff]
    %v4420 = vld [vmem:[%s4417 + $0x10] sm:$0xff]
    %v4421 = vld [vmem:[%s4417 + $0x18] sm:$0xff]
    %v4422 = vld [vmem:[%s4417 + $0x20] sm:$0xff]
    %v4423 = vld [vmem:[%s4417 + $0x28] sm:$0xff]
    %v4424 = vld [vmem:[%s4417 + $0x30] sm:$0xff]
    %v4425 = vld [vmem:[%s4417 + $0x38] sm:$0xff]
    %v4426 = vld [vmem:[%s4417 + $0x40] sm:$0xff]
    %v4427 = vld [vmem:[%s4417 + $0x48] sm:$0xff]
    %v4428 = vld [vmem:[%s4417 + $0x50] sm:$0xff]
    %v4429 = vld [vmem:[%s4417 + $0x58] sm:$0xff]
    %v4430 = vld [vmem:[%s4417 + $0x60] sm:$0xff]
    %v4431 = vld [vmem:[%s4417 + $0x68] sm:$0xff]
    %v4432 = vld [vmem:[%s4417 + $0x70] sm:$0xff]
    %v4433 = vld [vmem:[%s4417 + $0x78] sm:$0xff]
    %4434 = vmatprep.subr.mxu0 0.0
    %4435 = vmatpush1.msra.mxu0 %v36
    %4436 = vmatprep.subr.mxu0 0.0
    %4437 = vmatpush1.msra.mxu0 %v35
    %4438 = vmatprep.subr.mxu0 0.0
    %4439 = vmatpush1.msra.mxu0 %v34
    %4440 = vmatprep.subr.mxu0 0.0
    %4441 = vmatpush1.msra.mxu0 %v33
    %4442 = vmatprep.subr.mxu0 0.0
    %4443 = vmatpush1.msra.mxu0 %v32
    %4444 = vmatprep.subr.mxu0 0.0
    %4445 = vmatpush1.msra.mxu0 %v31
    %4446 = vmatprep.subr.mxu0 0.0
    %4447 = vmatpush1.msra.mxu0 %v30
    %4448 = vmatprep.subr.mxu0 0.0
    %4449 = vmatpush1.msra.mxu0 %v29
    %4450 = vmatprep.subr.mxu0 0.0
    %4451 = vmatpush1.msra.mxu0 %v28
    %4452 = vmatprep.subr.mxu0 0.0
    %4453 = vmatpush1.msra.mxu0 %v27
    %4454 = vmatprep.subr.mxu0 0.0
    %4455 = vmatpush1.msra.mxu0 %v26
    %4456 = vmatprep.subr.mxu0 0.0
    %4457 = vmatpush1.msra.mxu0 %v25
    %4458 = vmatprep.subr.mxu0 0.0
    %4459 = vmatpush1.msra.mxu0 %v24
    %4460 = vmatprep.subr.mxu0 0.0
    %4461 = vmatpush1.msra.mxu0 %v23
    %4462 = vmatprep.subr.mxu0 0.0
    %4463 = vmatpush1.msra.mxu0 %v22
    %4464 = vmatprep.subr.mxu0 0.0
    %4465 = vmatpush1.msra.mxu0 %v21
    %4466 = vmatprep.subr.mxu0 0.0
    %4467 = vmatpush2.msra.mxu0 %v52
    %4468 = vmatprep.subr.mxu0 0.0
    %4469 = vmatpush2.msra.mxu0 %v51
    %4470 = vmatprep.subr.mxu0 0.0
    %4471 = vmatpush2.msra.mxu0 %v50
    %4472 = vmatprep.subr.mxu0 0.0
    %4473 = vmatpush2.msra.mxu0 %v49
    %4474 = vmatprep.subr.mxu0 0.0
    %4475 = vmatpush2.msra.mxu0 %v48
    %4476 = vmatprep.subr.mxu0 0.0
    %4477 = vmatpush2.msra.mxu0 %v47
    %4478 = vmatprep.subr.mxu0 0.0
    %4479 = vmatpush2.msra.mxu0 %v46
    %4480 = vmatprep.subr.mxu0 0.0
    %4481 = vmatpush2.msra.mxu0 %v45
    %4482 = vmatprep.subr.mxu0 0.0
    %4483 = vmatpush2.msra.mxu0 %v44
    %4484 = vmatprep.subr.mxu0 0.0
    %4485 = vmatpush2.msra.mxu0 %v43
    %4486 = vmatprep.subr.mxu0 0.0
    %4487 = vmatpush2.msra.mxu0 %v42
    %4488 = vmatprep.subr.mxu0 0.0
    %4489 = vmatpush2.msra.mxu0 %v41
    %4490 = vmatprep.subr.mxu0 0.0
    %4491 = vmatpush2.msra.mxu0 %v40
    %4492 = vmatprep.subr.mxu0 0.0
    %4493 = vmatpush2.msra.mxu0 %v39
    %4494 = vmatprep.subr.mxu0 0.0
    %4495 = vmatpush2.msra.mxu0 %v38
    %4496 = vmatprep.subr.mxu0 0.0
    %4497 = vmatpush2.msra.mxu0 %v37
    %4498 = vmatprep.mubr.f32.mxu0 %v4419
    %4499 = vmatmul.mubr.f32.gmra.mxu0 %v4418
    %v4500 = vpop.f32.mrf.mxu0
    %v4501 = vadd.f32 0.0, %v4500
    %v4502 = vpop.f32.mrf.mxu0
    %4503 = vmatprep.mubr.f32.mxu0 %v4421
    %4504 = vmatmul.mubr.f32.gmra.mxu0 %v4420
    %v4505 = vpop.f32.mrf.mxu0
    %v4506 = vadd.f32 0.0, %v4505
    %v4507 = vpop.f32.mrf.mxu0
    %4508 = vmatprep.mubr.f32.mxu0 %v4423
    %4509 = vmatmul.mubr.f32.gmra.mxu0 %v4422
    %v4510 = vpop.f32.mrf.mxu0
    %v4511 = vadd.f32 0.0, %v4510
    %v4512 = vpop.f32.mrf.mxu0
    %4513 = vmatprep.mubr.f32.mxu0 %v4425
    %4514 = vmatmul.mubr.f32.gmra.mxu0 %v4424
    %v4515 = vpop.f32.mrf.mxu0
    %v4516 = vadd.f32 0.0, %v4515
    %v4517 = vpop.f32.mrf.mxu0
    %4518 = vmatprep.mubr.f32.mxu0 %v4427
    %4519 = vmatmul.mubr.f32.gmra.mxu0 %v4426
    %v4520 = vpop.f32.mrf.mxu0
    %v4521 = vadd.f32 0.0, %v4520
    %v4522 = vpop.f32.mrf.mxu0
    %4523 = vmatprep.mubr.f32.mxu0 %v4429
    %4524 = vmatmul.mubr.f32.gmra.mxu0 %v4428
    %v4525 = vpop.f32.mrf.mxu0
    %v4526 = vadd.f32 0.0, %v4525
    %v4527 = vpop.f32.mrf.mxu0
    %4528 = vmatprep.mubr.f32.mxu0 %v4431
    %4529 = vmatmul.mubr.f32.gmra.mxu0 %v4430
    %v4530 = vpop.f32.mrf.mxu0
    %v4531 = vadd.f32 0.0, %v4530
    %v4532 = vpop.f32.mrf.mxu0
    %4533 = vmatprep.mubr.f32.mxu0 %v4433
    %4534 = vmatmul.mubr.f32.gmra.mxu0 %v4432
    %v4535 = vpop.f32.mrf.mxu0
    %v4536 = vadd.f32 0.0, %v4535
    %v4537 = vpop.f32.mrf.mxu0
    %4538 = vdwg.mxu0
    %4539 = vmatprep.subr.mxu0 0.0
    %4540 = vmatpush1.msra.mxu0 0.0
    %4541 = vmatprep.subr.mxu0 0.0
    %4542 = vmatpush1.msra.mxu0 0.0
    %4543 = vmatprep.subr.mxu0 0.0
    %4544 = vmatpush1.msra.mxu0 0.0
    %4545 = vmatprep.subr.mxu0 0.0
    %4546 = vmatpush1.msra.mxu0 0.0
    %4547 = vmatprep.subr.mxu0 0.0
    %4548 = vmatpush1.msra.mxu0 0.0
    %4549 = vmatprep.subr.mxu0 0.0
    %4550 = vmatpush1.msra.mxu0 0.0
    %4551 = vmatprep.subr.mxu0 0.0
    %4552 = vmatpush1.msra.mxu0 0.0
    %4553 = vmatprep.subr.mxu0 0.0
    %4554 = vmatpush1.msra.mxu0 0.0
    %4555 = vmatprep.subr.mxu0 0.0
    %v4556 = vand.u32 %v4536, 4294901760
    %4557 = vmatpush1.msra.mxu0 %v4556
    %4558 = vmatprep.subr.mxu0 0.0
    %v4559 = vand.u32 %v4531, 4294901760
    %4560 = vmatpush1.msra.mxu0 %v4559
    %4561 = vmatprep.subr.mxu0 0.0
    %v4562 = vand.u32 %v4526, 4294901760
    %4563 = vmatpush1.msra.mxu0 %v4562
    %4564 = vmatprep.subr.mxu0 0.0
    %v4565 = vand.u32 %v4521, 4294901760
    %4566 = vmatpush1.msra.mxu0 %v4565
    %4567 = vmatprep.subr.mxu0 0.0
    %v4568 = vand.u32 %v4516, 4294901760
    %4569 = vmatpush1.msra.mxu0 %v4568
    %4570 = vmatprep.subr.mxu0 0.0
    %v4571 = vand.u32 %v4511, 4294901760
    %4572 = vmatpush1.msra.mxu0 %v4571
    %4573 = vmatprep.subr.mxu0 0.0
    %v4574 = vand.u32 %v4506, 4294901760
    %4575 = vmatpush1.msra.mxu0 %v4574
    %4576 = vmatprep.subr.mxu0 0.0
    %v4577 = vand.u32 %v4501, 4294901760
    %4578 = vmatpush1.msra.mxu0 %v4577
    %4579 = vmatprep.subr.mxu0 0.0
    %4580 = vmatpush2.msra.mxu0 0.0
    %4581 = vmatprep.subr.mxu0 0.0
    %4582 = vmatpush2.msra.mxu0 0.0
    %4583 = vmatprep.subr.mxu0 0.0
    %4584 = vmatpush2.msra.mxu0 0.0
    %4585 = vmatprep.subr.mxu0 0.0
    %4586 = vmatpush2.msra.mxu0 0.0
    %4587 = vmatprep.subr.mxu0 0.0
    %4588 = vmatpush2.msra.mxu0 0.0
    %4589 = vmatprep.subr.mxu0 0.0
    %4590 = vmatpush2.msra.mxu0 0.0
    %4591 = vmatprep.subr.mxu0 0.0
    %4592 = vmatpush2.msra.mxu0 0.0
    %4593 = vmatprep.subr.mxu0 0.0
    %4594 = vmatpush2.msra.mxu0 0.0
    %4595 = vmatprep.subr.mxu0 0.0
    %4596 = vmatpush2.msra.mxu0 0.0
    %4597 = vmatprep.subr.mxu0 0.0
    %4598 = vmatpush2.msra.mxu0 0.0
    %4599 = vmatprep.subr.mxu0 0.0
    %4600 = vmatpush2.msra.mxu0 0.0
    %4601 = vmatprep.subr.mxu0 0.0
    %4602 = vmatpush2.msra.mxu0 0.0
    %4603 = vmatprep.subr.mxu0 0.0
    %4604 = vmatpush2.msra.mxu0 0.0
    %4605 = vmatprep.subr.mxu0 0.0
    %4606 = vmatpush2.msra.mxu0 0.0
    %4607 = vmatprep.subr.mxu0 0.0
    %4608 = vmatpush2.msra.mxu0 0.0
    %4609 = vmatprep.subr.mxu0 0.0
    %4610 = vmatpush2.msra.mxu0 0.0
    %4611 = vmatprep.mubr.f32.mxu0 0.0
    %v4612 = vand.u32 %v195, 4294901760
    %v4613 = vsub.f32 %v195, %v4612
    %v4614 = vand.u32 %v4613, 4294901760
    %v4615 = vsub.f32 %v4613, %v4614
    %v4616 = vand.u32 %v4615, 4294901760
    %4617 = vmatmul.mubr.f32.gmra.mxu0 %v4616
    %v4618 = vpop.f32.mrf.mxu0
    %v4619 = vadd.f32 0.0, %v4618
    %v4620 = vpop.f32.mrf.mxu0
    %4621 = vdwg.mxu0
    %4622 = vmatprep.subr.mxu0 0.0
    %4623 = vmatpush1.msra.mxu0 0.0
    %4624 = vmatprep.subr.mxu0 0.0
    %4625 = vmatpush1.msra.mxu0 0.0
    %4626 = vmatprep.subr.mxu0 0.0
    %4627 = vmatpush1.msra.mxu0 0.0
    %4628 = vmatprep.subr.mxu0 0.0
    %4629 = vmatpush1.msra.mxu0 0.0
    %4630 = vmatprep.subr.mxu0 0.0
    %4631 = vmatpush1.msra.mxu0 0.0
    %4632 = vmatprep.subr.mxu0 0.0
    %4633 = vmatpush1.msra.mxu0 0.0
    %4634 = vmatprep.subr.mxu0 0.0
    %4635 = vmatpush1.msra.mxu0 0.0
    %4636 = vmatprep.subr.mxu0 0.0
    %4637 = vmatpush1.msra.mxu0 0.0
    %4638 = vmatprep.subr.mxu0 0.0
    %v4639 = vand.u32 %v4536, 4294901760
    %v4640 = vsub.f32 %v4536, %v4639
    %v4641 = vand.u32 %v4640, 4294901760
    %v4642 = vsub.f32 %v4640, %v4641
    %v4643 = vand.u32 %v4642, 4294901760
    %4644 = vmatpush1.msra.mxu0 %v4643
    %4645 = vmatprep.subr.mxu0 0.0
    %v4646 = vand.u32 %v4531, 4294901760
    %v4647 = vsub.f32 %v4531, %v4646
    %v4648 = vand.u32 %v4647, 4294901760
    %v4649 = vsub.f32 %v4647, %v4648
    %v4650 = vand.u32 %v4649, 4294901760
    %4651 = vmatpush1.msra.mxu0 %v4650
    %4652 = vmatprep.subr.mxu0 0.0
    %v4653 = vand.u32 %v4526, 4294901760
    %v4654 = vsub.f32 %v4526, %v4653
    %v4655 = vand.u32 %v4654, 4294901760
    %v4656 = vsub.f32 %v4654, %v4655
    %v4657 = vand.u32 %v4656, 4294901760
    %4658 = vmatpush1.msra.mxu0 %v4657
    %4659 = vmatprep.subr.mxu0 0.0
    %v4660 = vand.u32 %v4521, 4294901760
    %v4661 = vsub.f32 %v4521, %v4660
    %v4662 = vand.u32 %v4661, 4294901760
    %v4663 = vsub.f32 %v4661, %v4662
    %v4664 = vand.u32 %v4663, 4294901760
    %4665 = vmatpush1.msra.mxu0 %v4664
    %4666 = vmatprep.subr.mxu0 0.0
    %v4667 = vand.u32 %v4516, 4294901760
    %v4668 = vsub.f32 %v4516, %v4667
    %v4669 = vand.u32 %v4668, 4294901760
    %v4670 = vsub.f32 %v4668, %v4669
    %v4671 = vand.u32 %v4670, 4294901760
    %4672 = vmatpush1.msra.mxu0 %v4671
    %4673 = vmatprep.subr.mxu0 0.0
    %v4674 = vand.u32 %v4511, 4294901760
    %v4675 = vsub.f32 %v4511, %v4674
    %v4676 = vand.u32 %v4675, 4294901760
    %v4677 = vsub.f32 %v4675, %v4676
    %v4678 = vand.u32 %v4677, 4294901760
    %4679 = vmatpush1.msra.mxu0 %v4678
    %4680 = vmatprep.subr.mxu0 0.0
    %v4681 = vand.u32 %v4506, 4294901760
    %v4682 = vsub.f32 %v4506, %v4681
    %v4683 = vand.u32 %v4682, 4294901760
    %v4684 = vsub.f32 %v4682, %v4683
    %v4685 = vand.u32 %v4684, 4294901760
    %4686 = vmatpush1.msra.mxu0 %v4685
    %4687 = vmatprep.subr.mxu0 0.0
    %v4688 = vand.u32 %v4501, 4294901760
    %v4689 = vsub.f32 %v4501, %v4688
    %v4690 = vand.u32 %v4689, 4294901760
    %v4691 = vsub.f32 %v4689, %v4690
    %v4692 = vand.u32 %v4691, 4294901760
    %4693 = vmatpush1.msra.mxu0 %v4692
    %4694 = vmatprep.subr.mxu0 0.0
    %4695 = vmatpush2.msra.mxu0 0.0
    %4696 = vmatprep.subr.mxu0 0.0
    %4697 = vmatpush2.msra.mxu0 0.0
    %4698 = vmatprep.subr.mxu0 0.0
    %4699 = vmatpush2.msra.mxu0 0.0
    %4700 = vmatprep.subr.mxu0 0.0
    %4701 = vmatpush2.msra.mxu0 0.0
    %4702 = vmatprep.subr.mxu0 0.0
    %4703 = vmatpush2.msra.mxu0 0.0
    %4704 = vmatprep.subr.mxu0 0.0
    %4705 = vmatpush2.msra.mxu0 0.0
    %4706 = vmatprep.subr.mxu0 0.0
    %4707 = vmatpush2.msra.mxu0 0.0
    %4708 = vmatprep.subr.mxu0 0.0
    %4709 = vmatpush2.msra.mxu0 0.0
    %4710 = vmatprep.subr.mxu0 0.0
    %4711 = vmatpush2.msra.mxu0 0.0
    %4712 = vmatprep.subr.mxu0 0.0
    %4713 = vmatpush2.msra.mxu0 0.0
    %4714 = vmatprep.subr.mxu0 0.0
    %4715 = vmatpush2.msra.mxu0 0.0
    %4716 = vmatprep.subr.mxu0 0.0
    %4717 = vmatpush2.msra.mxu0 0.0
    %4718 = vmatprep.subr.mxu0 0.0
    %4719 = vmatpush2.msra.mxu0 0.0
    %4720 = vmatprep.subr.mxu0 0.0
    %4721 = vmatpush2.msra.mxu0 0.0
    %4722 = vmatprep.subr.mxu0 0.0
    %4723 = vmatpush2.msra.mxu0 0.0
    %4724 = vmatprep.subr.mxu0 0.0
    %4725 = vmatpush2.msra.mxu0 0.0
    %4726 = vmatprep.mubr.f32.mxu0 0.0
    %v4727 = vand.u32 %v195, 4294901760
    %4728 = vmatmul.mubr.f32.gmra.mxu0 %v4727
    %v4729 = vpop.f32.mrf.mxu0
    %v4730 = vadd.f32 %v4619, %v4729
    %v4731 = vpop.f32.mrf.mxu0
    %4732 = vdwg.mxu0
    %4733 = vmatprep.subr.mxu0 0.0
    %4734 = vmatpush1.msra.mxu0 0.0
    %4735 = vmatprep.subr.mxu0 0.0
    %4736 = vmatpush1.msra.mxu0 0.0
    %4737 = vmatprep.subr.mxu0 0.0
    %4738 = vmatpush1.msra.mxu0 0.0
    %4739 = vmatprep.subr.mxu0 0.0
    %4740 = vmatpush1.msra.mxu0 0.0
    %4741 = vmatprep.subr.mxu0 0.0
    %4742 = vmatpush1.msra.mxu0 0.0
    %4743 = vmatprep.subr.mxu0 0.0
    %4744 = vmatpush1.msra.mxu0 0.0
    %4745 = vmatprep.subr.mxu0 0.0
    %4746 = vmatpush1.msra.mxu0 0.0
    %4747 = vmatprep.subr.mxu0 0.0
    %4748 = vmatpush1.msra.mxu0 0.0
    %4749 = vmatprep.subr.mxu0 0.0
    %v4750 = vand.u32 %v4536, 4294901760
    %v4751 = vsub.f32 %v4536, %v4750
    %4752 = vmatpush1.msra.mxu0 %v4751
    %4753 = vmatprep.subr.mxu0 0.0
    %v4754 = vand.u32 %v4531, 4294901760
    %v4755 = vsub.f32 %v4531, %v4754
    %4756 = vmatpush1.msra.mxu0 %v4755
    %4757 = vmatprep.subr.mxu0 0.0
    %v4758 = vand.u32 %v4526, 4294901760
    %v4759 = vsub.f32 %v4526, %v4758
    %4760 = vmatpush1.msra.mxu0 %v4759
    %4761 = vmatprep.subr.mxu0 0.0
    %v4762 = vand.u32 %v4521, 4294901760
    %v4763 = vsub.f32 %v4521, %v4762
    %4764 = vmatpush1.msra.mxu0 %v4763
    %4765 = vmatprep.subr.mxu0 0.0
    %v4766 = vand.u32 %v4516, 4294901760
    %v4767 = vsub.f32 %v4516, %v4766
    %4768 = vmatpush1.msra.mxu0 %v4767
    %4769 = vmatprep.subr.mxu0 0.0
    %v4770 = vand.u32 %v4511, 4294901760
    %v4771 = vsub.f32 %v4511, %v4770
    %4772 = vmatpush1.msra.mxu0 %v4771
    %4773 = vmatprep.subr.mxu0 0.0
    %v4774 = vand.u32 %v4506, 4294901760
    %v4775 = vsub.f32 %v4506, %v4774
    %4776 = vmatpush1.msra.mxu0 %v4775
    %4777 = vmatprep.subr.mxu0 0.0
    %v4778 = vand.u32 %v4501, 4294901760
    %v4779 = vsub.f32 %v4501, %v4778
    %4780 = vmatpush1.msra.mxu0 %v4779
    %4781 = vmatprep.subr.mxu0 0.0
    %4782 = vmatpush2.msra.mxu0 0.0
    %4783 = vmatprep.subr.mxu0 0.0
    %4784 = vmatpush2.msra.mxu0 0.0
    %4785 = vmatprep.subr.mxu0 0.0
    %4786 = vmatpush2.msra.mxu0 0.0
    %4787 = vmatprep.subr.mxu0 0.0
    %4788 = vmatpush2.msra.mxu0 0.0
    %4789 = vmatprep.subr.mxu0 0.0
    %4790 = vmatpush2.msra.mxu0 0.0
    %4791 = vmatprep.subr.mxu0 0.0
    %4792 = vmatpush2.msra.mxu0 0.0
    %4793 = vmatprep.subr.mxu0 0.0
    %4794 = vmatpush2.msra.mxu0 0.0
    %4795 = vmatprep.subr.mxu0 0.0
    %4796 = vmatpush2.msra.mxu0 0.0
    %4797 = vmatprep.subr.mxu0 0.0
    %4798 = vmatpush2.msra.mxu0 0.0
    %4799 = vmatprep.subr.mxu0 0.0
    %4800 = vmatpush2.msra.mxu0 0.0
    %4801 = vmatprep.subr.mxu0 0.0
    %4802 = vmatpush2.msra.mxu0 0.0
    %4803 = vmatprep.subr.mxu0 0.0
    %4804 = vmatpush2.msra.mxu0 0.0
    %4805 = vmatprep.subr.mxu0 0.0
    %4806 = vmatpush2.msra.mxu0 0.0
    %4807 = vmatprep.subr.mxu0 0.0
    %4808 = vmatpush2.msra.mxu0 0.0
    %4809 = vmatprep.subr.mxu0 0.0
    %4810 = vmatpush2.msra.mxu0 0.0
    %4811 = vmatprep.subr.mxu0 0.0
    %4812 = vmatpush2.msra.mxu0 0.0
    %4813 = vmatprep.mubr.f32.mxu0 0.0
    %v4814 = vand.u32 %v195, 4294901760
    %v4815 = vsub.f32 %v195, %v4814
    %4816 = vmatmul.mubr.f32.gmra.mxu0 %v4815
    %v4817 = vpop.f32.mrf.mxu0
    %v4818 = vadd.f32 %v4730, %v4817
    %v4819 = vpop.f32.mrf.mxu0
    %4820 = vdwg.mxu0
    %4821 = vmatprep.subr.mxu0 0.0
    %4822 = vmatpush1.msra.mxu0 0.0
    %4823 = vmatprep.subr.mxu0 0.0
    %4824 = vmatpush1.msra.mxu0 0.0
    %4825 = vmatprep.subr.mxu0 0.0
    %4826 = vmatpush1.msra.mxu0 0.0
    %4827 = vmatprep.subr.mxu0 0.0
    %4828 = vmatpush1.msra.mxu0 0.0
    %4829 = vmatprep.subr.mxu0 0.0
    %4830 = vmatpush1.msra.mxu0 0.0
    %4831 = vmatprep.subr.mxu0 0.0
    %4832 = vmatpush1.msra.mxu0 0.0
    %4833 = vmatprep.subr.mxu0 0.0
    %4834 = vmatpush1.msra.mxu0 0.0
    %4835 = vmatprep.subr.mxu0 0.0
    %4836 = vmatpush1.msra.mxu0 0.0
    %4837 = vmatprep.subr.mxu0 0.0
    %v4838 = vand.u32 %v4536, 4294901760
    %4839 = vmatpush1.msra.mxu0 %v4838
    %4840 = vmatprep.subr.mxu0 0.0
    %v4841 = vand.u32 %v4531, 4294901760
    %4842 = vmatpush1.msra.mxu0 %v4841
    %4843 = vmatprep.subr.mxu0 0.0
    %v4844 = vand.u32 %v4526, 4294901760
    %4845 = vmatpush1.msra.mxu0 %v4844
    %4846 = vmatprep.subr.mxu0 0.0
    %v4847 = vand.u32 %v4521, 4294901760
    %4848 = vmatpush1.msra.mxu0 %v4847
    %4849 = vmatprep.subr.mxu0 0.0
    %v4850 = vand.u32 %v4516, 4294901760
    %4851 = vmatpush1.msra.mxu0 %v4850
    %4852 = vmatprep.subr.mxu0 0.0
    %v4853 = vand.u32 %v4511, 4294901760
    %4854 = vmatpush1.msra.mxu0 %v4853
    %4855 = vmatprep.subr.mxu0 0.0
    %v4856 = vand.u32 %v4506, 4294901760
    %4857 = vmatpush1.msra.mxu0 %v4856
    %4858 = vmatprep.subr.mxu0 0.0
    %v4859 = vand.u32 %v4501, 4294901760
    %4860 = vmatpush1.msra.mxu0 %v4859
    %4861 = vmatprep.subr.mxu0 0.0
    %4862 = vmatpush2.msra.mxu0 0.0
    %4863 = vmatprep.subr.mxu0 0.0
    %4864 = vmatpush2.msra.mxu0 0.0
    %4865 = vmatprep.subr.mxu0 0.0
    %4866 = vmatpush2.msra.mxu0 0.0
    %4867 = vmatprep.subr.mxu0 0.0
    %4868 = vmatpush2.msra.mxu0 0.0
    %4869 = vmatprep.subr.mxu0 0.0
    %4870 = vmatpush2.msra.mxu0 0.0
    %4871 = vmatprep.subr.mxu0 0.0
    %4872 = vmatpush2.msra.mxu0 0.0
    %4873 = vmatprep.subr.mxu0 0.0
    %4874 = vmatpush2.msra.mxu0 0.0
    %4875 = vmatprep.subr.mxu0 0.0
    %4876 = vmatpush2.msra.mxu0 0.0
    %4877 = vmatprep.subr.mxu0 0.0
    %4878 = vmatpush2.msra.mxu0 0.0
    %4879 = vmatprep.subr.mxu0 0.0
    %4880 = vmatpush2.msra.mxu0 0.0
    %4881 = vmatprep.subr.mxu0 0.0
    %4882 = vmatpush2.msra.mxu0 0.0
    %4883 = vmatprep.subr.mxu0 0.0
    %4884 = vmatpush2.msra.mxu0 0.0
    %4885 = vmatprep.subr.mxu0 0.0
    %4886 = vmatpush2.msra.mxu0 0.0
    %4887 = vmatprep.subr.mxu0 0.0
    %4888 = vmatpush2.msra.mxu0 0.0
    %4889 = vmatprep.subr.mxu0 0.0
    %4890 = vmatpush2.msra.mxu0 0.0
    %4891 = vmatprep.subr.mxu0 0.0
    %4892 = vmatpush2.msra.mxu0 0.0
    %4893 = vmatprep.mubr.f32.mxu0 0.0
    %v4894 = vand.u32 %v195, 4294901760
    %v4895 = vsub.f32 %v195, %v4894
    %v4896 = vand.u32 %v4895, 4294901760
    %4897 = vmatmul.mubr.f32.gmra.mxu0 %v4896
    %v4898 = vpop.f32.mrf.mxu0
    %v4899 = vadd.f32 %v4818, %v4898
    %v4900 = vpop.f32.mrf.mxu0
    %4901 = vdwg.mxu0
    %4902 = vmatprep.subr.mxu0 0.0
    %4903 = vmatpush1.msra.mxu0 0.0
    %4904 = vmatprep.subr.mxu0 0.0
    %4905 = vmatpush1.msra.mxu0 0.0
    %4906 = vmatprep.subr.mxu0 0.0
    %4907 = vmatpush1.msra.mxu0 0.0
    %4908 = vmatprep.subr.mxu0 0.0
    %4909 = vmatpush1.msra.mxu0 0.0
    %4910 = vmatprep.subr.mxu0 0.0
    %4911 = vmatpush1.msra.mxu0 0.0
    %4912 = vmatprep.subr.mxu0 0.0
    %4913 = vmatpush1.msra.mxu0 0.0
    %4914 = vmatprep.subr.mxu0 0.0
    %4915 = vmatpush1.msra.mxu0 0.0
    %4916 = vmatprep.subr.mxu0 0.0
    %4917 = vmatpush1.msra.mxu0 0.0
    %4918 = vmatprep.subr.mxu0 0.0
    %v4919 = vand.u32 %v4536, 4294901760
    %v4920 = vsub.f32 %v4536, %v4919
    %v4921 = vand.u32 %v4920, 4294901760
    %4922 = vmatpush1.msra.mxu0 %v4921
    %4923 = vmatprep.subr.mxu0 0.0
    %v4924 = vand.u32 %v4531, 4294901760
    %v4925 = vsub.f32 %v4531, %v4924
    %v4926 = vand.u32 %v4925, 4294901760
    %4927 = vmatpush1.msra.mxu0 %v4926
    %4928 = vmatprep.subr.mxu0 0.0
    %v4929 = vand.u32 %v4526, 4294901760
    %v4930 = vsub.f32 %v4526, %v4929
    %v4931 = vand.u32 %v4930, 4294901760
    %4932 = vmatpush1.msra.mxu0 %v4931
    %4933 = vmatprep.subr.mxu0 0.0
    %v4934 = vand.u32 %v4521, 4294901760
    %v4935 = vsub.f32 %v4521, %v4934
    %v4936 = vand.u32 %v4935, 4294901760
    %4937 = vmatpush1.msra.mxu0 %v4936
    %4938 = vmatprep.subr.mxu0 0.0
    %v4939 = vand.u32 %v4516, 4294901760
    %v4940 = vsub.f32 %v4516, %v4939
    %v4941 = vand.u32 %v4940, 4294901760
    %4942 = vmatpush1.msra.mxu0 %v4941
    %4943 = vmatprep.subr.mxu0 0.0
    %v4944 = vand.u32 %v4511, 4294901760
    %v4945 = vsub.f32 %v4511, %v4944
    %v4946 = vand.u32 %v4945, 4294901760
    %4947 = vmatpush1.msra.mxu0 %v4946
    %4948 = vmatprep.subr.mxu0 0.0
    %v4949 = vand.u32 %v4506, 4294901760
    %v4950 = vsub.f32 %v4506, %v4949
    %v4951 = vand.u32 %v4950, 4294901760
    %4952 = vmatpush1.msra.mxu0 %v4951
    %4953 = vmatprep.subr.mxu0 0.0
    %v4954 = vand.u32 %v4501, 4294901760
    %v4955 = vsub.f32 %v4501, %v4954
    %v4956 = vand.u32 %v4955, 4294901760
    %4957 = vmatpush1.msra.mxu0 %v4956
    %4958 = vmatprep.subr.mxu0 0.0
    %4959 = vmatpush2.msra.mxu0 0.0
    %4960 = vmatprep.subr.mxu0 0.0
    %4961 = vmatpush2.msra.mxu0 0.0
    %4962 = vmatprep.subr.mxu0 0.0
    %4963 = vmatpush2.msra.mxu0 0.0
    %4964 = vmatprep.subr.mxu0 0.0
    %4965 = vmatpush2.msra.mxu0 0.0
    %4966 = vmatprep.subr.mxu0 0.0
    %4967 = vmatpush2.msra.mxu0 0.0
    %4968 = vmatprep.subr.mxu0 0.0
    %4969 = vmatpush2.msra.mxu0 0.0
    %4970 = vmatprep.subr.mxu0 0.0
    %4971 = vmatpush2.msra.mxu0 0.0
    %4972 = vmatprep.subr.mxu0 0.0
    %4973 = vmatpush2.msra.mxu0 0.0
    %4974 = vmatprep.subr.mxu0 0.0
    %4975 = vmatpush2.msra.mxu0 0.0
    %4976 = vmatprep.subr.mxu0 0.0
    %4977 = vmatpush2.msra.mxu0 0.0
    %4978 = vmatprep.subr.mxu0 0.0
    %4979 = vmatpush2.msra.mxu0 0.0
    %4980 = vmatprep.subr.mxu0 0.0
    %4981 = vmatpush2.msra.mxu0 0.0
    %4982 = vmatprep.subr.mxu0 0.0
    %4983 = vmatpush2.msra.mxu0 0.0
    %4984 = vmatprep.subr.mxu0 0.0
    %4985 = vmatpush2.msra.mxu0 0.0
    %4986 = vmatprep.subr.mxu0 0.0
    %4987 = vmatpush2.msra.mxu0 0.0
    %4988 = vmatprep.subr.mxu0 0.0
    %4989 = vmatpush2.msra.mxu0 0.0
    %4990 = vmatprep.mubr.f32.mxu0 0.0
    %v4991 = vand.u32 %v195, 4294901760
    %4992 = vmatmul.mubr.f32.gmra.mxu0 %v4991
    %v4993 = vpop.f32.mrf.mxu0
    %v4994 = vadd.f32 %v4899, %v4993
    %v4995 = vpop.f32.mrf.mxu0
    %4996 = vdwg.mxu0
    %4997 = vmatprep.subr.mxu0 0.0
    %4998 = vmatpush1.msra.mxu0 0.0
    %4999 = vmatprep.subr.mxu0 0.0
    %5000 = vmatpush1.msra.mxu0 0.0
    %5001 = vmatprep.subr.mxu0 0.0
    %5002 = vmatpush1.msra.mxu0 0.0
    %5003 = vmatprep.subr.mxu0 0.0
    %5004 = vmatpush1.msra.mxu0 0.0
    %5005 = vmatprep.subr.mxu0 0.0
    %5006 = vmatpush1.msra.mxu0 0.0
    %5007 = vmatprep.subr.mxu0 0.0
    %5008 = vmatpush1.msra.mxu0 0.0
    %5009 = vmatprep.subr.mxu0 0.0
    %5010 = vmatpush1.msra.mxu0 0.0
    %5011 = vmatprep.subr.mxu0 0.0
    %5012 = vmatpush1.msra.mxu0 0.0
    %5013 = vmatprep.subr.mxu0 0.0
    %v5014 = vand.u32 %v4536, 4294901760
    %5015 = vmatpush1.msra.mxu0 %v5014
    %5016 = vmatprep.subr.mxu0 0.0
    %v5017 = vand.u32 %v4531, 4294901760
    %5018 = vmatpush1.msra.mxu0 %v5017
    %5019 = vmatprep.subr.mxu0 0.0
    %v5020 = vand.u32 %v4526, 4294901760
    %5021 = vmatpush1.msra.mxu0 %v5020
    %5022 = vmatprep.subr.mxu0 0.0
    %v5023 = vand.u32 %v4521, 4294901760
    %5024 = vmatpush1.msra.mxu0 %v5023
    %5025 = vmatprep.subr.mxu0 0.0
    %v5026 = vand.u32 %v4516, 4294901760
    %5027 = vmatpush1.msra.mxu0 %v5026
    %5028 = vmatprep.subr.mxu0 0.0
    %v5029 = vand.u32 %v4511, 4294901760
    %5030 = vmatpush1.msra.mxu0 %v5029
    %5031 = vmatprep.subr.mxu0 0.0
    %v5032 = vand.u32 %v4506, 4294901760
    %5033 = vmatpush1.msra.mxu0 %v5032
    %5034 = vmatprep.subr.mxu0 0.0
    %v5035 = vand.u32 %v4501, 4294901760
    %5036 = vmatpush1.msra.mxu0 %v5035
    %5037 = vmatprep.subr.mxu0 0.0
    %5038 = vmatpush2.msra.mxu0 0.0
    %5039 = vmatprep.subr.mxu0 0.0
    %5040 = vmatpush2.msra.mxu0 0.0
    %5041 = vmatprep.subr.mxu0 0.0
    %5042 = vmatpush2.msra.mxu0 0.0
    %5043 = vmatprep.subr.mxu0 0.0
    %5044 = vmatpush2.msra.mxu0 0.0
    %5045 = vmatprep.subr.mxu0 0.0
    %5046 = vmatpush2.msra.mxu0 0.0
    %5047 = vmatprep.subr.mxu0 0.0
    %5048 = vmatpush2.msra.mxu0 0.0
    %5049 = vmatprep.subr.mxu0 0.0
    %5050 = vmatpush2.msra.mxu0 0.0
    %5051 = vmatprep.subr.mxu0 0.0
    %5052 = vmatpush2.msra.mxu0 0.0
    %5053 = vmatprep.subr.mxu0 0.0
    %5054 = vmatpush2.msra.mxu0 0.0
    %5055 = vmatprep.subr.mxu0 0.0
    %5056 = vmatpush2.msra.mxu0 0.0
    %5057 = vmatprep.subr.mxu0 0.0
    %5058 = vmatpush2.msra.mxu0 0.0
    %5059 = vmatprep.subr.mxu0 0.0
    %5060 = vmatpush2.msra.mxu0 0.0
    %5061 = vmatprep.subr.mxu0 0.0
    %5062 = vmatpush2.msra.mxu0 0.0
    %5063 = vmatprep.subr.mxu0 0.0
    %5064 = vmatpush2.msra.mxu0 0.0
    %5065 = vmatprep.subr.mxu0 0.0
    %5066 = vmatpush2.msra.mxu0 0.0
    %5067 = vmatprep.subr.mxu0 0.0
    %5068 = vmatpush2.msra.mxu0 0.0
    %5069 = vmatprep.mubr.f32.mxu0 0.0
    %v5070 = vand.u32 %v195, 4294901760
    %5071 = vmatmul.mubr.f32.gmra.mxu0 %v5070
    %v5072 = vpop.f32.mrf.mxu0
    %v5073 = vadd.f32 %v4994, %v5072
    %v5074 = vpop.f32.mrf.mxu0
    %5075 = vdwg.mxu0
    %v5076 = vmax.f32 %v5073, 0.0
    %5077 = vmatprep.subr.mxu0 0.0
    %5078 = vmatpush1.msra.mxu0 0.0
    %5079 = vmatprep.subr.mxu0 0.0
    %5080 = vmatpush1.msra.mxu0 0.0
    %5081 = vmatprep.subr.mxu0 0.0
    %5082 = vmatpush1.msra.mxu0 0.0
    %5083 = vmatprep.subr.mxu0 0.0
    %5084 = vmatpush1.msra.mxu0 0.0
    %5085 = vmatprep.subr.mxu0 0.0
    %5086 = vmatpush1.msra.mxu0 0.0
    %5087 = vmatprep.subr.mxu0 0.0
    %5088 = vmatpush1.msra.mxu0 0.0
    %5089 = vmatprep.subr.mxu0 0.0
    %5090 = vmatpush1.msra.mxu0 0.0
    %5091 = vmatprep.subr.mxu0 0.0
    %5092 = vmatpush1.msra.mxu0 0.0
    %5093 = vmatprep.subr.mxu0 0.0
    %5094 = vmatpush1.msra.mxu0 0.0
    %5095 = vmatprep.subr.mxu0 0.0
    %5096 = vmatpush1.msra.mxu0 0.0
    %5097 = vmatprep.subr.mxu0 0.0
    %5098 = vmatpush1.msra.mxu0 0.0
    %5099 = vmatprep.subr.mxu0 0.0
    %5100 = vmatpush1.msra.mxu0 0.0
    %5101 = vmatprep.subr.mxu0 0.0
    %5102 = vmatpush1.msra.mxu0 0.0
    %5103 = vmatprep.subr.mxu0 0.0
    %5104 = vmatpush1.msra.mxu0 0.0
    %5105 = vmatprep.subr.mxu0 0.0
    %5106 = vmatpush1.msra.mxu0 0.0
    %5107 = vmatprep.subr.mxu0 0.0
    %v5108 = vand.u32 %v5076, 4294901760
    %5109 = vmatpush1.msra.mxu0 %v5108
    %5110 = vmatprep.subr.mxu0 0.0
    %5111 = vmatpush2.msra.mxu0 0.0
    %5112 = vmatprep.subr.mxu0 0.0
    %5113 = vmatpush2.msra.mxu0 0.0
    %5114 = vmatprep.subr.mxu0 0.0
    %5115 = vmatpush2.msra.mxu0 0.0
    %5116 = vmatprep.subr.mxu0 0.0
    %5117 = vmatpush2.msra.mxu0 0.0
    %5118 = vmatprep.subr.mxu0 0.0
    %5119 = vmatpush2.msra.mxu0 0.0
    %5120 = vmatprep.subr.mxu0 0.0
    %5121 = vmatpush2.msra.mxu0 0.0
    %5122 = vmatprep.subr.mxu0 0.0
    %5123 = vmatpush2.msra.mxu0 0.0
    %5124 = vmatprep.subr.mxu0 0.0
    %5125 = vmatpush2.msra.mxu0 0.0
    %5126 = vmatprep.subr.mxu0 0.0
    %5127 = vmatpush2.msra.mxu0 0.0
    %5128 = vmatprep.subr.mxu0 0.0
    %5129 = vmatpush2.msra.mxu0 0.0
    %5130 = vmatprep.subr.mxu0 0.0
    %5131 = vmatpush2.msra.mxu0 0.0
    %5132 = vmatprep.subr.mxu0 0.0
    %5133 = vmatpush2.msra.mxu0 0.0
    %5134 = vmatprep.subr.mxu0 0.0
    %5135 = vmatpush2.msra.mxu0 0.0
    %5136 = vmatprep.subr.mxu0 0.0
    %5137 = vmatpush2.msra.mxu0 0.0
    %5138 = vmatprep.subr.mxu0 0.0
    %5139 = vmatpush2.msra.mxu0 0.0
    %5140 = vmatprep.subr.mxu0 0.0
    %5141 = vmatpush2.msra.mxu0 0.0
    %5142 = vmatprep.mubr.f32.mxu0 0.0
    %v5143 = vand.u32 %v737, 4294901760
    %v5144 = vsub.f32 %v737, %v5143
    %v5145 = vand.u32 %v5144, 4294901760
    %v5146 = vsub.f32 %v5144, %v5145
    %v5147 = vand.u32 %v5146, 4294901760
    %5148 = vmatmul.mubr.f32.gmra.mxu0 %v5147
    %v5149 = vpop.f32.mrf.mxu0
    %v5150 = vadd.f32 0.0, %v5149
    %v5151 = vpop.f32.mrf.mxu0
    %5152 = vmatprep.mubr.f32.mxu0 0.0
    %v5153 = vand.u32 %v740, 4294901760
    %v5154 = vsub.f32 %v740, %v5153
    %v5155 = vand.u32 %v5154, 4294901760
    %v5156 = vsub.f32 %v5154, %v5155
    %v5157 = vand.u32 %v5156, 4294901760
    %5158 = vmatmul.mubr.f32.gmra.mxu0 %v5157
    %v5159 = vpop.f32.mrf.mxu0
    %v5160 = vadd.f32 0.0, %v5159
    %v5161 = vpop.f32.mrf.mxu0
    %5162 = vmatprep.mubr.f32.mxu0 0.0
    %v5163 = vand.u32 %v743, 4294901760
    %v5164 = vsub.f32 %v743, %v5163
    %v5165 = vand.u32 %v5164, 4294901760
    %v5166 = vsub.f32 %v5164, %v5165
    %v5167 = vand.u32 %v5166, 4294901760
    %5168 = vmatmul.mubr.f32.gmra.mxu0 %v5167
    %v5169 = vpop.f32.mrf.mxu0
    %v5170 = vadd.f32 0.0, %v5169
    %v5171 = vpop.f32.mrf.mxu0
    %5172 = vmatprep.mubr.f32.mxu0 0.0
    %v5173 = vand.u32 %v746, 4294901760
    %v5174 = vsub.f32 %v746, %v5173
    %v5175 = vand.u32 %v5174, 4294901760
    %v5176 = vsub.f32 %v5174, %v5175
    %v5177 = vand.u32 %v5176, 4294901760
    %5178 = vmatmul.mubr.f32.gmra.mxu0 %v5177
    %v5179 = vpop.f32.mrf.mxu0
    %v5180 = vadd.f32 0.0, %v5179
    %v5181 = vpop.f32.mrf.mxu0
    %5182 = vmatprep.mubr.f32.mxu0 0.0
    %v5183 = vand.u32 %v749, 4294901760
    %v5184 = vsub.f32 %v749, %v5183
    %v5185 = vand.u32 %v5184, 4294901760
    %v5186 = vsub.f32 %v5184, %v5185
    %v5187 = vand.u32 %v5186, 4294901760
    %5188 = vmatmul.mubr.f32.gmra.mxu0 %v5187
    %v5189 = vpop.f32.mrf.mxu0
    %v5190 = vadd.f32 0.0, %v5189
    %v5191 = vpop.f32.mrf.mxu0
    %5192 = vmatprep.mubr.f32.mxu0 0.0
    %v5193 = vand.u32 %v752, 4294901760
    %v5194 = vsub.f32 %v752, %v5193
    %v5195 = vand.u32 %v5194, 4294901760
    %v5196 = vsub.f32 %v5194, %v5195
    %v5197 = vand.u32 %v5196, 4294901760
    %5198 = vmatmul.mubr.f32.gmra.mxu0 %v5197
    %v5199 = vpop.f32.mrf.mxu0
    %v5200 = vadd.f32 0.0, %v5199
    %v5201 = vpop.f32.mrf.mxu0
    %5202 = vmatprep.mubr.f32.mxu0 0.0
    %v5203 = vand.u32 %v755, 4294901760
    %v5204 = vsub.f32 %v755, %v5203
    %v5205 = vand.u32 %v5204, 4294901760
    %v5206 = vsub.f32 %v5204, %v5205
    %v5207 = vand.u32 %v5206, 4294901760
    %5208 = vmatmul.mubr.f32.gmra.mxu0 %v5207
    %v5209 = vpop.f32.mrf.mxu0
    %v5210 = vadd.f32 0.0, %v5209
    %v5211 = vpop.f32.mrf.mxu0
    %5212 = vmatprep.mubr.f32.mxu0 0.0
    %v5213 = vand.u32 %v758, 4294901760
    %v5214 = vsub.f32 %v758, %v5213
    %v5215 = vand.u32 %v5214, 4294901760
    %v5216 = vsub.f32 %v5214, %v5215
    %v5217 = vand.u32 %v5216, 4294901760
    %5218 = vmatmul.mubr.f32.gmra.mxu0 %v5217
    %v5219 = vpop.f32.mrf.mxu0
    %v5220 = vadd.f32 0.0, %v5219
    %v5221 = vpop.f32.mrf.mxu0
    %5222 = vdwg.mxu0
    %5223 = vmatprep.subr.mxu0 0.0
    %5224 = vmatpush1.msra.mxu0 0.0
    %5225 = vmatprep.subr.mxu0 0.0
    %5226 = vmatpush1.msra.mxu0 0.0
    %5227 = vmatprep.subr.mxu0 0.0
    %5228 = vmatpush1.msra.mxu0 0.0
    %5229 = vmatprep.subr.mxu0 0.0
    %5230 = vmatpush1.msra.mxu0 0.0
    %5231 = vmatprep.subr.mxu0 0.0
    %5232 = vmatpush1.msra.mxu0 0.0
    %5233 = vmatprep.subr.mxu0 0.0
    %5234 = vmatpush1.msra.mxu0 0.0
    %5235 = vmatprep.subr.mxu0 0.0
    %5236 = vmatpush1.msra.mxu0 0.0
    %5237 = vmatprep.subr.mxu0 0.0
    %5238 = vmatpush1.msra.mxu0 0.0
    %5239 = vmatprep.subr.mxu0 0.0
    %5240 = vmatpush1.msra.mxu0 0.0
    %5241 = vmatprep.subr.mxu0 0.0
    %5242 = vmatpush1.msra.mxu0 0.0
    %5243 = vmatprep.subr.mxu0 0.0
    %5244 = vmatpush1.msra.mxu0 0.0
    %5245 = vmatprep.subr.mxu0 0.0
    %5246 = vmatpush1.msra.mxu0 0.0
    %5247 = vmatprep.subr.mxu0 0.0
    %5248 = vmatpush1.msra.mxu0 0.0
    %5249 = vmatprep.subr.mxu0 0.0
    %5250 = vmatpush1.msra.mxu0 0.0
    %5251 = vmatprep.subr.mxu0 0.0
    %5252 = vmatpush1.msra.mxu0 0.0
    %5253 = vmatprep.subr.mxu0 0.0
    %v5254 = vand.u32 %v5076, 4294901760
    %v5255 = vsub.f32 %v5076, %v5254
    %v5256 = vand.u32 %v5255, 4294901760
    %v5257 = vsub.f32 %v5255, %v5256
    %v5258 = vand.u32 %v5257, 4294901760
    %5259 = vmatpush1.msra.mxu0 %v5258
    %5260 = vmatprep.subr.mxu0 0.0
    %5261 = vmatpush2.msra.mxu0 0.0
    %5262 = vmatprep.subr.mxu0 0.0
    %5263 = vmatpush2.msra.mxu0 0.0
    %5264 = vmatprep.subr.mxu0 0.0
    %5265 = vmatpush2.msra.mxu0 0.0
    %5266 = vmatprep.subr.mxu0 0.0
    %5267 = vmatpush2.msra.mxu0 0.0
    %5268 = vmatprep.subr.mxu0 0.0
    %5269 = vmatpush2.msra.mxu0 0.0
    %5270 = vmatprep.subr.mxu0 0.0
    %5271 = vmatpush2.msra.mxu0 0.0
    %5272 = vmatprep.subr.mxu0 0.0
    %5273 = vmatpush2.msra.mxu0 0.0
    %5274 = vmatprep.subr.mxu0 0.0
    %5275 = vmatpush2.msra.mxu0 0.0
    %5276 = vmatprep.subr.mxu0 0.0
    %5277 = vmatpush2.msra.mxu0 0.0
    %5278 = vmatprep.subr.mxu0 0.0
    %5279 = vmatpush2.msra.mxu0 0.0
    %5280 = vmatprep.subr.mxu0 0.0
    %5281 = vmatpush2.msra.mxu0 0.0
    %5282 = vmatprep.subr.mxu0 0.0
    %5283 = vmatpush2.msra.mxu0 0.0
    %5284 = vmatprep.subr.mxu0 0.0
    %5285 = vmatpush2.msra.mxu0 0.0
    %5286 = vmatprep.subr.mxu0 0.0
    %5287 = vmatpush2.msra.mxu0 0.0
    %5288 = vmatprep.subr.mxu0 0.0
    %5289 = vmatpush2.msra.mxu0 0.0
    %5290 = vmatprep.subr.mxu0 0.0
    %5291 = vmatpush2.msra.mxu0 0.0
    %5292 = vmatprep.mubr.f32.mxu0 0.0
    %v5293 = vand.u32 %v737, 4294901760
    %5294 = vmatmul.mubr.f32.gmra.mxu0 %v5293
    %v5295 = vpop.f32.mrf.mxu0
    %v5296 = vadd.f32 %v5150, %v5295
    %v5297 = vpop.f32.mrf.mxu0
    %5298 = vmatprep.mubr.f32.mxu0 0.0
    %v5299 = vand.u32 %v740, 4294901760
    %5300 = vmatmul.mubr.f32.gmra.mxu0 %v5299
    %v5301 = vpop.f32.mrf.mxu0
    %v5302 = vadd.f32 %v5160, %v5301
    %v5303 = vpop.f32.mrf.mxu0
    %5304 = vmatprep.mubr.f32.mxu0 0.0
    %v5305 = vand.u32 %v743, 4294901760
    %5306 = vmatmul.mubr.f32.gmra.mxu0 %v5305
    %v5307 = vpop.f32.mrf.mxu0
    %v5308 = vadd.f32 %v5170, %v5307
    %v5309 = vpop.f32.mrf.mxu0
    %5310 = vmatprep.mubr.f32.mxu0 0.0
    %v5311 = vand.u32 %v746, 4294901760
    %5312 = vmatmul.mubr.f32.gmra.mxu0 %v5311
    %v5313 = vpop.f32.mrf.mxu0
    %v5314 = vadd.f32 %v5180, %v5313
    %v5315 = vpop.f32.mrf.mxu0
    %5316 = vmatprep.mubr.f32.mxu0 0.0
    %v5317 = vand.u32 %v749, 4294901760
    %5318 = vmatmul.mubr.f32.gmra.mxu0 %v5317
    %v5319 = vpop.f32.mrf.mxu0
    %v5320 = vadd.f32 %v5190, %v5319
    %v5321 = vpop.f32.mrf.mxu0
    %5322 = vmatprep.mubr.f32.mxu0 0.0
    %v5323 = vand.u32 %v752, 4294901760
    %5324 = vmatmul.mubr.f32.gmra.mxu0 %v5323
    %v5325 = vpop.f32.mrf.mxu0
    %v5326 = vadd.f32 %v5200, %v5325
    %v5327 = vpop.f32.mrf.mxu0
    %5328 = vmatprep.mubr.f32.mxu0 0.0
    %v5329 = vand.u32 %v755, 4294901760
    %5330 = vmatmul.mubr.f32.gmra.mxu0 %v5329
    %v5331 = vpop.f32.mrf.mxu0
    %v5332 = vadd.f32 %v5210, %v5331
    %v5333 = vpop.f32.mrf.mxu0
    %5334 = vmatprep.mubr.f32.mxu0 0.0
    %v5335 = vand.u32 %v758, 4294901760
    %5336 = vmatmul.mubr.f32.gmra.mxu0 %v5335
    %v5337 = vpop.f32.mrf.mxu0
    %v5338 = vadd.f32 %v5220, %v5337
    %v5339 = vpop.f32.mrf.mxu0
    %5340 = vdwg.mxu0
    %5341 = vmatprep.subr.mxu0 0.0
    %5342 = vmatpush1.msra.mxu0 0.0
    %5343 = vmatprep.subr.mxu0 0.0
    %5344 = vmatpush1.msra.mxu0 0.0
    %5345 = vmatprep.subr.mxu0 0.0
    %5346 = vmatpush1.msra.mxu0 0.0
    %5347 = vmatprep.subr.mxu0 0.0
    %5348 = vmatpush1.msra.mxu0 0.0
    %5349 = vmatprep.subr.mxu0 0.0
    %5350 = vmatpush1.msra.mxu0 0.0
    %5351 = vmatprep.subr.mxu0 0.0
    %5352 = vmatpush1.msra.mxu0 0.0
    %5353 = vmatprep.subr.mxu0 0.0
    %5354 = vmatpush1.msra.mxu0 0.0
    %5355 = vmatprep.subr.mxu0 0.0
    %5356 = vmatpush1.msra.mxu0 0.0
    %5357 = vmatprep.subr.mxu0 0.0
    %5358 = vmatpush1.msra.mxu0 0.0
    %5359 = vmatprep.subr.mxu0 0.0
    %5360 = vmatpush1.msra.mxu0 0.0
    %5361 = vmatprep.subr.mxu0 0.0
    %5362 = vmatpush1.msra.mxu0 0.0
    %5363 = vmatprep.subr.mxu0 0.0
    %5364 = vmatpush1.msra.mxu0 0.0
    %5365 = vmatprep.subr.mxu0 0.0
    %5366 = vmatpush1.msra.mxu0 0.0
    %5367 = vmatprep.subr.mxu0 0.0
    %5368 = vmatpush1.msra.mxu0 0.0
    %5369 = vmatprep.subr.mxu0 0.0
    %5370 = vmatpush1.msra.mxu0 0.0
    %5371 = vmatprep.subr.mxu0 0.0
    %v5372 = vand.u32 %v5076, 4294901760
    %v5373 = vsub.f32 %v5076, %v5372
    %5374 = vmatpush1.msra.mxu0 %v5373
    %5375 = vmatprep.subr.mxu0 0.0
    %5376 = vmatpush2.msra.mxu0 0.0
    %5377 = vmatprep.subr.mxu0 0.0
    %5378 = vmatpush2.msra.mxu0 0.0
    %5379 = vmatprep.subr.mxu0 0.0
    %5380 = vmatpush2.msra.mxu0 0.0
    %5381 = vmatprep.subr.mxu0 0.0
    %5382 = vmatpush2.msra.mxu0 0.0
    %5383 = vmatprep.subr.mxu0 0.0
    %5384 = vmatpush2.msra.mxu0 0.0
    %5385 = vmatprep.subr.mxu0 0.0
    %5386 = vmatpush2.msra.mxu0 0.0
    %5387 = vmatprep.subr.mxu0 0.0
    %5388 = vmatpush2.msra.mxu0 0.0
    %5389 = vmatprep.subr.mxu0 0.0
    %5390 = vmatpush2.msra.mxu0 0.0
    %5391 = vmatprep.subr.mxu0 0.0
    %5392 = vmatpush2.msra.mxu0 0.0
    %5393 = vmatprep.subr.mxu0 0.0
    %5394 = vmatpush2.msra.mxu0 0.0
    %5395 = vmatprep.subr.mxu0 0.0
    %5396 = vmatpush2.msra.mxu0 0.0
    %5397 = vmatprep.subr.mxu0 0.0
    %5398 = vmatpush2.msra.mxu0 0.0
    %5399 = vmatprep.subr.mxu0 0.0
    %5400 = vmatpush2.msra.mxu0 0.0
    %5401 = vmatprep.subr.mxu0 0.0
    %5402 = vmatpush2.msra.mxu0 0.0
    %5403 = vmatprep.subr.mxu0 0.0
    %5404 = vmatpush2.msra.mxu0 0.0
    %5405 = vmatprep.subr.mxu0 0.0
    %5406 = vmatpush2.msra.mxu0 0.0
    %5407 = vmatprep.mubr.f32.mxu0 0.0
    %v5408 = vand.u32 %v737, 4294901760
    %v5409 = vsub.f32 %v737, %v5408
    %5410 = vmatmul.mubr.f32.gmra.mxu0 %v5409
    %v5411 = vpop.f32.mrf.mxu0
    %v5412 = vadd.f32 %v5296, %v5411
    %v5413 = vpop.f32.mrf.mxu0
    %5414 = vmatprep.mubr.f32.mxu0 0.0
    %v5415 = vand.u32 %v740, 4294901760
    %v5416 = vsub.f32 %v740, %v5415
    %5417 = vmatmul.mubr.f32.gmra.mxu0 %v5416
    %v5418 = vpop.f32.mrf.mxu0
    %v5419 = vadd.f32 %v5302, %v5418
    %v5420 = vpop.f32.mrf.mxu0
    %5421 = vmatprep.mubr.f32.mxu0 0.0
    %v5422 = vand.u32 %v743, 4294901760
    %v5423 = vsub.f32 %v743, %v5422
    %5424 = vmatmul.mubr.f32.gmra.mxu0 %v5423
    %v5425 = vpop.f32.mrf.mxu0
    %v5426 = vadd.f32 %v5308, %v5425
    %v5427 = vpop.f32.mrf.mxu0
    %5428 = vmatprep.mubr.f32.mxu0 0.0
    %v5429 = vand.u32 %v746, 4294901760
    %v5430 = vsub.f32 %v746, %v5429
    %5431 = vmatmul.mubr.f32.gmra.mxu0 %v5430
    %v5432 = vpop.f32.mrf.mxu0
    %v5433 = vadd.f32 %v5314, %v5432
    %v5434 = vpop.f32.mrf.mxu0
    %5435 = vmatprep.mubr.f32.mxu0 0.0
    %v5436 = vand.u32 %v749, 4294901760
    %v5437 = vsub.f32 %v749, %v5436
    %5438 = vmatmul.mubr.f32.gmra.mxu0 %v5437
    %v5439 = vpop.f32.mrf.mxu0
    %v5440 = vadd.f32 %v5320, %v5439
    %v5441 = vpop.f32.mrf.mxu0
    %5442 = vmatprep.mubr.f32.mxu0 0.0
    %v5443 = vand.u32 %v752, 4294901760
    %v5444 = vsub.f32 %v752, %v5443
    %5445 = vmatmul.mubr.f32.gmra.mxu0 %v5444
    %v5446 = vpop.f32.mrf.mxu0
    %v5447 = vadd.f32 %v5326, %v5446
    %v5448 = vpop.f32.mrf.mxu0
    %5449 = vmatprep.mubr.f32.mxu0 0.0
    %v5450 = vand.u32 %v755, 4294901760
    %v5451 = vsub.f32 %v755, %v5450
    %5452 = vmatmul.mubr.f32.gmra.mxu0 %v5451
    %v5453 = vpop.f32.mrf.mxu0
    %v5454 = vadd.f32 %v5332, %v5453
    %v5455 = vpop.f32.mrf.mxu0
    %5456 = vmatprep.mubr.f32.mxu0 0.0
    %v5457 = vand.u32 %v758, 4294901760
    %v5458 = vsub.f32 %v758, %v5457
    %5459 = vmatmul.mubr.f32.gmra.mxu0 %v5458
    %v5460 = vpop.f32.mrf.mxu0
    %v5461 = vadd.f32 %v5338, %v5460
    %v5462 = vpop.f32.mrf.mxu0
    %5463 = vdwg.mxu0
    %5464 = vmatprep.subr.mxu0 0.0
    %5465 = vmatpush1.msra.mxu0 0.0
    %5466 = vmatprep.subr.mxu0 0.0
    %5467 = vmatpush1.msra.mxu0 0.0
    %5468 = vmatprep.subr.mxu0 0.0
    %5469 = vmatpush1.msra.mxu0 0.0
    %5470 = vmatprep.subr.mxu0 0.0
    %5471 = vmatpush1.msra.mxu0 0.0
    %5472 = vmatprep.subr.mxu0 0.0
    %5473 = vmatpush1.msra.mxu0 0.0
    %5474 = vmatprep.subr.mxu0 0.0
    %5475 = vmatpush1.msra.mxu0 0.0
    %5476 = vmatprep.subr.mxu0 0.0
    %5477 = vmatpush1.msra.mxu0 0.0
    %5478 = vmatprep.subr.mxu0 0.0
    %5479 = vmatpush1.msra.mxu0 0.0
    %5480 = vmatprep.subr.mxu0 0.0
    %5481 = vmatpush1.msra.mxu0 0.0
    %5482 = vmatprep.subr.mxu0 0.0
    %5483 = vmatpush1.msra.mxu0 0.0
    %5484 = vmatprep.subr.mxu0 0.0
    %5485 = vmatpush1.msra.mxu0 0.0
    %5486 = vmatprep.subr.mxu0 0.0
    %5487 = vmatpush1.msra.mxu0 0.0
    %5488 = vmatprep.subr.mxu0 0.0
    %5489 = vmatpush1.msra.mxu0 0.0
    %5490 = vmatprep.subr.mxu0 0.0
    %5491 = vmatpush1.msra.mxu0 0.0
    %5492 = vmatprep.subr.mxu0 0.0
    %5493 = vmatpush1.msra.mxu0 0.0
    %5494 = vmatprep.subr.mxu0 0.0
    %v5495 = vand.u32 %v5076, 4294901760
    %5496 = vmatpush1.msra.mxu0 %v5495
    %5497 = vmatprep.subr.mxu0 0.0
    %5498 = vmatpush2.msra.mxu0 0.0
    %5499 = vmatprep.subr.mxu0 0.0
    %5500 = vmatpush2.msra.mxu0 0.0
    %5501 = vmatprep.subr.mxu0 0.0
    %5502 = vmatpush2.msra.mxu0 0.0
    %5503 = vmatprep.subr.mxu0 0.0
    %5504 = vmatpush2.msra.mxu0 0.0
    %5505 = vmatprep.subr.mxu0 0.0
    %5506 = vmatpush2.msra.mxu0 0.0
    %5507 = vmatprep.subr.mxu0 0.0
    %5508 = vmatpush2.msra.mxu0 0.0
    %5509 = vmatprep.subr.mxu0 0.0
    %5510 = vmatpush2.msra.mxu0 0.0
    %5511 = vmatprep.subr.mxu0 0.0
    %5512 = vmatpush2.msra.mxu0 0.0
    %5513 = vmatprep.subr.mxu0 0.0
    %5514 = vmatpush2.msra.mxu0 0.0
    %5515 = vmatprep.subr.mxu0 0.0
    %5516 = vmatpush2.msra.mxu0 0.0
    %5517 = vmatprep.subr.mxu0 0.0
    %5518 = vmatpush2.msra.mxu0 0.0
    %5519 = vmatprep.subr.mxu0 0.0
    %5520 = vmatpush2.msra.mxu0 0.0
    %5521 = vmatprep.subr.mxu0 0.0
    %5522 = vmatpush2.msra.mxu0 0.0
    %5523 = vmatprep.subr.mxu0 0.0
    %5524 = vmatpush2.msra.mxu0 0.0
    %5525 = vmatprep.subr.mxu0 0.0
    %5526 = vmatpush2.msra.mxu0 0.0
    %5527 = vmatprep.subr.mxu0 0.0
    %5528 = vmatpush2.msra.mxu0 0.0
    %5529 = vmatprep.mubr.f32.mxu0 0.0
    %v5530 = vand.u32 %v737, 4294901760
    %v5531 = vsub.f32 %v737, %v5530
    %v5532 = vand.u32 %v5531, 4294901760
    %5533 = vmatmul.mubr.f32.gmra.mxu0 %v5532
    %v5534 = vpop.f32.mrf.mxu0
    %v5535 = vadd.f32 %v5412, %v5534
    %v5536 = vpop.f32.mrf.mxu0
    %5537 = vmatprep.mubr.f32.mxu0 0.0
    %v5538 = vand.u32 %v740, 4294901760
    %v5539 = vsub.f32 %v740, %v5538
    %v5540 = vand.u32 %v5539, 4294901760
    %5541 = vmatmul.mubr.f32.gmra.mxu0 %v5540
    %v5542 = vpop.f32.mrf.mxu0
    %v5543 = vadd.f32 %v5419, %v5542
    %v5544 = vpop.f32.mrf.mxu0
    %5545 = vmatprep.mubr.f32.mxu0 0.0
    %v5546 = vand.u32 %v743, 4294901760
    %v5547 = vsub.f32 %v743, %v5546
    %v5548 = vand.u32 %v5547, 4294901760
    %5549 = vmatmul.mubr.f32.gmra.mxu0 %v5548
    %v5550 = vpop.f32.mrf.mxu0
    %v5551 = vadd.f32 %v5426, %v5550
    %v5552 = vpop.f32.mrf.mxu0
    %5553 = vmatprep.mubr.f32.mxu0 0.0
    %v5554 = vand.u32 %v746, 4294901760
    %v5555 = vsub.f32 %v746, %v5554
    %v5556 = vand.u32 %v5555, 4294901760
    %5557 = vmatmul.mubr.f32.gmra.mxu0 %v5556
    %v5558 = vpop.f32.mrf.mxu0
    %v5559 = vadd.f32 %v5433, %v5558
    %v5560 = vpop.f32.mrf.mxu0
    %5561 = vmatprep.mubr.f32.mxu0 0.0
    %v5562 = vand.u32 %v749, 4294901760
    %v5563 = vsub.f32 %v749, %v5562
    %v5564 = vand.u32 %v5563, 4294901760
    %5565 = vmatmul.mubr.f32.gmra.mxu0 %v5564
    %v5566 = vpop.f32.mrf.mxu0
    %v5567 = vadd.f32 %v5440, %v5566
    %v5568 = vpop.f32.mrf.mxu0
    %5569 = vmatprep.mubr.f32.mxu0 0.0
    %v5570 = vand.u32 %v752, 4294901760
    %v5571 = vsub.f32 %v752, %v5570
    %v5572 = vand.u32 %v5571, 4294901760
    %5573 = vmatmul.mubr.f32.gmra.mxu0 %v5572
    %v5574 = vpop.f32.mrf.mxu0
    %v5575 = vadd.f32 %v5447, %v5574
    %v5576 = vpop.f32.mrf.mxu0
    %5577 = vmatprep.mubr.f32.mxu0 0.0
    %v5578 = vand.u32 %v755, 4294901760
    %v5579 = vsub.f32 %v755, %v5578
    %v5580 = vand.u32 %v5579, 4294901760
    %5581 = vmatmul.mubr.f32.gmra.mxu0 %v5580
    %v5582 = vpop.f32.mrf.mxu0
    %v5583 = vadd.f32 %v5454, %v5582
    %v5584 = vpop.f32.mrf.mxu0
    %5585 = vmatprep.mubr.f32.mxu0 0.0
    %v5586 = vand.u32 %v758, 4294901760
    %v5587 = vsub.f32 %v758, %v5586
    %v5588 = vand.u32 %v5587, 4294901760
    %5589 = vmatmul.mubr.f32.gmra.mxu0 %v5588
    %v5590 = vpop.f32.mrf.mxu0
    %v5591 = vadd.f32 %v5461, %v5590
    %v5592 = vpop.f32.mrf.mxu0
    %5593 = vdwg.mxu0
    %5594 = vmatprep.subr.mxu0 0.0
    %5595 = vmatpush1.msra.mxu0 0.0
    %5596 = vmatprep.subr.mxu0 0.0
    %5597 = vmatpush1.msra.mxu0 0.0
    %5598 = vmatprep.subr.mxu0 0.0
    %5599 = vmatpush1.msra.mxu0 0.0
    %5600 = vmatprep.subr.mxu0 0.0
    %5601 = vmatpush1.msra.mxu0 0.0
    %5602 = vmatprep.subr.mxu0 0.0
    %5603 = vmatpush1.msra.mxu0 0.0
    %5604 = vmatprep.subr.mxu0 0.0
    %5605 = vmatpush1.msra.mxu0 0.0
    %5606 = vmatprep.subr.mxu0 0.0
    %5607 = vmatpush1.msra.mxu0 0.0
    %5608 = vmatprep.subr.mxu0 0.0
    %5609 = vmatpush1.msra.mxu0 0.0
    %5610 = vmatprep.subr.mxu0 0.0
    %5611 = vmatpush1.msra.mxu0 0.0
    %5612 = vmatprep.subr.mxu0 0.0
    %5613 = vmatpush1.msra.mxu0 0.0
    %5614 = vmatprep.subr.mxu0 0.0
    %5615 = vmatpush1.msra.mxu0 0.0
    %5616 = vmatprep.subr.mxu0 0.0
    %5617 = vmatpush1.msra.mxu0 0.0
    %5618 = vmatprep.subr.mxu0 0.0
    %5619 = vmatpush1.msra.mxu0 0.0
    %5620 = vmatprep.subr.mxu0 0.0
    %5621 = vmatpush1.msra.mxu0 0.0
    %5622 = vmatprep.subr.mxu0 0.0
    %5623 = vmatpush1.msra.mxu0 0.0
    %5624 = vmatprep.subr.mxu0 0.0
    %v5625 = vand.u32 %v5076, 4294901760
    %v5626 = vsub.f32 %v5076, %v5625
    %v5627 = vand.u32 %v5626, 4294901760
    %5628 = vmatpush1.msra.mxu0 %v5627
    %5629 = vmatprep.subr.mxu0 0.0
    %5630 = vmatpush2.msra.mxu0 0.0
    %5631 = vmatprep.subr.mxu0 0.0
    %5632 = vmatpush2.msra.mxu0 0.0
    %5633 = vmatprep.subr.mxu0 0.0
    %5634 = vmatpush2.msra.mxu0 0.0
    %5635 = vmatprep.subr.mxu0 0.0
    %5636 = vmatpush2.msra.mxu0 0.0
    %5637 = vmatprep.subr.mxu0 0.0
    %5638 = vmatpush2.msra.mxu0 0.0
    %5639 = vmatprep.subr.mxu0 0.0
    %5640 = vmatpush2.msra.mxu0 0.0
    %5641 = vmatprep.subr.mxu0 0.0
    %5642 = vmatpush2.msra.mxu0 0.0
    %5643 = vmatprep.subr.mxu0 0.0
    %5644 = vmatpush2.msra.mxu0 0.0
    %5645 = vmatprep.subr.mxu0 0.0
    %5646 = vmatpush2.msra.mxu0 0.0
    %5647 = vmatprep.subr.mxu0 0.0
    %5648 = vmatpush2.msra.mxu0 0.0
    %5649 = vmatprep.subr.mxu0 0.0
    %5650 = vmatpush2.msra.mxu0 0.0
    %5651 = vmatprep.subr.mxu0 0.0
    %5652 = vmatpush2.msra.mxu0 0.0
    %5653 = vmatprep.subr.mxu0 0.0
    %5654 = vmatpush2.msra.mxu0 0.0
    %5655 = vmatprep.subr.mxu0 0.0
    %5656 = vmatpush2.msra.mxu0 0.0
    %5657 = vmatprep.subr.mxu0 0.0
    %5658 = vmatpush2.msra.mxu0 0.0
    %5659 = vmatprep.subr.mxu0 0.0
    %5660 = vmatpush2.msra.mxu0 0.0
    %5661 = vmatprep.mubr.f32.mxu0 0.0
    %v5662 = vand.u32 %v737, 4294901760
    %5663 = vmatmul.mubr.f32.gmra.mxu0 %v5662
    %v5664 = vpop.f32.mrf.mxu0
    %v5665 = vadd.f32 %v5535, %v5664
    %v5666 = vpop.f32.mrf.mxu0
    %5667 = vmatprep.mubr.f32.mxu0 0.0
    %v5668 = vand.u32 %v740, 4294901760
    %5669 = vmatmul.mubr.f32.gmra.mxu0 %v5668
    %v5670 = vpop.f32.mrf.mxu0
    %v5671 = vadd.f32 %v5543, %v5670
    %v5672 = vpop.f32.mrf.mxu0
    %5673 = vmatprep.mubr.f32.mxu0 0.0
    %v5674 = vand.u32 %v743, 4294901760
    %5675 = vmatmul.mubr.f32.gmra.mxu0 %v5674
    %v5676 = vpop.f32.mrf.mxu0
    %v5677 = vadd.f32 %v5551, %v5676
    %v5678 = vpop.f32.mrf.mxu0
    %5679 = vmatprep.mubr.f32.mxu0 0.0
    %v5680 = vand.u32 %v746, 4294901760
    %5681 = vmatmul.mubr.f32.gmra.mxu0 %v5680
    %v5682 = vpop.f32.mrf.mxu0
    %v5683 = vadd.f32 %v5559, %v5682
    %v5684 = vpop.f32.mrf.mxu0
    %5685 = vmatprep.mubr.f32.mxu0 0.0
    %v5686 = vand.u32 %v749, 4294901760
    %5687 = vmatmul.mubr.f32.gmra.mxu0 %v5686
    %v5688 = vpop.f32.mrf.mxu0
    %v5689 = vadd.f32 %v5567, %v5688
    %v5690 = vpop.f32.mrf.mxu0
    %5691 = vmatprep.mubr.f32.mxu0 0.0
    %v5692 = vand.u32 %v752, 4294901760
    %5693 = vmatmul.mubr.f32.gmra.mxu0 %v5692
    %v5694 = vpop.f32.mrf.mxu0
    %v5695 = vadd.f32 %v5575, %v5694
    %v5696 = vpop.f32.mrf.mxu0
    %5697 = vmatprep.mubr.f32.mxu0 0.0
    %v5698 = vand.u32 %v755, 4294901760
    %5699 = vmatmul.mubr.f32.gmra.mxu0 %v5698
    %v5700 = vpop.f32.mrf.mxu0
    %v5701 = vadd.f32 %v5583, %v5700
    %v5702 = vpop.f32.mrf.mxu0
    %5703 = vmatprep.mubr.f32.mxu0 0.0
    %v5704 = vand.u32 %v758, 4294901760
    %5705 = vmatmul.mubr.f32.gmra.mxu0 %v5704
    %v5706 = vpop.f32.mrf.mxu0
    %v5707 = vadd.f32 %v5591, %v5706
    %v5708 = vpop.f32.mrf.mxu0
    %5709 = vdwg.mxu0
    %5710 = vmatprep.subr.mxu0 0.0
    %5711 = vmatpush1.msra.mxu0 0.0
    %5712 = vmatprep.subr.mxu0 0.0
    %5713 = vmatpush1.msra.mxu0 0.0
    %5714 = vmatprep.subr.mxu0 0.0
    %5715 = vmatpush1.msra.mxu0 0.0
    %5716 = vmatprep.subr.mxu0 0.0
    %5717 = vmatpush1.msra.mxu0 0.0
    %5718 = vmatprep.subr.mxu0 0.0
    %5719 = vmatpush1.msra.mxu0 0.0
    %5720 = vmatprep.subr.mxu0 0.0
    %5721 = vmatpush1.msra.mxu0 0.0
    %5722 = vmatprep.subr.mxu0 0.0
    %5723 = vmatpush1.msra.mxu0 0.0
    %5724 = vmatprep.subr.mxu0 0.0
    %5725 = vmatpush1.msra.mxu0 0.0
    %5726 = vmatprep.subr.mxu0 0.0
    %5727 = vmatpush1.msra.mxu0 0.0
    %5728 = vmatprep.subr.mxu0 0.0
    %5729 = vmatpush1.msra.mxu0 0.0
    %5730 = vmatprep.subr.mxu0 0.0
    %5731 = vmatpush1.msra.mxu0 0.0
    %5732 = vmatprep.subr.mxu0 0.0
    %5733 = vmatpush1.msra.mxu0 0.0
    %5734 = vmatprep.subr.mxu0 0.0
    %5735 = vmatpush1.msra.mxu0 0.0
    %5736 = vmatprep.subr.mxu0 0.0
    %5737 = vmatpush1.msra.mxu0 0.0
    %5738 = vmatprep.subr.mxu0 0.0
    %5739 = vmatpush1.msra.mxu0 0.0
    %5740 = vmatprep.subr.mxu0 0.0
    %v5741 = vand.u32 %v5076, 4294901760
    %5742 = vmatpush1.msra.mxu0 %v5741
    %5743 = vmatprep.subr.mxu0 0.0
    %5744 = vmatpush2.msra.mxu0 0.0
    %5745 = vmatprep.subr.mxu0 0.0
    %5746 = vmatpush2.msra.mxu0 0.0
    %5747 = vmatprep.subr.mxu0 0.0
    %5748 = vmatpush2.msra.mxu0 0.0
    %5749 = vmatprep.subr.mxu0 0.0
    %5750 = vmatpush2.msra.mxu0 0.0
    %5751 = vmatprep.subr.mxu0 0.0
    %5752 = vmatpush2.msra.mxu0 0.0
    %5753 = vmatprep.subr.mxu0 0.0
    %5754 = vmatpush2.msra.mxu0 0.0
    %5755 = vmatprep.subr.mxu0 0.0
    %5756 = vmatpush2.msra.mxu0 0.0
    %5757 = vmatprep.subr.mxu0 0.0
    %5758 = vmatpush2.msra.mxu0 0.0
    %5759 = vmatprep.subr.mxu0 0.0
    %5760 = vmatpush2.msra.mxu0 0.0
    %5761 = vmatprep.subr.mxu0 0.0
    %5762 = vmatpush2.msra.mxu0 0.0
    %5763 = vmatprep.subr.mxu0 0.0
    %5764 = vmatpush2.msra.mxu0 0.0
    %5765 = vmatprep.subr.mxu0 0.0
    %5766 = vmatpush2.msra.mxu0 0.0
    %5767 = vmatprep.subr.mxu0 0.0
    %5768 = vmatpush2.msra.mxu0 0.0
    %5769 = vmatprep.subr.mxu0 0.0
    %5770 = vmatpush2.msra.mxu0 0.0
    %5771 = vmatprep.subr.mxu0 0.0
    %5772 = vmatpush2.msra.mxu0 0.0
    %5773 = vmatprep.subr.mxu0 0.0
    %5774 = vmatpush2.msra.mxu0 0.0
    %5775 = vmatprep.mubr.f32.mxu0 0.0
    %v5776 = vand.u32 %v737, 4294901760
    %5777 = vmatmul.mubr.f32.gmra.mxu0 %v5776
    %v5778 = vpop.f32.mrf.mxu0
    %v5779 = vadd.f32 %v5665, %v5778
    %v5780 = vpop.f32.mrf.mxu0
    %5781 = vmatprep.mubr.f32.mxu0 0.0
    %v5782 = vand.u32 %v740, 4294901760
    %5783 = vmatmul.mubr.f32.gmra.mxu0 %v5782
    %v5784 = vpop.f32.mrf.mxu0
    %v5785 = vadd.f32 %v5671, %v5784
    %v5786 = vpop.f32.mrf.mxu0
    %5787 = vmatprep.mubr.f32.mxu0 0.0
    %v5788 = vand.u32 %v743, 4294901760
    %5789 = vmatmul.mubr.f32.gmra.mxu0 %v5788
    %v5790 = vpop.f32.mrf.mxu0
    %v5791 = vadd.f32 %v5677, %v5790
    %v5792 = vpop.f32.mrf.mxu0
    %5793 = vmatprep.mubr.f32.mxu0 0.0
    %v5794 = vand.u32 %v746, 4294901760
    %5795 = vmatmul.mubr.f32.gmra.mxu0 %v5794
    %v5796 = vpop.f32.mrf.mxu0
    %v5797 = vadd.f32 %v5683, %v5796
    %v5798 = vpop.f32.mrf.mxu0
    %5799 = vmatprep.mubr.f32.mxu0 0.0
    %v5800 = vand.u32 %v749, 4294901760
    %5801 = vmatmul.mubr.f32.gmra.mxu0 %v5800
    %v5802 = vpop.f32.mrf.mxu0
    %v5803 = vadd.f32 %v5689, %v5802
    %v5804 = vpop.f32.mrf.mxu0
    %5805 = vmatprep.mubr.f32.mxu0 0.0
    %v5806 = vand.u32 %v752, 4294901760
    %5807 = vmatmul.mubr.f32.gmra.mxu0 %v5806
    %v5808 = vpop.f32.mrf.mxu0
    %v5809 = vadd.f32 %v5695, %v5808
    %v5810 = vpop.f32.mrf.mxu0
    %5811 = vmatprep.mubr.f32.mxu0 0.0
    %v5812 = vand.u32 %v755, 4294901760
    %5813 = vmatmul.mubr.f32.gmra.mxu0 %v5812
    %v5814 = vpop.f32.mrf.mxu0
    %v5815 = vadd.f32 %v5701, %v5814
    %v5816 = vpop.f32.mrf.mxu0
    %5817 = vmatprep.mubr.f32.mxu0 0.0
    %v5818 = vand.u32 %v758, 4294901760
    %5819 = vmatmul.mubr.f32.gmra.mxu0 %v5818
    %v5820 = vpop.f32.mrf.mxu0
    %v5821 = vadd.f32 %v5707, %v5820
    %v5822 = vpop.f32.mrf.mxu0
    %5823 = vdwg.mxu0
    %v5824 = vxor.u32 %v5779, 2147483648
    %v5825 = vxor.u32 %v5785, 2147483648
    %v5826 = vxor.u32 %v5791, 2147483648
    %v5827 = vxor.u32 %v5797, 2147483648
    %v5828 = vxor.u32 %v5803, 2147483648
    %v5829 = vxor.u32 %v5809, 2147483648
    %v5830 = vxor.u32 %v5815, 2147483648
    %v5831 = vxor.u32 %v5821, 2147483648
    %v5832 = vmul.f32 %v5824, 1.442695
    %v5833 = vpow.pop %v5832
    %v5834 = vmul.f32 %v5825, 1.442695
    %v5835 = vpow.pop %v5834
    %v5836 = vmul.f32 %v5826, 1.442695
    %v5837 = vpow.pop %v5836
    %v5838 = vmul.f32 %v5827, 1.442695
    %v5839 = vpow.pop %v5838
    %v5840 = vmul.f32 %v5828, 1.442695
    %v5841 = vpow.pop %v5840
    %v5842 = vmul.f32 %v5829, 1.442695
    %v5843 = vpow.pop %v5842
    %v5844 = vmul.f32 %v5830, 1.442695
    %v5845 = vpow.pop %v5844
    %v5846 = vmul.f32 %v5831, 1.442695
    %v5847 = vpow.pop %v5846
    %v5848 = vadd.f32 %v5833, 1.0
    %v5849 = vadd.f32 %v5835, 1.0
    %v5850 = vadd.f32 %v5837, 1.0
    %v5851 = vadd.f32 %v5839, 1.0
    %v5852 = vadd.f32 %v5841, 1.0
    %v5853 = vadd.f32 %v5843, 1.0
    %v5854 = vadd.f32 %v5845, 1.0
    %v5855 = vadd.f32 %v5847, 1.0
    %v5856 = vrcp.pop %v5848
    %v5857 = vmul.f32 1.0, %v5856
    %v5858 = vrcp.pop %v5849
    %v5859 = vmul.f32 1.0, %v5858
    %v5860 = vrcp.pop %v5850
    %v5861 = vmul.f32 1.0, %v5860
    %v5862 = vrcp.pop %v5851
    %v5863 = vmul.f32 1.0, %v5862
    %v5864 = vrcp.pop %v5852
    %v5865 = vmul.f32 1.0, %v5864
    %v5866 = vrcp.pop %v5853
    %v5867 = vmul.f32 1.0, %v5866
    %v5868 = vrcp.pop %v5854
    %v5869 = vmul.f32 1.0, %v5868
    %v5870 = vrcp.pop %v5855
    %v5871 = vmul.f32 1.0, %v5870
    %5873 = vrot.lane.b32.xlu0 %v5076, 112
    %v5874 = vpop.permute.xlu0 %5873
    %5876 = vmatprep.subr.mxu0 0.0
    %5877 = vmatpush1.msra.mxu0 0.0
    %5878 = vmatprep.subr.mxu0 0.0
    %5879 = vmatpush1.msra.mxu0 0.0
    %5880 = vmatprep.subr.mxu0 0.0
    %5881 = vmatpush1.msra.mxu0 0.0
    %5882 = vmatprep.subr.mxu0 0.0
    %5883 = vmatpush1.msra.mxu0 0.0
    %5884 = vmatprep.subr.mxu0 0.0
    %5885 = vmatpush1.msra.mxu0 0.0
    %5886 = vmatprep.subr.mxu0 0.0
    %5887 = vmatpush1.msra.mxu0 0.0
    %5888 = vmatprep.subr.mxu0 0.0
    %5889 = vmatpush1.msra.mxu0 0.0
    %5890 = vmatprep.subr.mxu0 0.0
    %5891 = vmatpush1.msra.mxu0 0.0
    %5892 = vmatprep.subr.mxu0 0.0
    %5893 = vmatpush1.msra.mxu0 0.0
    %5894 = vmatprep.subr.mxu0 0.0
    %5895 = vmatpush1.msra.mxu0 0.0
    %5896 = vmatprep.subr.mxu0 0.0
    %5897 = vmatpush1.msra.mxu0 0.0
    %5898 = vmatprep.subr.mxu0 0.0
    %5899 = vmatpush1.msra.mxu0 0.0
    %5900 = vmatprep.subr.mxu0 0.0
    %5901 = vmatpush1.msra.mxu0 0.0
    %5902 = vmatprep.subr.mxu0 0.0
    %5903 = vmatpush1.msra.mxu0 0.0
    %5904 = vmatprep.subr.mxu0 0.0
    %5905 = vmatpush1.msra.mxu0 0.0
    %5906 = vmatprep.subr.mxu0 0.0
    %v5907 = vand.u32 %v5874, 4294901760
    %5908 = vmatpush1.msra.mxu0 %v5907
    %5909 = vmatprep.subr.mxu0 0.0
    %5910 = vmatpush2.msra.mxu0 0.0
    %5911 = vmatprep.subr.mxu0 0.0
    %5912 = vmatpush2.msra.mxu0 0.0
    %5913 = vmatprep.subr.mxu0 0.0
    %5914 = vmatpush2.msra.mxu0 0.0
    %5915 = vmatprep.subr.mxu0 0.0
    %5916 = vmatpush2.msra.mxu0 0.0
    %5917 = vmatprep.subr.mxu0 0.0
    %5918 = vmatpush2.msra.mxu0 0.0
    %5919 = vmatprep.subr.mxu0 0.0
    %5920 = vmatpush2.msra.mxu0 0.0
    %5921 = vmatprep.subr.mxu0 0.0
    %5922 = vmatpush2.msra.mxu0 0.0
    %5923 = vmatprep.subr.mxu0 0.0
    %5924 = vmatpush2.msra.mxu0 0.0
    %5925 = vmatprep.subr.mxu0 0.0
    %5926 = vmatpush2.msra.mxu0 0.0
    %5927 = vmatprep.subr.mxu0 0.0
    %5928 = vmatpush2.msra.mxu0 0.0
    %5929 = vmatprep.subr.mxu0 0.0
    %5930 = vmatpush2.msra.mxu0 0.0
    %5931 = vmatprep.subr.mxu0 0.0
    %5932 = vmatpush2.msra.mxu0 0.0
    %5933 = vmatprep.subr.mxu0 0.0
    %5934 = vmatpush2.msra.mxu0 0.0
    %5935 = vmatprep.subr.mxu0 0.0
    %5936 = vmatpush2.msra.mxu0 0.0
    %5937 = vmatprep.subr.mxu0 0.0
    %5938 = vmatpush2.msra.mxu0 0.0
    %5939 = vmatprep.subr.mxu0 0.0
    %5940 = vmatpush2.msra.mxu0 0.0
    %5941 = vmatprep.mubr.f32.mxu0 0.0
    %v5942 = vand.u32 %v1575, 4294901760
    %v5943 = vsub.f32 %v1575, %v5942
    %v5944 = vand.u32 %v5943, 4294901760
    %v5945 = vsub.f32 %v5943, %v5944
    %v5946 = vand.u32 %v5945, 4294901760
    %5947 = vmatmul.mubr.f32.gmra.mxu0 %v5946
    %v5948 = vpop.f32.mrf.mxu0
    %v5949 = vadd.f32 0.0, %v5948
    %v5950 = vpop.f32.mrf.mxu0
    %5951 = vmatprep.mubr.f32.mxu0 0.0
    %v5952 = vand.u32 %v1577, 4294901760
    %v5953 = vsub.f32 %v1577, %v5952
    %v5954 = vand.u32 %v5953, 4294901760
    %v5955 = vsub.f32 %v5953, %v5954
    %v5956 = vand.u32 %v5955, 4294901760
    %5957 = vmatmul.mubr.f32.gmra.mxu0 %v5956
    %v5958 = vpop.f32.mrf.mxu0
    %v5959 = vadd.f32 0.0, %v5958
    %v5960 = vpop.f32.mrf.mxu0
    %5961 = vmatprep.mubr.f32.mxu0 0.0
    %v5962 = vand.u32 %v1579, 4294901760
    %v5963 = vsub.f32 %v1579, %v5962
    %v5964 = vand.u32 %v5963, 4294901760
    %v5965 = vsub.f32 %v5963, %v5964
    %v5966 = vand.u32 %v5965, 4294901760
    %5967 = vmatmul.mubr.f32.gmra.mxu0 %v5966
    %v5968 = vpop.f32.mrf.mxu0
    %v5969 = vadd.f32 0.0, %v5968
    %v5970 = vpop.f32.mrf.mxu0
    %5971 = vmatprep.mubr.f32.mxu0 0.0
    %v5972 = vand.u32 %v1581, 4294901760
    %v5973 = vsub.f32 %v1581, %v5972
    %v5974 = vand.u32 %v5973, 4294901760
    %v5975 = vsub.f32 %v5973, %v5974
    %v5976 = vand.u32 %v5975, 4294901760
    %5977 = vmatmul.mubr.f32.gmra.mxu0 %v5976
    %v5978 = vpop.f32.mrf.mxu0
    %v5979 = vadd.f32 0.0, %v5978
    %v5980 = vpop.f32.mrf.mxu0
    %5981 = vmatprep.mubr.f32.mxu0 0.0
    %v5982 = vand.u32 %v1583, 4294901760
    %v5983 = vsub.f32 %v1583, %v5982
    %v5984 = vand.u32 %v5983, 4294901760
    %v5985 = vsub.f32 %v5983, %v5984
    %v5986 = vand.u32 %v5985, 4294901760
    %5987 = vmatmul.mubr.f32.gmra.mxu0 %v5986
    %v5988 = vpop.f32.mrf.mxu0
    %v5989 = vadd.f32 0.0, %v5988
    %v5990 = vpop.f32.mrf.mxu0
    %5991 = vmatprep.mubr.f32.mxu0 0.0
    %v5992 = vand.u32 %v1585, 4294901760
    %v5993 = vsub.f32 %v1585, %v5992
    %v5994 = vand.u32 %v5993, 4294901760
    %v5995 = vsub.f32 %v5993, %v5994
    %v5996 = vand.u32 %v5995, 4294901760
    %5997 = vmatmul.mubr.f32.gmra.mxu0 %v5996
    %v5998 = vpop.f32.mrf.mxu0
    %v5999 = vadd.f32 0.0, %v5998
    %v6000 = vpop.f32.mrf.mxu0
    %6001 = vmatprep.mubr.f32.mxu0 0.0
    %v6002 = vand.u32 %v1587, 4294901760
    %v6003 = vsub.f32 %v1587, %v6002
    %v6004 = vand.u32 %v6003, 4294901760
    %v6005 = vsub.f32 %v6003, %v6004
    %v6006 = vand.u32 %v6005, 4294901760
    %6007 = vmatmul.mubr.f32.gmra.mxu0 %v6006
    %v6008 = vpop.f32.mrf.mxu0
    %v6009 = vadd.f32 0.0, %v6008
    %v6010 = vpop.f32.mrf.mxu0
    %6011 = vmatprep.mubr.f32.mxu0 0.0
    %v6012 = vand.u32 %v1589, 4294901760
    %v6013 = vsub.f32 %v1589, %v6012
    %v6014 = vand.u32 %v6013, 4294901760
    %v6015 = vsub.f32 %v6013, %v6014
    %v6016 = vand.u32 %v6015, 4294901760
    %6017 = vmatmul.mubr.f32.gmra.mxu0 %v6016
    %v6018 = vpop.f32.mrf.mxu0
    %v6019 = vadd.f32 0.0, %v6018
    %v6020 = vpop.f32.mrf.mxu0
    %6021 = vdwg.mxu0
    %6022 = vmatprep.subr.mxu0 0.0
    %6023 = vmatpush1.msra.mxu0 0.0
    %6024 = vmatprep.subr.mxu0 0.0
    %6025 = vmatpush1.msra.mxu0 0.0
    %6026 = vmatprep.subr.mxu0 0.0
    %6027 = vmatpush1.msra.mxu0 0.0
    %6028 = vmatprep.subr.mxu0 0.0
    %6029 = vmatpush1.msra.mxu0 0.0
    %6030 = vmatprep.subr.mxu0 0.0
    %6031 = vmatpush1.msra.mxu0 0.0
    %6032 = vmatprep.subr.mxu0 0.0
    %6033 = vmatpush1.msra.mxu0 0.0
    %6034 = vmatprep.subr.mxu0 0.0
    %6035 = vmatpush1.msra.mxu0 0.0
    %6036 = vmatprep.subr.mxu0 0.0
    %6037 = vmatpush1.msra.mxu0 0.0
    %6038 = vmatprep.subr.mxu0 0.0
    %6039 = vmatpush1.msra.mxu0 0.0
    %6040 = vmatprep.subr.mxu0 0.0
    %6041 = vmatpush1.msra.mxu0 0.0
    %6042 = vmatprep.subr.mxu0 0.0
    %6043 = vmatpush1.msra.mxu0 0.0
    %6044 = vmatprep.subr.mxu0 0.0
    %6045 = vmatpush1.msra.mxu0 0.0
    %6046 = vmatprep.subr.mxu0 0.0
    %6047 = vmatpush1.msra.mxu0 0.0
    %6048 = vmatprep.subr.mxu0 0.0
    %6049 = vmatpush1.msra.mxu0 0.0
    %6050 = vmatprep.subr.mxu0 0.0
    %6051 = vmatpush1.msra.mxu0 0.0
    %6052 = vmatprep.subr.mxu0 0.0
    %v6053 = vand.u32 %v5874, 4294901760
    %v6054 = vsub.f32 %v5874, %v6053
    %v6055 = vand.u32 %v6054, 4294901760
    %v6056 = vsub.f32 %v6054, %v6055
    %v6057 = vand.u32 %v6056, 4294901760
    %6058 = vmatpush1.msra.mxu0 %v6057
    %6059 = vmatprep.subr.mxu0 0.0
    %6060 = vmatpush2.msra.mxu0 0.0
    %6061 = vmatprep.subr.mxu0 0.0
    %6062 = vmatpush2.msra.mxu0 0.0
    %6063 = vmatprep.subr.mxu0 0.0
    %6064 = vmatpush2.msra.mxu0 0.0
    %6065 = vmatprep.subr.mxu0 0.0
    %6066 = vmatpush2.msra.mxu0 0.0
    %6067 = vmatprep.subr.mxu0 0.0
    %6068 = vmatpush2.msra.mxu0 0.0
    %6069 = vmatprep.subr.mxu0 0.0
    %6070 = vmatpush2.msra.mxu0 0.0
    %6071 = vmatprep.subr.mxu0 0.0
    %6072 = vmatpush2.msra.mxu0 0.0
    %6073 = vmatprep.subr.mxu0 0.0
    %6074 = vmatpush2.msra.mxu0 0.0
    %6075 = vmatprep.subr.mxu0 0.0
    %6076 = vmatpush2.msra.mxu0 0.0
    %6077 = vmatprep.subr.mxu0 0.0
    %6078 = vmatpush2.msra.mxu0 0.0
    %6079 = vmatprep.subr.mxu0 0.0
    %6080 = vmatpush2.msra.mxu0 0.0
    %6081 = vmatprep.subr.mxu0 0.0
    %6082 = vmatpush2.msra.mxu0 0.0
    %6083 = vmatprep.subr.mxu0 0.0
    %6084 = vmatpush2.msra.mxu0 0.0
    %6085 = vmatprep.subr.mxu0 0.0
    %6086 = vmatpush2.msra.mxu0 0.0
    %6087 = vmatprep.subr.mxu0 0.0
    %6088 = vmatpush2.msra.mxu0 0.0
    %6089 = vmatprep.subr.mxu0 0.0
    %6090 = vmatpush2.msra.mxu0 0.0
    %6091 = vmatprep.mubr.f32.mxu0 0.0
    %v6092 = vand.u32 %v1575, 4294901760
    %6093 = vmatmul.mubr.f32.gmra.mxu0 %v6092
    %v6094 = vpop.f32.mrf.mxu0
    %v6095 = vadd.f32 %v5949, %v6094
    %v6096 = vpop.f32.mrf.mxu0
    %6097 = vmatprep.mubr.f32.mxu0 0.0
    %v6098 = vand.u32 %v1577, 4294901760
    %6099 = vmatmul.mubr.f32.gmra.mxu0 %v6098
    %v6100 = vpop.f32.mrf.mxu0
    %v6101 = vadd.f32 %v5959, %v6100
    %v6102 = vpop.f32.mrf.mxu0
    %6103 = vmatprep.mubr.f32.mxu0 0.0
    %v6104 = vand.u32 %v1579, 4294901760
    %6105 = vmatmul.mubr.f32.gmra.mxu0 %v6104
    %v6106 = vpop.f32.mrf.mxu0
    %v6107 = vadd.f32 %v5969, %v6106
    %v6108 = vpop.f32.mrf.mxu0
    %6109 = vmatprep.mubr.f32.mxu0 0.0
    %v6110 = vand.u32 %v1581, 4294901760
    %6111 = vmatmul.mubr.f32.gmra.mxu0 %v6110
    %v6112 = vpop.f32.mrf.mxu0
    %v6113 = vadd.f32 %v5979, %v6112
    %v6114 = vpop.f32.mrf.mxu0
    %6115 = vmatprep.mubr.f32.mxu0 0.0
    %v6116 = vand.u32 %v1583, 4294901760
    %6117 = vmatmul.mubr.f32.gmra.mxu0 %v6116
    %v6118 = vpop.f32.mrf.mxu0
    %v6119 = vadd.f32 %v5989, %v6118
    %v6120 = vpop.f32.mrf.mxu0
    %6121 = vmatprep.mubr.f32.mxu0 0.0
    %v6122 = vand.u32 %v1585, 4294901760
    %6123 = vmatmul.mubr.f32.gmra.mxu0 %v6122
    %v6124 = vpop.f32.mrf.mxu0
    %v6125 = vadd.f32 %v5999, %v6124
    %v6126 = vpop.f32.mrf.mxu0
    %6127 = vmatprep.mubr.f32.mxu0 0.0
    %v6128 = vand.u32 %v1587, 4294901760
    %6129 = vmatmul.mubr.f32.gmra.mxu0 %v6128
    %v6130 = vpop.f32.mrf.mxu0
    %v6131 = vadd.f32 %v6009, %v6130
    %v6132 = vpop.f32.mrf.mxu0
    %6133 = vmatprep.mubr.f32.mxu0 0.0
    %v6134 = vand.u32 %v1589, 4294901760
    %6135 = vmatmul.mubr.f32.gmra.mxu0 %v6134
    %v6136 = vpop.f32.mrf.mxu0
    %v6137 = vadd.f32 %v6019, %v6136
    %v6138 = vpop.f32.mrf.mxu0
    %6139 = vdwg.mxu0
    %6140 = vmatprep.subr.mxu0 0.0
    %6141 = vmatpush1.msra.mxu0 0.0
    %6142 = vmatprep.subr.mxu0 0.0
    %6143 = vmatpush1.msra.mxu0 0.0
    %6144 = vmatprep.subr.mxu0 0.0
    %6145 = vmatpush1.msra.mxu0 0.0
    %6146 = vmatprep.subr.mxu0 0.0
    %6147 = vmatpush1.msra.mxu0 0.0
    %6148 = vmatprep.subr.mxu0 0.0
    %6149 = vmatpush1.msra.mxu0 0.0
    %6150 = vmatprep.subr.mxu0 0.0
    %6151 = vmatpush1.msra.mxu0 0.0
    %6152 = vmatprep.subr.mxu0 0.0
    %6153 = vmatpush1.msra.mxu0 0.0
    %6154 = vmatprep.subr.mxu0 0.0
    %6155 = vmatpush1.msra.mxu0 0.0
    %6156 = vmatprep.subr.mxu0 0.0
    %6157 = vmatpush1.msra.mxu0 0.0
    %6158 = vmatprep.subr.mxu0 0.0
    %6159 = vmatpush1.msra.mxu0 0.0
    %6160 = vmatprep.subr.mxu0 0.0
    %6161 = vmatpush1.msra.mxu0 0.0
    %6162 = vmatprep.subr.mxu0 0.0
    %6163 = vmatpush1.msra.mxu0 0.0
    %6164 = vmatprep.subr.mxu0 0.0
    %6165 = vmatpush1.msra.mxu0 0.0
    %6166 = vmatprep.subr.mxu0 0.0
    %6167 = vmatpush1.msra.mxu0 0.0
    %6168 = vmatprep.subr.mxu0 0.0
    %6169 = vmatpush1.msra.mxu0 0.0
    %6170 = vmatprep.subr.mxu0 0.0
    %v6171 = vand.u32 %v5874, 4294901760
    %v6172 = vsub.f32 %v5874, %v6171
    %6173 = vmatpush1.msra.mxu0 %v6172
    %6174 = vmatprep.subr.mxu0 0.0
    %6175 = vmatpush2.msra.mxu0 0.0
    %6176 = vmatprep.subr.mxu0 0.0
    %6177 = vmatpush2.msra.mxu0 0.0
    %6178 = vmatprep.subr.mxu0 0.0
    %6179 = vmatpush2.msra.mxu0 0.0
    %6180 = vmatprep.subr.mxu0 0.0
    %6181 = vmatpush2.msra.mxu0 0.0
    %6182 = vmatprep.subr.mxu0 0.0
    %6183 = vmatpush2.msra.mxu0 0.0
    %6184 = vmatprep.subr.mxu0 0.0
    %6185 = vmatpush2.msra.mxu0 0.0
    %6186 = vmatprep.subr.mxu0 0.0
    %6187 = vmatpush2.msra.mxu0 0.0
    %6188 = vmatprep.subr.mxu0 0.0
    %6189 = vmatpush2.msra.mxu0 0.0
    %6190 = vmatprep.subr.mxu0 0.0
    %6191 = vmatpush2.msra.mxu0 0.0
    %6192 = vmatprep.subr.mxu0 0.0
    %6193 = vmatpush2.msra.mxu0 0.0
    %6194 = vmatprep.subr.mxu0 0.0
    %6195 = vmatpush2.msra.mxu0 0.0
    %6196 = vmatprep.subr.mxu0 0.0
    %6197 = vmatpush2.msra.mxu0 0.0
    %6198 = vmatprep.subr.mxu0 0.0
    %6199 = vmatpush2.msra.mxu0 0.0
    %6200 = vmatprep.subr.mxu0 0.0
    %6201 = vmatpush2.msra.mxu0 0.0
    %6202 = vmatprep.subr.mxu0 0.0
    %6203 = vmatpush2.msra.mxu0 0.0
    %6204 = vmatprep.subr.mxu0 0.0
    %6205 = vmatpush2.msra.mxu0 0.0
    %6206 = vmatprep.mubr.f32.mxu0 0.0
    %v6207 = vand.u32 %v1575, 4294901760
    %v6208 = vsub.f32 %v1575, %v6207
    %6209 = vmatmul.mubr.f32.gmra.mxu0 %v6208
    %v6210 = vpop.f32.mrf.mxu0
    %v6211 = vadd.f32 %v6095, %v6210
    %v6212 = vpop.f32.mrf.mxu0
    %6213 = vmatprep.mubr.f32.mxu0 0.0
    %v6214 = vand.u32 %v1577, 4294901760
    %v6215 = vsub.f32 %v1577, %v6214
    %6216 = vmatmul.mubr.f32.gmra.mxu0 %v6215
    %v6217 = vpop.f32.mrf.mxu0
    %v6218 = vadd.f32 %v6101, %v6217
    %v6219 = vpop.f32.mrf.mxu0
    %6220 = vmatprep.mubr.f32.mxu0 0.0
    %v6221 = vand.u32 %v1579, 4294901760
    %v6222 = vsub.f32 %v1579, %v6221
    %6223 = vmatmul.mubr.f32.gmra.mxu0 %v6222
    %v6224 = vpop.f32.mrf.mxu0
    %v6225 = vadd.f32 %v6107, %v6224
    %v6226 = vpop.f32.mrf.mxu0
    %6227 = vmatprep.mubr.f32.mxu0 0.0
    %v6228 = vand.u32 %v1581, 4294901760
    %v6229 = vsub.f32 %v1581, %v6228
    %6230 = vmatmul.mubr.f32.gmra.mxu0 %v6229
    %v6231 = vpop.f32.mrf.mxu0
    %v6232 = vadd.f32 %v6113, %v6231
    %v6233 = vpop.f32.mrf.mxu0
    %6234 = vmatprep.mubr.f32.mxu0 0.0
    %v6235 = vand.u32 %v1583, 4294901760
    %v6236 = vsub.f32 %v1583, %v6235
    %6237 = vmatmul.mubr.f32.gmra.mxu0 %v6236
    %v6238 = vpop.f32.mrf.mxu0
    %v6239 = vadd.f32 %v6119, %v6238
    %v6240 = vpop.f32.mrf.mxu0
    %6241 = vmatprep.mubr.f32.mxu0 0.0
    %v6242 = vand.u32 %v1585, 4294901760
    %v6243 = vsub.f32 %v1585, %v6242
    %6244 = vmatmul.mubr.f32.gmra.mxu0 %v6243
    %v6245 = vpop.f32.mrf.mxu0
    %v6246 = vadd.f32 %v6125, %v6245
    %v6247 = vpop.f32.mrf.mxu0
    %6248 = vmatprep.mubr.f32.mxu0 0.0
    %v6249 = vand.u32 %v1587, 4294901760
    %v6250 = vsub.f32 %v1587, %v6249
    %6251 = vmatmul.mubr.f32.gmra.mxu0 %v6250
    %v6252 = vpop.f32.mrf.mxu0
    %v6253 = vadd.f32 %v6131, %v6252
    %v6254 = vpop.f32.mrf.mxu0
    %6255 = vmatprep.mubr.f32.mxu0 0.0
    %v6256 = vand.u32 %v1589, 4294901760
    %v6257 = vsub.f32 %v1589, %v6256
    %6258 = vmatmul.mubr.f32.gmra.mxu0 %v6257
    %v6259 = vpop.f32.mrf.mxu0
    %v6260 = vadd.f32 %v6137, %v6259
    %v6261 = vpop.f32.mrf.mxu0
    %6262 = vdwg.mxu0
    %6263 = vmatprep.subr.mxu0 0.0
    %6264 = vmatpush1.msra.mxu0 0.0
    %6265 = vmatprep.subr.mxu0 0.0
    %6266 = vmatpush1.msra.mxu0 0.0
    %6267 = vmatprep.subr.mxu0 0.0
    %6268 = vmatpush1.msra.mxu0 0.0
    %6269 = vmatprep.subr.mxu0 0.0
    %6270 = vmatpush1.msra.mxu0 0.0
    %6271 = vmatprep.subr.mxu0 0.0
    %6272 = vmatpush1.msra.mxu0 0.0
    %6273 = vmatprep.subr.mxu0 0.0
    %6274 = vmatpush1.msra.mxu0 0.0
    %6275 = vmatprep.subr.mxu0 0.0
    %6276 = vmatpush1.msra.mxu0 0.0
    %6277 = vmatprep.subr.mxu0 0.0
    %6278 = vmatpush1.msra.mxu0 0.0
    %6279 = vmatprep.subr.mxu0 0.0
    %6280 = vmatpush1.msra.mxu0 0.0
    %6281 = vmatprep.subr.mxu0 0.0
    %6282 = vmatpush1.msra.mxu0 0.0
    %6283 = vmatprep.subr.mxu0 0.0
    %6284 = vmatpush1.msra.mxu0 0.0
    %6285 = vmatprep.subr.mxu0 0.0
    %6286 = vmatpush1.msra.mxu0 0.0
    %6287 = vmatprep.subr.mxu0 0.0
    %6288 = vmatpush1.msra.mxu0 0.0
    %6289 = vmatprep.subr.mxu0 0.0
    %6290 = vmatpush1.msra.mxu0 0.0
    %6291 = vmatprep.subr.mxu0 0.0
    %6292 = vmatpush1.msra.mxu0 0.0
    %6293 = vmatprep.subr.mxu0 0.0
    %v6294 = vand.u32 %v5874, 4294901760
    %6295 = vmatpush1.msra.mxu0 %v6294
    %6296 = vmatprep.subr.mxu0 0.0
    %6297 = vmatpush2.msra.mxu0 0.0
    %6298 = vmatprep.subr.mxu0 0.0
    %6299 = vmatpush2.msra.mxu0 0.0
    %6300 = vmatprep.subr.mxu0 0.0
    %6301 = vmatpush2.msra.mxu0 0.0
    %6302 = vmatprep.subr.mxu0 0.0
    %6303 = vmatpush2.msra.mxu0 0.0
    %6304 = vmatprep.subr.mxu0 0.0
    %6305 = vmatpush2.msra.mxu0 0.0
    %6306 = vmatprep.subr.mxu0 0.0
    %6307 = vmatpush2.msra.mxu0 0.0
    %6308 = vmatprep.subr.mxu0 0.0
    %6309 = vmatpush2.msra.mxu0 0.0
    %6310 = vmatprep.subr.mxu0 0.0
    %6311 = vmatpush2.msra.mxu0 0.0
    %6312 = vmatprep.subr.mxu0 0.0
    %6313 = vmatpush2.msra.mxu0 0.0
    %6314 = vmatprep.subr.mxu0 0.0
    %6315 = vmatpush2.msra.mxu0 0.0
    %6316 = vmatprep.subr.mxu0 0.0
    %6317 = vmatpush2.msra.mxu0 0.0
    %6318 = vmatprep.subr.mxu0 0.0
    %6319 = vmatpush2.msra.mxu0 0.0
    %6320 = vmatprep.subr.mxu0 0.0
    %6321 = vmatpush2.msra.mxu0 0.0
    %6322 = vmatprep.subr.mxu0 0.0
    %6323 = vmatpush2.msra.mxu0 0.0
    %6324 = vmatprep.subr.mxu0 0.0
    %6325 = vmatpush2.msra.mxu0 0.0
    %6326 = vmatprep.subr.mxu0 0.0
    %6327 = vmatpush2.msra.mxu0 0.0
    %6328 = vmatprep.mubr.f32.mxu0 0.0
    %v6329 = vand.u32 %v1575, 4294901760
    %v6330 = vsub.f32 %v1575, %v6329
    %v6331 = vand.u32 %v6330, 4294901760
    %6332 = vmatmul.mubr.f32.gmra.mxu0 %v6331
    %v6333 = vpop.f32.mrf.mxu0
    %v6334 = vadd.f32 %v6211, %v6333
    %v6335 = vpop.f32.mrf.mxu0
    %6336 = vmatprep.mubr.f32.mxu0 0.0
    %v6337 = vand.u32 %v1577, 4294901760
    %v6338 = vsub.f32 %v1577, %v6337
    %v6339 = vand.u32 %v6338, 4294901760
    %6340 = vmatmul.mubr.f32.gmra.mxu0 %v6339
    %v6341 = vpop.f32.mrf.mxu0
    %v6342 = vadd.f32 %v6218, %v6341
    %v6343 = vpop.f32.mrf.mxu0
    %6344 = vmatprep.mubr.f32.mxu0 0.0
    %v6345 = vand.u32 %v1579, 4294901760
    %v6346 = vsub.f32 %v1579, %v6345
    %v6347 = vand.u32 %v6346, 4294901760
    %6348 = vmatmul.mubr.f32.gmra.mxu0 %v6347
    %v6349 = vpop.f32.mrf.mxu0
    %v6350 = vadd.f32 %v6225, %v6349
    %v6351 = vpop.f32.mrf.mxu0
    %6352 = vmatprep.mubr.f32.mxu0 0.0
    %v6353 = vand.u32 %v1581, 4294901760
    %v6354 = vsub.f32 %v1581, %v6353
    %v6355 = vand.u32 %v6354, 4294901760
    %6356 = vmatmul.mubr.f32.gmra.mxu0 %v6355
    %v6357 = vpop.f32.mrf.mxu0
    %v6358 = vadd.f32 %v6232, %v6357
    %v6359 = vpop.f32.mrf.mxu0
    %6360 = vmatprep.mubr.f32.mxu0 0.0
    %v6361 = vand.u32 %v1583, 4294901760
    %v6362 = vsub.f32 %v1583, %v6361
    %v6363 = vand.u32 %v6362, 4294901760
    %6364 = vmatmul.mubr.f32.gmra.mxu0 %v6363
    %v6365 = vpop.f32.mrf.mxu0
    %v6366 = vadd.f32 %v6239, %v6365
    %v6367 = vpop.f32.mrf.mxu0
    %6368 = vmatprep.mubr.f32.mxu0 0.0
    %v6369 = vand.u32 %v1585, 4294901760
    %v6370 = vsub.f32 %v1585, %v6369
    %v6371 = vand.u32 %v6370, 4294901760
    %6372 = vmatmul.mubr.f32.gmra.mxu0 %v6371
    %v6373 = vpop.f32.mrf.mxu0
    %v6374 = vadd.f32 %v6246, %v6373
    %v6375 = vpop.f32.mrf.mxu0
    %6376 = vmatprep.mubr.f32.mxu0 0.0
    %v6377 = vand.u32 %v1587, 4294901760
    %v6378 = vsub.f32 %v1587, %v6377
    %v6379 = vand.u32 %v6378, 4294901760
    %6380 = vmatmul.mubr.f32.gmra.mxu0 %v6379
    %v6381 = vpop.f32.mrf.mxu0
    %v6382 = vadd.f32 %v6253, %v6381
    %v6383 = vpop.f32.mrf.mxu0
    %6384 = vmatprep.mubr.f32.mxu0 0.0
    %v6385 = vand.u32 %v1589, 4294901760
    %v6386 = vsub.f32 %v1589, %v6385
    %v6387 = vand.u32 %v6386, 4294901760
    %6388 = vmatmul.mubr.f32.gmra.mxu0 %v6387
    %v6389 = vpop.f32.mrf.mxu0
    %v6390 = vadd.f32 %v6260, %v6389
    %v6391 = vpop.f32.mrf.mxu0
    %6392 = vdwg.mxu0
    %6393 = vmatprep.subr.mxu0 0.0
    %6394 = vmatpush1.msra.mxu0 0.0
    %6395 = vmatprep.subr.mxu0 0.0
    %6396 = vmatpush1.msra.mxu0 0.0
    %6397 = vmatprep.subr.mxu0 0.0
    %6398 = vmatpush1.msra.mxu0 0.0
    %6399 = vmatprep.subr.mxu0 0.0
    %6400 = vmatpush1.msra.mxu0 0.0
    %6401 = vmatprep.subr.mxu0 0.0
    %6402 = vmatpush1.msra.mxu0 0.0
    %6403 = vmatprep.subr.mxu0 0.0
    %6404 = vmatpush1.msra.mxu0 0.0
    %6405 = vmatprep.subr.mxu0 0.0
    %6406 = vmatpush1.msra.mxu0 0.0
    %6407 = vmatprep.subr.mxu0 0.0
    %6408 = vmatpush1.msra.mxu0 0.0
    %6409 = vmatprep.subr.mxu0 0.0
    %6410 = vmatpush1.msra.mxu0 0.0
    %6411 = vmatprep.subr.mxu0 0.0
    %6412 = vmatpush1.msra.mxu0 0.0
    %6413 = vmatprep.subr.mxu0 0.0
    %6414 = vmatpush1.msra.mxu0 0.0
    %6415 = vmatprep.subr.mxu0 0.0
    %6416 = vmatpush1.msra.mxu0 0.0
    %6417 = vmatprep.subr.mxu0 0.0
    %6418 = vmatpush1.msra.mxu0 0.0
    %6419 = vmatprep.subr.mxu0 0.0
    %6420 = vmatpush1.msra.mxu0 0.0
    %6421 = vmatprep.subr.mxu0 0.0
    %6422 = vmatpush1.msra.mxu0 0.0
    %6423 = vmatprep.subr.mxu0 0.0
    %v6424 = vand.u32 %v5874, 4294901760
    %v6425 = vsub.f32 %v5874, %v6424
    %v6426 = vand.u32 %v6425, 4294901760
    %6427 = vmatpush1.msra.mxu0 %v6426
    %6428 = vmatprep.subr.mxu0 0.0
    %6429 = vmatpush2.msra.mxu0 0.0
    %6430 = vmatprep.subr.mxu0 0.0
    %6431 = vmatpush2.msra.mxu0 0.0
    %6432 = vmatprep.subr.mxu0 0.0
    %6433 = vmatpush2.msra.mxu0 0.0
    %6434 = vmatprep.subr.mxu0 0.0
    %6435 = vmatpush2.msra.mxu0 0.0
    %6436 = vmatprep.subr.mxu0 0.0
    %6437 = vmatpush2.msra.mxu0 0.0
    %6438 = vmatprep.subr.mxu0 0.0
    %6439 = vmatpush2.msra.mxu0 0.0
    %6440 = vmatprep.subr.mxu0 0.0
    %6441 = vmatpush2.msra.mxu0 0.0
    %6442 = vmatprep.subr.mxu0 0.0
    %6443 = vmatpush2.msra.mxu0 0.0
    %6444 = vmatprep.subr.mxu0 0.0
    %6445 = vmatpush2.msra.mxu0 0.0
    %6446 = vmatprep.subr.mxu0 0.0
    %6447 = vmatpush2.msra.mxu0 0.0
    %6448 = vmatprep.subr.mxu0 0.0
    %6449 = vmatpush2.msra.mxu0 0.0
    %6450 = vmatprep.subr.mxu0 0.0
    %6451 = vmatpush2.msra.mxu0 0.0
    %6452 = vmatprep.subr.mxu0 0.0
    %6453 = vmatpush2.msra.mxu0 0.0
    %6454 = vmatprep.subr.mxu0 0.0
    %6455 = vmatpush2.msra.mxu0 0.0
    %6456 = vmatprep.subr.mxu0 0.0
    %6457 = vmatpush2.msra.mxu0 0.0
    %6458 = vmatprep.subr.mxu0 0.0
    %6459 = vmatpush2.msra.mxu0 0.0
    %6460 = vmatprep.mubr.f32.mxu0 0.0
    %v6461 = vand.u32 %v1575, 4294901760
    %6462 = vmatmul.mubr.f32.gmra.mxu0 %v6461
    %v6463 = vpop.f32.mrf.mxu0
    %v6464 = vadd.f32 %v6334, %v6463
    %v6465 = vpop.f32.mrf.mxu0
    %6466 = vmatprep.mubr.f32.mxu0 0.0
    %v6467 = vand.u32 %v1577, 4294901760
    %6468 = vmatmul.mubr.f32.gmra.mxu0 %v6467
    %v6469 = vpop.f32.mrf.mxu0
    %v6470 = vadd.f32 %v6342, %v6469
    %v6471 = vpop.f32.mrf.mxu0
    %6472 = vmatprep.mubr.f32.mxu0 0.0
    %v6473 = vand.u32 %v1579, 4294901760
    %6474 = vmatmul.mubr.f32.gmra.mxu0 %v6473
    %v6475 = vpop.f32.mrf.mxu0
    %v6476 = vadd.f32 %v6350, %v6475
    %v6477 = vpop.f32.mrf.mxu0
    %6478 = vmatprep.mubr.f32.mxu0 0.0
    %v6479 = vand.u32 %v1581, 4294901760
    %6480 = vmatmul.mubr.f32.gmra.mxu0 %v6479
    %v6481 = vpop.f32.mrf.mxu0
    %v6482 = vadd.f32 %v6358, %v6481
    %v6483 = vpop.f32.mrf.mxu0
    %6484 = vmatprep.mubr.f32.mxu0 0.0
    %v6485 = vand.u32 %v1583, 4294901760
    %6486 = vmatmul.mubr.f32.gmra.mxu0 %v6485
    %v6487 = vpop.f32.mrf.mxu0
    %v6488 = vadd.f32 %v6366, %v6487
    %v6489 = vpop.f32.mrf.mxu0
    %6490 = vmatprep.mubr.f32.mxu0 0.0
    %v6491 = vand.u32 %v1585, 4294901760
    %6492 = vmatmul.mubr.f32.gmra.mxu0 %v6491
    %v6493 = vpop.f32.mrf.mxu0
    %v6494 = vadd.f32 %v6374, %v6493
    %v6495 = vpop.f32.mrf.mxu0
    %6496 = vmatprep.mubr.f32.mxu0 0.0
    %v6497 = vand.u32 %v1587, 4294901760
    %6498 = vmatmul.mubr.f32.gmra.mxu0 %v6497
    %v6499 = vpop.f32.mrf.mxu0
    %v6500 = vadd.f32 %v6382, %v6499
    %v6501 = vpop.f32.mrf.mxu0
    %6502 = vmatprep.mubr.f32.mxu0 0.0
    %v6503 = vand.u32 %v1589, 4294901760
    %6504 = vmatmul.mubr.f32.gmra.mxu0 %v6503
    %v6505 = vpop.f32.mrf.mxu0
    %v6506 = vadd.f32 %v6390, %v6505
    %v6507 = vpop.f32.mrf.mxu0
    %6508 = vdwg.mxu0
    %6509 = vmatprep.subr.mxu0 0.0
    %6510 = vmatpush1.msra.mxu0 0.0
    %6511 = vmatprep.subr.mxu0 0.0
    %6512 = vmatpush1.msra.mxu0 0.0
    %6513 = vmatprep.subr.mxu0 0.0
    %6514 = vmatpush1.msra.mxu0 0.0
    %6515 = vmatprep.subr.mxu0 0.0
    %6516 = vmatpush1.msra.mxu0 0.0
    %6517 = vmatprep.subr.mxu0 0.0
    %6518 = vmatpush1.msra.mxu0 0.0
    %6519 = vmatprep.subr.mxu0 0.0
    %6520 = vmatpush1.msra.mxu0 0.0
    %6521 = vmatprep.subr.mxu0 0.0
    %6522 = vmatpush1.msra.mxu0 0.0
    %6523 = vmatprep.subr.mxu0 0.0
    %6524 = vmatpush1.msra.mxu0 0.0
    %6525 = vmatprep.subr.mxu0 0.0
    %6526 = vmatpush1.msra.mxu0 0.0
    %6527 = vmatprep.subr.mxu0 0.0
    %6528 = vmatpush1.msra.mxu0 0.0
    %6529 = vmatprep.subr.mxu0 0.0
    %6530 = vmatpush1.msra.mxu0 0.0
    %6531 = vmatprep.subr.mxu0 0.0
    %6532 = vmatpush1.msra.mxu0 0.0
    %6533 = vmatprep.subr.mxu0 0.0
    %6534 = vmatpush1.msra.mxu0 0.0
    %6535 = vmatprep.subr.mxu0 0.0
    %6536 = vmatpush1.msra.mxu0 0.0
    %6537 = vmatprep.subr.mxu0 0.0
    %6538 = vmatpush1.msra.mxu0 0.0
    %6539 = vmatprep.subr.mxu0 0.0
    %v6540 = vand.u32 %v5874, 4294901760
    %6541 = vmatpush1.msra.mxu0 %v6540
    %6542 = vmatprep.subr.mxu0 0.0
    %6543 = vmatpush2.msra.mxu0 0.0
    %6544 = vmatprep.subr.mxu0 0.0
    %6545 = vmatpush2.msra.mxu0 0.0
    %6546 = vmatprep.subr.mxu0 0.0
    %6547 = vmatpush2.msra.mxu0 0.0
    %6548 = vmatprep.subr.mxu0 0.0
    %6549 = vmatpush2.msra.mxu0 0.0
    %6550 = vmatprep.subr.mxu0 0.0
    %6551 = vmatpush2.msra.mxu0 0.0
    %6552 = vmatprep.subr.mxu0 0.0
    %6553 = vmatpush2.msra.mxu0 0.0
    %6554 = vmatprep.subr.mxu0 0.0
    %6555 = vmatpush2.msra.mxu0 0.0
    %6556 = vmatprep.subr.mxu0 0.0
    %6557 = vmatpush2.msra.mxu0 0.0
    %6558 = vmatprep.subr.mxu0 0.0
    %6559 = vmatpush2.msra.mxu0 0.0
    %6560 = vmatprep.subr.mxu0 0.0
    %6561 = vmatpush2.msra.mxu0 0.0
    %6562 = vmatprep.subr.mxu0 0.0
    %6563 = vmatpush2.msra.mxu0 0.0
    %6564 = vmatprep.subr.mxu0 0.0
    %6565 = vmatpush2.msra.mxu0 0.0
    %6566 = vmatprep.subr.mxu0 0.0
    %6567 = vmatpush2.msra.mxu0 0.0
    %6568 = vmatprep.subr.mxu0 0.0
    %6569 = vmatpush2.msra.mxu0 0.0
    %6570 = vmatprep.subr.mxu0 0.0
    %6571 = vmatpush2.msra.mxu0 0.0
    %6572 = vmatprep.subr.mxu0 0.0
    %6573 = vmatpush2.msra.mxu0 0.0
    %6574 = vmatprep.mubr.f32.mxu0 0.0
    %v6575 = vand.u32 %v1575, 4294901760
    %6576 = vmatmul.mubr.f32.gmra.mxu0 %v6575
    %v6577 = vpop.f32.mrf.mxu0
    %v6578 = vadd.f32 %v6464, %v6577
    %v6579 = vpop.f32.mrf.mxu0
    %6580 = vmatprep.mubr.f32.mxu0 0.0
    %v6581 = vand.u32 %v1577, 4294901760
    %6582 = vmatmul.mubr.f32.gmra.mxu0 %v6581
    %v6583 = vpop.f32.mrf.mxu0
    %v6584 = vadd.f32 %v6470, %v6583
    %v6585 = vpop.f32.mrf.mxu0
    %6586 = vmatprep.mubr.f32.mxu0 0.0
    %v6587 = vand.u32 %v1579, 4294901760
    %6588 = vmatmul.mubr.f32.gmra.mxu0 %v6587
    %v6589 = vpop.f32.mrf.mxu0
    %v6590 = vadd.f32 %v6476, %v6589
    %v6591 = vpop.f32.mrf.mxu0
    %6592 = vmatprep.mubr.f32.mxu0 0.0
    %v6593 = vand.u32 %v1581, 4294901760
    %6594 = vmatmul.mubr.f32.gmra.mxu0 %v6593
    %v6595 = vpop.f32.mrf.mxu0
    %v6596 = vadd.f32 %v6482, %v6595
    %v6597 = vpop.f32.mrf.mxu0
    %6598 = vmatprep.mubr.f32.mxu0 0.0
    %v6599 = vand.u32 %v1583, 4294901760
    %6600 = vmatmul.mubr.f32.gmra.mxu0 %v6599
    %v6601 = vpop.f32.mrf.mxu0
    %v6602 = vadd.f32 %v6488, %v6601
    %v6603 = vpop.f32.mrf.mxu0
    %6604 = vmatprep.mubr.f32.mxu0 0.0
    %v6605 = vand.u32 %v1585, 4294901760
    %6606 = vmatmul.mubr.f32.gmra.mxu0 %v6605
    %v6607 = vpop.f32.mrf.mxu0
    %v6608 = vadd.f32 %v6494, %v6607
    %v6609 = vpop.f32.mrf.mxu0
    %6610 = vmatprep.mubr.f32.mxu0 0.0
    %v6611 = vand.u32 %v1587, 4294901760
    %6612 = vmatmul.mubr.f32.gmra.mxu0 %v6611
    %v6613 = vpop.f32.mrf.mxu0
    %v6614 = vadd.f32 %v6500, %v6613
    %v6615 = vpop.f32.mrf.mxu0
    %6616 = vmatprep.mubr.f32.mxu0 0.0
    %v6617 = vand.u32 %v1589, 4294901760
    %6618 = vmatmul.mubr.f32.gmra.mxu0 %v6617
    %v6619 = vpop.f32.mrf.mxu0
    %v6620 = vadd.f32 %v6506, %v6619
    %v6621 = vpop.f32.mrf.mxu0
    %6622 = vdwg.mxu0
    %v6623 = vxor.u32 %v6578, 2147483648
    %v6624 = vxor.u32 %v6584, 2147483648
    %v6625 = vxor.u32 %v6590, 2147483648
    %v6626 = vxor.u32 %v6596, 2147483648
    %v6627 = vxor.u32 %v6602, 2147483648
    %v6628 = vxor.u32 %v6608, 2147483648
    %v6629 = vxor.u32 %v6614, 2147483648
    %v6630 = vxor.u32 %v6620, 2147483648
    %v6631 = vmul.f32 %v6623, 1.442695
    %v6632 = vpow.pop %v6631
    %v6633 = vmul.f32 %v6624, 1.442695
    %v6634 = vpow.pop %v6633
    %v6635 = vmul.f32 %v6625, 1.442695
    %v6636 = vpow.pop %v6635
    %v6637 = vmul.f32 %v6626, 1.442695
    %v6638 = vpow.pop %v6637
    %v6639 = vmul.f32 %v6627, 1.442695
    %v6640 = vpow.pop %v6639
    %v6641 = vmul.f32 %v6628, 1.442695
    %v6642 = vpow.pop %v6641
    %v6643 = vmul.f32 %v6629, 1.442695
    %v6644 = vpow.pop %v6643
    %v6645 = vmul.f32 %v6630, 1.442695
    %v6646 = vpow.pop %v6645
    %v6647 = vadd.f32 %v6632, 1.0
    %v6648 = vadd.f32 %v6634, 1.0
    %v6649 = vadd.f32 %v6636, 1.0
    %v6650 = vadd.f32 %v6638, 1.0
    %v6651 = vadd.f32 %v6640, 1.0
    %v6652 = vadd.f32 %v6642, 1.0
    %v6653 = vadd.f32 %v6644, 1.0
    %v6654 = vadd.f32 %v6646, 1.0
    %v6655 = vrcp.pop %v6647
    %v6656 = vmul.f32 1.0, %v6655
    %v6657 = vrcp.pop %v6648
    %v6658 = vmul.f32 1.0, %v6657
    %v6659 = vrcp.pop %v6649
    %v6660 = vmul.f32 1.0, %v6659
    %v6661 = vrcp.pop %v6650
    %v6662 = vmul.f32 1.0, %v6661
    %v6663 = vrcp.pop %v6651
    %v6664 = vmul.f32 1.0, %v6663
    %v6665 = vrcp.pop %v6652
    %v6666 = vmul.f32 1.0, %v6665
    %v6667 = vrcp.pop %v6653
    %v6668 = vmul.f32 1.0, %v6667
    %v6669 = vrcp.pop %v6654
    %v6670 = vmul.f32 1.0, %v6669
    %v6671 = vsel %vm2386, %v4501, 0.0
    %6672 = vadd.xlane.f32.xlu0 %v6671
    %v6673 = vpop.xlane.xlu0 %6672
    %v6674 = vsel %vm2386, %v4506, 0.0
    %6675 = vadd.xlane.f32.xlu0 %v6674
    %v6676 = vpop.xlane.xlu0 %6675
    %v6677 = vsel %vm2386, %v4511, 0.0
    %6678 = vadd.xlane.f32.xlu0 %v6677
    %v6679 = vpop.xlane.xlu0 %6678
    %v6680 = vsel %vm2386, %v4516, 0.0
    %6681 = vadd.xlane.f32.xlu0 %v6680
    %v6682 = vpop.xlane.xlu0 %6681
    %v6683 = vsel %vm2386, %v4521, 0.0
    %6684 = vadd.xlane.f32.xlu0 %v6683
    %v6685 = vpop.xlane.xlu0 %6684
    %v6686 = vsel %vm2386, %v4526, 0.0
    %6687 = vadd.xlane.f32.xlu0 %v6686
    %v6688 = vpop.xlane.xlu0 %6687
    %v6689 = vsel %vm2386, %v4531, 0.0
    %6690 = vadd.xlane.f32.xlu0 %v6689
    %v6691 = vpop.xlane.xlu0 %6690
    %v6692 = vsel %vm2386, %v4536, 0.0
    %6693 = vadd.xlane.f32.xlu0 %v6692
    %v6694 = vpop.xlane.xlu0 %6693
    %v6695 = vmul.f32 %v6673, %v2411
    %v6696 = vmul.f32 %v6676, %v2411
    %v6697 = vmul.f32 %v6679, %v2411
    %v6698 = vmul.f32 %v6682, %v2411
    %v6699 = vmul.f32 %v6685, %v2411
    %v6700 = vmul.f32 %v6688, %v2411
    %v6701 = vmul.f32 %v6691, %v2411
    %v6702 = vmul.f32 %v6694, %v2411
    %6703 = vmatprep.subr.mxu0 0.0
    %6704 = vmatpush1.msra.mxu0 0.0
    %6705 = vmatprep.subr.mxu0 0.0
    %6706 = vmatpush1.msra.mxu0 0.0
    %6707 = vmatprep.subr.mxu0 0.0
    %6708 = vmatpush1.msra.mxu0 0.0
    %6709 = vmatprep.subr.mxu0 0.0
    %6710 = vmatpush1.msra.mxu0 0.0
    %6711 = vmatprep.subr.mxu0 0.0
    %6712 = vmatpush1.msra.mxu0 0.0
    %6713 = vmatprep.subr.mxu0 0.0
    %6714 = vmatpush1.msra.mxu0 0.0
    %6715 = vmatprep.subr.mxu0 0.0
    %6716 = vmatpush1.msra.mxu0 0.0
    %6717 = vmatprep.subr.mxu0 0.0
    %6718 = vmatpush1.msra.mxu0 0.0
    %6719 = vmatprep.subr.mxu0 0.0
    %v6720 = vand.u32 %v6702, 4294901760
    %6721 = vmatpush1.msra.mxu0 %v6720
    %6722 = vmatprep.subr.mxu0 0.0
    %v6723 = vand.u32 %v6701, 4294901760
    %6724 = vmatpush1.msra.mxu0 %v6723
    %6725 = vmatprep.subr.mxu0 0.0
    %v6726 = vand.u32 %v6700, 4294901760
    %6727 = vmatpush1.msra.mxu0 %v6726
    %6728 = vmatprep.subr.mxu0 0.0
    %v6729 = vand.u32 %v6699, 4294901760
    %6730 = vmatpush1.msra.mxu0 %v6729
    %6731 = vmatprep.subr.mxu0 0.0
    %v6732 = vand.u32 %v6698, 4294901760
    %6733 = vmatpush1.msra.mxu0 %v6732
    %6734 = vmatprep.subr.mxu0 0.0
    %v6735 = vand.u32 %v6697, 4294901760
    %6736 = vmatpush1.msra.mxu0 %v6735
    %6737 = vmatprep.subr.mxu0 0.0
    %v6738 = vand.u32 %v6696, 4294901760
    %6739 = vmatpush1.msra.mxu0 %v6738
    %6740 = vmatprep.subr.mxu0 0.0
    %v6741 = vand.u32 %v6695, 4294901760
    %6742 = vmatpush1.msra.mxu0 %v6741
    %6743 = vmatprep.subr.mxu0 0.0
    %6744 = vmatpush2.msra.mxu0 0.0
    %6745 = vmatprep.subr.mxu0 0.0
    %6746 = vmatpush2.msra.mxu0 0.0
    %6747 = vmatprep.subr.mxu0 0.0
    %6748 = vmatpush2.msra.mxu0 0.0
    %6749 = vmatprep.subr.mxu0 0.0
    %6750 = vmatpush2.msra.mxu0 0.0
    %6751 = vmatprep.subr.mxu0 0.0
    %6752 = vmatpush2.msra.mxu0 0.0
    %6753 = vmatprep.subr.mxu0 0.0
    %6754 = vmatpush2.msra.mxu0 0.0
    %6755 = vmatprep.subr.mxu0 0.0
    %6756 = vmatpush2.msra.mxu0 0.0
    %6757 = vmatprep.subr.mxu0 0.0
    %6758 = vmatpush2.msra.mxu0 0.0
    %6759 = vmatprep.subr.mxu0 0.0
    %6760 = vmatpush2.msra.mxu0 0.0
    %6761 = vmatprep.subr.mxu0 0.0
    %6762 = vmatpush2.msra.mxu0 0.0
    %6763 = vmatprep.subr.mxu0 0.0
    %6764 = vmatpush2.msra.mxu0 0.0
    %6765 = vmatprep.subr.mxu0 0.0
    %6766 = vmatpush2.msra.mxu0 0.0
    %6767 = vmatprep.subr.mxu0 0.0
    %6768 = vmatpush2.msra.mxu0 0.0
    %6769 = vmatprep.subr.mxu0 0.0
    %6770 = vmatpush2.msra.mxu0 0.0
    %6771 = vmatprep.subr.mxu0 0.0
    %6772 = vmatpush2.msra.mxu0 0.0
    %6773 = vmatprep.subr.mxu0 0.0
    %6774 = vmatpush2.msra.mxu0 0.0
    %6775 = vmatprep.mubr.f32.mxu0 0.0
    %v6776 = vand.u32 %v2421, 4294901760
    %v6777 = vsub.f32 %v2421, %v6776
    %v6778 = vand.u32 %v6777, 4294901760
    %v6779 = vsub.f32 %v6777, %v6778
    %v6780 = vand.u32 %v6779, 4294901760
    %6781 = vmatmul.mubr.f32.gmra.mxu0 %v6780
    %v6782 = vpop.f32.mrf.mxu0
    %v6783 = vadd.f32 0.0, %v6782
    %v6784 = vpop.f32.mrf.mxu0
    %6785 = vdwg.mxu0
    %6786 = vmatprep.subr.mxu0 0.0
    %6787 = vmatpush1.msra.mxu0 0.0
    %6788 = vmatprep.subr.mxu0 0.0
    %6789 = vmatpush1.msra.mxu0 0.0
    %6790 = vmatprep.subr.mxu0 0.0
    %6791 = vmatpush1.msra.mxu0 0.0
    %6792 = vmatprep.subr.mxu0 0.0
    %6793 = vmatpush1.msra.mxu0 0.0
    %6794 = vmatprep.subr.mxu0 0.0
    %6795 = vmatpush1.msra.mxu0 0.0
    %6796 = vmatprep.subr.mxu0 0.0
    %6797 = vmatpush1.msra.mxu0 0.0
    %6798 = vmatprep.subr.mxu0 0.0
    %6799 = vmatpush1.msra.mxu0 0.0
    %6800 = vmatprep.subr.mxu0 0.0
    %6801 = vmatpush1.msra.mxu0 0.0
    %6802 = vmatprep.subr.mxu0 0.0
    %v6803 = vand.u32 %v6702, 4294901760
    %v6804 = vsub.f32 %v6702, %v6803
    %v6805 = vand.u32 %v6804, 4294901760
    %v6806 = vsub.f32 %v6804, %v6805
    %v6807 = vand.u32 %v6806, 4294901760
    %6808 = vmatpush1.msra.mxu0 %v6807
    %6809 = vmatprep.subr.mxu0 0.0
    %v6810 = vand.u32 %v6701, 4294901760
    %v6811 = vsub.f32 %v6701, %v6810
    %v6812 = vand.u32 %v6811, 4294901760
    %v6813 = vsub.f32 %v6811, %v6812
    %v6814 = vand.u32 %v6813, 4294901760
    %6815 = vmatpush1.msra.mxu0 %v6814
    %6816 = vmatprep.subr.mxu0 0.0
    %v6817 = vand.u32 %v6700, 4294901760
    %v6818 = vsub.f32 %v6700, %v6817
    %v6819 = vand.u32 %v6818, 4294901760
    %v6820 = vsub.f32 %v6818, %v6819
    %v6821 = vand.u32 %v6820, 4294901760
    %6822 = vmatpush1.msra.mxu0 %v6821
    %6823 = vmatprep.subr.mxu0 0.0
    %v6824 = vand.u32 %v6699, 4294901760
    %v6825 = vsub.f32 %v6699, %v6824
    %v6826 = vand.u32 %v6825, 4294901760
    %v6827 = vsub.f32 %v6825, %v6826
    %v6828 = vand.u32 %v6827, 4294901760
    %6829 = vmatpush1.msra.mxu0 %v6828
    %6830 = vmatprep.subr.mxu0 0.0
    %v6831 = vand.u32 %v6698, 4294901760
    %v6832 = vsub.f32 %v6698, %v6831
    %v6833 = vand.u32 %v6832, 4294901760
    %v6834 = vsub.f32 %v6832, %v6833
    %v6835 = vand.u32 %v6834, 4294901760
    %6836 = vmatpush1.msra.mxu0 %v6835
    %6837 = vmatprep.subr.mxu0 0.0
    %v6838 = vand.u32 %v6697, 4294901760
    %v6839 = vsub.f32 %v6697, %v6838
    %v6840 = vand.u32 %v6839, 4294901760
    %v6841 = vsub.f32 %v6839, %v6840
    %v6842 = vand.u32 %v6841, 4294901760
    %6843 = vmatpush1.msra.mxu0 %v6842
    %6844 = vmatprep.subr.mxu0 0.0
    %v6845 = vand.u32 %v6696, 4294901760
    %v6846 = vsub.f32 %v6696, %v6845
    %v6847 = vand.u32 %v6846, 4294901760
    %v6848 = vsub.f32 %v6846, %v6847
    %v6849 = vand.u32 %v6848, 4294901760
    %6850 = vmatpush1.msra.mxu0 %v6849
    %6851 = vmatprep.subr.mxu0 0.0
    %v6852 = vand.u32 %v6695, 4294901760
    %v6853 = vsub.f32 %v6695, %v6852
    %v6854 = vand.u32 %v6853, 4294901760
    %v6855 = vsub.f32 %v6853, %v6854
    %v6856 = vand.u32 %v6855, 4294901760
    %6857 = vmatpush1.msra.mxu0 %v6856
    %6858 = vmatprep.subr.mxu0 0.0
    %6859 = vmatpush2.msra.mxu0 0.0
    %6860 = vmatprep.subr.mxu0 0.0
    %6861 = vmatpush2.msra.mxu0 0.0
    %6862 = vmatprep.subr.mxu0 0.0
    %6863 = vmatpush2.msra.mxu0 0.0
    %6864 = vmatprep.subr.mxu0 0.0
    %6865 = vmatpush2.msra.mxu0 0.0
    %6866 = vmatprep.subr.mxu0 0.0
    %6867 = vmatpush2.msra.mxu0 0.0
    %6868 = vmatprep.subr.mxu0 0.0
    %6869 = vmatpush2.msra.mxu0 0.0
    %6870 = vmatprep.subr.mxu0 0.0
    %6871 = vmatpush2.msra.mxu0 0.0
    %6872 = vmatprep.subr.mxu0 0.0
    %6873 = vmatpush2.msra.mxu0 0.0
    %6874 = vmatprep.subr.mxu0 0.0
    %6875 = vmatpush2.msra.mxu0 0.0
    %6876 = vmatprep.subr.mxu0 0.0
    %6877 = vmatpush2.msra.mxu0 0.0
    %6878 = vmatprep.subr.mxu0 0.0
    %6879 = vmatpush2.msra.mxu0 0.0
    %6880 = vmatprep.subr.mxu0 0.0
    %6881 = vmatpush2.msra.mxu0 0.0
    %6882 = vmatprep.subr.mxu0 0.0
    %6883 = vmatpush2.msra.mxu0 0.0
    %6884 = vmatprep.subr.mxu0 0.0
    %6885 = vmatpush2.msra.mxu0 0.0
    %6886 = vmatprep.subr.mxu0 0.0
    %6887 = vmatpush2.msra.mxu0 0.0
    %6888 = vmatprep.subr.mxu0 0.0
    %6889 = vmatpush2.msra.mxu0 0.0
    %6890 = vmatprep.mubr.f32.mxu0 0.0
    %v6891 = vand.u32 %v2421, 4294901760
    %6892 = vmatmul.mubr.f32.gmra.mxu0 %v6891
    %v6893 = vpop.f32.mrf.mxu0
    %v6894 = vadd.f32 %v6783, %v6893
    %v6895 = vpop.f32.mrf.mxu0
    %6896 = vdwg.mxu0
    %6897 = vmatprep.subr.mxu0 0.0
    %6898 = vmatpush1.msra.mxu0 0.0
    %6899 = vmatprep.subr.mxu0 0.0
    %6900 = vmatpush1.msra.mxu0 0.0
    %6901 = vmatprep.subr.mxu0 0.0
    %6902 = vmatpush1.msra.mxu0 0.0
    %6903 = vmatprep.subr.mxu0 0.0
    %6904 = vmatpush1.msra.mxu0 0.0
    %6905 = vmatprep.subr.mxu0 0.0
    %6906 = vmatpush1.msra.mxu0 0.0
    %6907 = vmatprep.subr.mxu0 0.0
    %6908 = vmatpush1.msra.mxu0 0.0
    %6909 = vmatprep.subr.mxu0 0.0
    %6910 = vmatpush1.msra.mxu0 0.0
    %6911 = vmatprep.subr.mxu0 0.0
    %6912 = vmatpush1.msra.mxu0 0.0
    %6913 = vmatprep.subr.mxu0 0.0
    %v6914 = vand.u32 %v6702, 4294901760
    %v6915 = vsub.f32 %v6702, %v6914
    %6916 = vmatpush1.msra.mxu0 %v6915
    %6917 = vmatprep.subr.mxu0 0.0
    %v6918 = vand.u32 %v6701, 4294901760
    %v6919 = vsub.f32 %v6701, %v6918
    %6920 = vmatpush1.msra.mxu0 %v6919
    %6921 = vmatprep.subr.mxu0 0.0
    %v6922 = vand.u32 %v6700, 4294901760
    %v6923 = vsub.f32 %v6700, %v6922
    %6924 = vmatpush1.msra.mxu0 %v6923
    %6925 = vmatprep.subr.mxu0 0.0
    %v6926 = vand.u32 %v6699, 4294901760
    %v6927 = vsub.f32 %v6699, %v6926
    %6928 = vmatpush1.msra.mxu0 %v6927
    %6929 = vmatprep.subr.mxu0 0.0
    %v6930 = vand.u32 %v6698, 4294901760
    %v6931 = vsub.f32 %v6698, %v6930
    %6932 = vmatpush1.msra.mxu0 %v6931
    %6933 = vmatprep.subr.mxu0 0.0
    %v6934 = vand.u32 %v6697, 4294901760
    %v6935 = vsub.f32 %v6697, %v6934
    %6936 = vmatpush1.msra.mxu0 %v6935
    %6937 = vmatprep.subr.mxu0 0.0
    %v6938 = vand.u32 %v6696, 4294901760
    %v6939 = vsub.f32 %v6696, %v6938
    %6940 = vmatpush1.msra.mxu0 %v6939
    %6941 = vmatprep.subr.mxu0 0.0
    %v6942 = vand.u32 %v6695, 4294901760
    %v6943 = vsub.f32 %v6695, %v6942
    %6944 = vmatpush1.msra.mxu0 %v6943
    %6945 = vmatprep.subr.mxu0 0.0
    %6946 = vmatpush2.msra.mxu0 0.0
    %6947 = vmatprep.subr.mxu0 0.0
    %6948 = vmatpush2.msra.mxu0 0.0
    %6949 = vmatprep.subr.mxu0 0.0
    %6950 = vmatpush2.msra.mxu0 0.0
    %6951 = vmatprep.subr.mxu0 0.0
    %6952 = vmatpush2.msra.mxu0 0.0
    %6953 = vmatprep.subr.mxu0 0.0
    %6954 = vmatpush2.msra.mxu0 0.0
    %6955 = vmatprep.subr.mxu0 0.0
    %6956 = vmatpush2.msra.mxu0 0.0
    %6957 = vmatprep.subr.mxu0 0.0
    %6958 = vmatpush2.msra.mxu0 0.0
    %6959 = vmatprep.subr.mxu0 0.0
    %6960 = vmatpush2.msra.mxu0 0.0
    %6961 = vmatprep.subr.mxu0 0.0
    %6962 = vmatpush2.msra.mxu0 0.0
    %6963 = vmatprep.subr.mxu0 0.0
    %6964 = vmatpush2.msra.mxu0 0.0
    %6965 = vmatprep.subr.mxu0 0.0
    %6966 = vmatpush2.msra.mxu0 0.0
    %6967 = vmatprep.subr.mxu0 0.0
    %6968 = vmatpush2.msra.mxu0 0.0
    %6969 = vmatprep.subr.mxu0 0.0
    %6970 = vmatpush2.msra.mxu0 0.0
    %6971 = vmatprep.subr.mxu0 0.0
    %6972 = vmatpush2.msra.mxu0 0.0
    %6973 = vmatprep.subr.mxu0 0.0
    %6974 = vmatpush2.msra.mxu0 0.0
    %6975 = vmatprep.subr.mxu0 0.0
    %6976 = vmatpush2.msra.mxu0 0.0
    %6977 = vmatprep.mubr.f32.mxu0 0.0
    %v6978 = vand.u32 %v2421, 4294901760
    %v6979 = vsub.f32 %v2421, %v6978
    %6980 = vmatmul.mubr.f32.gmra.mxu0 %v6979
    %v6981 = vpop.f32.mrf.mxu0
    %v6982 = vadd.f32 %v6894, %v6981
    %v6983 = vpop.f32.mrf.mxu0
    %6984 = vdwg.mxu0
    %6985 = vmatprep.subr.mxu0 0.0
    %6986 = vmatpush1.msra.mxu0 0.0
    %6987 = vmatprep.subr.mxu0 0.0
    %6988 = vmatpush1.msra.mxu0 0.0
    %6989 = vmatprep.subr.mxu0 0.0
    %6990 = vmatpush1.msra.mxu0 0.0
    %6991 = vmatprep.subr.mxu0 0.0
    %6992 = vmatpush1.msra.mxu0 0.0
    %6993 = vmatprep.subr.mxu0 0.0
    %6994 = vmatpush1.msra.mxu0 0.0
    %6995 = vmatprep.subr.mxu0 0.0
    %6996 = vmatpush1.msra.mxu0 0.0
    %6997 = vmatprep.subr.mxu0 0.0
    %6998 = vmatpush1.msra.mxu0 0.0
    %6999 = vmatprep.subr.mxu0 0.0
    %7000 = vmatpush1.msra.mxu0 0.0
    %7001 = vmatprep.subr.mxu0 0.0
    %v7002 = vand.u32 %v6702, 4294901760
    %7003 = vmatpush1.msra.mxu0 %v7002
    %7004 = vmatprep.subr.mxu0 0.0
    %v7005 = vand.u32 %v6701, 4294901760
    %7006 = vmatpush1.msra.mxu0 %v7005
    %7007 = vmatprep.subr.mxu0 0.0
    %v7008 = vand.u32 %v6700, 4294901760
    %7009 = vmatpush1.msra.mxu0 %v7008
    %7010 = vmatprep.subr.mxu0 0.0
    %v7011 = vand.u32 %v6699, 4294901760
    %7012 = vmatpush1.msra.mxu0 %v7011
    %7013 = vmatprep.subr.mxu0 0.0
    %v7014 = vand.u32 %v6698, 4294901760
    %7015 = vmatpush1.msra.mxu0 %v7014
    %7016 = vmatprep.subr.mxu0 0.0
    %v7017 = vand.u32 %v6697, 4294901760
    %7018 = vmatpush1.msra.mxu0 %v7017
    %7019 = vmatprep.subr.mxu0 0.0
    %v7020 = vand.u32 %v6696, 4294901760
    %7021 = vmatpush1.msra.mxu0 %v7020
    %7022 = vmatprep.subr.mxu0 0.0
    %v7023 = vand.u32 %v6695, 4294901760
    %7024 = vmatpush1.msra.mxu0 %v7023
    %7025 = vmatprep.subr.mxu0 0.0
    %7026 = vmatpush2.msra.mxu0 0.0
    %7027 = vmatprep.subr.mxu0 0.0
    %7028 = vmatpush2.msra.mxu0 0.0
    %7029 = vmatprep.subr.mxu0 0.0
    %7030 = vmatpush2.msra.mxu0 0.0
    %7031 = vmatprep.subr.mxu0 0.0
    %7032 = vmatpush2.msra.mxu0 0.0
    %7033 = vmatprep.subr.mxu0 0.0
    %7034 = vmatpush2.msra.mxu0 0.0
    %7035 = vmatprep.subr.mxu0 0.0
    %7036 = vmatpush2.msra.mxu0 0.0
    %7037 = vmatprep.subr.mxu0 0.0
    %7038 = vmatpush2.msra.mxu0 0.0
    %7039 = vmatprep.subr.mxu0 0.0
    %7040 = vmatpush2.msra.mxu0 0.0
    %7041 = vmatprep.subr.mxu0 0.0
    %7042 = vmatpush2.msra.mxu0 0.0
    %7043 = vmatprep.subr.mxu0 0.0
    %7044 = vmatpush2.msra.mxu0 0.0
    %7045 = vmatprep.subr.mxu0 0.0
    %7046 = vmatpush2.msra.mxu0 0.0
    %7047 = vmatprep.subr.mxu0 0.0
    %7048 = vmatpush2.msra.mxu0 0.0
    %7049 = vmatprep.subr.mxu0 0.0
    %7050 = vmatpush2.msra.mxu0 0.0
    %7051 = vmatprep.subr.mxu0 0.0
    %7052 = vmatpush2.msra.mxu0 0.0
    %7053 = vmatprep.subr.mxu0 0.0
    %7054 = vmatpush2.msra.mxu0 0.0
    %7055 = vmatprep.subr.mxu0 0.0
    %7056 = vmatpush2.msra.mxu0 0.0
    %7057 = vmatprep.mubr.f32.mxu0 0.0
    %v7058 = vand.u32 %v2421, 4294901760
    %v7059 = vsub.f32 %v2421, %v7058
    %v7060 = vand.u32 %v7059, 4294901760
    %7061 = vmatmul.mubr.f32.gmra.mxu0 %v7060
    %v7062 = vpop.f32.mrf.mxu0
    %v7063 = vadd.f32 %v6982, %v7062
    %v7064 = vpop.f32.mrf.mxu0
    %7065 = vdwg.mxu0
    %7066 = vmatprep.subr.mxu0 0.0
    %7067 = vmatpush1.msra.mxu0 0.0
    %7068 = vmatprep.subr.mxu0 0.0
    %7069 = vmatpush1.msra.mxu0 0.0
    %7070 = vmatprep.subr.mxu0 0.0
    %7071 = vmatpush1.msra.mxu0 0.0
    %7072 = vmatprep.subr.mxu0 0.0
    %7073 = vmatpush1.msra.mxu0 0.0
    %7074 = vmatprep.subr.mxu0 0.0
    %7075 = vmatpush1.msra.mxu0 0.0
    %7076 = vmatprep.subr.mxu0 0.0
    %7077 = vmatpush1.msra.mxu0 0.0
    %7078 = vmatprep.subr.mxu0 0.0
    %7079 = vmatpush1.msra.mxu0 0.0
    %7080 = vmatprep.subr.mxu0 0.0
    %7081 = vmatpush1.msra.mxu0 0.0
    %7082 = vmatprep.subr.mxu0 0.0
    %v7083 = vand.u32 %v6702, 4294901760
    %v7084 = vsub.f32 %v6702, %v7083
    %v7085 = vand.u32 %v7084, 4294901760
    %7086 = vmatpush1.msra.mxu0 %v7085
    %7087 = vmatprep.subr.mxu0 0.0
    %v7088 = vand.u32 %v6701, 4294901760
    %v7089 = vsub.f32 %v6701, %v7088
    %v7090 = vand.u32 %v7089, 4294901760
    %7091 = vmatpush1.msra.mxu0 %v7090
    %7092 = vmatprep.subr.mxu0 0.0
    %v7093 = vand.u32 %v6700, 4294901760
    %v7094 = vsub.f32 %v6700, %v7093
    %v7095 = vand.u32 %v7094, 4294901760
    %7096 = vmatpush1.msra.mxu0 %v7095
    %7097 = vmatprep.subr.mxu0 0.0
    %v7098 = vand.u32 %v6699, 4294901760
    %v7099 = vsub.f32 %v6699, %v7098
    %v7100 = vand.u32 %v7099, 4294901760
    %7101 = vmatpush1.msra.mxu0 %v7100
    %7102 = vmatprep.subr.mxu0 0.0
    %v7103 = vand.u32 %v6698, 4294901760
    %v7104 = vsub.f32 %v6698, %v7103
    %v7105 = vand.u32 %v7104, 4294901760
    %7106 = vmatpush1.msra.mxu0 %v7105
    %7107 = vmatprep.subr.mxu0 0.0
    %v7108 = vand.u32 %v6697, 4294901760
    %v7109 = vsub.f32 %v6697, %v7108
    %v7110 = vand.u32 %v7109, 4294901760
    %7111 = vmatpush1.msra.mxu0 %v7110
    %7112 = vmatprep.subr.mxu0 0.0
    %v7113 = vand.u32 %v6696, 4294901760
    %v7114 = vsub.f32 %v6696, %v7113
    %v7115 = vand.u32 %v7114, 4294901760
    %7116 = vmatpush1.msra.mxu0 %v7115
    %7117 = vmatprep.subr.mxu0 0.0
    %v7118 = vand.u32 %v6695, 4294901760
    %v7119 = vsub.f32 %v6695, %v7118
    %v7120 = vand.u32 %v7119, 4294901760
    %7121 = vmatpush1.msra.mxu0 %v7120
    %7122 = vmatprep.subr.mxu0 0.0
    %7123 = vmatpush2.msra.mxu0 0.0
    %7124 = vmatprep.subr.mxu0 0.0
    %7125 = vmatpush2.msra.mxu0 0.0
    %7126 = vmatprep.subr.mxu0 0.0
    %7127 = vmatpush2.msra.mxu0 0.0
    %7128 = vmatprep.subr.mxu0 0.0
    %7129 = vmatpush2.msra.mxu0 0.0
    %7130 = vmatprep.subr.mxu0 0.0
    %7131 = vmatpush2.msra.mxu0 0.0
    %7132 = vmatprep.subr.mxu0 0.0
    %7133 = vmatpush2.msra.mxu0 0.0
    %7134 = vmatprep.subr.mxu0 0.0
    %7135 = vmatpush2.msra.mxu0 0.0
    %7136 = vmatprep.subr.mxu0 0.0
    %7137 = vmatpush2.msra.mxu0 0.0
    %7138 = vmatprep.subr.mxu0 0.0
    %7139 = vmatpush2.msra.mxu0 0.0
    %7140 = vmatprep.subr.mxu0 0.0
    %7141 = vmatpush2.msra.mxu0 0.0
    %7142 = vmatprep.subr.mxu0 0.0
    %7143 = vmatpush2.msra.mxu0 0.0
    %7144 = vmatprep.subr.mxu0 0.0
    %7145 = vmatpush2.msra.mxu0 0.0
    %7146 = vmatprep.subr.mxu0 0.0
    %7147 = vmatpush2.msra.mxu0 0.0
    %7148 = vmatprep.subr.mxu0 0.0
    %7149 = vmatpush2.msra.mxu0 0.0
    %7150 = vmatprep.subr.mxu0 0.0
    %7151 = vmatpush2.msra.mxu0 0.0
    %7152 = vmatprep.subr.mxu0 0.0
    %7153 = vmatpush2.msra.mxu0 0.0
    %7154 = vmatprep.mubr.f32.mxu0 0.0
    %v7155 = vand.u32 %v2421, 4294901760
    %7156 = vmatmul.mubr.f32.gmra.mxu0 %v7155
    %v7157 = vpop.f32.mrf.mxu0
    %v7158 = vadd.f32 %v7063, %v7157
    %v7159 = vpop.f32.mrf.mxu0
    %7160 = vdwg.mxu0
    %7161 = vmatprep.subr.mxu0 0.0
    %7162 = vmatpush1.msra.mxu0 0.0
    %7163 = vmatprep.subr.mxu0 0.0
    %7164 = vmatpush1.msra.mxu0 0.0
    %7165 = vmatprep.subr.mxu0 0.0
    %7166 = vmatpush1.msra.mxu0 0.0
    %7167 = vmatprep.subr.mxu0 0.0
    %7168 = vmatpush1.msra.mxu0 0.0
    %7169 = vmatprep.subr.mxu0 0.0
    %7170 = vmatpush1.msra.mxu0 0.0
    %7171 = vmatprep.subr.mxu0 0.0
    %7172 = vmatpush1.msra.mxu0 0.0
    %7173 = vmatprep.subr.mxu0 0.0
    %7174 = vmatpush1.msra.mxu0 0.0
    %7175 = vmatprep.subr.mxu0 0.0
    %7176 = vmatpush1.msra.mxu0 0.0
    %7177 = vmatprep.subr.mxu0 0.0
    %v7178 = vand.u32 %v6702, 4294901760
    %7179 = vmatpush1.msra.mxu0 %v7178
    %7180 = vmatprep.subr.mxu0 0.0
    %v7181 = vand.u32 %v6701, 4294901760
    %7182 = vmatpush1.msra.mxu0 %v7181
    %7183 = vmatprep.subr.mxu0 0.0
    %v7184 = vand.u32 %v6700, 4294901760
    %7185 = vmatpush1.msra.mxu0 %v7184
    %7186 = vmatprep.subr.mxu0 0.0
    %v7187 = vand.u32 %v6699, 4294901760
    %7188 = vmatpush1.msra.mxu0 %v7187
    %7189 = vmatprep.subr.mxu0 0.0
    %v7190 = vand.u32 %v6698, 4294901760
    %7191 = vmatpush1.msra.mxu0 %v7190
    %7192 = vmatprep.subr.mxu0 0.0
    %v7193 = vand.u32 %v6697, 4294901760
    %7194 = vmatpush1.msra.mxu0 %v7193
    %7195 = vmatprep.subr.mxu0 0.0
    %v7196 = vand.u32 %v6696, 4294901760
    %7197 = vmatpush1.msra.mxu0 %v7196
    %7198 = vmatprep.subr.mxu0 0.0
    %v7199 = vand.u32 %v6695, 4294901760
    %7200 = vmatpush1.msra.mxu0 %v7199
    %7201 = vmatprep.subr.mxu0 0.0
    %7202 = vmatpush2.msra.mxu0 0.0
    %7203 = vmatprep.subr.mxu0 0.0
    %7204 = vmatpush2.msra.mxu0 0.0
    %7205 = vmatprep.subr.mxu0 0.0
    %7206 = vmatpush2.msra.mxu0 0.0
    %7207 = vmatprep.subr.mxu0 0.0
    %7208 = vmatpush2.msra.mxu0 0.0
    %7209 = vmatprep.subr.mxu0 0.0
    %7210 = vmatpush2.msra.mxu0 0.0
    %7211 = vmatprep.subr.mxu0 0.0
    %7212 = vmatpush2.msra.mxu0 0.0
    %7213 = vmatprep.subr.mxu0 0.0
    %7214 = vmatpush2.msra.mxu0 0.0
    %7215 = vmatprep.subr.mxu0 0.0
    %7216 = vmatpush2.msra.mxu0 0.0
    %7217 = vmatprep.subr.mxu0 0.0
    %7218 = vmatpush2.msra.mxu0 0.0
    %7219 = vmatprep.subr.mxu0 0.0
    %7220 = vmatpush2.msra.mxu0 0.0
    %7221 = vmatprep.subr.mxu0 0.0
    %7222 = vmatpush2.msra.mxu0 0.0
    %7223 = vmatprep.subr.mxu0 0.0
    %7224 = vmatpush2.msra.mxu0 0.0
    %7225 = vmatprep.subr.mxu0 0.0
    %7226 = vmatpush2.msra.mxu0 0.0
    %7227 = vmatprep.subr.mxu0 0.0
    %7228 = vmatpush2.msra.mxu0 0.0
    %7229 = vmatprep.subr.mxu0 0.0
    %7230 = vmatpush2.msra.mxu0 0.0
    %7231 = vmatprep.subr.mxu0 0.0
    %7232 = vmatpush2.msra.mxu0 0.0
    %7233 = vmatprep.mubr.f32.mxu0 0.0
    %v7234 = vand.u32 %v2421, 4294901760
    %7235 = vmatmul.mubr.f32.gmra.mxu0 %v7234
    %v7236 = vpop.f32.mrf.mxu0
    %v7237 = vadd.f32 %v7158, %v7236
    %v7238 = vpop.f32.mrf.mxu0
    %7239 = vdwg.mxu0
    %vm7240 = vcmp.ge.f32.partialorder %v7237, 0.0
    %v7241 = vmul.f32 %v7237, 0.1
    %v7242 = vsel %vm7240, %v7237, %v7241
    %7243 = vmatprep.subr.mxu0 0.0
    %7244 = vmatpush1.msra.mxu0 0.0
    %7245 = vmatprep.subr.mxu0 0.0
    %7246 = vmatpush1.msra.mxu0 0.0
    %7247 = vmatprep.subr.mxu0 0.0
    %7248 = vmatpush1.msra.mxu0 0.0
    %7249 = vmatprep.subr.mxu0 0.0
    %7250 = vmatpush1.msra.mxu0 0.0
    %7251 = vmatprep.subr.mxu0 0.0
    %7252 = vmatpush1.msra.mxu0 0.0
    %7253 = vmatprep.subr.mxu0 0.0
    %7254 = vmatpush1.msra.mxu0 0.0
    %7255 = vmatprep.subr.mxu0 0.0
    %7256 = vmatpush1.msra.mxu0 0.0
    %7257 = vmatprep.subr.mxu0 0.0
    %7258 = vmatpush1.msra.mxu0 0.0
    %7259 = vmatprep.subr.mxu0 0.0
    %7260 = vmatpush1.msra.mxu0 0.0
    %7261 = vmatprep.subr.mxu0 0.0
    %7262 = vmatpush1.msra.mxu0 0.0
    %7263 = vmatprep.subr.mxu0 0.0
    %7264 = vmatpush1.msra.mxu0 0.0
    %7265 = vmatprep.subr.mxu0 0.0
    %7266 = vmatpush1.msra.mxu0 0.0
    %7267 = vmatprep.subr.mxu0 0.0
    %7268 = vmatpush1.msra.mxu0 0.0
    %7269 = vmatprep.subr.mxu0 0.0
    %7270 = vmatpush1.msra.mxu0 0.0
    %7271 = vmatprep.subr.mxu0 0.0
    %7272 = vmatpush1.msra.mxu0 0.0
    %7273 = vmatprep.subr.mxu0 0.0
    %v7274 = vand.u32 %v7242, 4294901760
    %7275 = vmatpush1.msra.mxu0 %v7274
    %7276 = vmatprep.subr.mxu0 0.0
    %7277 = vmatpush2.msra.mxu0 0.0
    %7278 = vmatprep.subr.mxu0 0.0
    %7279 = vmatpush2.msra.mxu0 0.0
    %7280 = vmatprep.subr.mxu0 0.0
    %7281 = vmatpush2.msra.mxu0 0.0
    %7282 = vmatprep.subr.mxu0 0.0
    %7283 = vmatpush2.msra.mxu0 0.0
    %7284 = vmatprep.subr.mxu0 0.0
    %7285 = vmatpush2.msra.mxu0 0.0
    %7286 = vmatprep.subr.mxu0 0.0
    %7287 = vmatpush2.msra.mxu0 0.0
    %7288 = vmatprep.subr.mxu0 0.0
    %7289 = vmatpush2.msra.mxu0 0.0
    %7290 = vmatprep.subr.mxu0 0.0
    %7291 = vmatpush2.msra.mxu0 0.0
    %7292 = vmatprep.subr.mxu0 0.0
    %7293 = vmatpush2.msra.mxu0 0.0
    %7294 = vmatprep.subr.mxu0 0.0
    %7295 = vmatpush2.msra.mxu0 0.0
    %7296 = vmatprep.subr.mxu0 0.0
    %7297 = vmatpush2.msra.mxu0 0.0
    %7298 = vmatprep.subr.mxu0 0.0
    %7299 = vmatpush2.msra.mxu0 0.0
    %7300 = vmatprep.subr.mxu0 0.0
    %7301 = vmatpush2.msra.mxu0 0.0
    %7302 = vmatprep.subr.mxu0 0.0
    %7303 = vmatpush2.msra.mxu0 0.0
    %7304 = vmatprep.subr.mxu0 0.0
    %7305 = vmatpush2.msra.mxu0 0.0
    %7306 = vmatprep.subr.mxu0 0.0
    %7307 = vmatpush2.msra.mxu0 0.0
    %7308 = vmatprep.mubr.f32.mxu0 0.0
    %v7309 = vand.u32 %v2979, 4294901760
    %v7310 = vsub.f32 %v2979, %v7309
    %v7311 = vand.u32 %v7310, 4294901760
    %v7312 = vsub.f32 %v7310, %v7311
    %v7313 = vand.u32 %v7312, 4294901760
    %7314 = vmatmul.mubr.f32.gmra.mxu0 %v7313
    %v7315 = vpop.f32.mrf.mxu0
    %v7316 = vadd.f32 0.0, %v7315
    %v7317 = vpop.f32.mrf.mxu0
    %7318 = vmatprep.mubr.f32.mxu0 0.0
    %v7319 = vand.u32 %v2981, 4294901760
    %v7320 = vsub.f32 %v2981, %v7319
    %v7321 = vand.u32 %v7320, 4294901760
    %v7322 = vsub.f32 %v7320, %v7321
    %v7323 = vand.u32 %v7322, 4294901760
    %7324 = vmatmul.mubr.f32.gmra.mxu0 %v7323
    %v7325 = vpop.f32.mrf.mxu0
    %v7326 = vadd.f32 0.0, %v7325
    %v7327 = vpop.f32.mrf.mxu0
    %7328 = vmatprep.mubr.f32.mxu0 0.0
    %v7329 = vand.u32 %v2983, 4294901760
    %v7330 = vsub.f32 %v2983, %v7329
    %v7331 = vand.u32 %v7330, 4294901760
    %v7332 = vsub.f32 %v7330, %v7331
    %v7333 = vand.u32 %v7332, 4294901760
    %7334 = vmatmul.mubr.f32.gmra.mxu0 %v7333
    %v7335 = vpop.f32.mrf.mxu0
    %v7336 = vadd.f32 0.0, %v7335
    %v7337 = vpop.f32.mrf.mxu0
    %7338 = vmatprep.mubr.f32.mxu0 0.0
    %v7339 = vand.u32 %v2985, 4294901760
    %v7340 = vsub.f32 %v2985, %v7339
    %v7341 = vand.u32 %v7340, 4294901760
    %v7342 = vsub.f32 %v7340, %v7341
    %v7343 = vand.u32 %v7342, 4294901760
    %7344 = vmatmul.mubr.f32.gmra.mxu0 %v7343
    %v7345 = vpop.f32.mrf.mxu0
    %v7346 = vadd.f32 0.0, %v7345
    %v7347 = vpop.f32.mrf.mxu0
    %7348 = vmatprep.mubr.f32.mxu0 0.0
    %v7349 = vand.u32 %v2987, 4294901760
    %v7350 = vsub.f32 %v2987, %v7349
    %v7351 = vand.u32 %v7350, 4294901760
    %v7352 = vsub.f32 %v7350, %v7351
    %v7353 = vand.u32 %v7352, 4294901760
    %7354 = vmatmul.mubr.f32.gmra.mxu0 %v7353
    %v7355 = vpop.f32.mrf.mxu0
    %v7356 = vadd.f32 0.0, %v7355
    %v7357 = vpop.f32.mrf.mxu0
    %7358 = vmatprep.mubr.f32.mxu0 0.0
    %v7359 = vand.u32 %v2989, 4294901760
    %v7360 = vsub.f32 %v2989, %v7359
    %v7361 = vand.u32 %v7360, 4294901760
    %v7362 = vsub.f32 %v7360, %v7361
    %v7363 = vand.u32 %v7362, 4294901760
    %7364 = vmatmul.mubr.f32.gmra.mxu0 %v7363
    %v7365 = vpop.f32.mrf.mxu0
    %v7366 = vadd.f32 0.0, %v7365
    %v7367 = vpop.f32.mrf.mxu0
    %7368 = vmatprep.mubr.f32.mxu0 0.0
    %v7369 = vand.u32 %v2991, 4294901760
    %v7370 = vsub.f32 %v2991, %v7369
    %v7371 = vand.u32 %v7370, 4294901760
    %v7372 = vsub.f32 %v7370, %v7371
    %v7373 = vand.u32 %v7372, 4294901760
    %7374 = vmatmul.mubr.f32.gmra.mxu0 %v7373
    %v7375 = vpop.f32.mrf.mxu0
    %v7376 = vadd.f32 0.0, %v7375
    %v7377 = vpop.f32.mrf.mxu0
    %7378 = vmatprep.mubr.f32.mxu0 0.0
    %v7379 = vand.u32 %v2993, 4294901760
    %v7380 = vsub.f32 %v2993, %v7379
    %v7381 = vand.u32 %v7380, 4294901760
    %v7382 = vsub.f32 %v7380, %v7381
    %v7383 = vand.u32 %v7382, 4294901760
    %7384 = vmatmul.mubr.f32.gmra.mxu0 %v7383
    %v7385 = vpop.f32.mrf.mxu0
    %v7386 = vadd.f32 0.0, %v7385
    %v7387 = vpop.f32.mrf.mxu0
    %7388 = vdwg.mxu0
    %7389 = vmatprep.subr.mxu0 0.0
    %7390 = vmatpush1.msra.mxu0 0.0
    %7391 = vmatprep.subr.mxu0 0.0
    %7392 = vmatpush1.msra.mxu0 0.0
    %7393 = vmatprep.subr.mxu0 0.0
    %7394 = vmatpush1.msra.mxu0 0.0
    %7395 = vmatprep.subr.mxu0 0.0
    %7396 = vmatpush1.msra.mxu0 0.0
    %7397 = vmatprep.subr.mxu0 0.0
    %7398 = vmatpush1.msra.mxu0 0.0
    %7399 = vmatprep.subr.mxu0 0.0
    %7400 = vmatpush1.msra.mxu0 0.0
    %7401 = vmatprep.subr.mxu0 0.0
    %7402 = vmatpush1.msra.mxu0 0.0
    %7403 = vmatprep.subr.mxu0 0.0
    %7404 = vmatpush1.msra.mxu0 0.0
    %7405 = vmatprep.subr.mxu0 0.0
    %7406 = vmatpush1.msra.mxu0 0.0
    %7407 = vmatprep.subr.mxu0 0.0
    %7408 = vmatpush1.msra.mxu0 0.0
    %7409 = vmatprep.subr.mxu0 0.0
    %7410 = vmatpush1.msra.mxu0 0.0
    %7411 = vmatprep.subr.mxu0 0.0
    %7412 = vmatpush1.msra.mxu0 0.0
    %7413 = vmatprep.subr.mxu0 0.0
    %7414 = vmatpush1.msra.mxu0 0.0
    %7415 = vmatprep.subr.mxu0 0.0
    %7416 = vmatpush1.msra.mxu0 0.0
    %7417 = vmatprep.subr.mxu0 0.0
    %7418 = vmatpush1.msra.mxu0 0.0
    %7419 = vmatprep.subr.mxu0 0.0
    %v7420 = vand.u32 %v7242, 4294901760
    %v7421 = vsub.f32 %v7242, %v7420
    %v7422 = vand.u32 %v7421, 4294901760
    %v7423 = vsub.f32 %v7421, %v7422
    %v7424 = vand.u32 %v7423, 4294901760
    %7425 = vmatpush1.msra.mxu0 %v7424
    %7426 = vmatprep.subr.mxu0 0.0
    %7427 = vmatpush2.msra.mxu0 0.0
    %7428 = vmatprep.subr.mxu0 0.0
    %7429 = vmatpush2.msra.mxu0 0.0
    %7430 = vmatprep.subr.mxu0 0.0
    %7431 = vmatpush2.msra.mxu0 0.0
    %7432 = vmatprep.subr.mxu0 0.0
    %7433 = vmatpush2.msra.mxu0 0.0
    %7434 = vmatprep.subr.mxu0 0.0
    %7435 = vmatpush2.msra.mxu0 0.0
    %7436 = vmatprep.subr.mxu0 0.0
    %7437 = vmatpush2.msra.mxu0 0.0
    %7438 = vmatprep.subr.mxu0 0.0
    %7439 = vmatpush2.msra.mxu0 0.0
    %7440 = vmatprep.subr.mxu0 0.0
    %7441 = vmatpush2.msra.mxu0 0.0
    %7442 = vmatprep.subr.mxu0 0.0
    %7443 = vmatpush2.msra.mxu0 0.0
    %7444 = vmatprep.subr.mxu0 0.0
    %7445 = vmatpush2.msra.mxu0 0.0
    %7446 = vmatprep.subr.mxu0 0.0
    %7447 = vmatpush2.msra.mxu0 0.0
    %7448 = vmatprep.subr.mxu0 0.0
    %7449 = vmatpush2.msra.mxu0 0.0
    %7450 = vmatprep.subr.mxu0 0.0
    %7451 = vmatpush2.msra.mxu0 0.0
    %7452 = vmatprep.subr.mxu0 0.0
    %7453 = vmatpush2.msra.mxu0 0.0
    %7454 = vmatprep.subr.mxu0 0.0
    %7455 = vmatpush2.msra.mxu0 0.0
    %7456 = vmatprep.subr.mxu0 0.0
    %7457 = vmatpush2.msra.mxu0 0.0
    %7458 = vmatprep.mubr.f32.mxu0 0.0
    %v7459 = vand.u32 %v2979, 4294901760
    %7460 = vmatmul.mubr.f32.gmra.mxu0 %v7459
    %v7461 = vpop.f32.mrf.mxu0
    %v7462 = vadd.f32 %v7316, %v7461
    %v7463 = vpop.f32.mrf.mxu0
    %7464 = vmatprep.mubr.f32.mxu0 0.0
    %v7465 = vand.u32 %v2981, 4294901760
    %7466 = vmatmul.mubr.f32.gmra.mxu0 %v7465
    %v7467 = vpop.f32.mrf.mxu0
    %v7468 = vadd.f32 %v7326, %v7467
    %v7469 = vpop.f32.mrf.mxu0
    %7470 = vmatprep.mubr.f32.mxu0 0.0
    %v7471 = vand.u32 %v2983, 4294901760
    %7472 = vmatmul.mubr.f32.gmra.mxu0 %v7471
    %v7473 = vpop.f32.mrf.mxu0
    %v7474 = vadd.f32 %v7336, %v7473
    %v7475 = vpop.f32.mrf.mxu0
    %7476 = vmatprep.mubr.f32.mxu0 0.0
    %v7477 = vand.u32 %v2985, 4294901760
    %7478 = vmatmul.mubr.f32.gmra.mxu0 %v7477
    %v7479 = vpop.f32.mrf.mxu0
    %v7480 = vadd.f32 %v7346, %v7479
    %v7481 = vpop.f32.mrf.mxu0
    %7482 = vmatprep.mubr.f32.mxu0 0.0
    %v7483 = vand.u32 %v2987, 4294901760
    %7484 = vmatmul.mubr.f32.gmra.mxu0 %v7483
    %v7485 = vpop.f32.mrf.mxu0
    %v7486 = vadd.f32 %v7356, %v7485
    %v7487 = vpop.f32.mrf.mxu0
    %7488 = vmatprep.mubr.f32.mxu0 0.0
    %v7489 = vand.u32 %v2989, 4294901760
    %7490 = vmatmul.mubr.f32.gmra.mxu0 %v7489
    %v7491 = vpop.f32.mrf.mxu0
    %v7492 = vadd.f32 %v7366, %v7491
    %v7493 = vpop.f32.mrf.mxu0
    %7494 = vmatprep.mubr.f32.mxu0 0.0
    %v7495 = vand.u32 %v2991, 4294901760
    %7496 = vmatmul.mubr.f32.gmra.mxu0 %v7495
    %v7497 = vpop.f32.mrf.mxu0
    %v7498 = vadd.f32 %v7376, %v7497
    %v7499 = vpop.f32.mrf.mxu0
    %7500 = vmatprep.mubr.f32.mxu0 0.0
    %v7501 = vand.u32 %v2993, 4294901760
    %7502 = vmatmul.mubr.f32.gmra.mxu0 %v7501
    %v7503 = vpop.f32.mrf.mxu0
    %v7504 = vadd.f32 %v7386, %v7503
    %v7505 = vpop.f32.mrf.mxu0
    %7506 = vdwg.mxu0
    %7507 = vmatprep.subr.mxu0 0.0
    %7508 = vmatpush1.msra.mxu0 0.0
    %7509 = vmatprep.subr.mxu0 0.0
    %7510 = vmatpush1.msra.mxu0 0.0
    %7511 = vmatprep.subr.mxu0 0.0
    %7512 = vmatpush1.msra.mxu0 0.0
    %7513 = vmatprep.subr.mxu0 0.0
    %7514 = vmatpush1.msra.mxu0 0.0
    %7515 = vmatprep.subr.mxu0 0.0
    %7516 = vmatpush1.msra.mxu0 0.0
    %7517 = vmatprep.subr.mxu0 0.0
    %7518 = vmatpush1.msra.mxu0 0.0
    %7519 = vmatprep.subr.mxu0 0.0
    %7520 = vmatpush1.msra.mxu0 0.0
    %7521 = vmatprep.subr.mxu0 0.0
    %7522 = vmatpush1.msra.mxu0 0.0
    %7523 = vmatprep.subr.mxu0 0.0
    %7524 = vmatpush1.msra.mxu0 0.0
    %7525 = vmatprep.subr.mxu0 0.0
    %7526 = vmatpush1.msra.mxu0 0.0
    %7527 = vmatprep.subr.mxu0 0.0
    %7528 = vmatpush1.msra.mxu0 0.0
    %7529 = vmatprep.subr.mxu0 0.0
    %7530 = vmatpush1.msra.mxu0 0.0
    %7531 = vmatprep.subr.mxu0 0.0
    %7532 = vmatpush1.msra.mxu0 0.0
    %7533 = vmatprep.subr.mxu0 0.0
    %7534 = vmatpush1.msra.mxu0 0.0
    %7535 = vmatprep.subr.mxu0 0.0
    %7536 = vmatpush1.msra.mxu0 0.0
    %7537 = vmatprep.subr.mxu0 0.0
    %v7538 = vand.u32 %v7242, 4294901760
    %v7539 = vsub.f32 %v7242, %v7538
    %7540 = vmatpush1.msra.mxu0 %v7539
    %7541 = vmatprep.subr.mxu0 0.0
    %7542 = vmatpush2.msra.mxu0 0.0
    %7543 = vmatprep.subr.mxu0 0.0
    %7544 = vmatpush2.msra.mxu0 0.0
    %7545 = vmatprep.subr.mxu0 0.0
    %7546 = vmatpush2.msra.mxu0 0.0
    %7547 = vmatprep.subr.mxu0 0.0
    %7548 = vmatpush2.msra.mxu0 0.0
    %7549 = vmatprep.subr.mxu0 0.0
    %7550 = vmatpush2.msra.mxu0 0.0
    %7551 = vmatprep.subr.mxu0 0.0
    %7552 = vmatpush2.msra.mxu0 0.0
    %7553 = vmatprep.subr.mxu0 0.0
    %7554 = vmatpush2.msra.mxu0 0.0
    %7555 = vmatprep.subr.mxu0 0.0
    %7556 = vmatpush2.msra.mxu0 0.0
    %7557 = vmatprep.subr.mxu0 0.0
    %7558 = vmatpush2.msra.mxu0 0.0
    %7559 = vmatprep.subr.mxu0 0.0
    %7560 = vmatpush2.msra.mxu0 0.0
    %7561 = vmatprep.subr.mxu0 0.0
    %7562 = vmatpush2.msra.mxu0 0.0
    %7563 = vmatprep.subr.mxu0 0.0
    %7564 = vmatpush2.msra.mxu0 0.0
    %7565 = vmatprep.subr.mxu0 0.0
    %7566 = vmatpush2.msra.mxu0 0.0
    %7567 = vmatprep.subr.mxu0 0.0
    %7568 = vmatpush2.msra.mxu0 0.0
    %7569 = vmatprep.subr.mxu0 0.0
    %7570 = vmatpush2.msra.mxu0 0.0
    %7571 = vmatprep.subr.mxu0 0.0
    %7572 = vmatpush2.msra.mxu0 0.0
    %7573 = vmatprep.mubr.f32.mxu0 0.0
    %v7574 = vand.u32 %v2979, 4294901760
    %v7575 = vsub.f32 %v2979, %v7574
    %7576 = vmatmul.mubr.f32.gmra.mxu0 %v7575
    %v7577 = vpop.f32.mrf.mxu0
    %v7578 = vadd.f32 %v7462, %v7577
    %v7579 = vpop.f32.mrf.mxu0
    %7580 = vmatprep.mubr.f32.mxu0 0.0
    %v7581 = vand.u32 %v2981, 4294901760
    %v7582 = vsub.f32 %v2981, %v7581
    %7583 = vmatmul.mubr.f32.gmra.mxu0 %v7582
    %v7584 = vpop.f32.mrf.mxu0
    %v7585 = vadd.f32 %v7468, %v7584
    %v7586 = vpop.f32.mrf.mxu0
    %7587 = vmatprep.mubr.f32.mxu0 0.0
    %v7588 = vand.u32 %v2983, 4294901760
    %v7589 = vsub.f32 %v2983, %v7588
    %7590 = vmatmul.mubr.f32.gmra.mxu0 %v7589
    %v7591 = vpop.f32.mrf.mxu0
    %v7592 = vadd.f32 %v7474, %v7591
    %v7593 = vpop.f32.mrf.mxu0
    %7594 = vmatprep.mubr.f32.mxu0 0.0
    %v7595 = vand.u32 %v2985, 4294901760
    %v7596 = vsub.f32 %v2985, %v7595
    %7597 = vmatmul.mubr.f32.gmra.mxu0 %v7596
    %v7598 = vpop.f32.mrf.mxu0
    %v7599 = vadd.f32 %v7480, %v7598
    %v7600 = vpop.f32.mrf.mxu0
    %7601 = vmatprep.mubr.f32.mxu0 0.0
    %v7602 = vand.u32 %v2987, 4294901760
    %v7603 = vsub.f32 %v2987, %v7602
    %7604 = vmatmul.mubr.f32.gmra.mxu0 %v7603
    %v7605 = vpop.f32.mrf.mxu0
    %v7606 = vadd.f32 %v7486, %v7605
    %v7607 = vpop.f32.mrf.mxu0
    %7608 = vmatprep.mubr.f32.mxu0 0.0
    %v7609 = vand.u32 %v2989, 4294901760
    %v7610 = vsub.f32 %v2989, %v7609
    %7611 = vmatmul.mubr.f32.gmra.mxu0 %v7610
    %v7612 = vpop.f32.mrf.mxu0
    %v7613 = vadd.f32 %v7492, %v7612
    %v7614 = vpop.f32.mrf.mxu0
    %7615 = vmatprep.mubr.f32.mxu0 0.0
    %v7616 = vand.u32 %v2991, 4294901760
    %v7617 = vsub.f32 %v2991, %v7616
    %7618 = vmatmul.mubr.f32.gmra.mxu0 %v7617
    %v7619 = vpop.f32.mrf.mxu0
    %v7620 = vadd.f32 %v7498, %v7619
    %v7621 = vpop.f32.mrf.mxu0
    %7622 = vmatprep.mubr.f32.mxu0 0.0
    %v7623 = vand.u32 %v2993, 4294901760
    %v7624 = vsub.f32 %v2993, %v7623
    %7625 = vmatmul.mubr.f32.gmra.mxu0 %v7624
    %v7626 = vpop.f32.mrf.mxu0
    %v7627 = vadd.f32 %v7504, %v7626
    %v7628 = vpop.f32.mrf.mxu0
    %7629 = vdwg.mxu0
    %7630 = vmatprep.subr.mxu0 0.0
    %7631 = vmatpush1.msra.mxu0 0.0
    %7632 = vmatprep.subr.mxu0 0.0
    %7633 = vmatpush1.msra.mxu0 0.0
    %7634 = vmatprep.subr.mxu0 0.0
    %7635 = vmatpush1.msra.mxu0 0.0
    %7636 = vmatprep.subr.mxu0 0.0
    %7637 = vmatpush1.msra.mxu0 0.0
    %7638 = vmatprep.subr.mxu0 0.0
    %7639 = vmatpush1.msra.mxu0 0.0
    %7640 = vmatprep.subr.mxu0 0.0
    %7641 = vmatpush1.msra.mxu0 0.0
    %7642 = vmatprep.subr.mxu0 0.0
    %7643 = vmatpush1.msra.mxu0 0.0
    %7644 = vmatprep.subr.mxu0 0.0
    %7645 = vmatpush1.msra.mxu0 0.0
    %7646 = vmatprep.subr.mxu0 0.0
    %7647 = vmatpush1.msra.mxu0 0.0
    %7648 = vmatprep.subr.mxu0 0.0
    %7649 = vmatpush1.msra.mxu0 0.0
    %7650 = vmatprep.subr.mxu0 0.0
    %7651 = vmatpush1.msra.mxu0 0.0
    %7652 = vmatprep.subr.mxu0 0.0
    %7653 = vmatpush1.msra.mxu0 0.0
    %7654 = vmatprep.subr.mxu0 0.0
    %7655 = vmatpush1.msra.mxu0 0.0
    %7656 = vmatprep.subr.mxu0 0.0
    %7657 = vmatpush1.msra.mxu0 0.0
    %7658 = vmatprep.subr.mxu0 0.0
    %7659 = vmatpush1.msra.mxu0 0.0
    %7660 = vmatprep.subr.mxu0 0.0
    %v7661 = vand.u32 %v7242, 4294901760
    %7662 = vmatpush1.msra.mxu0 %v7661
    %7663 = vmatprep.subr.mxu0 0.0
    %7664 = vmatpush2.msra.mxu0 0.0
    %7665 = vmatprep.subr.mxu0 0.0
    %7666 = vmatpush2.msra.mxu0 0.0
    %7667 = vmatprep.subr.mxu0 0.0
    %7668 = vmatpush2.msra.mxu0 0.0
    %7669 = vmatprep.subr.mxu0 0.0
    %7670 = vmatpush2.msra.mxu0 0.0
    %7671 = vmatprep.subr.mxu0 0.0
    %7672 = vmatpush2.msra.mxu0 0.0
    %7673 = vmatprep.subr.mxu0 0.0
    %7674 = vmatpush2.msra.mxu0 0.0
    %7675 = vmatprep.subr.mxu0 0.0
    %7676 = vmatpush2.msra.mxu0 0.0
    %7677 = vmatprep.subr.mxu0 0.0
    %7678 = vmatpush2.msra.mxu0 0.0
    %7679 = vmatprep.subr.mxu0 0.0
    %7680 = vmatpush2.msra.mxu0 0.0
    %7681 = vmatprep.subr.mxu0 0.0
    %7682 = vmatpush2.msra.mxu0 0.0
    %7683 = vmatprep.subr.mxu0 0.0
    %7684 = vmatpush2.msra.mxu0 0.0
    %7685 = vmatprep.subr.mxu0 0.0
    %7686 = vmatpush2.msra.mxu0 0.0
    %7687 = vmatprep.subr.mxu0 0.0
    %7688 = vmatpush2.msra.mxu0 0.0
    %7689 = vmatprep.subr.mxu0 0.0
    %7690 = vmatpush2.msra.mxu0 0.0
    %7691 = vmatprep.subr.mxu0 0.0
    %7692 = vmatpush2.msra.mxu0 0.0
    %7693 = vmatprep.subr.mxu0 0.0
    %7694 = vmatpush2.msra.mxu0 0.0
    %7695 = vmatprep.mubr.f32.mxu0 0.0
    %v7696 = vand.u32 %v2979, 4294901760
    %v7697 = vsub.f32 %v2979, %v7696
    %v7698 = vand.u32 %v7697, 4294901760
    %7699 = vmatmul.mubr.f32.gmra.mxu0 %v7698
    %v7700 = vpop.f32.mrf.mxu0
    %v7701 = vadd.f32 %v7578, %v7700
    %v7702 = vpop.f32.mrf.mxu0
    %7703 = vmatprep.mubr.f32.mxu0 0.0
    %v7704 = vand.u32 %v2981, 4294901760
    %v7705 = vsub.f32 %v2981, %v7704
    %v7706 = vand.u32 %v7705, 4294901760
    %7707 = vmatmul.mubr.f32.gmra.mxu0 %v7706
    %v7708 = vpop.f32.mrf.mxu0
    %v7709 = vadd.f32 %v7585, %v7708
    %v7710 = vpop.f32.mrf.mxu0
    %7711 = vmatprep.mubr.f32.mxu0 0.0
    %v7712 = vand.u32 %v2983, 4294901760
    %v7713 = vsub.f32 %v2983, %v7712
    %v7714 = vand.u32 %v7713, 4294901760
    %7715 = vmatmul.mubr.f32.gmra.mxu0 %v7714
    %v7716 = vpop.f32.mrf.mxu0
    %v7717 = vadd.f32 %v7592, %v7716
    %v7718 = vpop.f32.mrf.mxu0
    %7719 = vmatprep.mubr.f32.mxu0 0.0
    %v7720 = vand.u32 %v2985, 4294901760
    %v7721 = vsub.f32 %v2985, %v7720
    %v7722 = vand.u32 %v7721, 4294901760
    %7723 = vmatmul.mubr.f32.gmra.mxu0 %v7722
    %v7724 = vpop.f32.mrf.mxu0
    %v7725 = vadd.f32 %v7599, %v7724
    %v7726 = vpop.f32.mrf.mxu0
    %7727 = vmatprep.mubr.f32.mxu0 0.0
    %v7728 = vand.u32 %v2987, 4294901760
    %v7729 = vsub.f32 %v2987, %v7728
    %v7730 = vand.u32 %v7729, 4294901760
    %7731 = vmatmul.mubr.f32.gmra.mxu0 %v7730
    %v7732 = vpop.f32.mrf.mxu0
    %v7733 = vadd.f32 %v7606, %v7732
    %v7734 = vpop.f32.mrf.mxu0
    %7735 = vmatprep.mubr.f32.mxu0 0.0
    %v7736 = vand.u32 %v2989, 4294901760
    %v7737 = vsub.f32 %v2989, %v7736
    %v7738 = vand.u32 %v7737, 4294901760
    %7739 = vmatmul.mubr.f32.gmra.mxu0 %v7738
    %v7740 = vpop.f32.mrf.mxu0
    %v7741 = vadd.f32 %v7613, %v7740
    %v7742 = vpop.f32.mrf.mxu0
    %7743 = vmatprep.mubr.f32.mxu0 0.0
    %v7744 = vand.u32 %v2991, 4294901760
    %v7745 = vsub.f32 %v2991, %v7744
    %v7746 = vand.u32 %v7745, 4294901760
    %7747 = vmatmul.mubr.f32.gmra.mxu0 %v7746
    %v7748 = vpop.f32.mrf.mxu0
    %v7749 = vadd.f32 %v7620, %v7748
    %v7750 = vpop.f32.mrf.mxu0
    %7751 = vmatprep.mubr.f32.mxu0 0.0
    %v7752 = vand.u32 %v2993, 4294901760
    %v7753 = vsub.f32 %v2993, %v7752
    %v7754 = vand.u32 %v7753, 4294901760
    %7755 = vmatmul.mubr.f32.gmra.mxu0 %v7754
    %v7756 = vpop.f32.mrf.mxu0
    %v7757 = vadd.f32 %v7627, %v7756
    %v7758 = vpop.f32.mrf.mxu0
    %7759 = vdwg.mxu0
    %7760 = vmatprep.subr.mxu0 0.0
    %7761 = vmatpush1.msra.mxu0 0.0
    %7762 = vmatprep.subr.mxu0 0.0
    %7763 = vmatpush1.msra.mxu0 0.0
    %7764 = vmatprep.subr.mxu0 0.0
    %7765 = vmatpush1.msra.mxu0 0.0
    %7766 = vmatprep.subr.mxu0 0.0
    %7767 = vmatpush1.msra.mxu0 0.0
    %7768 = vmatprep.subr.mxu0 0.0
    %7769 = vmatpush1.msra.mxu0 0.0
    %7770 = vmatprep.subr.mxu0 0.0
    %7771 = vmatpush1.msra.mxu0 0.0
    %7772 = vmatprep.subr.mxu0 0.0
    %7773 = vmatpush1.msra.mxu0 0.0
    %7774 = vmatprep.subr.mxu0 0.0
    %7775 = vmatpush1.msra.mxu0 0.0
    %7776 = vmatprep.subr.mxu0 0.0
    %7777 = vmatpush1.msra.mxu0 0.0
    %7778 = vmatprep.subr.mxu0 0.0
    %7779 = vmatpush1.msra.mxu0 0.0
    %7780 = vmatprep.subr.mxu0 0.0
    %7781 = vmatpush1.msra.mxu0 0.0
    %7782 = vmatprep.subr.mxu0 0.0
    %7783 = vmatpush1.msra.mxu0 0.0
    %7784 = vmatprep.subr.mxu0 0.0
    %7785 = vmatpush1.msra.mxu0 0.0
    %7786 = vmatprep.subr.mxu0 0.0
    %7787 = vmatpush1.msra.mxu0 0.0
    %7788 = vmatprep.subr.mxu0 0.0
    %7789 = vmatpush1.msra.mxu0 0.0
    %7790 = vmatprep.subr.mxu0 0.0
    %v7791 = vand.u32 %v7242, 4294901760
    %v7792 = vsub.f32 %v7242, %v7791
    %v7793 = vand.u32 %v7792, 4294901760
    %7794 = vmatpush1.msra.mxu0 %v7793
    %7795 = vmatprep.subr.mxu0 0.0
    %7796 = vmatpush2.msra.mxu0 0.0
    %7797 = vmatprep.subr.mxu0 0.0
    %7798 = vmatpush2.msra.mxu0 0.0
    %7799 = vmatprep.subr.mxu0 0.0
    %7800 = vmatpush2.msra.mxu0 0.0
    %7801 = vmatprep.subr.mxu0 0.0
    %7802 = vmatpush2.msra.mxu0 0.0
    %7803 = vmatprep.subr.mxu0 0.0
    %7804 = vmatpush2.msra.mxu0 0.0
    %7805 = vmatprep.subr.mxu0 0.0
    %7806 = vmatpush2.msra.mxu0 0.0
    %7807 = vmatprep.subr.mxu0 0.0
    %7808 = vmatpush2.msra.mxu0 0.0
    %7809 = vmatprep.subr.mxu0 0.0
    %7810 = vmatpush2.msra.mxu0 0.0
    %7811 = vmatprep.subr.mxu0 0.0
    %7812 = vmatpush2.msra.mxu0 0.0
    %7813 = vmatprep.subr.mxu0 0.0
    %7814 = vmatpush2.msra.mxu0 0.0
    %7815 = vmatprep.subr.mxu0 0.0
    %7816 = vmatpush2.msra.mxu0 0.0
    %7817 = vmatprep.subr.mxu0 0.0
    %7818 = vmatpush2.msra.mxu0 0.0
    %7819 = vmatprep.subr.mxu0 0.0
    %7820 = vmatpush2.msra.mxu0 0.0
    %7821 = vmatprep.subr.mxu0 0.0
    %7822 = vmatpush2.msra.mxu0 0.0
    %7823 = vmatprep.subr.mxu0 0.0
    %7824 = vmatpush2.msra.mxu0 0.0
    %7825 = vmatprep.subr.mxu0 0.0
    %7826 = vmatpush2.msra.mxu0 0.0
    %7827 = vmatprep.mubr.f32.mxu0 0.0
    %v7828 = vand.u32 %v2979, 4294901760
    %7829 = vmatmul.mubr.f32.gmra.mxu0 %v7828
    %v7830 = vpop.f32.mrf.mxu0
    %v7831 = vadd.f32 %v7701, %v7830
    %v7832 = vpop.f32.mrf.mxu0
    %7833 = vmatprep.mubr.f32.mxu0 0.0
    %v7834 = vand.u32 %v2981, 4294901760
    %7835 = vmatmul.mubr.f32.gmra.mxu0 %v7834
    %v7836 = vpop.f32.mrf.mxu0
    %v7837 = vadd.f32 %v7709, %v7836
    %v7838 = vpop.f32.mrf.mxu0
    %7839 = vmatprep.mubr.f32.mxu0 0.0
    %v7840 = vand.u32 %v2983, 4294901760
    %7841 = vmatmul.mubr.f32.gmra.mxu0 %v7840
    %v7842 = vpop.f32.mrf.mxu0
    %v7843 = vadd.f32 %v7717, %v7842
    %v7844 = vpop.f32.mrf.mxu0
    %7845 = vmatprep.mubr.f32.mxu0 0.0
    %v7846 = vand.u32 %v2985, 4294901760
    %7847 = vmatmul.mubr.f32.gmra.mxu0 %v7846
    %v7848 = vpop.f32.mrf.mxu0
    %v7849 = vadd.f32 %v7725, %v7848
    %v7850 = vpop.f32.mrf.mxu0
    %7851 = vmatprep.mubr.f32.mxu0 0.0
    %v7852 = vand.u32 %v2987, 4294901760
    %7853 = vmatmul.mubr.f32.gmra.mxu0 %v7852
    %v7854 = vpop.f32.mrf.mxu0
    %v7855 = vadd.f32 %v7733, %v7854
    %v7856 = vpop.f32.mrf.mxu0
    %7857 = vmatprep.mubr.f32.mxu0 0.0
    %v7858 = vand.u32 %v2989, 4294901760
    %7859 = vmatmul.mubr.f32.gmra.mxu0 %v7858
    %v7860 = vpop.f32.mrf.mxu0
    %v7861 = vadd.f32 %v7741, %v7860
    %v7862 = vpop.f32.mrf.mxu0
    %7863 = vmatprep.mubr.f32.mxu0 0.0
    %v7864 = vand.u32 %v2991, 4294901760
    %7865 = vmatmul.mubr.f32.gmra.mxu0 %v7864
    %v7866 = vpop.f32.mrf.mxu0
    %v7867 = vadd.f32 %v7749, %v7866
    %v7868 = vpop.f32.mrf.mxu0
    %7869 = vmatprep.mubr.f32.mxu0 0.0
    %v7870 = vand.u32 %v2993, 4294901760
    %7871 = vmatmul.mubr.f32.gmra.mxu0 %v7870
    %v7872 = vpop.f32.mrf.mxu0
    %v7873 = vadd.f32 %v7757, %v7872
    %v7874 = vpop.f32.mrf.mxu0
    %7875 = vdwg.mxu0
    %7876 = vmatprep.subr.mxu0 0.0
    %7877 = vmatpush1.msra.mxu0 0.0
    %7878 = vmatprep.subr.mxu0 0.0
    %7879 = vmatpush1.msra.mxu0 0.0
    %7880 = vmatprep.subr.mxu0 0.0
    %7881 = vmatpush1.msra.mxu0 0.0
    %7882 = vmatprep.subr.mxu0 0.0
    %7883 = vmatpush1.msra.mxu0 0.0
    %7884 = vmatprep.subr.mxu0 0.0
    %7885 = vmatpush1.msra.mxu0 0.0
    %7886 = vmatprep.subr.mxu0 0.0
    %7887 = vmatpush1.msra.mxu0 0.0
    %7888 = vmatprep.subr.mxu0 0.0
    %7889 = vmatpush1.msra.mxu0 0.0
    %7890 = vmatprep.subr.mxu0 0.0
    %7891 = vmatpush1.msra.mxu0 0.0
    %7892 = vmatprep.subr.mxu0 0.0
    %7893 = vmatpush1.msra.mxu0 0.0
    %7894 = vmatprep.subr.mxu0 0.0
    %7895 = vmatpush1.msra.mxu0 0.0
    %7896 = vmatprep.subr.mxu0 0.0
    %7897 = vmatpush1.msra.mxu0 0.0
    %7898 = vmatprep.subr.mxu0 0.0
    %7899 = vmatpush1.msra.mxu0 0.0
    %7900 = vmatprep.subr.mxu0 0.0
    %7901 = vmatpush1.msra.mxu0 0.0
    %7902 = vmatprep.subr.mxu0 0.0
    %7903 = vmatpush1.msra.mxu0 0.0
    %7904 = vmatprep.subr.mxu0 0.0
    %7905 = vmatpush1.msra.mxu0 0.0
    %7906 = vmatprep.subr.mxu0 0.0
    %v7907 = vand.u32 %v7242, 4294901760
    %7908 = vmatpush1.msra.mxu0 %v7907
    %7909 = vmatprep.subr.mxu0 0.0
    %7910 = vmatpush2.msra.mxu0 0.0
    %7911 = vmatprep.subr.mxu0 0.0
    %7912 = vmatpush2.msra.mxu0 0.0
    %7913 = vmatprep.subr.mxu0 0.0
    %7914 = vmatpush2.msra.mxu0 0.0
    %7915 = vmatprep.subr.mxu0 0.0
    %7916 = vmatpush2.msra.mxu0 0.0
    %7917 = vmatprep.subr.mxu0 0.0
    %7918 = vmatpush2.msra.mxu0 0.0
    %7919 = vmatprep.subr.mxu0 0.0
    %7920 = vmatpush2.msra.mxu0 0.0
    %7921 = vmatprep.subr.mxu0 0.0
    %7922 = vmatpush2.msra.mxu0 0.0
    %7923 = vmatprep.subr.mxu0 0.0
    %7924 = vmatpush2.msra.mxu0 0.0
    %7925 = vmatprep.subr.mxu0 0.0
    %7926 = vmatpush2.msra.mxu0 0.0
    %7927 = vmatprep.subr.mxu0 0.0
    %7928 = vmatpush2.msra.mxu0 0.0
    %7929 = vmatprep.subr.mxu0 0.0
    %7930 = vmatpush2.msra.mxu0 0.0
    %7931 = vmatprep.subr.mxu0 0.0
    %7932 = vmatpush2.msra.mxu0 0.0
    %7933 = vmatprep.subr.mxu0 0.0
    %7934 = vmatpush2.msra.mxu0 0.0
    %7935 = vmatprep.subr.mxu0 0.0
    %7936 = vmatpush2.msra.mxu0 0.0
    %7937 = vmatprep.subr.mxu0 0.0
    %7938 = vmatpush2.msra.mxu0 0.0
    %7939 = vmatprep.subr.mxu0 0.0
    %7940 = vmatpush2.msra.mxu0 0.0
    %7941 = vmatprep.mubr.f32.mxu0 0.0
    %v7942 = vand.u32 %v2979, 4294901760
    %7943 = vmatmul.mubr.f32.gmra.mxu0 %v7942
    %v7944 = vpop.f32.mrf.mxu0
    %v7945 = vadd.f32 %v7831, %v7944
    %v7946 = vpop.f32.mrf.mxu0
    %7947 = vmatprep.mubr.f32.mxu0 0.0
    %v7948 = vand.u32 %v2981, 4294901760
    %7949 = vmatmul.mubr.f32.gmra.mxu0 %v7948
    %v7950 = vpop.f32.mrf.mxu0
    %v7951 = vadd.f32 %v7837, %v7950
    %v7952 = vpop.f32.mrf.mxu0
    %7953 = vmatprep.mubr.f32.mxu0 0.0
    %v7954 = vand.u32 %v2983, 4294901760
    %7955 = vmatmul.mubr.f32.gmra.mxu0 %v7954
    %v7956 = vpop.f32.mrf.mxu0
    %v7957 = vadd.f32 %v7843, %v7956
    %v7958 = vpop.f32.mrf.mxu0
    %7959 = vmatprep.mubr.f32.mxu0 0.0
    %v7960 = vand.u32 %v2985, 4294901760
    %7961 = vmatmul.mubr.f32.gmra.mxu0 %v7960
    %v7962 = vpop.f32.mrf.mxu0
    %v7963 = vadd.f32 %v7849, %v7962
    %v7964 = vpop.f32.mrf.mxu0
    %7965 = vmatprep.mubr.f32.mxu0 0.0
    %v7966 = vand.u32 %v2987, 4294901760
    %7967 = vmatmul.mubr.f32.gmra.mxu0 %v7966
    %v7968 = vpop.f32.mrf.mxu0
    %v7969 = vadd.f32 %v7855, %v7968
    %v7970 = vpop.f32.mrf.mxu0
    %7971 = vmatprep.mubr.f32.mxu0 0.0
    %v7972 = vand.u32 %v2989, 4294901760
    %7973 = vmatmul.mubr.f32.gmra.mxu0 %v7972
    %v7974 = vpop.f32.mrf.mxu0
    %v7975 = vadd.f32 %v7861, %v7974
    %v7976 = vpop.f32.mrf.mxu0
    %7977 = vmatprep.mubr.f32.mxu0 0.0
    %v7978 = vand.u32 %v2991, 4294901760
    %7979 = vmatmul.mubr.f32.gmra.mxu0 %v7978
    %v7980 = vpop.f32.mrf.mxu0
    %v7981 = vadd.f32 %v7867, %v7980
    %v7982 = vpop.f32.mrf.mxu0
    %7983 = vmatprep.mubr.f32.mxu0 0.0
    %v7984 = vand.u32 %v2993, 4294901760
    %7985 = vmatmul.mubr.f32.gmra.mxu0 %v7984
    %v7986 = vpop.f32.mrf.mxu0
    %v7987 = vadd.f32 %v7873, %v7986
    %v7988 = vpop.f32.mrf.mxu0
    %7989 = vdwg.mxu0
    %v7990 = vxor.u32 %v7945, 2147483648
    %v7991 = vxor.u32 %v7951, 2147483648
    %v7992 = vxor.u32 %v7957, 2147483648
    %v7993 = vxor.u32 %v7963, 2147483648
    %v7994 = vxor.u32 %v7969, 2147483648
    %v7995 = vxor.u32 %v7975, 2147483648
    %v7996 = vxor.u32 %v7981, 2147483648
    %v7997 = vxor.u32 %v7987, 2147483648
    %v7998 = vmul.f32 %v7990, 1.442695
    %v7999 = vpow.pop %v7998
    %v8000 = vmul.f32 %v7991, 1.442695
    %v8001 = vpow.pop %v8000
    %v8002 = vmul.f32 %v7992, 1.442695
    %v8003 = vpow.pop %v8002
    %v8004 = vmul.f32 %v7993, 1.442695
    %v8005 = vpow.pop %v8004
    %v8006 = vmul.f32 %v7994, 1.442695
    %v8007 = vpow.pop %v8006
    %v8008 = vmul.f32 %v7995, 1.442695
    %v8009 = vpow.pop %v8008
    %v8010 = vmul.f32 %v7996, 1.442695
    %v8011 = vpow.pop %v8010
    %v8012 = vmul.f32 %v7997, 1.442695
    %v8013 = vpow.pop %v8012
    %v8014 = vadd.f32 %v7999, 1.0
    %v8015 = vadd.f32 %v8001, 1.0
    %v8016 = vadd.f32 %v8003, 1.0
    %v8017 = vadd.f32 %v8005, 1.0
    %v8018 = vadd.f32 %v8007, 1.0
    %v8019 = vadd.f32 %v8009, 1.0
    %v8020 = vadd.f32 %v8011, 1.0
    %v8021 = vadd.f32 %v8013, 1.0
    %v8022 = vrcp.pop %v8014
    %v8023 = vmul.f32 1.0, %v8022
    %v8024 = vrcp.pop %v8015
    %v8025 = vmul.f32 1.0, %v8024
    %v8026 = vrcp.pop %v8016
    %v8027 = vmul.f32 1.0, %v8026
    %v8028 = vrcp.pop %v8017
    %v8029 = vmul.f32 1.0, %v8028
    %v8030 = vrcp.pop %v8018
    %v8031 = vmul.f32 1.0, %v8030
    %v8032 = vrcp.pop %v8019
    %v8033 = vmul.f32 1.0, %v8032
    %v8034 = vrcp.pop %v8020
    %v8035 = vmul.f32 1.0, %v8034
    %v8036 = vrcp.pop %v8021
    %v8037 = vmul.f32 1.0, %v8036
    %8038 = vmatprep.subr.mxu0 0.0
    %8039 = vmatpush1.msra.mxu0 0.0
    %8040 = vmatprep.subr.mxu0 0.0
    %8041 = vmatpush1.msra.mxu0 0.0
    %8042 = vmatprep.subr.mxu0 0.0
    %8043 = vmatpush1.msra.mxu0 0.0
    %8044 = vmatprep.subr.mxu0 0.0
    %8045 = vmatpush1.msra.mxu0 0.0
    %8046 = vmatprep.subr.mxu0 0.0
    %8047 = vmatpush1.msra.mxu0 0.0
    %8048 = vmatprep.subr.mxu0 0.0
    %8049 = vmatpush1.msra.mxu0 0.0
    %8050 = vmatprep.subr.mxu0 0.0
    %8051 = vmatpush1.msra.mxu0 0.0
    %8052 = vmatprep.subr.mxu0 0.0
    %8053 = vmatpush1.msra.mxu0 0.0
    %8054 = vmatprep.subr.mxu0 %v4433
    %8055 = vmatpush1.msra.mxu0 %v4432
    %8056 = vmatprep.subr.mxu0 %v4431
    %8057 = vmatpush1.msra.mxu0 %v4430
    %8058 = vmatprep.subr.mxu0 %v4429
    %8059 = vmatpush1.msra.mxu0 %v4428
    %8060 = vmatprep.subr.mxu0 %v4427
    %8061 = vmatpush1.msra.mxu0 %v4426
    %8062 = vmatprep.subr.mxu0 %v4425
    %8063 = vmatpush1.msra.mxu0 %v4424
    %8064 = vmatprep.subr.mxu0 %v4423
    %8065 = vmatpush1.msra.mxu0 %v4422
    %8066 = vmatprep.subr.mxu0 %v4421
    %8067 = vmatpush1.msra.mxu0 %v4420
    %8068 = vmatprep.subr.mxu0 %v4419
    %8069 = vmatpush1.msra.mxu0 %v4418
    %8070 = vmatprep.subr.mxu0 0.0
    %8071 = vmatpush2.msra.mxu0 0.0
    %8072 = vmatprep.subr.mxu0 0.0
    %8073 = vmatpush2.msra.mxu0 0.0
    %8074 = vmatprep.subr.mxu0 0.0
    %8075 = vmatpush2.msra.mxu0 0.0
    %8076 = vmatprep.subr.mxu0 0.0
    %8077 = vmatpush2.msra.mxu0 0.0
    %8078 = vmatprep.subr.mxu0 0.0
    %8079 = vmatpush2.msra.mxu0 0.0
    %8080 = vmatprep.subr.mxu0 0.0
    %8081 = vmatpush2.msra.mxu0 0.0
    %8082 = vmatprep.subr.mxu0 0.0
    %8083 = vmatpush2.msra.mxu0 0.0
    %8084 = vmatprep.subr.mxu0 0.0
    %8085 = vmatpush2.msra.mxu0 0.0
    %8086 = vmatprep.subr.mxu0 0.0
    %8087 = vmatpush2.msra.mxu0 0.0
    %8088 = vmatprep.subr.mxu0 0.0
    %8089 = vmatpush2.msra.mxu0 0.0
    %8090 = vmatprep.subr.mxu0 0.0
    %8091 = vmatpush2.msra.mxu0 0.0
    %8092 = vmatprep.subr.mxu0 0.0
    %8093 = vmatpush2.msra.mxu0 0.0
    %8094 = vmatprep.subr.mxu0 0.0
    %8095 = vmatpush2.msra.mxu0 0.0
    %8096 = vmatprep.subr.mxu0 0.0
    %8097 = vmatpush2.msra.mxu0 0.0
    %8098 = vmatprep.subr.mxu0 0.0
    %8099 = vmatpush2.msra.mxu0 0.0
    %8100 = vmatprep.subr.mxu0 0.0
    %8101 = vmatpush2.msra.mxu0 0.0
    %8102 = vmatprep.mubr.f32.mxu0 0.0
    %8103 = vmatmul.mubr.f32.gmra.mxu0 %v3791
    %v8104 = vpop.f32.mrf.mxu0
    %v8105 = vadd.f32 0.0, %v8104
    %v8106 = vpop.f32.mrf.mxu0
    %v8107 = vadd.f32 0.0, %v8106
    %8108 = vdwg.mxu0
    %vm8109 = vcmp.ge.f32.partialorder %v8105, 0.0
    %vm8110 = vcmp.ge.f32.partialorder %v8107, 0.0
    %v8111 = vmul.f32 %v8105, 0.1
    %v8112 = vmul.f32 %v8107, 0.1
    %v8113 = vsel %vm8109, %v8105, %v8111
    %v8114 = vsel %vm8110, %v8107, %v8112
    %8115 = vmatprep.subr.mxu0 0.0
    %8116 = vmatpush1.msra.mxu0 0.0
    %8117 = vmatprep.subr.mxu0 0.0
    %8118 = vmatpush1.msra.mxu0 0.0
    %8119 = vmatprep.subr.mxu0 0.0
    %8120 = vmatpush1.msra.mxu0 0.0
    %8121 = vmatprep.subr.mxu0 0.0
    %8122 = vmatpush1.msra.mxu0 0.0
    %8123 = vmatprep.subr.mxu0 0.0
    %8124 = vmatpush1.msra.mxu0 0.0
    %8125 = vmatprep.subr.mxu0 0.0
    %8126 = vmatpush1.msra.mxu0 0.0
    %8127 = vmatprep.subr.mxu0 0.0
    %8128 = vmatpush1.msra.mxu0 0.0
    %8129 = vmatprep.subr.mxu0 0.0
    %8130 = vmatpush1.msra.mxu0 0.0
    %8131 = vmatprep.subr.mxu0 0.0
    %8132 = vmatpush1.msra.mxu0 0.0
    %8133 = vmatprep.subr.mxu0 0.0
    %8134 = vmatpush1.msra.mxu0 0.0
    %8135 = vmatprep.subr.mxu0 0.0
    %8136 = vmatpush1.msra.mxu0 0.0
    %8137 = vmatprep.subr.mxu0 0.0
    %8138 = vmatpush1.msra.mxu0 0.0
    %8139 = vmatprep.subr.mxu0 0.0
    %8140 = vmatpush1.msra.mxu0 0.0
    %8141 = vmatprep.subr.mxu0 0.0
    %8142 = vmatpush1.msra.mxu0 0.0
    %8143 = vmatprep.subr.mxu0 0.0
    %8144 = vmatpush1.msra.mxu0 0.0
    %8145 = vmatprep.subr.mxu0 %v8114
    %8146 = vmatpush1.msra.mxu0 %v8113
    %8147 = vmatprep.subr.mxu0 0.0
    %8148 = vmatpush2.msra.mxu0 0.0
    %8149 = vmatprep.subr.mxu0 0.0
    %8150 = vmatpush2.msra.mxu0 0.0
    %8151 = vmatprep.subr.mxu0 0.0
    %8152 = vmatpush2.msra.mxu0 0.0
    %8153 = vmatprep.subr.mxu0 0.0
    %8154 = vmatpush2.msra.mxu0 0.0
    %8155 = vmatprep.subr.mxu0 0.0
    %8156 = vmatpush2.msra.mxu0 0.0
    %8157 = vmatprep.subr.mxu0 0.0
    %8158 = vmatpush2.msra.mxu0 0.0
    %8159 = vmatprep.subr.mxu0 0.0
    %8160 = vmatpush2.msra.mxu0 0.0
    %8161 = vmatprep.subr.mxu0 0.0
    %8162 = vmatpush2.msra.mxu0 0.0
    %8163 = vmatprep.subr.mxu0 0.0
    %8164 = vmatpush2.msra.mxu0 0.0
    %8165 = vmatprep.subr.mxu0 0.0
    %8166 = vmatpush2.msra.mxu0 0.0
    %8167 = vmatprep.subr.mxu0 0.0
    %8168 = vmatpush2.msra.mxu0 0.0
    %8169 = vmatprep.subr.mxu0 0.0
    %8170 = vmatpush2.msra.mxu0 0.0
    %8171 = vmatprep.subr.mxu0 0.0
    %8172 = vmatpush2.msra.mxu0 0.0
    %8173 = vmatprep.subr.mxu0 0.0
    %8174 = vmatpush2.msra.mxu0 0.0
    %8175 = vmatprep.subr.mxu0 0.0
    %8176 = vmatpush2.msra.mxu0 0.0
    %8177 = vmatprep.subr.mxu0 0.0
    %8178 = vmatpush2.msra.mxu0 0.0
    %8179 = vmatprep.mubr.f32.mxu0 0.0
    %8180 = vmatmul.mubr.f32.gmra.mxu0 %v3886
    %v8181 = vpop.f32.mrf.mxu0
    %v8182 = vadd.f32 0.0, %v8181
    %v8183 = vpop.f32.mrf.mxu0
    %v8184 = vadd.f32 0.0, %v8183
    %8185 = vmatprep.mubr.f32.mxu0 0.0
    %8186 = vmatmul.mubr.f32.gmra.mxu0 %v3888
    %v8187 = vpop.f32.mrf.mxu0
    %v8188 = vadd.f32 0.0, %v8187
    %v8189 = vpop.f32.mrf.mxu0
    %v8190 = vadd.f32 0.0, %v8189
    %8191 = vmatprep.mubr.f32.mxu0 0.0
    %8192 = vmatmul.mubr.f32.gmra.mxu0 %v3890
    %v8193 = vpop.f32.mrf.mxu0
    %v8194 = vadd.f32 0.0, %v8193
    %v8195 = vpop.f32.mrf.mxu0
    %v8196 = vadd.f32 0.0, %v8195
    %8197 = vmatprep.mubr.f32.mxu0 0.0
    %8198 = vmatmul.mubr.f32.gmra.mxu0 %v3892
    %v8199 = vpop.f32.mrf.mxu0
    %v8200 = vadd.f32 0.0, %v8199
    %v8201 = vpop.f32.mrf.mxu0
    %v8202 = vadd.f32 0.0, %v8201
    %8203 = vmatprep.mubr.f32.mxu0 0.0
    %8204 = vmatmul.mubr.f32.gmra.mxu0 %v3894
    %v8205 = vpop.f32.mrf.mxu0
    %v8206 = vadd.f32 0.0, %v8205
    %v8207 = vpop.f32.mrf.mxu0
    %v8208 = vadd.f32 0.0, %v8207
    %8209 = vmatprep.mubr.f32.mxu0 0.0
    %8210 = vmatmul.mubr.f32.gmra.mxu0 %v3896
    %v8211 = vpop.f32.mrf.mxu0
    %v8212 = vadd.f32 0.0, %v8211
    %v8213 = vpop.f32.mrf.mxu0
    %v8214 = vadd.f32 0.0, %v8213
    %8215 = vmatprep.mubr.f32.mxu0 0.0
    %8216 = vmatmul.mubr.f32.gmra.mxu0 %v3898
    %v8217 = vpop.f32.mrf.mxu0
    %v8218 = vadd.f32 0.0, %v8217
    %v8219 = vpop.f32.mrf.mxu0
    %v8220 = vadd.f32 0.0, %v8219
    %8221 = vmatprep.mubr.f32.mxu0 0.0
    %8222 = vmatmul.mubr.f32.gmra.mxu0 %v3900
    %v8223 = vpop.f32.mrf.mxu0
    %v8224 = vadd.f32 0.0, %v8223
    %v8225 = vpop.f32.mrf.mxu0
    %v8226 = vadd.f32 0.0, %v8225
    %8227 = vdwg.mxu0
    %8229 = vset.pattern.permute.xlu0 0
    %8230 = vperm.xlu0 %8229, %v8023
    %v8231 = vpop.permute.xlu0 %8230
    %8234 = vset.pattern.permute.xlu0 0
    %8235 = vperm.xlu0 %8234, %v8025
    %v8236 = vpop.permute.xlu0 %8235
    %8239 = vset.pattern.permute.xlu0 0
    %8240 = vperm.xlu0 %8239, %v8027
    %v8241 = vpop.permute.xlu0 %8240
    %8244 = vset.pattern.permute.xlu0 0
    %8245 = vperm.xlu0 %8244, %v8029
    %v8246 = vpop.permute.xlu0 %8245
    %8249 = vset.pattern.permute.xlu0 0
    %8250 = vperm.xlu0 %8249, %v8031
    %v8251 = vpop.permute.xlu0 %8250
    %8254 = vset.pattern.permute.xlu0 0
    %8255 = vperm.xlu0 %8254, %v8033
    %v8256 = vpop.permute.xlu0 %8255
    %8259 = vset.pattern.permute.xlu0 0
    %8260 = vperm.xlu0 %8259, %v8035
    %v8261 = vpop.permute.xlu0 %8260
    %8264 = vset.pattern.permute.xlu0 0
    %8265 = vperm.xlu0 %8264, %v8037
    %v8266 = vpop.permute.xlu0 %8265
    %v8268 = vmul.f32 %v5857, %v8231
    %v8269 = vmul.f32 %v5859, %v8236
    %v8270 = vmul.f32 %v5861, %v8241
    %v8271 = vmul.f32 %v5863, %v8246
    %v8272 = vmul.f32 %v5865, %v8251
    %v8273 = vmul.f32 %v5867, %v8256
    %v8274 = vmul.f32 %v5869, %v8261
    %v8275 = vmul.f32 %v5871, %v8266
    %v8277 = vsel %vm2386, %v8268, 0
    %v8280 = vsel %vm2386, %v8269, 0
    %v8283 = vsel %vm2386, %v8270, 0
    %v8286 = vsel %vm2386, %v8271, 0
    %v8289 = vsel %vm2386, %v8272, 0
    %v8292 = vsel %vm2386, %v8273, 0
    %v8295 = vsel %vm2386, %v8274, 0
    %v8298 = vsel %vm2386, %v8275, 0
    %8300 = vmatprep.subr.mxu0 0.0
    %8301 = vmatpush1.msra.mxu0 0.0
    %8302 = vmatprep.subr.mxu0 0.0
    %8303 = vmatpush1.msra.mxu0 0.0
    %8304 = vmatprep.subr.mxu0 0.0
    %8305 = vmatpush1.msra.mxu0 0.0
    %8306 = vmatprep.subr.mxu0 0.0
    %8307 = vmatpush1.msra.mxu0 0.0
    %8308 = vmatprep.subr.mxu0 0.0
    %8309 = vmatpush1.msra.mxu0 0.0
    %8310 = vmatprep.subr.mxu0 0.0
    %8311 = vmatpush1.msra.mxu0 0.0
    %8312 = vmatprep.subr.mxu0 0.0
    %8313 = vmatpush1.msra.mxu0 0.0
    %8314 = vmatprep.subr.mxu0 0.0
    %8315 = vmatpush1.msra.mxu0 0.0
    %8316 = vmatprep.subr.mxu0 0.0
    %8317 = vmatpush1.msra.mxu0 0.0
    %8318 = vmatprep.subr.mxu0 0.0
    %8319 = vmatpush1.msra.mxu0 0.0
    %8320 = vmatprep.subr.mxu0 0.0
    %8321 = vmatpush1.msra.mxu0 0.0
    %8322 = vmatprep.subr.mxu0 0.0
    %8323 = vmatpush1.msra.mxu0 0.0
    %8324 = vmatprep.subr.mxu0 0.0
    %8325 = vmatpush1.msra.mxu0 0.0
    %8326 = vmatprep.subr.mxu0 0.0
    %8327 = vmatpush1.msra.mxu0 0.0
    %8328 = vmatprep.subr.mxu0 %v56
    %8329 = vmatpush1.msra.mxu0 %v55
    %8330 = vmatprep.subr.mxu0 %v54
    %8331 = vmatpush1.msra.mxu0 %v53
    %8332 = vmatprep.subr.mxu0 0.0
    %8333 = vmatpush2.msra.mxu0 0.0
    %8334 = vmatprep.subr.mxu0 0.0
    %8335 = vmatpush2.msra.mxu0 0.0
    %8336 = vmatprep.subr.mxu0 0.0
    %8337 = vmatpush2.msra.mxu0 0.0
    %8338 = vmatprep.subr.mxu0 0.0
    %8339 = vmatpush2.msra.mxu0 0.0
    %8340 = vmatprep.subr.mxu0 0.0
    %8341 = vmatpush2.msra.mxu0 0.0
    %8342 = vmatprep.subr.mxu0 0.0
    %8343 = vmatpush2.msra.mxu0 0.0
    %8344 = vmatprep.subr.mxu0 0.0
    %8345 = vmatpush2.msra.mxu0 0.0
    %8346 = vmatprep.subr.mxu0 0.0
    %8347 = vmatpush2.msra.mxu0 0.0
    %8348 = vmatprep.subr.mxu0 0.0
    %8349 = vmatpush2.msra.mxu0 0.0
    %8350 = vmatprep.subr.mxu0 0.0
    %8351 = vmatpush2.msra.mxu0 0.0
    %8352 = vmatprep.subr.mxu0 0.0
    %8353 = vmatpush2.msra.mxu0 0.0
    %8354 = vmatprep.subr.mxu0 0.0
    %8355 = vmatpush2.msra.mxu0 0.0
    %8356 = vmatprep.subr.mxu0 0.0
    %8357 = vmatpush2.msra.mxu0 0.0
    %8358 = vmatprep.subr.mxu0 0.0
    %8359 = vmatpush2.msra.mxu0 0.0
    %8360 = vmatprep.subr.mxu0 0.0
    %8361 = vmatpush2.msra.mxu0 0.0
    %8362 = vmatprep.subr.mxu0 0.0
    %8363 = vmatpush2.msra.mxu0 0.0
    %8364 = vmatprep.mubr.f32.mxu0 0.0
    %8365 = vmatmul.mubr.f32.gmra.mxu0 %v8277
    %v8366 = vpop.f32.mrf.mxu0
    %v8367 = vadd.f32 0.0, %v8366
    %v8368 = vpop.f32.mrf.mxu0
    %v8369 = vadd.f32 0.0, %v8368
    %8370 = vmatprep.mubr.f32.mxu0 0.0
    %8371 = vmatmul.mubr.f32.gmra.mxu0 %v8280
    %v8372 = vpop.f32.mrf.mxu0
    %v8373 = vadd.f32 0.0, %v8372
    %v8374 = vpop.f32.mrf.mxu0
    %v8375 = vadd.f32 0.0, %v8374
    %8376 = vmatprep.mubr.f32.mxu0 0.0
    %8377 = vmatmul.mubr.f32.gmra.mxu0 %v8283
    %v8378 = vpop.f32.mrf.mxu0
    %v8379 = vadd.f32 0.0, %v8378
    %v8380 = vpop.f32.mrf.mxu0
    %v8381 = vadd.f32 0.0, %v8380
    %8382 = vmatprep.mubr.f32.mxu0 0.0
    %8383 = vmatmul.mubr.f32.gmra.mxu0 %v8286
    %v8384 = vpop.f32.mrf.mxu0
    %v8385 = vadd.f32 0.0, %v8384
    %v8386 = vpop.f32.mrf.mxu0
    %v8387 = vadd.f32 0.0, %v8386
    %8388 = vmatprep.mubr.f32.mxu0 0.0
    %8389 = vmatmul.mubr.f32.gmra.mxu0 %v8289
    %v8390 = vpop.f32.mrf.mxu0
    %v8391 = vadd.f32 0.0, %v8390
    %v8392 = vpop.f32.mrf.mxu0
    %v8393 = vadd.f32 0.0, %v8392
    %8394 = vmatprep.mubr.f32.mxu0 0.0
    %8395 = vmatmul.mubr.f32.gmra.mxu0 %v8292
    %v8396 = vpop.f32.mrf.mxu0
    %v8397 = vadd.f32 0.0, %v8396
    %v8398 = vpop.f32.mrf.mxu0
    %v8399 = vadd.f32 0.0, %v8398
    %8400 = vmatprep.mubr.f32.mxu0 0.0
    %8401 = vmatmul.mubr.f32.gmra.mxu0 %v8295
    %v8402 = vpop.f32.mrf.mxu0
    %v8403 = vadd.f32 0.0, %v8402
    %v8404 = vpop.f32.mrf.mxu0
    %v8405 = vadd.f32 0.0, %v8404
    %8406 = vmatprep.mubr.f32.mxu0 0.0
    %8407 = vmatmul.mubr.f32.gmra.mxu0 %v8298
    %v8408 = vpop.f32.mrf.mxu0
    %v8409 = vadd.f32 0.0, %v8408
    %v8410 = vpop.f32.mrf.mxu0
    %v8411 = vadd.f32 0.0, %v8410
    %8412 = vdwg.mxu0
    %v8414 = vsel %vm2386, %v6656, 0
    %v8417 = vsel %vm2386, %v6658, 0
    %v8420 = vsel %vm2386, %v6660, 0
    %v8423 = vsel %vm2386, %v6662, 0
    %v8426 = vsel %vm2386, %v6664, 0
    %v8429 = vsel %vm2386, %v6666, 0
    %v8432 = vsel %vm2386, %v6668, 0
    %v8435 = vsel %vm2386, %v6670, 0
    %8437 = vmatprep.subr.mxu0 0.0
    %8438 = vmatpush1.msra.mxu0 0.0
    %8439 = vmatprep.subr.mxu0 0.0
    %8440 = vmatpush1.msra.mxu0 0.0
    %8441 = vmatprep.subr.mxu0 0.0
    %8442 = vmatpush1.msra.mxu0 0.0
    %8443 = vmatprep.subr.mxu0 0.0
    %8444 = vmatpush1.msra.mxu0 0.0
    %8445 = vmatprep.subr.mxu0 0.0
    %8446 = vmatpush1.msra.mxu0 0.0
    %8447 = vmatprep.subr.mxu0 0.0
    %8448 = vmatpush1.msra.mxu0 0.0
    %8449 = vmatprep.subr.mxu0 0.0
    %8450 = vmatpush1.msra.mxu0 0.0
    %8451 = vmatprep.subr.mxu0 0.0
    %8452 = vmatpush1.msra.mxu0 0.0
    %8453 = vmatprep.subr.mxu0 0.0
    %8454 = vmatpush1.msra.mxu0 0.0
    %8455 = vmatprep.subr.mxu0 0.0
    %8456 = vmatpush1.msra.mxu0 0.0
    %8457 = vmatprep.subr.mxu0 0.0
    %8458 = vmatpush1.msra.mxu0 0.0
    %8459 = vmatprep.subr.mxu0 0.0
    %8460 = vmatpush1.msra.mxu0 0.0
    %8461 = vmatprep.subr.mxu0 0.0
    %8462 = vmatpush1.msra.mxu0 0.0
    %8463 = vmatprep.subr.mxu0 0.0
    %8464 = vmatpush1.msra.mxu0 0.0
    %8465 = vmatprep.subr.mxu0 %v60
    %8466 = vmatpush1.msra.mxu0 %v59
    %8467 = vmatprep.subr.mxu0 %v58
    %8468 = vmatpush1.msra.mxu0 %v57
    %8469 = vmatprep.subr.mxu0 0.0
    %8470 = vmatpush2.msra.mxu0 0.0
    %8471 = vmatprep.subr.mxu0 0.0
    %8472 = vmatpush2.msra.mxu0 0.0
    %8473 = vmatprep.subr.mxu0 0.0
    %8474 = vmatpush2.msra.mxu0 0.0
    %8475 = vmatprep.subr.mxu0 0.0
    %8476 = vmatpush2.msra.mxu0 0.0
    %8477 = vmatprep.subr.mxu0 0.0
    %8478 = vmatpush2.msra.mxu0 0.0
    %8479 = vmatprep.subr.mxu0 0.0
    %8480 = vmatpush2.msra.mxu0 0.0
    %8481 = vmatprep.subr.mxu0 0.0
    %8482 = vmatpush2.msra.mxu0 0.0
    %8483 = vmatprep.subr.mxu0 0.0
    %8484 = vmatpush2.msra.mxu0 0.0
    %8485 = vmatprep.subr.mxu0 0.0
    %8486 = vmatpush2.msra.mxu0 0.0
    %8487 = vmatprep.subr.mxu0 0.0
    %8488 = vmatpush2.msra.mxu0 0.0
    %8489 = vmatprep.subr.mxu0 0.0
    %8490 = vmatpush2.msra.mxu0 0.0
    %8491 = vmatprep.subr.mxu0 0.0
    %8492 = vmatpush2.msra.mxu0 0.0
    %8493 = vmatprep.subr.mxu0 0.0
    %8494 = vmatpush2.msra.mxu0 0.0
    %8495 = vmatprep.subr.mxu0 0.0
    %8496 = vmatpush2.msra.mxu0 0.0
    %8497 = vmatprep.subr.mxu0 0.0
    %8498 = vmatpush2.msra.mxu0 0.0
    %8499 = vmatprep.subr.mxu0 0.0
    %8500 = vmatpush2.msra.mxu0 0.0
    %8501 = vmatprep.mubr.f32.mxu0 0.0
    %8502 = vmatmul.mubr.f32.gmra.mxu0 %v8414
    %v8503 = vpop.f32.mrf.mxu0
    %v8504 = vadd.f32 0.0, %v8503
    %v8505 = vpop.f32.mrf.mxu0
    %v8506 = vadd.f32 0.0, %v8505
    %8507 = vmatprep.mubr.f32.mxu0 0.0
    %8508 = vmatmul.mubr.f32.gmra.mxu0 %v8417
    %v8509 = vpop.f32.mrf.mxu0
    %v8510 = vadd.f32 0.0, %v8509
    %v8511 = vpop.f32.mrf.mxu0
    %v8512 = vadd.f32 0.0, %v8511
    %8513 = vmatprep.mubr.f32.mxu0 0.0
    %8514 = vmatmul.mubr.f32.gmra.mxu0 %v8420
    %v8515 = vpop.f32.mrf.mxu0
    %v8516 = vadd.f32 0.0, %v8515
    %v8517 = vpop.f32.mrf.mxu0
    %v8518 = vadd.f32 0.0, %v8517
    %8519 = vmatprep.mubr.f32.mxu0 0.0
    %8520 = vmatmul.mubr.f32.gmra.mxu0 %v8423
    %v8521 = vpop.f32.mrf.mxu0
    %v8522 = vadd.f32 0.0, %v8521
    %v8523 = vpop.f32.mrf.mxu0
    %v8524 = vadd.f32 0.0, %v8523
    %8525 = vmatprep.mubr.f32.mxu0 0.0
    %8526 = vmatmul.mubr.f32.gmra.mxu0 %v8426
    %v8527 = vpop.f32.mrf.mxu0
    %v8528 = vadd.f32 0.0, %v8527
    %v8529 = vpop.f32.mrf.mxu0
    %v8530 = vadd.f32 0.0, %v8529
    %8531 = vmatprep.mubr.f32.mxu0 0.0
    %8532 = vmatmul.mubr.f32.gmra.mxu0 %v8429
    %v8533 = vpop.f32.mrf.mxu0
    %v8534 = vadd.f32 0.0, %v8533
    %v8535 = vpop.f32.mrf.mxu0
    %v8536 = vadd.f32 0.0, %v8535
    %8537 = vmatprep.mubr.f32.mxu0 0.0
    %8538 = vmatmul.mubr.f32.gmra.mxu0 %v8432
    %v8539 = vpop.f32.mrf.mxu0
    %v8540 = vadd.f32 0.0, %v8539
    %v8541 = vpop.f32.mrf.mxu0
    %v8542 = vadd.f32 0.0, %v8541
    %8543 = vmatprep.mubr.f32.mxu0 0.0
    %8544 = vmatmul.mubr.f32.gmra.mxu0 %v8435
    %v8545 = vpop.f32.mrf.mxu0
    %v8546 = vadd.f32 0.0, %v8545
    %v8547 = vpop.f32.mrf.mxu0
    %v8548 = vadd.f32 0.0, %v8547
    %8549 = vdwg.mxu0
    %v8550 = vmul.f32 %v4418, %v8367
    %v8551 = vmul.f32 %v4419, %v8369
    %v8552 = vmul.f32 %v4420, %v8373
    %v8553 = vmul.f32 %v4421, %v8375
    %v8554 = vmul.f32 %v4422, %v8379
    %v8555 = vmul.f32 %v4423, %v8381
    %v8556 = vmul.f32 %v4424, %v8385
    %v8557 = vmul.f32 %v4425, %v8387
    %v8558 = vmul.f32 %v4426, %v8391
    %v8559 = vmul.f32 %v4427, %v8393
    %v8560 = vmul.f32 %v4428, %v8397
    %v8561 = vmul.f32 %v4429, %v8399
    %v8562 = vmul.f32 %v4430, %v8403
    %v8563 = vmul.f32 %v4431, %v8405
    %v8564 = vmul.f32 %v4432, %v8409
    %v8565 = vmul.f32 %v4433, %v8411
    %v8566 = vmul.f32 %v8550, %v8504
    %v8567 = vmul.f32 %v8551, %v8506
    %v8568 = vmul.f32 %v8552, %v8510
    %v8569 = vmul.f32 %v8553, %v8512
    %v8570 = vmul.f32 %v8554, %v8516
    %v8571 = vmul.f32 %v8555, %v8518
    %v8572 = vmul.f32 %v8556, %v8522
    %v8573 = vmul.f32 %v8557, %v8524
    %v8574 = vmul.f32 %v8558, %v8528
    %v8575 = vmul.f32 %v8559, %v8530
    %v8576 = vmul.f32 %v8560, %v8534
    %v8577 = vmul.f32 %v8561, %v8536
    %v8578 = vmul.f32 %v8562, %v8540
    %v8579 = vmul.f32 %v8563, %v8542
    %v8580 = vmul.f32 %v8564, %v8546
    %v8581 = vmul.f32 %v8565, %v8548
    %v8582 = vadd.f32 %v4418, %v8182
    %v8583 = vadd.f32 %v4419, %v8184
    %v8584 = vadd.f32 %v4420, %v8188
    %v8585 = vadd.f32 %v4421, %v8190
    %v8586 = vadd.f32 %v4422, %v8194
    %v8587 = vadd.f32 %v4423, %v8196
    %v8588 = vadd.f32 %v4424, %v8200
    %v8589 = vadd.f32 %v4425, %v8202
    %v8590 = vadd.f32 %v4426, %v8206
    %v8591 = vadd.f32 %v4427, %v8208
    %v8592 = vadd.f32 %v4428, %v8212
    %v8593 = vadd.f32 %v4429, %v8214
    %v8594 = vadd.f32 %v4430, %v8218
    %v8595 = vadd.f32 %v4431, %v8220
    %v8596 = vadd.f32 %v4432, %v8224
    %v8597 = vadd.f32 %v4433, %v8226
    %v8598 = vmul.f32 %v8566, %v8582
    %v8599 = vmul.f32 %v8567, %v8583
    %v8600 = vmul.f32 %v8568, %v8584
    %v8601 = vmul.f32 %v8569, %v8585
    %v8602 = vmul.f32 %v8570, %v8586
    %v8603 = vmul.f32 %v8571, %v8587
    %v8604 = vmul.f32 %v8572, %v8588
    %v8605 = vmul.f32 %v8573, %v8589
    %v8606 = vmul.f32 %v8574, %v8590
    %v8607 = vmul.f32 %v8575, %v8591
    %v8608 = vmul.f32 %v8576, %v8592
    %v8609 = vmul.f32 %v8577, %v8593
    %v8610 = vmul.f32 %v8578, %v8594
    %v8611 = vmul.f32 %v8579, %v8595
    %v8612 = vmul.f32 %v8580, %v8596
    %v8613 = vmul.f32 %v8581, %v8597
    %s8614 = scalar_lea.vmem [#allocation2], 128
    %8615 = vst [vmem:[%s8614] sm:$0xff] %v8598
    %8616 = vst [vmem:[%s8614 + $0x8] sm:$0xff] %v8599
    %8617 = vst [vmem:[%s8614 + $0x10] sm:$0xff] %v8600
    %8618 = vst [vmem:[%s8614 + $0x18] sm:$0xff] %v8601
    %8619 = vst [vmem:[%s8614 + $0x20] sm:$0xff] %v8602
    %8620 = vst [vmem:[%s8614 + $0x28] sm:$0xff] %v8603
    %8621 = vst [vmem:[%s8614 + $0x30] sm:$0xff] %v8604
    %8622 = vst [vmem:[%s8614 + $0x38] sm:$0xff] %v8605
    %8623 = vst [vmem:[%s8614 + $0x40] sm:$0xff] %v8606
    %8624 = vst [vmem:[%s8614 + $0x48] sm:$0xff] %v8607
    %8625 = vst [vmem:[%s8614 + $0x50] sm:$0xff] %v8608
    %8626 = vst [vmem:[%s8614 + $0x58] sm:$0xff] %v8609
    %8627 = vst [vmem:[%s8614 + $0x60] sm:$0xff] %v8610
    %8628 = vst [vmem:[%s8614 + $0x68] sm:$0xff] %v8611
    %8629 = vst [vmem:[%s8614 + $0x70] sm:$0xff] %v8612
    %8630 = vst [vmem:[%s8614 + $0x78] sm:$0xff] %v8613
    // Predicated region
    $region22: #{tpu_custom_call.1} parent=1 // pred_check
      _
    $region23: #{tpu_custom_call.1} parent=1 // pred_check_branch
      %8632 = sbr.rel (0) target = $region25
    $region24: #{tpu_custom_call.1} parent=1 // pred_region
      %s8634 = ssub.s32 4096, 4096
      %8635 = vsyncadd [#allocation3], %s8634
      %s8636 = sshll.u32 [#allocation2], 4
      %s8637 = int_to_ptr.vmem [resolvable:$true] %s8636
      %8642 = dma.vmem_to_hbm [thread:$0]  %s8637, 4096, %s5, [#allocation3], 256, 256, 16
    $region25: #{tpu_custom_call.1} parent=1 // pred_fallthru
      _
    // Predicated region
    $region26: #{tpu_custom_call.1} parent=1 // pred_check
      _
    $region27: #{tpu_custom_call.1} parent=1 // pred_check_branch
      %8644 = sbr.rel (0) target = $region29
    $region28: #{tpu_custom_call.1} parent=1 // pred_region
      %8645 = dma.done [#allocation3], 4096
    $region29: #{tpu_custom_call.1} parent=1 // pred_fallthru
      _
    %8646 = vsyncpa [#allocation3], 1

</llo_original>
